<compile_context>
chip_gen: v7x
topology: tpu7x:2x2x1
jax: 0.10.0
libtpu: 0.0.40
codegen_flags: <defaults>
</compile_context>

<pallas_src>
import functools

import jax
import jax.numpy as jnp
import numpy as np
from jax import lax
from jax.experimental import pallas as pl
from jax.experimental.pallas import tpu as pltpu

# ---- module config (matches MultiHeadSelfAtt(in_ch=32, num_heads=8)) ----
IN_CH = 32
NUM_HEADS = 8
CPH = IN_CH // NUM_HEADS                    # channels per head
CPH1 = CPH + 1                              # + fused all-ones channel (softmax denominator)
QKV_ROWS = 2 * IN_CH + NUM_HEADS * CPH1     # [scaled-Q | K | V+ones] = 104
BATCH = 2
HH, WW = 16, 16
SEQ = HH * WW                               # S = h*w = 256
S_TILE = 128                                # lane-slab width of the attention inner block


def mhsa_kernel(w0_ref, x_ref, wqkv_ref, bqkv_ref, wl_ref, bl_ref, o_ref,
                qkv_sc, head_sc):
    """Channels-first block: x_ref is (bn, C, S).

    w0_ref   : (1,) scalar parameter in SMEM.
    wqkv_ref : (QKV_ROWS, C) fused [scaled-Q | K | V+ones] 1x1-conv weight.
    bqkv_ref : (QKV_ROWS, 1) fused bias (ones-channel: weight 0, bias 1.0).
    wl_ref   : (C, C) final 1x1-conv weight;  bl_ref : (C, 1) its bias.
    qkv_sc   : (QKV_ROWS, S) VMEM scratch holding the fused projection (keeps it out of
               registers across the head loop).
    head_sc  : (C, S) VMEM scratch collecting the per-head attention outputs.
    """
    bn, ch, seq = x_ref.shape
    cph = ch // NUM_HEADS
    cph1 = cph + 1
    n_s = seq // S_TILE
    w0 = w0_ref[0]

    for n in range(bn):                                   # static (bn is 1 or BATCH)
        # fused (scaled-Q | K | V | ones) projection: one canonical MXU matmul.
        # Weight/bias loaded at the use site (not hoisted) so they are dead during the
        # attention loop below -- register pressure beats two duplicate vlds when bn=2.
        qkv_sc[...] = (jnp.dot(wqkv_ref[...], x_ref[n],
                               preferred_element_type=jnp.float32)
                       + bqkv_ref[...])                    # (QKV_ROWS, S)

        for h in range(NUM_HEADS):                         # static unroll over 8 heads
            qh = qkv_sc[h * cph:(h + 1) * cph, :]                           # (Cph, S), scaled
            kh = qkv_sc[ch + h * cph:ch + (h + 1) * cph, :]                 # (Cph, S)
            vha = qkv_sc[2 * ch + h * cph1:2 * ch + (h + 1) * cph1, :]      # (Cph+1, S), last row = 1

            for j in range(n_s):                           # 128-lane s-slabs: live e tile is
                s0 = j * S_TILE                            # 32 vregs, not 64 (no spills)
                khj = kh[:, s0:s0 + S_TILE]                # (Cph, 128)

                # scoresT[t, s] = sum_c (scale*Q)[c, t] * K[c, s]
                # == (key.mT @ query * scale) transposed; only the tiny Q tile is consumed
                # transposed by the MXU (pl.dot trans_a form), never the (S, S) score matrix.
                sc = lax.dot_general(qh, khj, (((0,), (0,)), ((), ())),
                                     preferred_element_type=jnp.float32)    # (S, 128)

                # max-shifted, un-normalized softmax over t (sublane axis -> VPU-cheap).
                m = jnp.max(sc, axis=0, keepdims=True)                      # (1, 128)
                e = jnp.exp(sc - m)                                         # (S, 128)

                # one canonical MXU matmul gives the attention output (rows 0..Cph-1) AND
                # the softmax denominator (row Cph, from the fused all-ones channel).
                agg = jnp.dot(vha, e, preferred_element_type=jnp.float32)   # (Cph+1, 128)

                # deferred normalization on the small head output; exact reciprocal keeps
                # the 1e-4 accuracy check.
                inv = 1.0 / agg[cph:cph + 1]                                # (1, 128)
                head_sc[h * cph:(h + 1) * cph, s0:s0 + S_TILE] = agg[0:cph] * inv

        # final 1x1 conv + learnable-scale residual (lane-dense, canonical matmul).
        lin = (jnp.dot(wl_ref[...], head_sc[...], preferred_element_type=jnp.float32)
               + bl_ref[...])                              # (C, S)
        o_ref[n] = w0 * lin + x_ref[n]


def _batch_per_grid_step(n_batch: int) -> int:
    """Collapse the batch grid on single-TensorCore chips (v5e/v6e); keep a ("parallel",)
    per-batch grid on multi-core parts (v7x 2xTC, v4/v5p megacore).
    TODO(synk): benchmark grid=(N,) vs grid=(1,) on v7x rather than relying on this heuristic."""
    try:
        kind = jax.devices()[0].device_kind.lower()
    except Exception:
        return 1
    single_tc = any(t in kind for t in ("v5e", "v5 lite", "v5litepod", "v6e", "v6 lite"))
    return n_batch if single_tc else 1


@functools.partial(jax.jit, static_argnames=("bn",))
def _mhsa_forward_impl(x_nchw, w0, wq, bq, wk, bk, wv, bv, wl, bl, *, bn):
    N, ch, h, w = x_nchw.shape
    S = h * w
    cph = ch // NUM_HEADS
    assert S % S_TILE == 0

    # channels-first internal layout (N, C, S): a free reshape of NCHW -- no transposes.
    x_ncs = x_nchw.reshape(N, ch, S).astype(jnp.float32)

    scale = float(cph ** (-0.5))
    # Fuse the three 1x1 convs, fold the attention scale into Q, and append one extra output
    # channel per head to V (zero weight, bias 1.0): its activation is the all-ones row used
    # to produce the softmax denominator inside the e @ V matmul.
    wv_aug = jnp.concatenate(
        [wv.reshape(NUM_HEADS, cph, ch).astype(jnp.float32),
         jnp.zeros((NUM_HEADS, 1, ch), jnp.float32)], axis=1).reshape(NUM_HEADS * (cph + 1), ch)
    bv_aug = jnp.concatenate(
        [bv.reshape(NUM_HEADS, cph).astype(jnp.float32),
         jnp.ones((NUM_HEADS, 1), jnp.float32)], axis=1).reshape(NUM_HEADS * (cph + 1))

    wqkv = jnp.concatenate([wq * scale, wk, wv_aug], axis=0).astype(jnp.float32)   # (104, 32)
    bqkv = jnp.concatenate([bq * scale, bk, bv_aug],
                           axis=0).reshape(-1, 1).astype(jnp.float32)              # (104, 1)
    wl_f = wl.astype(jnp.float32)                                                  # (32, 32)
    bl_c = bl.reshape(ch, 1).astype(jnp.float32)                                   # (32, 1)
    qkv_rows = wqkv.shape[0]

    grid = (N // bn,)
    out = pl.pallas_call(
        mhsa_kernel,
        out_shape=jax.ShapeDtypeStruct((N, ch, S), jnp.float32),
        grid=grid,
        in_specs=[
            pl.BlockSpec(memory_space=pltpu.MemorySpace.SMEM),       # w0 scalar param
            pl.BlockSpec((bn, ch, S), lambda n: (n, 0, 0)),          # x (channels-first)
            pl.BlockSpec((qkv_rows, ch), lambda n: (0, 0)),          # fused qkv weight
            pl.BlockSpec((qkv_rows, 1), lambda n: (0, 0)),           # fused qkv bias
            pl.BlockSpec((ch, ch), lambda n: (0, 0)),                # linear weight
            pl.BlockSpec((ch, 1), lambda n: (0, 0)),                 # linear bias
        ],
        out_specs=pl.BlockSpec((bn, ch, S), lambda n: (n, 0, 0)),
        scratch_shapes=[pltpu.VMEM((qkv_rows, S), jnp.float32),      # fused projection
                        pltpu.VMEM((ch, S), jnp.float32)],           # per-head output slab
        compiler_params=pltpu.CompilerParams(
            dimension_semantics=("parallel",)),
    )(w0, x_ncs, wqkv, bqkv, wl_f, bl_c)

    return out.reshape(N, ch, h, w)


def mhsa_forward(x_nchw, w0, wq, bq, wk, bk, wv, bv, wl, bl):
    bn = _batch_per_grid_step(x_nchw.shape[0])
    return _mhsa_forward_impl(x_nchw, w0, wq, bq, wk, bk, wv, bv, wl, bl, bn=bn)


def mhsa_reference(x_nchw, w0, wq, bq, wk, bk, wv, bv, wl, bl):
    """Pure-JAX reference mirroring the PyTorch forward (un-fused, exact softmax)."""
    N, ch, h, w = x_nchw.shape
    S = h * w
    xf = x_nchw.reshape(N, ch, S).astype(jnp.float32)

    def proj(W, b):
        return jnp.einsum('oc,ncs->nos', W, xf) + b[None, :, None]   # (N, ch, S)

    q = proj(wq, bq).reshape(N, NUM_HEADS, CPH, S)
    k = proj(wk, bk).reshape(N, NUM_HEADS, CPH, S)
    v = proj(wv, bv).reshape(N, NUM_HEADS, CPH, S)

    scores = jnp.einsum('nhcs,nhct->nhst', k, q) * (CPH ** -0.5)     # key.mT @ query
    att = jax.nn.softmax(scores, axis=-1)
    out = jnp.einsum('nhst,nhct->nhcs', att, v)                      # (att @ val.mT).mT
    out = out.reshape(N, ch, S)
    out = jnp.einsum('oc,ncs->nos', wl, out) + bl[None, :, None]
    out = w0[0] * out + xf
    return out.reshape(N, ch, h, w)


if __name__ == "__main__":
    key = jax.random.PRNGKey(0)
    keys = jax.random.split(key, 10)

    fan = 1.0 / np.sqrt(IN_CH)
    wq = jax.random.uniform(keys[0], (IN_CH, IN_CH), jnp.float32, -fan, fan)
    bq = jax.random.uniform(keys[1], (IN_CH,), jnp.float32, -fan, fan)
    wk = jax.random.uniform(keys[2], (IN_CH, IN_CH), jnp.float32, -fan, fan)
    bk = jax.random.uniform(keys[3], (IN_CH,), jnp.float32, -fan, fan)
    wv = jax.random.uniform(keys[4], (IN_CH, IN_CH), jnp.float32, -fan, fan)
    bv = jax.random.uniform(keys[5], (IN_CH,), jnp.float32, -fan, fan)
    wl = jax.random.uniform(keys[6], (IN_CH, IN_CH), jnp.float32, -fan, fan)
    bl = jax.random.uniform(keys[7], (IN_CH,), jnp.float32, -fan, fan)
    # nn.Parameter(torch.zeros(1)) in __init__; use a nonzero deterministic value so the
    # attention path actually contributes to the checked output.
    w0 = jnp.array([0.5], dtype=jnp.float32)

    x = jax.random.normal(keys[8], (BATCH, IN_CH, HH, WW), jnp.float32)

    params = (w0, wq, bq, wk, bk, wv, bv, wl, bl)
    out = mhsa_forward(x, *params)
    out = jax.block_until_ready(out)

    ref = mhsa_reference(x, *params)
    np.testing.assert_allclose(np.asarray(out), np.asarray(ref), rtol=1e-4, atol=1e-4)

    print("KERNEL_OK")
</pallas_src>

<mosaic_0001>
module attributes {stable_mosaic.version = 11 : i64} {
  func.func @mhsa_kernel(%arg0: i32, %arg1: memref<1xf32, #tpu.memory_space<smem>>, %arg2: memref<1x32x256xf32, #tpu.memory_space<vmem>>, %arg3: memref<104x32xf32, #tpu.memory_space<vmem>>, %arg4: memref<104x1xf32, #tpu.memory_space<vmem>>, %arg5: memref<32x32xf32, #tpu.memory_space<vmem>>, %arg6: memref<32x1xf32, #tpu.memory_space<vmem>>, %arg7: memref<1x32x256xf32, #tpu.memory_space<vmem>>, %arg8: memref<104x256xf32, #tpu.memory_space<vmem>>, %arg9: memref<32x256xf32, #tpu.memory_space<vmem>>) attributes {dimension_semantics = [#tpu.dimension_semantics<parallel>], iteration_bounds = array<i64: 2>, scalar_prefetch = 0 : i64, scratch_operands = 2 : i64, tpu.core_type = #tpu.core_type<tc>, window_params = [{transform_indices = @transform_0, window_bounds = array<i64: 1>}, {transform_indices = @transform_1, window_bounds = array<i64: 1, 32, 256>}, {pipeline_mode = #tpu.pipeline_mode<synchronous>, transform_indices = @transform_2, window_bounds = array<i64: 104, 32>}, {pipeline_mode = #tpu.pipeline_mode<synchronous>, transform_indices = @transform_3, window_bounds = array<i64: 104, 1>}, {pipeline_mode = #tpu.pipeline_mode<synchronous>, transform_indices = @transform_4, window_bounds = array<i64: 32, 32>}, {pipeline_mode = #tpu.pipeline_mode<synchronous>, transform_indices = @transform_5, window_bounds = array<i64: 32, 1>}, {transform_indices = @transform_6, window_bounds = array<i64: 1, 32, 256>}]} {
    %c0 = arith.constant 0 : index
    %0 = memref.load %arg1[%c0] : memref<1xf32, #tpu.memory_space<smem>>
    %c0_0 = arith.constant 0 : index
    %c0_1 = arith.constant 0 : index
    %1 = vector.load %arg3[%c0_0, %c0_1] : memref<104x32xf32, #tpu.memory_space<vmem>>, vector<104x32xf32>
    %c0_2 = arith.constant 0 : index
    %c0_3 = arith.constant 0 : index
    %c0_4 = arith.constant 0 : index
    %2 = vector.load %arg2[%c0_2, %c0_3, %c0_4] : memref<1x32x256xf32, #tpu.memory_space<vmem>>, vector<1x32x256xf32>
    %3 = vector.shape_cast %2 : vector<1x32x256xf32> to vector<32x256xf32>
    %cst = arith.constant dense<0.000000e+00> : vector<104x256xf32>
    %4 = tpu.matmul %1, %3, %cst {dimension_numbers = #tpu.dot_dimension_numbers<[1], [0], [0], [1], [0, 0, 1, 1], [], []>} : vector<104x32xf32>, vector<32x256xf32>, vector<104x256xf32> -> vector<104x256xf32>
    %c0_5 = arith.constant 0 : index
    %c0_6 = arith.constant 0 : index
    %5 = vector.load %arg4[%c0_5, %c0_6] : memref<104x1xf32, #tpu.memory_space<vmem>>, vector<104x1xf32>
    %6 = vector.broadcast %5 : vector<104x1xf32> to vector<104x256xf32>
    %7 = arith.addf %4, %6 : vector<104x256xf32>
    %c0_7 = arith.constant 0 : index
    %c0_8 = arith.constant 0 : index
    %8 = vector.load %arg8[%c0_7, %c0_8] : memref<104x256xf32, #tpu.memory_space<vmem>>, vector<104x256xf32>
    tpu.vector_store %arg8[%c0_7, %c0_8], %7 {strides = array<i32>} : memref<104x256xf32, #tpu.memory_space<vmem>>, vector<104x256xf32>,
    %c0_9 = arith.constant 0 : index
    %c0_10 = arith.constant 0 : index
    %9 = vector.load %arg8[%c0_9, %c0_10] : memref<104x256xf32, #tpu.memory_space<vmem>>, vector<4x256xf32>
    %c32 = arith.constant 32 : index
    %c0_11 = arith.constant 0 : index
    %10 = vector.load %arg8[%c32, %c0_11] : memref<104x256xf32, #tpu.memory_space<vmem>>, vector<4x256xf32>
    %c64 = arith.constant 64 : index
    %c0_12 = arith.constant 0 : index
    %11 = vector.load %arg8[%c64, %c0_12] : memref<104x256xf32, #tpu.memory_space<vmem>>, vector<5x256xf32>
    %12 = vector.extract_strided_slice %10 {offsets = [0, 0], sizes = [4, 128], strides = [1, 1]} : vector<4x256xf32> to vector<4x128xf32>
    %cst_13 = arith.constant dense<0.000000e+00> : vector<256x128xf32>
    %13 = tpu.matmul %9, %12, %cst_13 {dimension_numbers = #tpu.dot_dimension_numbers<[0], [0], [1], [1], [0, 1, 1, 1], [], []>} : vector<4x256xf32>, vector<4x128xf32>, vector<256x128xf32> -> vector<256x128xf32>
    %cst_14 = arith.constant dense<0xFF800000> : vector<128xf32>
    %14 = vector.multi_reduction <maximumf>, %13, %cst_14 [0] : vector<256x128xf32> to vector<128xf32>
    %15 = vector.shape_cast %14 : vector<128xf32> to vector<1x128xf32>
    %16 = vector.broadcast %15 : vector<1x128xf32> to vector<256x128xf32>
    %17 = arith.subf %13, %16 : vector<256x128xf32>
    %18 = math.exp %17 : vector<256x128xf32>
    %cst_15 = arith.constant dense<0.000000e+00> : vector<5x128xf32>
    %19 = tpu.matmul %11, %18, %cst_15 {dimension_numbers = #tpu.dot_dimension_numbers<[1], [0], [0], [1], [0, 0, 1, 1], [], []>} : vector<5x256xf32>, vector<256x128xf32>, vector<5x128xf32> -> vector<5x128xf32>
    %20 = vector.extract_strided_slice %19 {offsets = [4, 0], sizes = [1, 128], strides = [1, 1]} : vector<5x128xf32> to vector<1x128xf32>
    %cst_16 = arith.constant 1.000000e+00 : f32
    %21 = vector.broadcast %cst_16 : f32 to vector<1x128xf32>
    %22 = arith.divf %21, %20 : vector<1x128xf32>
    %23 = vector.extract_strided_slice %19 {offsets = [0, 0], sizes = [4, 128], strides = [1, 1]} : vector<5x128xf32> to vector<4x128xf32>
    %24 = vector.broadcast %22 : vector<1x128xf32> to vector<4x128xf32>
    %25 = arith.mulf %23, %24 : vector<4x128xf32>
    %c0_17 = arith.constant 0 : index
    %c0_18 = arith.constant 0 : index
    %26 = vector.load %arg9[%c0_17, %c0_18] : memref<32x256xf32, #tpu.memory_space<vmem>>, vector<4x128xf32>
    tpu.vector_store %arg9[%c0_17, %c0_18], %25 {strides = array<i32>} : memref<32x256xf32, #tpu.memory_space<vmem>>, vector<4x128xf32>,
    %27 = vector.extract_strided_slice %10 {offsets = [0, 128], sizes = [4, 128], strides = [1, 1]} : vector<4x256xf32> to vector<4x128xf32>
    %cst_19 = arith.constant dense<0.000000e+00> : vector<256x128xf32>
    %28 = tpu.matmul %9, %27, %cst_19 {dimension_numbers = #tpu.dot_dimension_numbers<[0], [0], [1], [1], [0, 1, 1, 1], [], []>} : vector<4x256xf32>, vector<4x128xf32>, vector<256x128xf32> -> vector<256x128xf32>
    %cst_20 = arith.constant dense<0xFF800000> : vector<128xf32>
    %29 = vector.multi_reduction <maximumf>, %28, %cst_20 [0] : vector<256x128xf32> to vector<128xf32>
    %30 = vector.shape_cast %29 : vector<128xf32> to vector<1x128xf32>
    %31 = vector.broadcast %30 : vector<1x128xf32> to vector<256x128xf32>
    %32 = arith.subf %28, %31 : vector<256x128xf32>
    %33 = math.exp %32 : vector<256x128xf32>
    %cst_21 = arith.constant dense<0.000000e+00> : vector<5x128xf32>
    %34 = tpu.matmul %11, %33, %cst_21 {dimension_numbers = #tpu.dot_dimension_numbers<[1], [0], [0], [1], [0, 0, 1, 1], [], []>} : vector<5x256xf32>, vector<256x128xf32>, vector<5x128xf32> -> vector<5x128xf32>
    %35 = vector.extract_strided_slice %34 {offsets = [4, 0], sizes = [1, 128], strides = [1, 1]} : vector<5x128xf32> to vector<1x128xf32>
    %cst_22 = arith.constant 1.000000e+00 : f32
    %36 = vector.broadcast %cst_22 : f32 to vector<1x128xf32>
    %37 = arith.divf %36, %35 : vector<1x128xf32>
    %38 = vector.extract_strided_slice %34 {offsets = [0, 0], sizes = [4, 128], strides = [1, 1]} : vector<5x128xf32> to vector<4x128xf32>
    %39 = vector.broadcast %37 : vector<1x128xf32> to vector<4x128xf32>
    %40 = arith.mulf %38, %39 : vector<4x128xf32>
    %c0_23 = arith.constant 0 : index
    %c128 = arith.constant 128 : index
    %41 = vector.load %arg9[%c0_23, %c128] : memref<32x256xf32, #tpu.memory_space<vmem>>, vector<4x128xf32>
    tpu.vector_store %arg9[%c0_23, %c128], %40 {strides = array<i32>} : memref<32x256xf32, #tpu.memory_space<vmem>>, vector<4x128xf32>,
    %c4 = arith.constant 4 : index
    %c0_24 = arith.constant 0 : index
    %42 = vector.load %arg8[%c4, %c0_24] : memref<104x256xf32, #tpu.memory_space<vmem>>, vector<4x256xf32>
    %c36 = arith.constant 36 : index
    %c0_25 = arith.constant 0 : index
    %43 = vector.load %arg8[%c36, %c0_25] : memref<104x256xf32, #tpu.memory_space<vmem>>, vector<4x256xf32>
    %c69 = arith.constant 69 : index
    %c0_26 = arith.constant 0 : index
    %44 = vector.load %arg8[%c69, %c0_26] : memref<104x256xf32, #tpu.memory_space<vmem>>, vector<5x256xf32>
    %45 = vector.extract_strided_slice %43 {offsets = [0, 0], sizes = [4, 128], strides = [1, 1]} : vector<4x256xf32> to vector<4x128xf32>
    %cst_27 = arith.constant dense<0.000000e+00> : vector<256x128xf32>
    %46 = tpu.matmul %42, %45, %cst_27 {dimension_numbers = #tpu.dot_dimension_numbers<[0], [0], [1], [1], [0, 1, 1, 1], [], []>} : vector<4x256xf32>, vector<4x128xf32>, vector<256x128xf32> -> vector<256x128xf32>
    %cst_28 = arith.constant dense<0xFF800000> : vector<128xf32>
    %47 = vector.multi_reduction <maximumf>, %46, %cst_28 [0] : vector<256x128xf32> to vector<128xf32>
    %48 = vector.shape_cast %47 : vector<128xf32> to vector<1x128xf32>
    %49 = vector.broadcast %48 : vector<1x128xf32> to vector<256x128xf32>
    %50 = arith.subf %46, %49 : vector<256x128xf32>
    %51 = math.exp %50 : vector<256x128xf32>
    %cst_29 = arith.constant dense<0.000000e+00> : vector<5x128xf32>
    %52 = tpu.matmul %44, %51, %cst_29 {dimension_numbers = #tpu.dot_dimension_numbers<[1], [0], [0], [1], [0, 0, 1, 1], [], []>} : vector<5x256xf32>, vector<256x128xf32>, vector<5x128xf32> -> vector<5x128xf32>
    %53 = vector.extract_strided_slice %52 {offsets = [4, 0], sizes = [1, 128], strides = [1, 1]} : vector<5x128xf32> to vector<1x128xf32>
    %cst_30 = arith.constant 1.000000e+00 : f32
    %54 = vector.broadcast %cst_30 : f32 to vector<1x128xf32>
    %55 = arith.divf %54, %53 : vector<1x128xf32>
    %56 = vector.extract_strided_slice %52 {offsets = [0, 0], sizes = [4, 128], strides = [1, 1]} : vector<5x128xf32> to vector<4x128xf32>
    %57 = vector.broadcast %55 : vector<1x128xf32> to vector<4x128xf32>
    %58 = arith.mulf %56, %57 : vector<4x128xf32>
    %c4_31 = arith.constant 4 : index
    %c0_32 = arith.constant 0 : index
    %59 = vector.load %arg9[%c4_31, %c0_32] : memref<32x256xf32, #tpu.memory_space<vmem>>, vector<4x128xf32>
    tpu.vector_store %arg9[%c4_31, %c0_32], %58 {strides = array<i32>} : memref<32x256xf32, #tpu.memory_space<vmem>>, vector<4x128xf32>,
    %60 = vector.extract_strided_slice %43 {offsets = [0, 128], sizes = [4, 128], strides = [1, 1]} : vector<4x256xf32> to vector<4x128xf32>
    %cst_33 = arith.constant dense<0.000000e+00> : vector<256x128xf32>
    %61 = tpu.matmul %42, %60, %cst_33 {dimension_numbers = #tpu.dot_dimension_numbers<[0], [0], [1], [1], [0, 1, 1, 1], [], []>} : vector<4x256xf32>, vector<4x128xf32>, vector<256x128xf32> -> vector<256x128xf32>
    %cst_34 = arith.constant dense<0xFF800000> : vector<128xf32>
    %62 = vector.multi_reduction <maximumf>, %61, %cst_34 [0] : vector<256x128xf32> to vector<128xf32>
    %63 = vector.shape_cast %62 : vector<128xf32> to vector<1x128xf32>
    %64 = vector.broadcast %63 : vector<1x128xf32> to vector<256x128xf32>
    %65 = arith.subf %61, %64 : vector<256x128xf32>
    %66 = math.exp %65 : vector<256x128xf32>
    %cst_35 = arith.constant dense<0.000000e+00> : vector<5x128xf32>
    %67 = tpu.matmul %44, %66, %cst_35 {dimension_numbers = #tpu.dot_dimension_numbers<[1], [0], [0], [1], [0, 0, 1, 1], [], []>} : vector<5x256xf32>, vector<256x128xf32>, vector<5x128xf32> -> vector<5x128xf32>
    %68 = vector.extract_strided_slice %67 {offsets = [4, 0], sizes = [1, 128], strides = [1, 1]} : vector<5x128xf32> to vector<1x128xf32>
    %cst_36 = arith.constant 1.000000e+00 : f32
    %69 = vector.broadcast %cst_36 : f32 to vector<1x128xf32>
    %70 = arith.divf %69, %68 : vector<1x128xf32>
    %71 = vector.extract_strided_slice %67 {offsets = [0, 0], sizes = [4, 128], strides = [1, 1]} : vector<5x128xf32> to vector<4x128xf32>
    %72 = vector.broadcast %70 : vector<1x128xf32> to vector<4x128xf32>
    %73 = arith.mulf %71, %72 : vector<4x128xf32>
    %c4_37 = arith.constant 4 : index
    %c128_38 = arith.constant 128 : index
    %74 = vector.load %arg9[%c4_37, %c128_38] : memref<32x256xf32, #tpu.memory_space<vmem>>, vector<4x128xf32>
    tpu.vector_store %arg9[%c4_37, %c128_38], %73 {strides = array<i32>} : memref<32x256xf32, #tpu.memory_space<vmem>>, vector<4x128xf32>,
    %c8 = arith.constant 8 : index
    %c0_39 = arith.constant 0 : index
    %75 = vector.load %arg8[%c8, %c0_39] : memref<104x256xf32, #tpu.memory_space<vmem>>, vector<4x256xf32>
    %c40 = arith.constant 40 : index
    %c0_40 = arith.constant 0 : index
    %76 = vector.load %arg8[%c40, %c0_40] : memref<104x256xf32, #tpu.memory_space<vmem>>, vector<4x256xf32>
    %c74 = arith.constant 74 : index
    %c0_41 = arith.constant 0 : index
    %77 = vector.load %arg8[%c74, %c0_41] : memref<104x256xf32, #tpu.memory_space<vmem>>, vector<5x256xf32>
    %78 = vector.extract_strided_slice %76 {offsets = [0, 0], sizes = [4, 128], strides = [1, 1]} : vector<4x256xf32> to vector<4x128xf32>
    %cst_42 = arith.constant dense<0.000000e+00> : vector<256x128xf32>
    %79 = tpu.matmul %75, %78, %cst_42 {dimension_numbers = #tpu.dot_dimension_numbers<[0], [0], [1], [1], [0, 1, 1, 1], [], []>} : vector<4x256xf32>, vector<4x128xf32>, vector<256x128xf32> -> vector<256x128xf32>
    %cst_43 = arith.constant dense<0xFF800000> : vector<128xf32>
    %80 = vector.multi_reduction <maximumf>, %79, %cst_43 [0] : vector<256x128xf32> to vector<128xf32>
    %81 = vector.shape_cast %80 : vector<128xf32> to vector<1x128xf32>
    %82 = vector.broadcast %81 : vector<1x128xf32> to vector<256x128xf32>
    %83 = arith.subf %79, %82 : vector<256x128xf32>
    %84 = math.exp %83 : vector<256x128xf32>
    %cst_44 = arith.constant dense<0.000000e+00> : vector<5x128xf32>
    %85 = tpu.matmul %77, %84, %cst_44 {dimension_numbers = #tpu.dot_dimension_numbers<[1], [0], [0], [1], [0, 0, 1, 1], [], []>} : vector<5x256xf32>, vector<256x128xf32>, vector<5x128xf32> -> vector<5x128xf32>
    %86 = vector.extract_strided_slice %85 {offsets = [4, 0], sizes = [1, 128], strides = [1, 1]} : vector<5x128xf32> to vector<1x128xf32>
    %cst_45 = arith.constant 1.000000e+00 : f32
    %87 = vector.broadcast %cst_45 : f32 to vector<1x128xf32>
    %88 = arith.divf %87, %86 : vector<1x128xf32>
    %89 = vector.extract_strided_slice %85 {offsets = [0, 0], sizes = [4, 128], strides = [1, 1]} : vector<5x128xf32> to vector<4x128xf32>
    %90 = vector.broadcast %88 : vector<1x128xf32> to vector<4x128xf32>
    %91 = arith.mulf %89, %90 : vector<4x128xf32>
    %c8_46 = arith.constant 8 : index
    %c0_47 = arith.constant 0 : index
    %92 = vector.load %arg9[%c8_46, %c0_47] : memref<32x256xf32, #tpu.memory_space<vmem>>, vector<4x128xf32>
    tpu.vector_store %arg9[%c8_46, %c0_47], %91 {strides = array<i32>} : memref<32x256xf32, #tpu.memory_space<vmem>>, vector<4x128xf32>,
    %93 = vector.extract_strided_slice %76 {offsets = [0, 128], sizes = [4, 128], strides = [1, 1]} : vector<4x256xf32> to vector<4x128xf32>
    %cst_48 = arith.constant dense<0.000000e+00> : vector<256x128xf32>
    %94 = tpu.matmul %75, %93, %cst_48 {dimension_numbers = #tpu.dot_dimension_numbers<[0], [0], [1], [1], [0, 1, 1, 1], [], []>} : vector<4x256xf32>, vector<4x128xf32>, vector<256x128xf32> -> vector<256x128xf32>
    %cst_49 = arith.constant dense<0xFF800000> : vector<128xf32>
    %95 = vector.multi_reduction <maximumf>, %94, %cst_49 [0] : vector<256x128xf32> to vector<128xf32>
    %96 = vector.shape_cast %95 : vector<128xf32> to vector<1x128xf32>
    %97 = vector.broadcast %96 : vector<1x128xf32> to vector<256x128xf32>
    %98 = arith.subf %94, %97 : vector<256x128xf32>
    %99 = math.exp %98 : vector<256x128xf32>
    %cst_50 = arith.constant dense<0.000000e+00> : vector<5x128xf32>
    %100 = tpu.matmul %77, %99, %cst_50 {dimension_numbers = #tpu.dot_dimension_numbers<[1], [0], [0], [1], [0, 0, 1, 1], [], []>} : vector<5x256xf32>, vector<256x128xf32>, vector<5x128xf32> -> vector<5x128xf32>
    %101 = vector.extract_strided_slice %100 {offsets = [4, 0], sizes = [1, 128], strides = [1, 1]} : vector<5x128xf32> to vector<1x128xf32>
    %cst_51 = arith.constant 1.000000e+00 : f32
    %102 = vector.broadcast %cst_51 : f32 to vector<1x128xf32>
    %103 = arith.divf %102, %101 : vector<1x128xf32>
    %104 = vector.extract_strided_slice %100 {offsets = [0, 0], sizes = [4, 128], strides = [1, 1]} : vector<5x128xf32> to vector<4x128xf32>
    %105 = vector.broadcast %103 : vector<1x128xf32> to vector<4x128xf32>
    %106 = arith.mulf %104, %105 : vector<4x128xf32>
    %c8_52 = arith.constant 8 : index
    %c128_53 = arith.constant 128 : index
    %107 = vector.load %arg9[%c8_52, %c128_53] : memref<32x256xf32, #tpu.memory_space<vmem>>, vector<4x128xf32>
    tpu.vector_store %arg9[%c8_52, %c128_53], %106 {strides = array<i32>} : memref<32x256xf32, #tpu.memory_space<vmem>>, vector<4x128xf32>,
    %c12 = arith.constant 12 : index
    %c0_54 = arith.constant 0 : index
    %108 = vector.load %arg8[%c12, %c0_54] : memref<104x256xf32, #tpu.memory_space<vmem>>, vector<4x256xf32>
    %c44 = arith.constant 44 : index
    %c0_55 = arith.constant 0 : index
    %109 = vector.load %arg8[%c44, %c0_55] : memref<104x256xf32, #tpu.memory_space<vmem>>, vector<4x256xf32>
    %c79 = arith.constant 79 : index
    %c0_56 = arith.constant 0 : index
    %110 = vector.load %arg8[%c79, %c0_56] : memref<104x256xf32, #tpu.memory_space<vmem>>, vector<5x256xf32>
    %111 = vector.extract_strided_slice %109 {offsets = [0, 0], sizes = [4, 128], strides = [1, 1]} : vector<4x256xf32> to vector<4x128xf32>
    %cst_57 = arith.constant dense<0.000000e+00> : vector<256x128xf32>
    %112 = tpu.matmul %108, %111, %cst_57 {dimension_numbers = #tpu.dot_dimension_numbers<[0], [0], [1], [1], [0, 1, 1, 1], [], []>} : vector<4x256xf32>, vector<4x128xf32>, vector<256x128xf32> -> vector<256x128xf32>
    %cst_58 = arith.constant dense<0xFF800000> : vector<128xf32>
    %113 = vector.multi_reduction <maximumf>, %112, %cst_58 [0] : vector<256x128xf32> to vector<128xf32>
    %114 = vector.shape_cast %113 : vector<128xf32> to vector<1x128xf32>
    %115 = vector.broadcast %114 : vector<1x128xf32> to vector<256x128xf32>
    %116 = arith.subf %112, %115 : vector<256x128xf32>
    %117 = math.exp %116 : vector<256x128xf32>
    %cst_59 = arith.constant dense<0.000000e+00> : vector<5x128xf32>
    %118 = tpu.matmul %110, %117, %cst_59 {dimension_numbers = #tpu.dot_dimension_numbers<[1], [0], [0], [1], [0, 0, 1, 1], [], []>} : vector<5x256xf32>, vector<256x128xf32>, vector<5x128xf32> -> vector<5x128xf32>
    %119 = vector.extract_strided_slice %118 {offsets = [4, 0], sizes = [1, 128], strides = [1, 1]} : vector<5x128xf32> to vector<1x128xf32>
    %cst_60 = arith.constant 1.000000e+00 : f32
    %120 = vector.broadcast %cst_60 : f32 to vector<1x128xf32>
    %121 = arith.divf %120, %119 : vector<1x128xf32>
    %122 = vector.extract_strided_slice %118 {offsets = [0, 0], sizes = [4, 128], strides = [1, 1]} : vector<5x128xf32> to vector<4x128xf32>
    %123 = vector.broadcast %121 : vector<1x128xf32> to vector<4x128xf32>
    %124 = arith.mulf %122, %123 : vector<4x128xf32>
    %c12_61 = arith.constant 12 : index
    %c0_62 = arith.constant 0 : index
    %125 = vector.load %arg9[%c12_61, %c0_62] : memref<32x256xf32, #tpu.memory_space<vmem>>, vector<4x128xf32>
    tpu.vector_store %arg9[%c12_61, %c0_62], %124 {strides = array<i32>} : memref<32x256xf32, #tpu.memory_space<vmem>>, vector<4x128xf32>,
    %126 = vector.extract_strided_slice %109 {offsets = [0, 128], sizes = [4, 128], strides = [1, 1]} : vector<4x256xf32> to vector<4x128xf32>
    %cst_63 = arith.constant dense<0.000000e+00> : vector<256x128xf32>
    %127 = tpu.matmul %108, %126, %cst_63 {dimension_numbers = #tpu.dot_dimension_numbers<[0], [0], [1], [1], [0, 1, 1, 1], [], []>} : vector<4x256xf32>, vector<4x128xf32>, vector<256x128xf32> -> vector<256x128xf32>
    %cst_64 = arith.constant dense<0xFF800000> : vector<128xf32>
    %128 = vector.multi_reduction <maximumf>, %127, %cst_64 [0] : vector<256x128xf32> to vector<128xf32>
    %129 = vector.shape_cast %128 : vector<128xf32> to vector<1x128xf32>
    %130 = vector.broadcast %129 : vector<1x128xf32> to vector<256x128xf32>
    %131 = arith.subf %127, %130 : vector<256x128xf32>
    %132 = math.exp %131 : vector<256x128xf32>
    %cst_65 = arith.constant dense<0.000000e+00> : vector<5x128xf32>
    %133 = tpu.matmul %110, %132, %cst_65 {dimension_numbers = #tpu.dot_dimension_numbers<[1], [0], [0], [1], [0, 0, 1, 1], [], []>} : vector<5x256xf32>, vector<256x128xf32>, vector<5x128xf32> -> vector<5x128xf32>
    %134 = vector.extract_strided_slice %133 {offsets = [4, 0], sizes = [1, 128], strides = [1, 1]} : vector<5x128xf32> to vector<1x128xf32>
    %cst_66 = arith.constant 1.000000e+00 : f32
    %135 = vector.broadcast %cst_66 : f32 to vector<1x128xf32>
    %136 = arith.divf %135, %134 : vector<1x128xf32>
    %137 = vector.extract_strided_slice %133 {offsets = [0, 0], sizes = [4, 128], strides = [1, 1]} : vector<5x128xf32> to vector<4x128xf32>
    %138 = vector.broadcast %136 : vector<1x128xf32> to vector<4x128xf32>
    %139 = arith.mulf %137, %138 : vector<4x128xf32>
    %c12_67 = arith.constant 12 : index
    %c128_68 = arith.constant 128 : index
    %140 = vector.load %arg9[%c12_67, %c128_68] : memref<32x256xf32, #tpu.memory_space<vmem>>, vector<4x128xf32>
    tpu.vector_store %arg9[%c12_67, %c128_68], %139 {strides = array<i32>} : memref<32x256xf32, #tpu.memory_space<vmem>>, vector<4x128xf32>,
    %c16 = arith.constant 16 : index
    %c0_69 = arith.constant 0 : index
    %141 = vector.load %arg8[%c16, %c0_69] : memref<104x256xf32, #tpu.memory_space<vmem>>, vector<4x256xf32>
    %c48 = arith.constant 48 : index
    %c0_70 = arith.constant 0 : index
    %142 = vector.load %arg8[%c48, %c0_70] : memref<104x256xf32, #tpu.memory_space<vmem>>, vector<4x256xf32>
    %c84 = arith.constant 84 : index
    %c0_71 = arith.constant 0 : index
    %143 = vector.load %arg8[%c84, %c0_71] : memref<104x256xf32, #tpu.memory_space<vmem>>, vector<5x256xf32>
    %144 = vector.extract_strided_slice %142 {offsets = [0, 0], sizes = [4, 128], strides = [1, 1]} : vector<4x256xf32> to vector<4x128xf32>
    %cst_72 = arith.constant dense<0.000000e+00> : vector<256x128xf32>
    %145 = tpu.matmul %141, %144, %cst_72 {dimension_numbers = #tpu.dot_dimension_numbers<[0], [0], [1], [1], [0, 1, 1, 1], [], []>} : vector<4x256xf32>, vector<4x128xf32>, vector<256x128xf32> -> vector<256x128xf32>
    %cst_73 = arith.constant dense<0xFF800000> : vector<128xf32>
    %146 = vector.multi_reduction <maximumf>, %145, %cst_73 [0] : vector<256x128xf32> to vector<128xf32>
    %147 = vector.shape_cast %146 : vector<128xf32> to vector<1x128xf32>
    %148 = vector.broadcast %147 : vector<1x128xf32> to vector<256x128xf32>
    %149 = arith.subf %145, %148 : vector<256x128xf32>
    %150 = math.exp %149 : vector<256x128xf32>
    %cst_74 = arith.constant dense<0.000000e+00> : vector<5x128xf32>
    %151 = tpu.matmul %143, %150, %cst_74 {dimension_numbers = #tpu.dot_dimension_numbers<[1], [0], [0], [1], [0, 0, 1, 1], [], []>} : vector<5x256xf32>, vector<256x128xf32>, vector<5x128xf32> -> vector<5x128xf32>
    %152 = vector.extract_strided_slice %151 {offsets = [4, 0], sizes = [1, 128], strides = [1, 1]} : vector<5x128xf32> to vector<1x128xf32>
    %cst_75 = arith.constant 1.000000e+00 : f32
    %153 = vector.broadcast %cst_75 : f32 to vector<1x128xf32>
    %154 = arith.divf %153, %152 : vector<1x128xf32>
    %155 = vector.extract_strided_slice %151 {offsets = [0, 0], sizes = [4, 128], strides = [1, 1]} : vector<5x128xf32> to vector<4x128xf32>
    %156 = vector.broadcast %154 : vector<1x128xf32> to vector<4x128xf32>
    %157 = arith.mulf %155, %156 : vector<4x128xf32>
    %c16_76 = arith.constant 16 : index
    %c0_77 = arith.constant 0 : index
    %158 = vector.load %arg9[%c16_76, %c0_77] : memref<32x256xf32, #tpu.memory_space<vmem>>, vector<4x128xf32>
    tpu.vector_store %arg9[%c16_76, %c0_77], %157 {strides = array<i32>} : memref<32x256xf32, #tpu.memory_space<vmem>>, vector<4x128xf32>,
    %159 = vector.extract_strided_slice %142 {offsets = [0, 128], sizes = [4, 128], strides = [1, 1]} : vector<4x256xf32> to vector<4x128xf32>
    %cst_78 = arith.constant dense<0.000000e+00> : vector<256x128xf32>
    %160 = tpu.matmul %141, %159, %cst_78 {dimension_numbers = #tpu.dot_dimension_numbers<[0], [0], [1], [1], [0, 1, 1, 1], [], []>} : vector<4x256xf32>, vector<4x128xf32>, vector<256x128xf32> -> vector<256x128xf32>
    %cst_79 = arith.constant dense<0xFF800000> : vector<128xf32>
    %161 = vector.multi_reduction <maximumf>, %160, %cst_79 [0] : vector<256x128xf32> to vector<128xf32>
    %162 = vector.shape_cast %161 : vector<128xf32> to vector<1x128xf32>
    %163 = vector.broadcast %162 : vector<1x128xf32> to vector<256x128xf32>
    %164 = arith.subf %160, %163 : vector<256x128xf32>
    %165 = math.exp %164 : vector<256x128xf32>
    %cst_80 = arith.constant dense<0.000000e+00> : vector<5x128xf32>
    %166 = tpu.matmul %143, %165, %cst_80 {dimension_numbers = #tpu.dot_dimension_numbers<[1], [0], [0], [1], [0, 0, 1, 1], [], []>} : vector<5x256xf32>, vector<256x128xf32>, vector<5x128xf32> -> vector<5x128xf32>
    %167 = vector.extract_strided_slice %166 {offsets = [4, 0], sizes = [1, 128], strides = [1, 1]} : vector<5x128xf32> to vector<1x128xf32>
    %cst_81 = arith.constant 1.000000e+00 : f32
    %168 = vector.broadcast %cst_81 : f32 to vector<1x128xf32>
    %169 = arith.divf %168, %167 : vector<1x128xf32>
    %170 = vector.extract_strided_slice %166 {offsets = [0, 0], sizes = [4, 128], strides = [1, 1]} : vector<5x128xf32> to vector<4x128xf32>
    %171 = vector.broadcast %169 : vector<1x128xf32> to vector<4x128xf32>
    %172 = arith.mulf %170, %171 : vector<4x128xf32>
    %c16_82 = arith.constant 16 : index
    %c128_83 = arith.constant 128 : index
    %173 = vector.load %arg9[%c16_82, %c128_83] : memref<32x256xf32, #tpu.memory_space<vmem>>, vector<4x128xf32>
    tpu.vector_store %arg9[%c16_82, %c128_83], %172 {strides = array<i32>} : memref<32x256xf32, #tpu.memory_space<vmem>>, vector<4x128xf32>,
    %c20 = arith.constant 20 : index
    %c0_84 = arith.constant 0 : index
    %174 = vector.load %arg8[%c20, %c0_84] : memref<104x256xf32, #tpu.memory_space<vmem>>, vector<4x256xf32>
    %c52 = arith.constant 52 : index
    %c0_85 = arith.constant 0 : index
    %175 = vector.load %arg8[%c52, %c0_85] : memref<104x256xf32, #tpu.memory_space<vmem>>, vector<4x256xf32>
    %c89 = arith.constant 89 : index
    %c0_86 = arith.constant 0 : index
    %176 = vector.load %arg8[%c89, %c0_86] : memref<104x256xf32, #tpu.memory_space<vmem>>, vector<5x256xf32>
    %177 = vector.extract_strided_slice %175 {offsets = [0, 0], sizes = [4, 128], strides = [1, 1]} : vector<4x256xf32> to vector<4x128xf32>
    %cst_87 = arith.constant dense<0.000000e+00> : vector<256x128xf32>
    %178 = tpu.matmul %174, %177, %cst_87 {dimension_numbers = #tpu.dot_dimension_numbers<[0], [0], [1], [1], [0, 1, 1, 1], [], []>} : vector<4x256xf32>, vector<4x128xf32>, vector<256x128xf32> -> vector<256x128xf32>
    %cst_88 = arith.constant dense<0xFF800000> : vector<128xf32>
    %179 = vector.multi_reduction <maximumf>, %178, %cst_88 [0] : vector<256x128xf32> to vector<128xf32>
    %180 = vector.shape_cast %179 : vector<128xf32> to vector<1x128xf32>
    %181 = vector.broadcast %180 : vector<1x128xf32> to vector<256x128xf32>
    %182 = arith.subf %178, %181 : vector<256x128xf32>
    %183 = math.exp %182 : vector<256x128xf32>
    %cst_89 = arith.constant dense<0.000000e+00> : vector<5x128xf32>
    %184 = tpu.matmul %176, %183, %cst_89 {dimension_numbers = #tpu.dot_dimension_numbers<[1], [0], [0], [1], [0, 0, 1, 1], [], []>} : vector<5x256xf32>, vector<256x128xf32>, vector<5x128xf32> -> vector<5x128xf32>
    %185 = vector.extract_strided_slice %184 {offsets = [4, 0], sizes = [1, 128], strides = [1, 1]} : vector<5x128xf32> to vector<1x128xf32>
    %cst_90 = arith.constant 1.000000e+00 : f32
    %186 = vector.broadcast %cst_90 : f32 to vector<1x128xf32>
    %187 = arith.divf %186, %185 : vector<1x128xf32>
    %188 = vector.extract_strided_slice %184 {offsets = [0, 0], sizes = [4, 128], strides = [1, 1]} : vector<5x128xf32> to vector<4x128xf32>
    %189 = vector.broadcast %187 : vector<1x128xf32> to vector<4x128xf32>
    %190 = arith.mulf %188, %189 : vector<4x128xf32>
    %c20_91 = arith.constant 20 : index
    %c0_92 = arith.constant 0 : index
    %191 = vector.load %arg9[%c20_91, %c0_92] : memref<32x256xf32, #tpu.memory_space<vmem>>, vector<4x128xf32>
    tpu.vector_store %arg9[%c20_91, %c0_92], %190 {strides = array<i32>} : memref<32x256xf32, #tpu.memory_space<vmem>>, vector<4x128xf32>,
    %192 = vector.extract_strided_slice %175 {offsets = [0, 128], sizes = [4, 128], strides = [1, 1]} : vector<4x256xf32> to vector<4x128xf32>
    %cst_93 = arith.constant dense<0.000000e+00> : vector<256x128xf32>
    %193 = tpu.matmul %174, %192, %cst_93 {dimension_numbers = #tpu.dot_dimension_numbers<[0], [0], [1], [1], [0, 1, 1, 1], [], []>} : vector<4x256xf32>, vector<4x128xf32>, vector<256x128xf32> -> vector<256x128xf32>
    %cst_94 = arith.constant dense<0xFF800000> : vector<128xf32>
    %194 = vector.multi_reduction <maximumf>, %193, %cst_94 [0] : vector<256x128xf32> to vector<128xf32>
    %195 = vector.shape_cast %194 : vector<128xf32> to vector<1x128xf32>
    %196 = vector.broadcast %195 : vector<1x128xf32> to vector<256x128xf32>
    %197 = arith.subf %193, %196 : vector<256x128xf32>
    %198 = math.exp %197 : vector<256x128xf32>
    %cst_95 = arith.constant dense<0.000000e+00> : vector<5x128xf32>
    %199 = tpu.matmul %176, %198, %cst_95 {dimension_numbers = #tpu.dot_dimension_numbers<[1], [0], [0], [1], [0, 0, 1, 1], [], []>} : vector<5x256xf32>, vector<256x128xf32>, vector<5x128xf32> -> vector<5x128xf32>
    %200 = vector.extract_strided_slice %199 {offsets = [4, 0], sizes = [1, 128], strides = [1, 1]} : vector<5x128xf32> to vector<1x128xf32>
    %cst_96 = arith.constant 1.000000e+00 : f32
    %201 = vector.broadcast %cst_96 : f32 to vector<1x128xf32>
    %202 = arith.divf %201, %200 : vector<1x128xf32>
    %203 = vector.extract_strided_slice %199 {offsets = [0, 0], sizes = [4, 128], strides = [1, 1]} : vector<5x128xf32> to vector<4x128xf32>
    %204 = vector.broadcast %202 : vector<1x128xf32> to vector<4x128xf32>
    %205 = arith.mulf %203, %204 : vector<4x128xf32>
    %c20_97 = arith.constant 20 : index
    %c128_98 = arith.constant 128 : index
    %206 = vector.load %arg9[%c20_97, %c128_98] : memref<32x256xf32, #tpu.memory_space<vmem>>, vector<4x128xf32>
    tpu.vector_store %arg9[%c20_97, %c128_98], %205 {strides = array<i32>} : memref<32x256xf32, #tpu.memory_space<vmem>>, vector<4x128xf32>,
    %c24 = arith.constant 24 : index
    %c0_99 = arith.constant 0 : index
    %207 = vector.load %arg8[%c24, %c0_99] : memref<104x256xf32, #tpu.memory_space<vmem>>, vector<4x256xf32>
    %c56 = arith.constant 56 : index
    %c0_100 = arith.constant 0 : index
    %208 = vector.load %arg8[%c56, %c0_100] : memref<104x256xf32, #tpu.memory_space<vmem>>, vector<4x256xf32>
    %c94 = arith.constant 94 : index
    %c0_101 = arith.constant 0 : index
    %209 = vector.load %arg8[%c94, %c0_101] : memref<104x256xf32, #tpu.memory_space<vmem>>, vector<5x256xf32>
    %210 = vector.extract_strided_slice %208 {offsets = [0, 0], sizes = [4, 128], strides = [1, 1]} : vector<4x256xf32> to vector<4x128xf32>
    %cst_102 = arith.constant dense<0.000000e+00> : vector<256x128xf32>
    %211 = tpu.matmul %207, %210, %cst_102 {dimension_numbers = #tpu.dot_dimension_numbers<[0], [0], [1], [1], [0, 1, 1, 1], [], []>} : vector<4x256xf32>, vector<4x128xf32>, vector<256x128xf32> -> vector<256x128xf32>
    %cst_103 = arith.constant dense<0xFF800000> : vector<128xf32>
    %212 = vector.multi_reduction <maximumf>, %211, %cst_103 [0] : vector<256x128xf32> to vector<128xf32>
    %213 = vector.shape_cast %212 : vector<128xf32> to vector<1x128xf32>
    %214 = vector.broadcast %213 : vector<1x128xf32> to vector<256x128xf32>
    %215 = arith.subf %211, %214 : vector<256x128xf32>
    %216 = math.exp %215 : vector<256x128xf32>
    %cst_104 = arith.constant dense<0.000000e+00> : vector<5x128xf32>
    %217 = tpu.matmul %209, %216, %cst_104 {dimension_numbers = #tpu.dot_dimension_numbers<[1], [0], [0], [1], [0, 0, 1, 1], [], []>} : vector<5x256xf32>, vector<256x128xf32>, vector<5x128xf32> -> vector<5x128xf32>
    %218 = vector.extract_strided_slice %217 {offsets = [4, 0], sizes = [1, 128], strides = [1, 1]} : vector<5x128xf32> to vector<1x128xf32>
    %cst_105 = arith.constant 1.000000e+00 : f32
    %219 = vector.broadcast %cst_105 : f32 to vector<1x128xf32>
    %220 = arith.divf %219, %218 : vector<1x128xf32>
    %221 = vector.extract_strided_slice %217 {offsets = [0, 0], sizes = [4, 128], strides = [1, 1]} : vector<5x128xf32> to vector<4x128xf32>
    %222 = vector.broadcast %220 : vector<1x128xf32> to vector<4x128xf32>
    %223 = arith.mulf %221, %222 : vector<4x128xf32>
    %c24_106 = arith.constant 24 : index
    %c0_107 = arith.constant 0 : index
    %224 = vector.load %arg9[%c24_106, %c0_107] : memref<32x256xf32, #tpu.memory_space<vmem>>, vector<4x128xf32>
    tpu.vector_store %arg9[%c24_106, %c0_107], %223 {strides = array<i32>} : memref<32x256xf32, #tpu.memory_space<vmem>>, vector<4x128xf32>,
    %225 = vector.extract_strided_slice %208 {offsets = [0, 128], sizes = [4, 128], strides = [1, 1]} : vector<4x256xf32> to vector<4x128xf32>
    %cst_108 = arith.constant dense<0.000000e+00> : vector<256x128xf32>
    %226 = tpu.matmul %207, %225, %cst_108 {dimension_numbers = #tpu.dot_dimension_numbers<[0], [0], [1], [1], [0, 1, 1, 1], [], []>} : vector<4x256xf32>, vector<4x128xf32>, vector<256x128xf32> -> vector<256x128xf32>
    %cst_109 = arith.constant dense<0xFF800000> : vector<128xf32>
    %227 = vector.multi_reduction <maximumf>, %226, %cst_109 [0] : vector<256x128xf32> to vector<128xf32>
    %228 = vector.shape_cast %227 : vector<128xf32> to vector<1x128xf32>
    %229 = vector.broadcast %228 : vector<1x128xf32> to vector<256x128xf32>
    %230 = arith.subf %226, %229 : vector<256x128xf32>
    %231 = math.exp %230 : vector<256x128xf32>
    %cst_110 = arith.constant dense<0.000000e+00> : vector<5x128xf32>
    %232 = tpu.matmul %209, %231, %cst_110 {dimension_numbers = #tpu.dot_dimension_numbers<[1], [0], [0], [1], [0, 0, 1, 1], [], []>} : vector<5x256xf32>, vector<256x128xf32>, vector<5x128xf32> -> vector<5x128xf32>
    %233 = vector.extract_strided_slice %232 {offsets = [4, 0], sizes = [1, 128], strides = [1, 1]} : vector<5x128xf32> to vector<1x128xf32>
    %cst_111 = arith.constant 1.000000e+00 : f32
    %234 = vector.broadcast %cst_111 : f32 to vector<1x128xf32>
    %235 = arith.divf %234, %233 : vector<1x128xf32>
    %236 = vector.extract_strided_slice %232 {offsets = [0, 0], sizes = [4, 128], strides = [1, 1]} : vector<5x128xf32> to vector<4x128xf32>
    %237 = vector.broadcast %235 : vector<1x128xf32> to vector<4x128xf32>
    %238 = arith.mulf %236, %237 : vector<4x128xf32>
    %c24_112 = arith.constant 24 : index
    %c128_113 = arith.constant 128 : index
    %239 = vector.load %arg9[%c24_112, %c128_113] : memref<32x256xf32, #tpu.memory_space<vmem>>, vector<4x128xf32>
    tpu.vector_store %arg9[%c24_112, %c128_113], %238 {strides = array<i32>} : memref<32x256xf32, #tpu.memory_space<vmem>>, vector<4x128xf32>,
    %c28 = arith.constant 28 : index
    %c0_114 = arith.constant 0 : index
    %240 = vector.load %arg8[%c28, %c0_114] : memref<104x256xf32, #tpu.memory_space<vmem>>, vector<4x256xf32>
    %c60 = arith.constant 60 : index
    %c0_115 = arith.constant 0 : index
    %241 = vector.load %arg8[%c60, %c0_115] : memref<104x256xf32, #tpu.memory_space<vmem>>, vector<4x256xf32>
    %c99 = arith.constant 99 : index
    %c0_116 = arith.constant 0 : index
    %242 = vector.load %arg8[%c99, %c0_116] : memref<104x256xf32, #tpu.memory_space<vmem>>, vector<5x256xf32>
    %243 = vector.extract_strided_slice %241 {offsets = [0, 0], sizes = [4, 128], strides = [1, 1]} : vector<4x256xf32> to vector<4x128xf32>
    %cst_117 = arith.constant dense<0.000000e+00> : vector<256x128xf32>
    %244 = tpu.matmul %240, %243, %cst_117 {dimension_numbers = #tpu.dot_dimension_numbers<[0], [0], [1], [1], [0, 1, 1, 1], [], []>} : vector<4x256xf32>, vector<4x128xf32>, vector<256x128xf32> -> vector<256x128xf32>
    %cst_118 = arith.constant dense<0xFF800000> : vector<128xf32>
    %245 = vector.multi_reduction <maximumf>, %244, %cst_118 [0] : vector<256x128xf32> to vector<128xf32>
    %246 = vector.shape_cast %245 : vector<128xf32> to vector<1x128xf32>
    %247 = vector.broadcast %246 : vector<1x128xf32> to vector<256x128xf32>
    %248 = arith.subf %244, %247 : vector<256x128xf32>
    %249 = math.exp %248 : vector<256x128xf32>
    %cst_119 = arith.constant dense<0.000000e+00> : vector<5x128xf32>
    %250 = tpu.matmul %242, %249, %cst_119 {dimension_numbers = #tpu.dot_dimension_numbers<[1], [0], [0], [1], [0, 0, 1, 1], [], []>} : vector<5x256xf32>, vector<256x128xf32>, vector<5x128xf32> -> vector<5x128xf32>
    %251 = vector.extract_strided_slice %250 {offsets = [4, 0], sizes = [1, 128], strides = [1, 1]} : vector<5x128xf32> to vector<1x128xf32>
    %cst_120 = arith.constant 1.000000e+00 : f32
    %252 = vector.broadcast %cst_120 : f32 to vector<1x128xf32>
    %253 = arith.divf %252, %251 : vector<1x128xf32>
    %254 = vector.extract_strided_slice %250 {offsets = [0, 0], sizes = [4, 128], strides = [1, 1]} : vector<5x128xf32> to vector<4x128xf32>
    %255 = vector.broadcast %253 : vector<1x128xf32> to vector<4x128xf32>
    %256 = arith.mulf %254, %255 : vector<4x128xf32>
    %c28_121 = arith.constant 28 : index
    %c0_122 = arith.constant 0 : index
    %257 = vector.load %arg9[%c28_121, %c0_122] : memref<32x256xf32, #tpu.memory_space<vmem>>, vector<4x128xf32>
    tpu.vector_store %arg9[%c28_121, %c0_122], %256 {strides = array<i32>} : memref<32x256xf32, #tpu.memory_space<vmem>>, vector<4x128xf32>,
    %258 = vector.extract_strided_slice %241 {offsets = [0, 128], sizes = [4, 128], strides = [1, 1]} : vector<4x256xf32> to vector<4x128xf32>
    %cst_123 = arith.constant dense<0.000000e+00> : vector<256x128xf32>
    %259 = tpu.matmul %240, %258, %cst_123 {dimension_numbers = #tpu.dot_dimension_numbers<[0], [0], [1], [1], [0, 1, 1, 1], [], []>} : vector<4x256xf32>, vector<4x128xf32>, vector<256x128xf32> -> vector<256x128xf32>
    %cst_124 = arith.constant dense<0xFF800000> : vector<128xf32>
    %260 = vector.multi_reduction <maximumf>, %259, %cst_124 [0] : vector<256x128xf32> to vector<128xf32>
    %261 = vector.shape_cast %260 : vector<128xf32> to vector<1x128xf32>
    %262 = vector.broadcast %261 : vector<1x128xf32> to vector<256x128xf32>
    %263 = arith.subf %259, %262 : vector<256x128xf32>
    %264 = math.exp %263 : vector<256x128xf32>
    %cst_125 = arith.constant dense<0.000000e+00> : vector<5x128xf32>
    %265 = tpu.matmul %242, %264, %cst_125 {dimension_numbers = #tpu.dot_dimension_numbers<[1], [0], [0], [1], [0, 0, 1, 1], [], []>} : vector<5x256xf32>, vector<256x128xf32>, vector<5x128xf32> -> vector<5x128xf32>
    %266 = vector.extract_strided_slice %265 {offsets = [4, 0], sizes = [1, 128], strides = [1, 1]} : vector<5x128xf32> to vector<1x128xf32>
    %cst_126 = arith.constant 1.000000e+00 : f32
    %267 = vector.broadcast %cst_126 : f32 to vector<1x128xf32>
    %268 = arith.divf %267, %266 : vector<1x128xf32>
    %269 = vector.extract_strided_slice %265 {offsets = [0, 0], sizes = [4, 128], strides = [1, 1]} : vector<5x128xf32> to vector<4x128xf32>
    %270 = vector.broadcast %268 : vector<1x128xf32> to vector<4x128xf32>
    %271 = arith.mulf %269, %270 : vector<4x128xf32>
    %c28_127 = arith.constant 28 : index
    %c128_128 = arith.constant 128 : index
    %272 = vector.load %arg9[%c28_127, %c128_128] : memref<32x256xf32, #tpu.memory_space<vmem>>, vector<4x128xf32>
    tpu.vector_store %arg9[%c28_127, %c128_128], %271 {strides = array<i32>} : memref<32x256xf32, #tpu.memory_space<vmem>>, vector<4x128xf32>,
    %c0_129 = arith.constant 0 : index
    %c0_130 = arith.constant 0 : index
    %273 = vector.load %arg5[%c0_129, %c0_130] : memref<32x32xf32, #tpu.memory_space<vmem>>, vector<32x32xf32>
    %c0_131 = arith.constant 0 : index
    %c0_132 = arith.constant 0 : index
    %274 = vector.load %arg9[%c0_131, %c0_132] : memref<32x256xf32, #tpu.memory_space<vmem>>, vector<32x256xf32>
    %cst_133 = arith.constant dense<0.000000e+00> : vector<32x256xf32>
    %275 = tpu.matmul %273, %274, %cst_133 {dimension_numbers = #tpu.dot_dimension_numbers<[1], [0], [0], [1], [0, 0, 1, 1], [], []>} : vector<32x32xf32>, vector<32x256xf32>, vector<32x256xf32> -> vector<32x256xf32>
    %c0_134 = arith.constant 0 : index
    %c0_135 = arith.constant 0 : index
    %276 = vector.load %arg6[%c0_134, %c0_135] : memref<32x1xf32, #tpu.memory_space<vmem>>, vector<32x1xf32>
    %277 = vector.broadcast %276 : vector<32x1xf32> to vector<32x256xf32>
    %278 = arith.addf %275, %277 : vector<32x256xf32>
    %279 = vector.broadcast %0 : f32 to vector<32x256xf32>
    %280 = arith.mulf %279, %278 : vector<32x256xf32>
    %c0_136 = arith.constant 0 : index
    %c0_137 = arith.constant 0 : index
    %c0_138 = arith.constant 0 : index
    %281 = vector.load %arg2[%c0_136, %c0_137, %c0_138] : memref<1x32x256xf32, #tpu.memory_space<vmem>>, vector<1x32x256xf32>
    %282 = vector.shape_cast %281 : vector<1x32x256xf32> to vector<32x256xf32>
    %283 = arith.addf %280, %282 : vector<32x256xf32>
    %c0_139 = arith.constant 0 : index
    %c0_140 = arith.constant 0 : index
    %c0_141 = arith.constant 0 : index
    %284 = vector.load %arg7[%c0_139, %c0_140, %c0_141] : memref<1x32x256xf32, #tpu.memory_space<vmem>>, vector<1x32x256xf32>
    %285 = vector.shape_cast %284 : vector<1x32x256xf32> to vector<32x256xf32>
    %286 = vector.shape_cast %283 : vector<32x256xf32> to vector<1x32x256xf32>
    tpu.vector_store %arg7[%c0_139, %c0_140, %c0_141], %286 {strides = array<i32>} : memref<1x32x256xf32, #tpu.memory_space<vmem>>, vector<1x32x256xf32>,
    return
  }
  func.func @transform_0(%arg0: i32) -> i32 {
    %c0_i32 = arith.constant 0 : i32
    %c0_i32_0 = arith.constant 0 : i32
    return %c0_i32 : i32
  }
  func.func @transform_1(%arg0: i32) -> (i32, i32, i32) {
    %c0_i32 = arith.constant 0 : i32
    %c0_i32_0 = arith.constant 0 : i32
    %c0_i32_1 = arith.constant 0 : i32
    return %arg0, %c0_i32, %c0_i32_0 : i32, i32, i32
  }
  func.func @transform_2(%arg0: i32) -> (i32, i32) {
    %c0_i32 = arith.constant 0 : i32
    %c0_i32_0 = arith.constant 0 : i32
    %c0_i32_1 = arith.constant 0 : i32
    return %c0_i32, %c0_i32_0 : i32, i32
  }
  func.func @transform_3(%arg0: i32) -> (i32, i32) {
    %c0_i32 = arith.constant 0 : i32
    %c0_i32_0 = arith.constant 0 : i32
    %c0_i32_1 = arith.constant 0 : i32
    return %c0_i32, %c0_i32_0 : i32, i32
  }
  func.func @transform_4(%arg0: i32) -> (i32, i32) {
    %c0_i32 = arith.constant 0 : i32
    %c0_i32_0 = arith.constant 0 : i32
    %c0_i32_1 = arith.constant 0 : i32
    return %c0_i32, %c0_i32_0 : i32, i32
  }
  func.func @transform_5(%arg0: i32) -> (i32, i32) {
    %c0_i32 = arith.constant 0 : i32
    %c0_i32_0 = arith.constant 0 : i32
    %c0_i32_1 = arith.constant 0 : i32
    return %c0_i32, %c0_i32_0 : i32, i32
  }
  func.func @transform_6(%arg0: i32) -> (i32, i32, i32) {
    %c0_i32 = arith.constant 0 : i32
    %c0_i32_0 = arith.constant 0 : i32
    %c0_i32_1 = arith.constant 0 : i32
    return %arg0, %c0_i32, %c0_i32_0 : i32, i32, i32
  }
}

</mosaic_0001>

<llo_original>
// kernel: _mhsa_forward_impl.1
$region0: #{_mhsa_forward_impl.1}
  #allocation0 [shape = 'u32[]', space=smem, size = 0x4, offset = 0x4, fixed_abs, tag = 'smem constant byte address 0x4 - core index']
  #allocation1 [shape = 'u32[144,128]{1,0:T(1,128)}', space=vmem, size = 0x12000, scoped, tag = 'internal scratch']
  #allocation2 [shape = 'f32[104,256]{1,0:T(8,128)}', space=vmem, size = 0x1a000, scoped, tag = 'scratch operand']
  #allocation3 [shape = 'f32[32,256]{1,0:T(8,128)}', space=vmem, size = 0x8000, scoped, tag = 'scratch operand']
  #allocation4 [shape = 'f32[1]{0:T(128)S(6)}', space=smem, size = 0x200, scoped, tag = 'scoped memory for _mhsa_forward_impl.1']
  %s0 = inlined_call_operand.<no memory space> [shape: f32[1], index: 0, kind: input, shape index: {}]
  %s1 = inlined_call_operand.vmem [shape: f32[2,32,256], index: 1, kind: input, shape index: {}]
  %s2 = inlined_call_operand.vmem [shape: f32[104,32], index: 2, kind: input, shape index: {}]
  %s3 = inlined_call_operand.vmem [shape: f32[104,1], index: 3, kind: input, shape index: {}]
  %s4 = inlined_call_operand.vmem [shape: f32[32,32], index: 4, kind: input, shape index: {}]
  %s5 = inlined_call_operand.vmem [shape: f32[32,1], index: 5, kind: input, shape index: {}]
  %s6 = inlined_call_operand.vmem [shape: f32[2,32,256], index: 6, kind: output, shape index: {}]
  %s7 = sld [smem:[#allocation0]]
  $region57: #{_mhsa_forward_impl.1} parent=0
    _
  %s9 = ssub.s32 1, %s7
  %s10 = scalar_select 0, %s9, %s7
  %11 = sst [smem:[#allocation4]] %s0
  loop: start=0, step=1, limit=4
  $region2: #{_mhsa_forward_impl.1} parent=0 // loop_pre_header
    _
  $region3: #{_mhsa_forward_impl.1} parent=0 // loop_header
    %s13 = sphi 0, %s17
    %p14 = scmp.ge.s32.totalorder %s13, 4
    %s21 = sphi 0, %s21
    %s23 = sphi 0, %s21
    %s24 = sphi 0, %s23
    %s38 = sphi 0, %s24
    %s44 = sphi 0, %s46
    %s47 = sphi 0, %s44
    %s48 = sphi 0, %s47
    %s64 = sphi 0, %s48
    %s68 = sphi 0, %s68
    %s70 = sphi 0, %s68
    %s71 = sphi 0, %s70
    %s85 = sphi 0, %s71
    %s89 = sphi 0, %s89
    %s91 = sphi 0, %s89
    %s92 = sphi 0, %s91
    %s106 = sphi 0, %s92
    %s110 = sphi 0, %s110
    %s112 = sphi 0, %s110
    %s113 = sphi 0, %s112
    %s127 = sphi 0, %s113
    %s131 = sphi 0, %s131
    %s133 = sphi 0, %s131
    %s134 = sphi 0, %s133
    %s148 = sphi 0, %s134
    %s154 = sphi 0, %s156
    %s157 = sphi 0, %s154
    %s158 = sphi 0, %s157
    %s174 = sphi 0, %s158
  $region4: #{_mhsa_forward_impl.1} parent=0 // loop_header_branch
    %16 = sbr.rel (%p14) target = $region8
  $region5: #{_mhsa_forward_impl.1} parent=0 // loop_body
    %s18 = ssub.s32 %s13, 1
    %s19 = ssub.s32 %s13, 2
    %s20 = sadd.s32 %s13, 1
    %s22 = sadd.s32 %s21, 1
    %p25 = scmp.eq.s32.totalorder %s13, 1
    %p26 = scmp.ne.s32.totalorder %s21, %s23
    %p27 = scmp.eq.s32.totalorder %s13, 0
    %p28 = por %p26, %p27
    %p29 = scmp.ne.s32.totalorder %s21, %s23
    %p30 = scmp.eq.s32.totalorder %s18, 1
    %p31 = por %p29, %p30
    %p32 = scmp.ne.s32.totalorder %s23, %s24
    %p33 = scmp.eq.s32.totalorder %s18, 0
    %p34 = por %p32, %p33
    %p35 = scmp.ne.s32.totalorder %s23, %s24
    %p36 = scmp.eq.s32.totalorder %s19, 1
    %p37 = por %p35, %p36
    %p39 = scmp.ne.s32.totalorder %s24, %s38
    %p40 = scmp.eq.s32.totalorder %s19, 0
    %p41 = por %p39, %p40
    %s42 = ssub.s32 %s13, %s20
    %p43 = scmp.eq.s32.totalorder %s42, 0
    %s45 = sadd.s32 %s44, 1
    %s46 = scalar_select %p43, %s44, %s45
    %p49 = pneg %p43
    %p50 = scmp.eq.s32.totalorder %s13, 1
    %p51 = por %p49, %p50
    %p52 = scmp.ne.s32.totalorder %s44, %s47
    %p53 = scmp.eq.s32.totalorder %s13, 0
    %p54 = por %p52, %p53
    %p55 = scmp.ne.s32.totalorder %s44, %s47
    %p56 = scmp.eq.s32.totalorder %s18, 1
    %p57 = por %p55, %p56
    %p58 = scmp.ne.s32.totalorder %s47, %s48
    %p59 = scmp.eq.s32.totalorder %s18, 0
    %p60 = por %p58, %p59
    %p61 = scmp.ne.s32.totalorder %s47, %s48
    %p62 = scmp.eq.s32.totalorder %s19, 1
    %p63 = por %p61, %p62
    %p65 = scmp.ne.s32.totalorder %s48, %s64
    %p66 = scmp.eq.s32.totalorder %s19, 0
    %p67 = por %p65, %p66
    %s69 = sadd.s32 %s68, 1
    %p72 = scmp.eq.s32.totalorder %s13, 1
    %p73 = scmp.ne.s32.totalorder %s68, %s70
    %p74 = scmp.eq.s32.totalorder %s13, 0
    %p75 = por %p73, %p74
    %p76 = scmp.ne.s32.totalorder %s68, %s70
    %p77 = scmp.eq.s32.totalorder %s18, 1
    %p78 = por %p76, %p77
    %p79 = scmp.ne.s32.totalorder %s70, %s71
    %p80 = scmp.eq.s32.totalorder %s18, 0
    %p81 = por %p79, %p80
    %p82 = scmp.ne.s32.totalorder %s70, %s71
    %p83 = scmp.eq.s32.totalorder %s19, 1
    %p84 = por %p82, %p83
    %p86 = scmp.ne.s32.totalorder %s71, %s85
    %p87 = scmp.eq.s32.totalorder %s19, 0
    %p88 = por %p86, %p87
    %s90 = sadd.s32 %s89, 1
    %p93 = scmp.eq.s32.totalorder %s13, 1
    %p94 = scmp.ne.s32.totalorder %s89, %s91
    %p95 = scmp.eq.s32.totalorder %s13, 0
    %p96 = por %p94, %p95
    %p97 = scmp.ne.s32.totalorder %s89, %s91
    %p98 = scmp.eq.s32.totalorder %s18, 1
    %p99 = por %p97, %p98
    %p100 = scmp.ne.s32.totalorder %s91, %s92
    %p101 = scmp.eq.s32.totalorder %s18, 0
    %p102 = por %p100, %p101
    %p103 = scmp.ne.s32.totalorder %s91, %s92
    %p104 = scmp.eq.s32.totalorder %s19, 1
    %p105 = por %p103, %p104
    %p107 = scmp.ne.s32.totalorder %s92, %s106
    %p108 = scmp.eq.s32.totalorder %s19, 0
    %p109 = por %p107, %p108
    %s111 = sadd.s32 %s110, 1
    %p114 = scmp.eq.s32.totalorder %s13, 1
    %p115 = scmp.ne.s32.totalorder %s110, %s112
    %p116 = scmp.eq.s32.totalorder %s13, 0
    %p117 = por %p115, %p116
    %p118 = scmp.ne.s32.totalorder %s110, %s112
    %p119 = scmp.eq.s32.totalorder %s18, 1
    %p120 = por %p118, %p119
    %p121 = scmp.ne.s32.totalorder %s112, %s113
    %p122 = scmp.eq.s32.totalorder %s18, 0
    %p123 = por %p121, %p122
    %p124 = scmp.ne.s32.totalorder %s112, %s113
    %p125 = scmp.eq.s32.totalorder %s19, 1
    %p126 = por %p124, %p125
    %p128 = scmp.ne.s32.totalorder %s113, %s127
    %p129 = scmp.eq.s32.totalorder %s19, 0
    %p130 = por %p128, %p129
    %s132 = sadd.s32 %s131, 1
    %p135 = scmp.eq.s32.totalorder %s13, 1
    %p136 = scmp.ne.s32.totalorder %s131, %s133
    %p137 = scmp.eq.s32.totalorder %s13, 0
    %p138 = por %p136, %p137
    %p139 = scmp.ne.s32.totalorder %s131, %s133
    %p140 = scmp.eq.s32.totalorder %s18, 1
    %p141 = por %p139, %p140
    %p142 = scmp.ne.s32.totalorder %s133, %s134
    %p143 = scmp.eq.s32.totalorder %s18, 0
    %p144 = por %p142, %p143
    %p145 = scmp.ne.s32.totalorder %s133, %s134
    %p146 = scmp.eq.s32.totalorder %s19, 1
    %p147 = por %p145, %p146
    %p149 = scmp.ne.s32.totalorder %s134, %s148
    %p150 = scmp.eq.s32.totalorder %s19, 0
    %p151 = por %p149, %p150
    %s152 = ssub.s32 %s13, %s20
    %p153 = scmp.eq.s32.totalorder %s152, 0
    %s155 = sadd.s32 %s154, 1
    %s156 = scalar_select %p153, %s154, %s155
    %p159 = pneg %p153
    %p160 = scmp.eq.s32.totalorder %s13, 1
    %p161 = por %p159, %p160
    %p162 = scmp.ne.s32.totalorder %s154, %s157
    %p163 = scmp.eq.s32.totalorder %s13, 0
    %p164 = por %p162, %p163
    %p165 = scmp.ne.s32.totalorder %s154, %s157
    %p166 = scmp.eq.s32.totalorder %s18, 1
    %p167 = por %p165, %p166
    %p168 = scmp.ne.s32.totalorder %s157, %s158
    %p169 = scmp.eq.s32.totalorder %s18, 0
    %p170 = por %p168, %p169
    %p171 = scmp.ne.s32.totalorder %s157, %s158
    %p172 = scmp.eq.s32.totalorder %s19, 1
    %p173 = por %p171, %p172
    %p175 = scmp.ne.s32.totalorder %s158, %s174
    %p176 = scmp.eq.s32.totalorder %s19, 0
    %p177 = por %p175, %p176
    %p178 = scmp.le.s32.totalorder 1, %s13
    %p179 = scmp.lt.s32.totalorder %s13, 3
    %p180 = pnand %p178, %p179
    %p181 = pneg %p180
    // Predicated region
    $region9: #{_mhsa_forward_impl.1} parent=5 // pred_check
      _
    $region10: #{_mhsa_forward_impl.1} parent=5 // pred_check_branch
      %183 = sbr.rel (%p180) target = $region12
    $region11: #{_mhsa_forward_impl.1} parent=5 // pred_region
      %s184 = ssub.s32 %s13, 1
      // Predicated region
      $region13: #{_mhsa_forward_impl.1} parent=11 // pred_check
        %p185 = pneg %p34
      $region14: #{_mhsa_forward_impl.1} parent=11 // pred_check_branch
        %187 = sbr.rel (%p185) target = $region16
      $region15: #{_mhsa_forward_impl.1} parent=11 // pred_region
        _
      $region16: #{_mhsa_forward_impl.1} parent=11 // pred_fallthru
        _
      // Predicated region
      $region17: #{_mhsa_forward_impl.1} parent=11 // pred_check
        %p188 = pneg %p81
      $region18: #{_mhsa_forward_impl.1} parent=11 // pred_check_branch
        %190 = sbr.rel (%p188) target = $region20
      $region19: #{_mhsa_forward_impl.1} parent=11 // pred_region
        _
      $region20: #{_mhsa_forward_impl.1} parent=11 // pred_fallthru
        _
      // Predicated region
      $region21: #{_mhsa_forward_impl.1} parent=11 // pred_check
        %p191 = pneg %p102
      $region22: #{_mhsa_forward_impl.1} parent=11 // pred_check_branch
        %193 = sbr.rel (%p191) target = $region24
      $region23: #{_mhsa_forward_impl.1} parent=11 // pred_region
        _
      $region24: #{_mhsa_forward_impl.1} parent=11 // pred_fallthru
        _
      // Predicated region
      $region25: #{_mhsa_forward_impl.1} parent=11 // pred_check
        %p194 = pneg %p123
      $region26: #{_mhsa_forward_impl.1} parent=11 // pred_check_branch
        %196 = sbr.rel (%p194) target = $region28
      $region27: #{_mhsa_forward_impl.1} parent=11 // pred_region
        _
      $region28: #{_mhsa_forward_impl.1} parent=11 // pred_fallthru
        _
      // Predicated region
      $region29: #{_mhsa_forward_impl.1} parent=11 // pred_check
        %p197 = pneg %p144
      $region30: #{_mhsa_forward_impl.1} parent=11 // pred_check_branch
        %199 = sbr.rel (%p197) target = $region32
      $region31: #{_mhsa_forward_impl.1} parent=11 // pred_region
        _
      $region32: #{_mhsa_forward_impl.1} parent=11 // pred_fallthru
        _
    $region12: #{_mhsa_forward_impl.1} parent=5 // pred_fallthru
      _
    %p200 = scmp.lt.s32.totalorder %s13, 2
    // Predicated region
    $region33: #{_mhsa_forward_impl.1} parent=5 // pred_check
      %p201 = pneg %p200
    $region34: #{_mhsa_forward_impl.1} parent=5 // pred_check_branch
      %203 = sbr.rel (%p201) target = $region36
    $region35: #{_mhsa_forward_impl.1} parent=5 // pred_region
      // Predicated region
      $region37: #{_mhsa_forward_impl.1} parent=35 // pred_check
        %p204 = pneg %p54
      $region38: #{_mhsa_forward_impl.1} parent=35 // pred_check_branch
        %206 = sbr.rel (%p204) target = $region40
      $region39: #{_mhsa_forward_impl.1} parent=35 // pred_region
        %p207 = scmp.lt.s32.totalorder %s13, 1
        %s208 = scalar_select %p207, %s13, 1
        %s209 = smul.addr %s208, 8
        %s210 = smul.addr %s209, 8
        %s211 = scalar_lea.vmem %s1, %s210
      $region40: #{_mhsa_forward_impl.1} parent=35 // pred_fallthru
        _
    $region36: #{_mhsa_forward_impl.1} parent=5 // pred_fallthru
      _
    %p212 = scmp.le.s32.totalorder 1, %s13
    %p213 = scmp.lt.s32.totalorder %s13, 3
    %p214 = pnand %p212, %p213
    %p215 = pneg %p214
    // Predicated region
    $region41: #{_mhsa_forward_impl.1} parent=5 // pred_check
      _
    $region42: #{_mhsa_forward_impl.1} parent=5 // pred_check_branch
      %217 = sbr.rel (%p214) target = $region44
    $region43: #{_mhsa_forward_impl.1} parent=5 // pred_region
      %s218 = ssub.s32 %s13, 1
      %p219 = pneg %p34
      %p220 = pneg %p31
      %p221 = scmp.lt.s32.totalorder %s18, 1
      %s222 = scalar_select %p221, %s18, 1
      %s223 = smul.addr %s222, 8
      %s224 = smul.addr %s223, 8
      %s225 = scalar_lea.vmem %s1, %s224
      %p226 = pneg %p60
      %p227 = pneg %p57
      %p228 = pneg %p81
      %p229 = pneg %p78
      %p230 = pneg %p102
      %p231 = pneg %p99
      %p232 = pneg %p123
      %p233 = pneg %p120
      %p234 = pneg %p144
      %p235 = pneg %p141
      %p236 = pneg %p170
      %p237 = pneg %p167
      %p238 = scmp.lt.s32.totalorder %s18, 1
      %s239 = scalar_select %p238, %s18, 1
      %s240 = smul.addr %s239, 8
      %s241 = smul.addr %s240, 8
      %s242 = scalar_lea.vmem %s6, %s241
      %p243 = scmp.lt.s32.totalorder %s18, 1
      %s244 = scalar_select %p243, %s18, 1
      %s245 = smul.addr %s244, 8
      %s246 = smul.addr %s245, 8
      %s247 = scalar_lea.vmem %s1, %s246
      %p248 = scmp.lt.s32.totalorder %s18, 1
      %s249 = scalar_select %p248, %s18, 1
      %s250 = smul.addr %s249, 8
      %s251 = smul.addr %s250, 8
      %s252 = scalar_lea.vmem %s6, %s251
      %s253 = sld [smem:[#allocation4]]
      %v254 = vld [vmem:[%s2] sm:$0xff]
      %v255 = vld [vmem:[%s2 + $0x8] sm:$0xff]
      %v256 = vld [vmem:[%s2 + $0x10] sm:$0xff]
      %v257 = vld [vmem:[%s2 + $0x18] sm:$0xff]
      %v258 = vld [vmem:[%s2 + $0x20] sm:$0xff]
      %v259 = vld [vmem:[%s2 + $0x28] sm:$0xff]
      %v260 = vld [vmem:[%s2 + $0x30] sm:$0xff]
      %v261 = vld [vmem:[%s2 + $0x38] sm:$0xff]
      %v262 = vld [vmem:[%s2 + $0x40] sm:$0xff]
      %v263 = vld [vmem:[%s2 + $0x48] sm:$0xff]
      %v264 = vld [vmem:[%s2 + $0x50] sm:$0xff]
      %v265 = vld [vmem:[%s2 + $0x58] sm:$0xff]
      %v266 = vld [vmem:[%s2 + $0x60] sm:$0xff]
      %v267 = vld [vmem:[%s247] sm:$0xff]
      %v268 = vld [vmem:[%s247 + $0x8] sm:$0xff]
      %v269 = vld [vmem:[%s247 + $0x10] sm:$0xff]
      %v270 = vld [vmem:[%s247 + $0x18] sm:$0xff]
      %v271 = vld [vmem:[%s247 + $0x20] sm:$0xff]
      %v272 = vld [vmem:[%s247 + $0x28] sm:$0xff]
      %v273 = vld [vmem:[%s247 + $0x30] sm:$0xff]
      %v274 = vld [vmem:[%s247 + $0x38] sm:$0xff]
      %v275 = vld [vmem:[%s3] sm:$0xff]
      %v276 = vld [vmem:[%s3 + $0x8] sm:$0xff]
      %v277 = vld [vmem:[%s3 + $0x10] sm:$0xff]
      %v278 = vld [vmem:[%s3 + $0x18] sm:$0xff]
      %v279 = vld [vmem:[%s3 + $0x20] sm:$0xff]
      %v280 = vld [vmem:[%s3 + $0x28] sm:$0xff]
      %v281 = vld [vmem:[%s3 + $0x30] sm:$0xff]
      %v282 = vld [vmem:[%s3 + $0x38] sm:$0xff]
      %v283 = vld [vmem:[%s3 + $0x40] sm:$0xff]
      %v284 = vld [vmem:[%s3 + $0x48] sm:$0xff]
      %v285 = vld [vmem:[%s3 + $0x50] sm:$0xff]
      %v286 = vld [vmem:[%s3 + $0x58] sm:$0xff]
      %v287 = vld [vmem:[%s3 + $0x60] sm:$0xff]
      %289 = vset.pattern.permute.xlu0 0
      %290 = vperm.xlu0 %289, %v275
      %v291 = vpop.permute.xlu0 %290
      %294 = vset.pattern.permute.xlu0 0
      %295 = vperm.xlu0 %294, %v276
      %v296 = vpop.permute.xlu0 %295
      %299 = vset.pattern.permute.xlu0 0
      %300 = vperm.xlu0 %299, %v277
      %v301 = vpop.permute.xlu0 %300
      %304 = vset.pattern.permute.xlu0 0
      %305 = vperm.xlu0 %304, %v278
      %v306 = vpop.permute.xlu0 %305
      %309 = vset.pattern.permute.xlu0 0
      %310 = vperm.xlu0 %309, %v279
      %v311 = vpop.permute.xlu0 %310
      %314 = vset.pattern.permute.xlu0 0
      %315 = vperm.xlu0 %314, %v280
      %v316 = vpop.permute.xlu0 %315
      %319 = vset.pattern.permute.xlu0 0
      %320 = vperm.xlu0 %319, %v281
      %v321 = vpop.permute.xlu0 %320
      %324 = vset.pattern.permute.xlu0 0
      %325 = vperm.xlu0 %324, %v282
      %v326 = vpop.permute.xlu0 %325
      %329 = vset.pattern.permute.xlu0 0
      %330 = vperm.xlu0 %329, %v283
      %v331 = vpop.permute.xlu0 %330
      %334 = vset.pattern.permute.xlu0 0
      %335 = vperm.xlu0 %334, %v284
      %v336 = vpop.permute.xlu0 %335
      %339 = vset.pattern.permute.xlu0 0
      %340 = vperm.xlu0 %339, %v285
      %v341 = vpop.permute.xlu0 %340
      %344 = vset.pattern.permute.xlu0 0
      %345 = vperm.xlu0 %344, %v286
      %v346 = vpop.permute.xlu0 %345
      %349 = vset.pattern.permute.xlu0 0
      %350 = vperm.xlu0 %349, %v287
      %v351 = vpop.permute.xlu0 %350
      %vm353 = vcmask 261120
      %v355 = vsel %vm353, %v254, 0
      %v358 = vsel %vm353, %v255, 0
      %v361 = vsel %vm353, %v256, 0
      %v364 = vsel %vm353, %v257, 0
      %v367 = vsel %vm353, %v258, 0
      %v370 = vsel %vm353, %v259, 0
      %v373 = vsel %vm353, %v260, 0
      %v376 = vsel %vm353, %v261, 0
      %v379 = vsel %vm353, %v262, 0
      %v382 = vsel %vm353, %v263, 0
      %v385 = vsel %vm353, %v264, 0
      %v388 = vsel %vm353, %v265, 0
      %v391 = vsel %vm353, %v266, 0
      %393 = vmatprep.subr.mxu0 %v268
      %394 = vmatpush1.msra.mxu0 %v267
      %395 = vmatprep.subr.mxu0 %v270
      %396 = vmatpush1.msra.mxu0 %v269
      %397 = vmatprep.subr.mxu0 %v272
      %398 = vmatpush1.msra.mxu0 %v271
      %399 = vmatprep.subr.mxu0 %v274
      %400 = vmatpush1.msra.mxu0 %v273
      %401 = vmatprep.subr.mxu0 0.0
      %402 = vmatpush1.msra.mxu0 0.0
      %403 = vmatprep.subr.mxu0 0.0
      %404 = vmatpush1.msra.mxu0 0.0
      %405 = vmatprep.subr.mxu0 0.0
      %406 = vmatpush1.msra.mxu0 0.0
      %407 = vmatprep.subr.mxu0 0.0
      %408 = vmatpush1.msra.mxu0 0.0
      %409 = vmatprep.subr.mxu0 0.0
      %410 = vmatpush1.msra.mxu0 0.0
      %411 = vmatprep.subr.mxu0 0.0
      %412 = vmatpush1.msra.mxu0 0.0
      %413 = vmatprep.subr.mxu0 0.0
      %414 = vmatpush1.msra.mxu0 0.0
      %415 = vmatprep.subr.mxu0 0.0
      %416 = vmatpush1.msra.mxu0 0.0
      %417 = vmatprep.subr.mxu0 0.0
      %418 = vmatpush1.msra.mxu0 0.0
      %419 = vmatprep.subr.mxu0 0.0
      %420 = vmatpush1.msra.mxu0 0.0
      %421 = vmatprep.subr.mxu0 0.0
      %422 = vmatpush1.msra.mxu0 0.0
      %423 = vmatprep.subr.mxu0 0.0
      %424 = vmatpush1.msra.mxu0 0.0
      %425 = vmatprep.subr.mxu0 0.0
      %426 = vmatpush1.msra.mxu0 0.0
      %427 = vmatprep.subr.mxu0 0.0
      %428 = vmatpush1.msra.mxu0 0.0
      %429 = vmatprep.subr.mxu0 0.0
      %430 = vmatpush1.msra.mxu0 0.0
      %431 = vmatprep.subr.mxu0 0.0
      %432 = vmatpush1.msra.mxu0 0.0
      %433 = vmatprep.subr.mxu0 0.0
      %434 = vmatpush1.msra.mxu0 0.0
      %435 = vmatprep.subr.mxu0 0.0
      %436 = vmatpush1.msra.mxu0 0.0
      %437 = vmatprep.subr.mxu0 0.0
      %438 = vmatpush1.msra.mxu0 0.0
      %439 = vmatprep.subr.mxu0 0.0
      %440 = vmatpush1.msra.mxu0 0.0
      %441 = vmatprep.subr.mxu0 0.0
      %442 = vmatpush1.msra.mxu0 0.0
      %443 = vmatprep.subr.mxu0 0.0
      %444 = vmatpush1.msra.mxu0 0.0
      %445 = vmatprep.subr.mxu0 0.0
      %446 = vmatpush1.msra.mxu0 0.0
      %447 = vmatprep.subr.mxu0 0.0
      %448 = vmatpush1.msra.mxu0 0.0
      %449 = vmatprep.subr.mxu0 0.0
      %450 = vmatpush1.msra.mxu0 0.0
      %451 = vmatprep.subr.mxu0 0.0
      %452 = vmatpush1.msra.mxu0 0.0
      %453 = vmatprep.subr.mxu0 0.0
      %454 = vmatpush1.msra.mxu0 0.0
      %455 = vmatprep.subr.mxu0 0.0
      %456 = vmatpush1.msra.mxu0 0.0
      %457 = vmatprep.mubr.f32.mxu0 0.0
      %458 = vmatmul.mubr.f32.gmra.mrb[0].mxu0 %v355
      %v459 = vpop.f32.mrb[0].mxu0
      %v460 = vadd.f32 %v291, %v459
      %v461 = vpop.f32.mrb[0].mxu0
      %v462 = vadd.f32 %v291, %v461
      %463 = vmatprep.mubr.f32.mxu0 0.0
      %464 = vmatmul.mubr.f32.gmra.mrb[0].mxu0 %v358
      %v465 = vpop.f32.mrb[0].mxu0
      %v466 = vadd.f32 %v296, %v465
      %v467 = vpop.f32.mrb[0].mxu0
      %v468 = vadd.f32 %v296, %v467
      %469 = vmatprep.mubr.f32.mxu0 0.0
      %470 = vmatmul.mubr.f32.gmra.mrb[0].mxu0 %v361
      %v471 = vpop.f32.mrb[0].mxu0
      %v472 = vadd.f32 %v301, %v471
      %v473 = vpop.f32.mrb[0].mxu0
      %v474 = vadd.f32 %v301, %v473
      %475 = vmatprep.mubr.f32.mxu0 0.0
      %476 = vmatmul.mubr.f32.gmra.mrb[0].mxu0 %v364
      %v477 = vpop.f32.mrb[0].mxu0
      %v478 = vadd.f32 %v306, %v477
      %v479 = vpop.f32.mrb[0].mxu0
      %v480 = vadd.f32 %v306, %v479
      %481 = vmatprep.mubr.f32.mxu0 0.0
      %482 = vmatmul.mubr.f32.gmra.mrb[0].mxu0 %v367
      %v483 = vpop.f32.mrb[0].mxu0
      %v484 = vadd.f32 %v311, %v483
      %v485 = vpop.f32.mrb[0].mxu0
      %v486 = vadd.f32 %v311, %v485
      %487 = vmatprep.mubr.f32.mxu0 0.0
      %488 = vmatmul.mubr.f32.gmra.mrb[0].mxu0 %v370
      %v489 = vpop.f32.mrb[0].mxu0
      %v490 = vadd.f32 %v316, %v489
      %v491 = vpop.f32.mrb[0].mxu0
      %v492 = vadd.f32 %v316, %v491
      %493 = vmatprep.mubr.f32.mxu0 0.0
      %494 = vmatmul.mubr.f32.gmra.mrb[0].mxu0 %v373
      %v495 = vpop.f32.mrb[0].mxu0
      %v496 = vadd.f32 %v321, %v495
      %v497 = vpop.f32.mrb[0].mxu0
      %v498 = vadd.f32 %v321, %v497
      %499 = vmatprep.mubr.f32.mxu0 0.0
      %500 = vmatmul.mubr.f32.gmra.mrb[0].mxu0 %v376
      %v501 = vpop.f32.mrb[0].mxu0
      %v502 = vadd.f32 %v326, %v501
      %v503 = vpop.f32.mrb[0].mxu0
      %v504 = vadd.f32 %v326, %v503
      %505 = vmatprep.mubr.f32.mxu0 0.0
      %506 = vmatmul.mubr.f32.gmra.mrb[0].mxu0 %v379
      %v507 = vpop.f32.mrb[0].mxu0
      %v508 = vadd.f32 %v331, %v507
      %v509 = vpop.f32.mrb[0].mxu0
      %v510 = vadd.f32 %v331, %v509
      %511 = vmatprep.mubr.f32.mxu0 0.0
      %512 = vmatmul.mubr.f32.gmra.mrb[0].mxu0 %v382
      %v513 = vpop.f32.mrb[0].mxu0
      %v514 = vadd.f32 %v336, %v513
      %v515 = vpop.f32.mrb[0].mxu0
      %v516 = vadd.f32 %v336, %v515
      %517 = vmatprep.mubr.f32.mxu0 0.0
      %518 = vmatmul.mubr.f32.gmra.mrb[0].mxu0 %v385
      %v519 = vpop.f32.mrb[0].mxu0
      %v520 = vadd.f32 %v341, %v519
      %v521 = vpop.f32.mrb[0].mxu0
      %v522 = vadd.f32 %v341, %v521
      %523 = vmatprep.mubr.f32.mxu0 0.0
      %524 = vmatmul.mubr.f32.gmra.mrb[0].mxu0 %v388
      %v525 = vpop.f32.mrb[0].mxu0
      %v526 = vadd.f32 %v346, %v525
      %v527 = vpop.f32.mrb[0].mxu0
      %v528 = vadd.f32 %v346, %v527
      %529 = vmatprep.mubr.f32.mxu0 0.0
      %530 = vmatmul.mubr.f32.gmra.mrb[0].mxu0 %v391
      %v531 = vpop.f32.mrb[0].mxu0
      %v532 = vadd.f32 %v351, %v531
      %v533 = vpop.f32.mrb[0].mxu0
      %v534 = vadd.f32 %v351, %v533
      %535 = vdwg.mxu0
      %536 = vst [vmem:[#allocation2] sm:$0xff] %v460
      %537 = vst [vmem:[#allocation2 + $0x8] sm:$0xff] %v462
      %538 = vst [vmem:[#allocation2 + $0x10] sm:$0xff] %v466
      %539 = vst [vmem:[#allocation2 + $0x18] sm:$0xff] %v468
      %540 = vst [vmem:[#allocation2 + $0x20] sm:$0xff] %v472
      %541 = vst [vmem:[#allocation2 + $0x28] sm:$0xff] %v474
      %542 = vst [vmem:[#allocation2 + $0x30] sm:$0xff] %v478
      %543 = vst [vmem:[#allocation2 + $0x38] sm:$0xff] %v480
      %544 = vst [vmem:[#allocation2 + $0x40] sm:$0xff] %v484
      %545 = vst [vmem:[#allocation2 + $0x48] sm:$0xff] %v486
      %546 = vst [vmem:[#allocation2 + $0x50] sm:$0xff] %v490
      %547 = vst [vmem:[#allocation2 + $0x58] sm:$0xff] %v492
      %548 = vst [vmem:[#allocation2 + $0x60] sm:$0xff] %v496
      %549 = vst [vmem:[#allocation2 + $0x68] sm:$0xff] %v498
      %550 = vst [vmem:[#allocation2 + $0x70] sm:$0xff] %v502
      %551 = vst [vmem:[#allocation2 + $0x78] sm:$0xff] %v504
      %552 = vst [vmem:[#allocation2 + $0x80] sm:$0xff] %v508
      %553 = vst [vmem:[#allocation2 + $0x88] sm:$0xff] %v510
      %554 = vst [vmem:[#allocation2 + $0x90] sm:$0xff] %v514
      %555 = vst [vmem:[#allocation2 + $0x98] sm:$0xff] %v516
      %556 = vst [vmem:[#allocation2 + $0xa0] sm:$0xff] %v520
      %557 = vst [vmem:[#allocation2 + $0xa8] sm:$0xff] %v522
      %558 = vst [vmem:[#allocation2 + $0xb0] sm:$0xff] %v526
      %559 = vst [vmem:[#allocation2 + $0xb8] sm:$0xff] %v528
      %560 = vst [vmem:[#allocation2 + $0xc0] sm:$0xff] %v532
      %561 = vst [vmem:[#allocation2 + $0xc8] sm:$0xff] %v534
      %v562 = vld [vmem:[#allocation2] sm:$0xf]
      %v563 = vld [vmem:[#allocation2 + $0x8] sm:$0xf]
      %v564 = vld [vmem:[#allocation2 + $0x40] sm:$0xf]
      %v565 = vld [vmem:[#allocation2 + $0x48] sm:$0xf]
      %v566 = vld [vmem:[#allocation2 + $0x80] sm:$0x1f]
      %v567 = vld [vmem:[#allocation2 + $0x88] sm:$0x1f]
      %568 = vxpose.xlu0.b32.start [1/16] %v562, 128
      %569 = vxpose.xlu0.b32.cont [2/16] 0.0, 128
      %570 = vxpose.xlu0.b32.cont [3/16] 0.0, 128
      %571 = vxpose.xlu0.b32.cont [4/16] 0.0, 128
      %572 = vxpose.xlu0.b32.cont [5/16] 0.0, 128
      %573 = vxpose.xlu0.b32.cont [6/16] 0.0, 128
      %574 = vxpose.xlu0.b32.cont [7/16] 0.0, 128
      %575 = vxpose.xlu0.b32.cont [8/16] 0.0, 128
      %576 = vxpose.xlu0.b32.cont [9/16] 0.0, 128
      %577 = vxpose.xlu0.b32.cont [10/16] 0.0, 128
      %578 = vxpose.xlu0.b32.cont [11/16] 0.0, 128
      %579 = vxpose.xlu0.b32.cont [12/16] 0.0, 128
      %580 = vxpose.xlu0.b32.cont [13/16] 0.0, 128
      %581 = vxpose.xlu0.b32.cont [14/16] 0.0, 128
      %582 = vxpose.xlu0.b32.cont [15/16] 0.0, 128
      %583 = vxpose.xlu0.b32.end [16/16] 0.0, 128
      %v584 = vpop.trf.xlu0
      %v585 = vpop.trf.xlu0
      %v586 = vpop.trf.xlu0
      %v587 = vpop.trf.xlu0
      %v588 = vpop.trf.xlu0
      %v589 = vpop.trf.xlu0
      %v590 = vpop.trf.xlu0
      %v591 = vpop.trf.xlu0
      %v592 = vpop.trf.xlu0
      %v593 = vpop.trf.xlu0
      %v594 = vpop.trf.xlu0
      %v595 = vpop.trf.xlu0
      %v596 = vpop.trf.xlu0
      %v597 = vpop.trf.xlu0
      %v598 = vpop.trf.xlu0
      %v599 = vpop.trf.xlu0
      %600 = vxpose.xlu0.b32.start [1/16] %v563, 128
      %601 = vxpose.xlu0.b32.cont [2/16] 0.0, 128
      %602 = vxpose.xlu0.b32.cont [3/16] 0.0, 128
      %603 = vxpose.xlu0.b32.cont [4/16] 0.0, 128
      %604 = vxpose.xlu0.b32.cont [5/16] 0.0, 128
      %605 = vxpose.xlu0.b32.cont [6/16] 0.0, 128
      %606 = vxpose.xlu0.b32.cont [7/16] 0.0, 128
      %607 = vxpose.xlu0.b32.cont [8/16] 0.0, 128
      %608 = vxpose.xlu0.b32.cont [9/16] 0.0, 128
      %609 = vxpose.xlu0.b32.cont [10/16] 0.0, 128
      %610 = vxpose.xlu0.b32.cont [11/16] 0.0, 128
      %611 = vxpose.xlu0.b32.cont [12/16] 0.0, 128
      %612 = vxpose.xlu0.b32.cont [13/16] 0.0, 128
      %613 = vxpose.xlu0.b32.cont [14/16] 0.0, 128
      %614 = vxpose.xlu0.b32.cont [15/16] 0.0, 128
      %615 = vxpose.xlu0.b32.end [16/16] 0.0, 128
      %v616 = vpop.trf.xlu0
      %v617 = vpop.trf.xlu0
      %v618 = vpop.trf.xlu0
      %v619 = vpop.trf.xlu0
      %v620 = vpop.trf.xlu0
      %v621 = vpop.trf.xlu0
      %v622 = vpop.trf.xlu0
      %v623 = vpop.trf.xlu0
      %v624 = vpop.trf.xlu0
      %v625 = vpop.trf.xlu0
      %v626 = vpop.trf.xlu0
      %v627 = vpop.trf.xlu0
      %v628 = vpop.trf.xlu0
      %v629 = vpop.trf.xlu0
      %v630 = vpop.trf.xlu0
      %v631 = vpop.trf.xlu0
      %vm632 = vcmask 31744
      %v634 = vsel %vm632, %v584, 0
      %v637 = vsel %vm632, %v585, 0
      %v640 = vsel %vm632, %v586, 0
      %v643 = vsel %vm632, %v587, 0
      %v646 = vsel %vm632, %v588, 0
      %v649 = vsel %vm632, %v589, 0
      %v652 = vsel %vm632, %v590, 0
      %v655 = vsel %vm632, %v591, 0
      %v658 = vsel %vm632, %v592, 0
      %v661 = vsel %vm632, %v593, 0
      %v664 = vsel %vm632, %v594, 0
      %v667 = vsel %vm632, %v595, 0
      %v670 = vsel %vm632, %v596, 0
      %v673 = vsel %vm632, %v597, 0
      %v676 = vsel %vm632, %v598, 0
      %v679 = vsel %vm632, %v599, 0
      %v682 = vsel %vm632, %v616, 0
      %v685 = vsel %vm632, %v617, 0
      %v688 = vsel %vm632, %v618, 0
      %v691 = vsel %vm632, %v619, 0
      %v694 = vsel %vm632, %v620, 0
      %v697 = vsel %vm632, %v621, 0
      %v700 = vsel %vm632, %v622, 0
      %v703 = vsel %vm632, %v623, 0
      %v706 = vsel %vm632, %v624, 0
      %v709 = vsel %vm632, %v625, 0
      %v712 = vsel %vm632, %v626, 0
      %v715 = vsel %vm632, %v627, 0
      %v718 = vsel %vm632, %v628, 0
      %v721 = vsel %vm632, %v629, 0
      %v724 = vsel %vm632, %v630, 0
      %v727 = vsel %vm632, %v631, 0
      %vm729 = vcmask 1043456
      %v731 = vsel %vm729, %v564, 0
      %733 = vmatprep.subr.mxu0 0.0
      %734 = vmatpush1.msra.mxu0 %v731
      %735 = vmatprep.subr.mxu0 0.0
      %736 = vmatpush1.msra.mxu0 0.0
      %737 = vmatprep.subr.mxu0 0.0
      %738 = vmatpush1.msra.mxu0 0.0
      %739 = vmatprep.subr.mxu0 0.0
      %740 = vmatpush1.msra.mxu0 0.0
      %741 = vmatprep.subr.mxu0 0.0
      %742 = vmatpush1.msra.mxu0 0.0
      %743 = vmatprep.subr.mxu0 0.0
      %744 = vmatpush1.msra.mxu0 0.0
      %745 = vmatprep.subr.mxu0 0.0
      %746 = vmatpush1.msra.mxu0 0.0
      %747 = vmatprep.subr.mxu0 0.0
      %748 = vmatpush1.msra.mxu0 0.0
      %749 = vmatprep.subr.mxu0 0.0
      %750 = vmatpush1.msra.mxu0 0.0
      %751 = vmatprep.subr.mxu0 0.0
      %752 = vmatpush1.msra.mxu0 0.0
      %753 = vmatprep.subr.mxu0 0.0
      %754 = vmatpush1.msra.mxu0 0.0
      %755 = vmatprep.subr.mxu0 0.0
      %756 = vmatpush1.msra.mxu0 0.0
      %757 = vmatprep.subr.mxu0 0.0
      %758 = vmatpush1.msra.mxu0 0.0
      %759 = vmatprep.subr.mxu0 0.0
      %760 = vmatpush1.msra.mxu0 0.0
      %761 = vmatprep.subr.mxu0 0.0
      %762 = vmatpush1.msra.mxu0 0.0
      %763 = vmatprep.subr.mxu0 0.0
      %764 = vmatpush1.msra.mxu0 0.0
      %765 = vmatprep.subr.mxu0 0.0
      %766 = vmatpush1.msra.mxu0 0.0
      %767 = vmatprep.subr.mxu0 0.0
      %768 = vmatpush1.msra.mxu0 0.0
      %769 = vmatprep.subr.mxu0 0.0
      %770 = vmatpush1.msra.mxu0 0.0
      %771 = vmatprep.subr.mxu0 0.0
      %772 = vmatpush1.msra.mxu0 0.0
      %773 = vmatprep.subr.mxu0 0.0
      %774 = vmatpush1.msra.mxu0 0.0
      %775 = vmatprep.subr.mxu0 0.0
      %776 = vmatpush1.msra.mxu0 0.0
      %777 = vmatprep.subr.mxu0 0.0
      %778 = vmatpush1.msra.mxu0 0.0
      %779 = vmatprep.subr.mxu0 0.0
      %780 = vmatpush1.msra.mxu0 0.0
      %781 = vmatprep.subr.mxu0 0.0
      %782 = vmatpush1.msra.mxu0 0.0
      %783 = vmatprep.subr.mxu0 0.0
      %784 = vmatpush1.msra.mxu0 0.0
      %785 = vmatprep.subr.mxu0 0.0
      %786 = vmatpush1.msra.mxu0 0.0
      %787 = vmatprep.subr.mxu0 0.0
      %788 = vmatpush1.msra.mxu0 0.0
      %789 = vmatprep.subr.mxu0 0.0
      %790 = vmatpush1.msra.mxu0 0.0
      %791 = vmatprep.subr.mxu0 0.0
      %792 = vmatpush1.msra.mxu0 0.0
      %793 = vmatprep.subr.mxu0 0.0
      %794 = vmatpush1.msra.mxu0 0.0
      %795 = vmatprep.subr.mxu0 0.0
      %796 = vmatpush1.msra.mxu0 0.0
      %797 = vmatprep.mubr.f32.mxu0 0.0
      %798 = vmatmul.mubr.f32.gmra.mrb[0].mxu0 %v634
      %v799 = vpop.f32.mrb[0].mxu0
      %v800 = vadd.f32 0.0, %v799
      %v801 = vpop.f32.mrb[0].mxu0
      %802 = vmatprep.mubr.f32.mxu0 0.0
      %803 = vmatmul.mubr.f32.gmra.mrb[0].mxu0 %v637
      %v804 = vpop.f32.mrb[0].mxu0
      %v805 = vadd.f32 0.0, %v804
      %v806 = vpop.f32.mrb[0].mxu0
      %807 = vmatprep.mubr.f32.mxu0 0.0
      %808 = vmatmul.mubr.f32.gmra.mrb[0].mxu0 %v640
      %v809 = vpop.f32.mrb[0].mxu0
      %v810 = vadd.f32 0.0, %v809
      %v811 = vpop.f32.mrb[0].mxu0
      %812 = vmatprep.mubr.f32.mxu0 0.0
      %813 = vmatmul.mubr.f32.gmra.mrb[0].mxu0 %v643
      %v814 = vpop.f32.mrb[0].mxu0
      %v815 = vadd.f32 0.0, %v814
      %v816 = vpop.f32.mrb[0].mxu0
      %817 = vmatprep.mubr.f32.mxu0 0.0
      %818 = vmatmul.mubr.f32.gmra.mrb[0].mxu0 %v646
      %v819 = vpop.f32.mrb[0].mxu0
      %v820 = vadd.f32 0.0, %v819
      %v821 = vpop.f32.mrb[0].mxu0
      %822 = vmatprep.mubr.f32.mxu0 0.0
      %823 = vmatmul.mubr.f32.gmra.mrb[0].mxu0 %v649
      %v824 = vpop.f32.mrb[0].mxu0
      %v825 = vadd.f32 0.0, %v824
      %v826 = vpop.f32.mrb[0].mxu0
      %827 = vmatprep.mubr.f32.mxu0 0.0
      %828 = vmatmul.mubr.f32.gmra.mrb[0].mxu0 %v652
      %v829 = vpop.f32.mrb[0].mxu0
      %v830 = vadd.f32 0.0, %v829
      %v831 = vpop.f32.mrb[0].mxu0
      %832 = vmatprep.mubr.f32.mxu0 0.0
      %833 = vmatmul.mubr.f32.gmra.mrb[0].mxu0 %v655
      %v834 = vpop.f32.mrb[0].mxu0
      %v835 = vadd.f32 0.0, %v834
      %v836 = vpop.f32.mrb[0].mxu0
      %837 = vmatprep.mubr.f32.mxu0 0.0
      %838 = vmatmul.mubr.f32.gmra.mrb[0].mxu0 %v658
      %v839 = vpop.f32.mrb[0].mxu0
      %v840 = vadd.f32 0.0, %v839
      %v841 = vpop.f32.mrb[0].mxu0
      %842 = vmatprep.mubr.f32.mxu0 0.0
      %843 = vmatmul.mubr.f32.gmra.mrb[0].mxu0 %v661
      %v844 = vpop.f32.mrb[0].mxu0
      %v845 = vadd.f32 0.0, %v844
      %v846 = vpop.f32.mrb[0].mxu0
      %847 = vmatprep.mubr.f32.mxu0 0.0
      %848 = vmatmul.mubr.f32.gmra.mrb[0].mxu0 %v664
      %v849 = vpop.f32.mrb[0].mxu0
      %v850 = vadd.f32 0.0, %v849
      %v851 = vpop.f32.mrb[0].mxu0
      %852 = vmatprep.mubr.f32.mxu0 0.0
      %853 = vmatmul.mubr.f32.gmra.mrb[0].mxu0 %v667
      %v854 = vpop.f32.mrb[0].mxu0
      %v855 = vadd.f32 0.0, %v854
      %v856 = vpop.f32.mrb[0].mxu0
      %857 = vmatprep.mubr.f32.mxu0 0.0
      %858 = vmatmul.mubr.f32.gmra.mrb[0].mxu0 %v670
      %v859 = vpop.f32.mrb[0].mxu0
      %v860 = vadd.f32 0.0, %v859
      %v861 = vpop.f32.mrb[0].mxu0
      %862 = vmatprep.mubr.f32.mxu0 0.0
      %863 = vmatmul.mubr.f32.gmra.mrb[0].mxu0 %v673
      %v864 = vpop.f32.mrb[0].mxu0
      %v865 = vadd.f32 0.0, %v864
      %v866 = vpop.f32.mrb[0].mxu0
      %867 = vmatprep.mubr.f32.mxu0 0.0
      %868 = vmatmul.mubr.f32.gmra.mrb[0].mxu0 %v676
      %v869 = vpop.f32.mrb[0].mxu0
      %v870 = vadd.f32 0.0, %v869
      %v871 = vpop.f32.mrb[0].mxu0
      %872 = vmatprep.mubr.f32.mxu0 0.0
      %873 = vmatmul.mubr.f32.gmra.mrb[0].mxu0 %v679
      %v874 = vpop.f32.mrb[0].mxu0
      %v875 = vadd.f32 0.0, %v874
      %v876 = vpop.f32.mrb[0].mxu0
      %877 = vmatprep.mubr.f32.mxu0 0.0
      %878 = vmatmul.mubr.f32.gmra.mrb[0].mxu0 %v682
      %v879 = vpop.f32.mrb[0].mxu0
      %v880 = vadd.f32 0.0, %v879
      %v881 = vpop.f32.mrb[0].mxu0
      %882 = vmatprep.mubr.f32.mxu0 0.0
      %883 = vmatmul.mubr.f32.gmra.mrb[0].mxu0 %v685
      %v884 = vpop.f32.mrb[0].mxu0
      %v885 = vadd.f32 0.0, %v884
      %v886 = vpop.f32.mrb[0].mxu0
      %887 = vmatprep.mubr.f32.mxu0 0.0
      %888 = vmatmul.mubr.f32.gmra.mrb[0].mxu0 %v688
      %v889 = vpop.f32.mrb[0].mxu0
      %v890 = vadd.f32 0.0, %v889
      %v891 = vpop.f32.mrb[0].mxu0
      %892 = vmatprep.mubr.f32.mxu0 0.0
      %893 = vmatmul.mubr.f32.gmra.mrb[0].mxu0 %v691
      %v894 = vpop.f32.mrb[0].mxu0
      %v895 = vadd.f32 0.0, %v894
      %v896 = vpop.f32.mrb[0].mxu0
      %897 = vmatprep.mubr.f32.mxu0 0.0
      %898 = vmatmul.mubr.f32.gmra.mrb[0].mxu0 %v694
      %v899 = vpop.f32.mrb[0].mxu0
      %v900 = vadd.f32 0.0, %v899
      %v901 = vpop.f32.mrb[0].mxu0
      %902 = vmatprep.mubr.f32.mxu0 0.0
      %903 = vmatmul.mubr.f32.gmra.mrb[0].mxu0 %v697
      %v904 = vpop.f32.mrb[0].mxu0
      %v905 = vadd.f32 0.0, %v904
      %v906 = vpop.f32.mrb[0].mxu0
      %907 = vmatprep.mubr.f32.mxu0 0.0
      %908 = vmatmul.mubr.f32.gmra.mrb[0].mxu0 %v700
      %v909 = vpop.f32.mrb[0].mxu0
      %v910 = vadd.f32 0.0, %v909
      %v911 = vpop.f32.mrb[0].mxu0
      %912 = vmatprep.mubr.f32.mxu0 0.0
      %913 = vmatmul.mubr.f32.gmra.mrb[0].mxu0 %v703
      %v914 = vpop.f32.mrb[0].mxu0
      %v915 = vadd.f32 0.0, %v914
      %v916 = vpop.f32.mrb[0].mxu0
      %917 = vmatprep.mubr.f32.mxu0 0.0
      %918 = vmatmul.mubr.f32.gmra.mrb[0].mxu0 %v706
      %v919 = vpop.f32.mrb[0].mxu0
      %v920 = vadd.f32 0.0, %v919
      %v921 = vpop.f32.mrb[0].mxu0
      %922 = vmatprep.mubr.f32.mxu0 0.0
      %923 = vmatmul.mubr.f32.gmra.mrb[0].mxu0 %v709
      %v924 = vpop.f32.mrb[0].mxu0
      %v925 = vadd.f32 0.0, %v924
      %v926 = vpop.f32.mrb[0].mxu0
      %927 = vmatprep.mubr.f32.mxu0 0.0
      %928 = vmatmul.mubr.f32.gmra.mrb[0].mxu0 %v712
      %v929 = vpop.f32.mrb[0].mxu0
      %v930 = vadd.f32 0.0, %v929
      %v931 = vpop.f32.mrb[0].mxu0
      %932 = vmatprep.mubr.f32.mxu0 0.0
      %933 = vmatmul.mubr.f32.gmra.mrb[0].mxu0 %v715
      %v934 = vpop.f32.mrb[0].mxu0
      %v935 = vadd.f32 0.0, %v934
      %v936 = vpop.f32.mrb[0].mxu0
      %937 = vmatprep.mubr.f32.mxu0 0.0
      %938 = vmatmul.mubr.f32.gmra.mrb[0].mxu0 %v718
      %v939 = vpop.f32.mrb[0].mxu0
      %v940 = vadd.f32 0.0, %v939
      %v941 = vpop.f32.mrb[0].mxu0
      %942 = vmatprep.mubr.f32.mxu0 0.0
      %943 = vmatmul.mubr.f32.gmra.mrb[0].mxu0 %v721
      %v944 = vpop.f32.mrb[0].mxu0
      %v945 = vadd.f32 0.0, %v944
      %v946 = vpop.f32.mrb[0].mxu0
      %947 = vmatprep.mubr.f32.mxu0 0.0
      %948 = vmatmul.mubr.f32.gmra.mrb[0].mxu0 %v724
      %v949 = vpop.f32.mrb[0].mxu0
      %v950 = vadd.f32 0.0, %v949
      %v951 = vpop.f32.mrb[0].mxu0
      %952 = vmatprep.mubr.f32.mxu0 0.0
      %953 = vmatmul.mubr.f32.gmra.mrb[0].mxu0 %v727
      %v954 = vpop.f32.mrb[0].mxu0
      %v955 = vadd.f32 0.0, %v954
      %v956 = vpop.f32.mrb[0].mxu0
      %957 = vdwg.mxu0
      %v958 = vmax.f32 %v800, %v820
      %v959 = vmax.f32 %v805, %v825
      %v960 = vmax.f32 %v810, %v830
      %v961 = vmax.f32 %v815, %v835
      %v962 = vmax.f32 %v958, %v840
      %v963 = vmax.f32 %v959, %v845
      %v964 = vmax.f32 %v960, %v850
      %v965 = vmax.f32 %v961, %v855
      %v966 = vmax.f32 %v962, %v860
      %v967 = vmax.f32 %v963, %v865
      %v968 = vmax.f32 %v964, %v870
      %v969 = vmax.f32 %v965, %v875
      %v970 = vmax.f32 %v966, %v880
      %v971 = vmax.f32 %v967, %v885
      %v972 = vmax.f32 %v968, %v890
      %v973 = vmax.f32 %v969, %v895
      %v974 = vmax.f32 %v970, %v900
      %v975 = vmax.f32 %v971, %v905
      %v976 = vmax.f32 %v972, %v910
      %v977 = vmax.f32 %v973, %v915
      %v978 = vmax.f32 %v974, %v920
      %v979 = vmax.f32 %v975, %v925
      %v980 = vmax.f32 %v976, %v930
      %v981 = vmax.f32 %v977, %v935
      %v982 = vmax.f32 %v978, %v940
      %v983 = vmax.f32 %v979, %v945
      %v984 = vmax.f32 %v980, %v950
      %v985 = vmax.f32 %v981, %v955
      %v986 = vmax.f32 %v982, %v983
      %v987 = vmax.f32 %v984, %v985
      %v988 = vmax.f32 %v986, %v987
      %v989 = vrot.slane %v988, 4
      %v990 = vmax.f32 %v988, %v989
      %v991 = vrot.slane %v990, 2
      %v992 = vmax.f32 %v990, %v991
      %v993 = vrot.slane %v992, 1
      %v994 = vmax.f32 %v992, %v993
      %v995 = vsub.f32 %v800, %v994
      %v996 = vsub.f32 %v805, %v994
      %v997 = vsub.f32 %v810, %v994
      %v998 = vsub.f32 %v815, %v994
      %v999 = vsub.f32 %v820, %v994
      %v1000 = vsub.f32 %v825, %v994
      %v1001 = vsub.f32 %v830, %v994
      %v1002 = vsub.f32 %v835, %v994
      %v1003 = vsub.f32 %v840, %v994
      %v1004 = vsub.f32 %v845, %v994
      %v1005 = vsub.f32 %v850, %v994
      %v1006 = vsub.f32 %v855, %v994
      %v1007 = vsub.f32 %v860, %v994
      %v1008 = vsub.f32 %v865, %v994
      %v1009 = vsub.f32 %v870, %v994
      %v1010 = vsub.f32 %v875, %v994
      %v1011 = vsub.f32 %v880, %v994
      %v1012 = vsub.f32 %v885, %v994
      %v1013 = vsub.f32 %v890, %v994
      %v1014 = vsub.f32 %v895, %v994
      %v1015 = vsub.f32 %v900, %v994
      %v1016 = vsub.f32 %v905, %v994
      %v1017 = vsub.f32 %v910, %v994
      %v1018 = vsub.f32 %v915, %v994
      %v1019 = vsub.f32 %v920, %v994
      %v1020 = vsub.f32 %v925, %v994
      %v1021 = vsub.f32 %v930, %v994
      %v1022 = vsub.f32 %v935, %v994
      %v1023 = vsub.f32 %v940, %v994
      %v1024 = vsub.f32 %v945, %v994
      %v1025 = vsub.f32 %v950, %v994
      %v1026 = vsub.f32 %v955, %v994
      %v1027 = vmul.f32 %v995, 1.442695
      %v1028 = vpow.pop %v1027
      %v1029 = vmul.f32 %v996, 1.442695
      %v1030 = vpow.pop %v1029
      %v1031 = vmul.f32 %v997, 1.442695
      %v1032 = vpow.pop %v1031
      %v1033 = vmul.f32 %v998, 1.442695
      %v1034 = vpow.pop %v1033
      %v1035 = vmul.f32 %v999, 1.442695
      %v1036 = vpow.pop %v1035
      %v1037 = vmul.f32 %v1000, 1.442695
      %v1038 = vpow.pop %v1037
      %v1039 = vmul.f32 %v1001, 1.442695
      %v1040 = vpow.pop %v1039
      %v1041 = vmul.f32 %v1002, 1.442695
      %v1042 = vpow.pop %v1041
      %v1043 = vmul.f32 %v1003, 1.442695
      %v1044 = vpow.pop %v1043
      %v1045 = vmul.f32 %v1004, 1.442695
      %v1046 = vpow.pop %v1045
      %v1047 = vmul.f32 %v1005, 1.442695
      %v1048 = vpow.pop %v1047
      %v1049 = vmul.f32 %v1006, 1.442695
      %v1050 = vpow.pop %v1049
      %v1051 = vmul.f32 %v1007, 1.442695
      %v1052 = vpow.pop %v1051
      %v1053 = vmul.f32 %v1008, 1.442695
      %v1054 = vpow.pop %v1053
      %v1055 = vmul.f32 %v1009, 1.442695
      %v1056 = vpow.pop %v1055
      %v1057 = vmul.f32 %v1010, 1.442695
      %v1058 = vpow.pop %v1057
      %v1059 = vmul.f32 %v1011, 1.442695
      %v1060 = vpow.pop %v1059
      %v1061 = vmul.f32 %v1012, 1.442695
      %v1062 = vpow.pop %v1061
      %v1063 = vmul.f32 %v1013, 1.442695
      %v1064 = vpow.pop %v1063
      %v1065 = vmul.f32 %v1014, 1.442695
      %v1066 = vpow.pop %v1065
      %v1067 = vmul.f32 %v1015, 1.442695
      %v1068 = vpow.pop %v1067
      %v1069 = vmul.f32 %v1016, 1.442695
      %v1070 = vpow.pop %v1069
      %v1071 = vmul.f32 %v1017, 1.442695
      %v1072 = vpow.pop %v1071
      %v1073 = vmul.f32 %v1018, 1.442695
      %v1074 = vpow.pop %v1073
      %v1075 = vmul.f32 %v1019, 1.442695
      %v1076 = vpow.pop %v1075
      %v1077 = vmul.f32 %v1020, 1.442695
      %v1078 = vpow.pop %v1077
      %v1079 = vmul.f32 %v1021, 1.442695
      %v1080 = vpow.pop %v1079
      %v1081 = vmul.f32 %v1022, 1.442695
      %v1082 = vpow.pop %v1081
      %v1083 = vmul.f32 %v1023, 1.442695
      %v1084 = vpow.pop %v1083
      %v1085 = vmul.f32 %v1024, 1.442695
      %v1086 = vpow.pop %v1085
      %v1087 = vmul.f32 %v1025, 1.442695
      %v1088 = vpow.pop %v1087
      %v1089 = vmul.f32 %v1026, 1.442695
      %v1090 = vpow.pop %v1089
      %1091 = vmatprep.subr.mxu0 0.0
      %1092 = vmatpush1.msra.mxu0 %v1028
      %1093 = vmatprep.subr.mxu0 0.0
      %1094 = vmatpush1.msra.mxu0 %v1030
      %1095 = vmatprep.subr.mxu0 0.0
      %1096 = vmatpush1.msra.mxu0 %v1032
      %1097 = vmatprep.subr.mxu0 0.0
      %1098 = vmatpush1.msra.mxu0 %v1034
      %1099 = vmatprep.subr.mxu0 0.0
      %1100 = vmatpush1.msra.mxu0 %v1036
      %1101 = vmatprep.subr.mxu0 0.0
      %1102 = vmatpush1.msra.mxu0 %v1038
      %1103 = vmatprep.subr.mxu0 0.0
      %1104 = vmatpush1.msra.mxu0 %v1040
      %1105 = vmatprep.subr.mxu0 0.0
      %1106 = vmatpush1.msra.mxu0 %v1042
      %1107 = vmatprep.subr.mxu0 0.0
      %1108 = vmatpush1.msra.mxu0 %v1044
      %1109 = vmatprep.subr.mxu0 0.0
      %1110 = vmatpush1.msra.mxu0 %v1046
      %1111 = vmatprep.subr.mxu0 0.0
      %1112 = vmatpush1.msra.mxu0 %v1048
      %1113 = vmatprep.subr.mxu0 0.0
      %1114 = vmatpush1.msra.mxu0 %v1050
      %1115 = vmatprep.subr.mxu0 0.0
      %1116 = vmatpush1.msra.mxu0 %v1052
      %1117 = vmatprep.subr.mxu0 0.0
      %1118 = vmatpush1.msra.mxu0 %v1054
      %1119 = vmatprep.subr.mxu0 0.0
      %1120 = vmatpush1.msra.mxu0 %v1056
      %1121 = vmatprep.subr.mxu0 0.0
      %1122 = vmatpush1.msra.mxu0 %v1058
      %1123 = vmatprep.subr.mxu0 0.0
      %1124 = vmatpush1.msra.mxu0 %v1060
      %1125 = vmatprep.subr.mxu0 0.0
      %1126 = vmatpush1.msra.mxu0 %v1062
      %1127 = vmatprep.subr.mxu0 0.0
      %1128 = vmatpush1.msra.mxu0 %v1064
      %1129 = vmatprep.subr.mxu0 0.0
      %1130 = vmatpush1.msra.mxu0 %v1066
      %1131 = vmatprep.subr.mxu0 0.0
      %1132 = vmatpush1.msra.mxu0 %v1068
      %1133 = vmatprep.subr.mxu0 0.0
      %1134 = vmatpush1.msra.mxu0 %v1070
      %1135 = vmatprep.subr.mxu0 0.0
      %1136 = vmatpush1.msra.mxu0 %v1072
      %1137 = vmatprep.subr.mxu0 0.0
      %1138 = vmatpush1.msra.mxu0 %v1074
      %1139 = vmatprep.subr.mxu0 0.0
      %1140 = vmatpush1.msra.mxu0 %v1076
      %1141 = vmatprep.subr.mxu0 0.0
      %1142 = vmatpush1.msra.mxu0 %v1078
      %1143 = vmatprep.subr.mxu0 0.0
      %1144 = vmatpush1.msra.mxu0 %v1080
      %1145 = vmatprep.subr.mxu0 0.0
      %1146 = vmatpush1.msra.mxu0 %v1082
      %1147 = vmatprep.subr.mxu0 0.0
      %1148 = vmatpush1.msra.mxu0 %v1084
      %1149 = vmatprep.subr.mxu0 0.0
      %1150 = vmatpush1.msra.mxu0 %v1086
      %1151 = vmatprep.subr.mxu0 0.0
      %1152 = vmatpush1.msra.mxu0 %v1088
      %1153 = vmatprep.subr.mxu0 0.0
      %1154 = vmatpush1.msra.mxu0 %v1090
      %1155 = vmatprep.mubr.f32.mxu0 %v567
      %1156 = vmatmul.mubr.f32.gmra.mrb[0].mxu0 %v566
      %v1157 = vpop.f32.mrb[0].mxu0
      %v1158 = vadd.f32 0.0, %v1157
      %v1159 = vpop.f32.mrb[0].mxu0
      %1160 = vdwg.mxu0
      %v1161 = vrcp.pop %v1158
      %v1162 = vmul.f32 1.0, %v1161
      %v1163 = vlaneseq
      %v1164 = vshrl.u32 %v1163, 7
      %v1165 = vsub.s32 4, %v1164
      %v1166 = vrot.slane %v1162, %v1165
      %v1167 = vmul.f32 %v1158, %v1166
      %1168 = vst [vmem:[#allocation3] sm:$0xf] %v1167
      %v1170 = vsel %vm729, %v565, 0
      %1172 = vmatprep.subr.mxu0 0.0
      %1173 = vmatpush1.msra.mxu0 %v1170
      %1174 = vmatprep.subr.mxu0 0.0
      %1175 = vmatpush1.msra.mxu0 0.0
      %1176 = vmatprep.subr.mxu0 0.0
      %1177 = vmatpush1.msra.mxu0 0.0
      %1178 = vmatprep.subr.mxu0 0.0
      %1179 = vmatpush1.msra.mxu0 0.0
      %1180 = vmatprep.subr.mxu0 0.0
      %1181 = vmatpush1.msra.mxu0 0.0
      %1182 = vmatprep.subr.mxu0 0.0
      %1183 = vmatpush1.msra.mxu0 0.0
      %1184 = vmatprep.subr.mxu0 0.0
      %1185 = vmatpush1.msra.mxu0 0.0
      %1186 = vmatprep.subr.mxu0 0.0
      %1187 = vmatpush1.msra.mxu0 0.0
      %1188 = vmatprep.subr.mxu0 0.0
      %1189 = vmatpush1.msra.mxu0 0.0
      %1190 = vmatprep.subr.mxu0 0.0
      %1191 = vmatpush1.msra.mxu0 0.0
      %1192 = vmatprep.subr.mxu0 0.0
      %1193 = vmatpush1.msra.mxu0 0.0
      %1194 = vmatprep.subr.mxu0 0.0
      %1195 = vmatpush1.msra.mxu0 0.0
      %1196 = vmatprep.subr.mxu0 0.0
      %1197 = vmatpush1.msra.mxu0 0.0
      %1198 = vmatprep.subr.mxu0 0.0
      %1199 = vmatpush1.msra.mxu0 0.0
      %1200 = vmatprep.subr.mxu0 0.0
      %1201 = vmatpush1.msra.mxu0 0.0
      %1202 = vmatprep.subr.mxu0 0.0
      %1203 = vmatpush1.msra.mxu0 0.0
      %1204 = vmatprep.subr.mxu0 0.0
      %1205 = vmatpush1.msra.mxu0 0.0
      %1206 = vmatprep.subr.mxu0 0.0
      %1207 = vmatpush1.msra.mxu0 0.0
      %1208 = vmatprep.subr.mxu0 0.0
      %1209 = vmatpush1.msra.mxu0 0.0
      %1210 = vmatprep.subr.mxu0 0.0
      %1211 = vmatpush1.msra.mxu0 0.0
      %1212 = vmatprep.subr.mxu0 0.0
      %1213 = vmatpush1.msra.mxu0 0.0
      %1214 = vmatprep.subr.mxu0 0.0
      %1215 = vmatpush1.msra.mxu0 0.0
      %1216 = vmatprep.subr.mxu0 0.0
      %1217 = vmatpush1.msra.mxu0 0.0
      %1218 = vmatprep.subr.mxu0 0.0
      %1219 = vmatpush1.msra.mxu0 0.0
      %1220 = vmatprep.subr.mxu0 0.0
      %1221 = vmatpush1.msra.mxu0 0.0
      %1222 = vmatprep.subr.mxu0 0.0
      %1223 = vmatpush1.msra.mxu0 0.0
      %1224 = vmatprep.subr.mxu0 0.0
      %1225 = vmatpush1.msra.mxu0 0.0
      %1226 = vmatprep.subr.mxu0 0.0
      %1227 = vmatpush1.msra.mxu0 0.0
      %1228 = vmatprep.subr.mxu0 0.0
      %1229 = vmatpush1.msra.mxu0 0.0
      %1230 = vmatprep.subr.mxu0 0.0
      %1231 = vmatpush1.msra.mxu0 0.0
      %1232 = vmatprep.subr.mxu0 0.0
      %1233 = vmatpush1.msra.mxu0 0.0
      %1234 = vmatprep.subr.mxu0 0.0
      %1235 = vmatpush1.msra.mxu0 0.0
      %1236 = vmatprep.mubr.f32.mxu0 0.0
      %1237 = vmatmul.mubr.f32.gmra.mrb[0].mxu0 %v634
      %v1238 = vpop.f32.mrb[0].mxu0
      %v1239 = vadd.f32 0.0, %v1238
      %v1240 = vpop.f32.mrb[0].mxu0
      %1241 = vmatprep.mubr.f32.mxu0 0.0
      %1242 = vmatmul.mubr.f32.gmra.mrb[0].mxu0 %v637
      %v1243 = vpop.f32.mrb[0].mxu0
      %v1244 = vadd.f32 0.0, %v1243
      %v1245 = vpop.f32.mrb[0].mxu0
      %1246 = vmatprep.mubr.f32.mxu0 0.0
      %1247 = vmatmul.mubr.f32.gmra.mrb[0].mxu0 %v640
      %v1248 = vpop.f32.mrb[0].mxu0
      %v1249 = vadd.f32 0.0, %v1248
      %v1250 = vpop.f32.mrb[0].mxu0
      %1251 = vmatprep.mubr.f32.mxu0 0.0
      %1252 = vmatmul.mubr.f32.gmra.mrb[0].mxu0 %v643
      %v1253 = vpop.f32.mrb[0].mxu0
      %v1254 = vadd.f32 0.0, %v1253
      %v1255 = vpop.f32.mrb[0].mxu0
      %1256 = vmatprep.mubr.f32.mxu0 0.0
      %1257 = vmatmul.mubr.f32.gmra.mrb[0].mxu0 %v646
      %v1258 = vpop.f32.mrb[0].mxu0
      %v1259 = vadd.f32 0.0, %v1258
      %v1260 = vpop.f32.mrb[0].mxu0
      %1261 = vmatprep.mubr.f32.mxu0 0.0
      %1262 = vmatmul.mubr.f32.gmra.mrb[0].mxu0 %v649
      %v1263 = vpop.f32.mrb[0].mxu0
      %v1264 = vadd.f32 0.0, %v1263
      %v1265 = vpop.f32.mrb[0].mxu0
      %1266 = vmatprep.mubr.f32.mxu0 0.0
      %1267 = vmatmul.mubr.f32.gmra.mrb[0].mxu0 %v652
      %v1268 = vpop.f32.mrb[0].mxu0
      %v1269 = vadd.f32 0.0, %v1268
      %v1270 = vpop.f32.mrb[0].mxu0
      %1271 = vmatprep.mubr.f32.mxu0 0.0
      %1272 = vmatmul.mubr.f32.gmra.mrb[0].mxu0 %v655
      %v1273 = vpop.f32.mrb[0].mxu0
      %v1274 = vadd.f32 0.0, %v1273
      %v1275 = vpop.f32.mrb[0].mxu0
      %1276 = vmatprep.mubr.f32.mxu0 0.0
      %1277 = vmatmul.mubr.f32.gmra.mrb[0].mxu0 %v658
      %v1278 = vpop.f32.mrb[0].mxu0
      %v1279 = vadd.f32 0.0, %v1278
      %v1280 = vpop.f32.mrb[0].mxu0
      %1281 = vmatprep.mubr.f32.mxu0 0.0
      %1282 = vmatmul.mubr.f32.gmra.mrb[0].mxu0 %v661
      %v1283 = vpop.f32.mrb[0].mxu0
      %v1284 = vadd.f32 0.0, %v1283
      %v1285 = vpop.f32.mrb[0].mxu0
      %1286 = vmatprep.mubr.f32.mxu0 0.0
      %1287 = vmatmul.mubr.f32.gmra.mrb[0].mxu0 %v664
      %v1288 = vpop.f32.mrb[0].mxu0
      %v1289 = vadd.f32 0.0, %v1288
      %v1290 = vpop.f32.mrb[0].mxu0
      %1291 = vmatprep.mubr.f32.mxu0 0.0
      %1292 = vmatmul.mubr.f32.gmra.mrb[0].mxu0 %v667
      %v1293 = vpop.f32.mrb[0].mxu0
      %v1294 = vadd.f32 0.0, %v1293
      %v1295 = vpop.f32.mrb[0].mxu0
      %1296 = vmatprep.mubr.f32.mxu0 0.0
      %1297 = vmatmul.mubr.f32.gmra.mrb[0].mxu0 %v670
      %v1298 = vpop.f32.mrb[0].mxu0
      %v1299 = vadd.f32 0.0, %v1298
      %v1300 = vpop.f32.mrb[0].mxu0
      %1301 = vmatprep.mubr.f32.mxu0 0.0
      %1302 = vmatmul.mubr.f32.gmra.mrb[0].mxu0 %v673
      %v1303 = vpop.f32.mrb[0].mxu0
      %v1304 = vadd.f32 0.0, %v1303
      %v1305 = vpop.f32.mrb[0].mxu0
      %1306 = vmatprep.mubr.f32.mxu0 0.0
      %1307 = vmatmul.mubr.f32.gmra.mrb[0].mxu0 %v676
      %v1308 = vpop.f32.mrb[0].mxu0
      %v1309 = vadd.f32 0.0, %v1308
      %v1310 = vpop.f32.mrb[0].mxu0
      %1311 = vmatprep.mubr.f32.mxu0 0.0
      %1312 = vmatmul.mubr.f32.gmra.mrb[0].mxu0 %v679
      %v1313 = vpop.f32.mrb[0].mxu0
      %v1314 = vadd.f32 0.0, %v1313
      %v1315 = vpop.f32.mrb[0].mxu0
      %1316 = vmatprep.mubr.f32.mxu0 0.0
      %1317 = vmatmul.mubr.f32.gmra.mrb[0].mxu0 %v682
      %v1318 = vpop.f32.mrb[0].mxu0
      %v1319 = vadd.f32 0.0, %v1318
      %v1320 = vpop.f32.mrb[0].mxu0
      %1321 = vmatprep.mubr.f32.mxu0 0.0
      %1322 = vmatmul.mubr.f32.gmra.mrb[0].mxu0 %v685
      %v1323 = vpop.f32.mrb[0].mxu0
      %v1324 = vadd.f32 0.0, %v1323
      %v1325 = vpop.f32.mrb[0].mxu0
      %1326 = vmatprep.mubr.f32.mxu0 0.0
      %1327 = vmatmul.mubr.f32.gmra.mrb[0].mxu0 %v688
      %v1328 = vpop.f32.mrb[0].mxu0
      %v1329 = vadd.f32 0.0, %v1328
      %v1330 = vpop.f32.mrb[0].mxu0
      %1331 = vmatprep.mubr.f32.mxu0 0.0
      %1332 = vmatmul.mubr.f32.gmra.mrb[0].mxu0 %v691
      %v1333 = vpop.f32.mrb[0].mxu0
      %v1334 = vadd.f32 0.0, %v1333
      %v1335 = vpop.f32.mrb[0].mxu0
      %1336 = vmatprep.mubr.f32.mxu0 0.0
      %1337 = vmatmul.mubr.f32.gmra.mrb[0].mxu0 %v694
      %v1338 = vpop.f32.mrb[0].mxu0
      %v1339 = vadd.f32 0.0, %v1338
      %v1340 = vpop.f32.mrb[0].mxu0
      %1341 = vmatprep.mubr.f32.mxu0 0.0
      %1342 = vmatmul.mubr.f32.gmra.mrb[0].mxu0 %v697
      %v1343 = vpop.f32.mrb[0].mxu0
      %v1344 = vadd.f32 0.0, %v1343
      %v1345 = vpop.f32.mrb[0].mxu0
      %1346 = vmatprep.mubr.f32.mxu0 0.0
      %1347 = vmatmul.mubr.f32.gmra.mrb[0].mxu0 %v700
      %v1348 = vpop.f32.mrb[0].mxu0
      %v1349 = vadd.f32 0.0, %v1348
      %v1350 = vpop.f32.mrb[0].mxu0
      %1351 = vmatprep.mubr.f32.mxu0 0.0
      %1352 = vmatmul.mubr.f32.gmra.mrb[0].mxu0 %v703
      %v1353 = vpop.f32.mrb[0].mxu0
      %v1354 = vadd.f32 0.0, %v1353
      %v1355 = vpop.f32.mrb[0].mxu0
      %1356 = vmatprep.mubr.f32.mxu0 0.0
      %1357 = vmatmul.mubr.f32.gmra.mrb[0].mxu0 %v706
      %v1358 = vpop.f32.mrb[0].mxu0
      %v1359 = vadd.f32 0.0, %v1358
      %v1360 = vpop.f32.mrb[0].mxu0
      %1361 = vmatprep.mubr.f32.mxu0 0.0
      %1362 = vmatmul.mubr.f32.gmra.mrb[0].mxu0 %v709
      %v1363 = vpop.f32.mrb[0].mxu0
      %v1364 = vadd.f32 0.0, %v1363
      %v1365 = vpop.f32.mrb[0].mxu0
      %1366 = vmatprep.mubr.f32.mxu0 0.0
      %1367 = vmatmul.mubr.f32.gmra.mrb[0].mxu0 %v712
      %v1368 = vpop.f32.mrb[0].mxu0
      %v1369 = vadd.f32 0.0, %v1368
      %v1370 = vpop.f32.mrb[0].mxu0
      %1371 = vmatprep.mubr.f32.mxu0 0.0
      %1372 = vmatmul.mubr.f32.gmra.mrb[0].mxu0 %v715
      %v1373 = vpop.f32.mrb[0].mxu0
      %v1374 = vadd.f32 0.0, %v1373
      %v1375 = vpop.f32.mrb[0].mxu0
      %1376 = vmatprep.mubr.f32.mxu0 0.0
      %1377 = vmatmul.mubr.f32.gmra.mrb[0].mxu0 %v718
      %v1378 = vpop.f32.mrb[0].mxu0
      %v1379 = vadd.f32 0.0, %v1378
      %v1380 = vpop.f32.mrb[0].mxu0
      %1381 = vmatprep.mubr.f32.mxu0 0.0
      %1382 = vmatmul.mubr.f32.gmra.mrb[0].mxu0 %v721
      %v1383 = vpop.f32.mrb[0].mxu0
      %v1384 = vadd.f32 0.0, %v1383
      %v1385 = vpop.f32.mrb[0].mxu0
      %1386 = vmatprep.mubr.f32.mxu0 0.0
      %1387 = vmatmul.mubr.f32.gmra.mrb[0].mxu0 %v724
      %v1388 = vpop.f32.mrb[0].mxu0
      %v1389 = vadd.f32 0.0, %v1388
      %v1390 = vpop.f32.mrb[0].mxu0
      %1391 = vmatprep.mubr.f32.mxu0 0.0
      %1392 = vmatmul.mubr.f32.gmra.mrb[0].mxu0 %v727
      %v1393 = vpop.f32.mrb[0].mxu0
      %v1394 = vadd.f32 0.0, %v1393
      %v1395 = vpop.f32.mrb[0].mxu0
      %1396 = vdwg.mxu0
      %v1397 = vmax.f32 %v1239, %v1259
      %v1398 = vmax.f32 %v1244, %v1264
      %v1399 = vmax.f32 %v1249, %v1269
      %v1400 = vmax.f32 %v1254, %v1274
      %v1401 = vmax.f32 %v1397, %v1279
      %v1402 = vmax.f32 %v1398, %v1284
      %v1403 = vmax.f32 %v1399, %v1289
      %v1404 = vmax.f32 %v1400, %v1294
      %v1405 = vmax.f32 %v1401, %v1299
      %v1406 = vmax.f32 %v1402, %v1304
      %v1407 = vmax.f32 %v1403, %v1309
      %v1408 = vmax.f32 %v1404, %v1314
      %v1409 = vmax.f32 %v1405, %v1319
      %v1410 = vmax.f32 %v1406, %v1324
      %v1411 = vmax.f32 %v1407, %v1329
      %v1412 = vmax.f32 %v1408, %v1334
      %v1413 = vmax.f32 %v1409, %v1339
      %v1414 = vmax.f32 %v1410, %v1344
      %v1415 = vmax.f32 %v1411, %v1349
      %v1416 = vmax.f32 %v1412, %v1354
      %v1417 = vmax.f32 %v1413, %v1359
      %v1418 = vmax.f32 %v1414, %v1364
      %v1419 = vmax.f32 %v1415, %v1369
      %v1420 = vmax.f32 %v1416, %v1374
      %v1421 = vmax.f32 %v1417, %v1379
      %v1422 = vmax.f32 %v1418, %v1384
      %v1423 = vmax.f32 %v1419, %v1389
      %v1424 = vmax.f32 %v1420, %v1394
      %v1425 = vmax.f32 %v1421, %v1422
      %v1426 = vmax.f32 %v1423, %v1424
      %v1427 = vmax.f32 %v1425, %v1426
      %v1428 = vrot.slane %v1427, 4
      %v1429 = vmax.f32 %v1427, %v1428
      %v1430 = vrot.slane %v1429, 2
      %v1431 = vmax.f32 %v1429, %v1430
      %v1432 = vrot.slane %v1431, 1
      %v1433 = vmax.f32 %v1431, %v1432
      %v1434 = vsub.f32 %v1239, %v1433
      %v1435 = vsub.f32 %v1244, %v1433
      %v1436 = vsub.f32 %v1249, %v1433
      %v1437 = vsub.f32 %v1254, %v1433
      %v1438 = vsub.f32 %v1259, %v1433
      %v1439 = vsub.f32 %v1264, %v1433
      %v1440 = vsub.f32 %v1269, %v1433
      %v1441 = vsub.f32 %v1274, %v1433
      %v1442 = vsub.f32 %v1279, %v1433
      %v1443 = vsub.f32 %v1284, %v1433
      %v1444 = vsub.f32 %v1289, %v1433
      %v1445 = vsub.f32 %v1294, %v1433
      %v1446 = vsub.f32 %v1299, %v1433
      %v1447 = vsub.f32 %v1304, %v1433
      %v1448 = vsub.f32 %v1309, %v1433
      %v1449 = vsub.f32 %v1314, %v1433
      %v1450 = vsub.f32 %v1319, %v1433
      %v1451 = vsub.f32 %v1324, %v1433
      %v1452 = vsub.f32 %v1329, %v1433
      %v1453 = vsub.f32 %v1334, %v1433
      %v1454 = vsub.f32 %v1339, %v1433
      %v1455 = vsub.f32 %v1344, %v1433
      %v1456 = vsub.f32 %v1349, %v1433
      %v1457 = vsub.f32 %v1354, %v1433
      %v1458 = vsub.f32 %v1359, %v1433
      %v1459 = vsub.f32 %v1364, %v1433
      %v1460 = vsub.f32 %v1369, %v1433
      %v1461 = vsub.f32 %v1374, %v1433
      %v1462 = vsub.f32 %v1379, %v1433
      %v1463 = vsub.f32 %v1384, %v1433
      %v1464 = vsub.f32 %v1389, %v1433
      %v1465 = vsub.f32 %v1394, %v1433
      %v1466 = vmul.f32 %v1434, 1.442695
      %v1467 = vpow.pop %v1466
      %v1468 = vmul.f32 %v1435, 1.442695
      %v1469 = vpow.pop %v1468
      %v1470 = vmul.f32 %v1436, 1.442695
      %v1471 = vpow.pop %v1470
      %v1472 = vmul.f32 %v1437, 1.442695
      %v1473 = vpow.pop %v1472
      %v1474 = vmul.f32 %v1438, 1.442695
      %v1475 = vpow.pop %v1474
      %v1476 = vmul.f32 %v1439, 1.442695
      %v1477 = vpow.pop %v1476
      %v1478 = vmul.f32 %v1440, 1.442695
      %v1479 = vpow.pop %v1478
      %v1480 = vmul.f32 %v1441, 1.442695
      %v1481 = vpow.pop %v1480
      %v1482 = vmul.f32 %v1442, 1.442695
      %v1483 = vpow.pop %v1482
      %v1484 = vmul.f32 %v1443, 1.442695
      %v1485 = vpow.pop %v1484
      %v1486 = vmul.f32 %v1444, 1.442695
      %v1487 = vpow.pop %v1486
      %v1488 = vmul.f32 %v1445, 1.442695
      %v1489 = vpow.pop %v1488
      %v1490 = vmul.f32 %v1446, 1.442695
      %v1491 = vpow.pop %v1490
      %v1492 = vmul.f32 %v1447, 1.442695
      %v1493 = vpow.pop %v1492
      %v1494 = vmul.f32 %v1448, 1.442695
      %v1495 = vpow.pop %v1494
      %v1496 = vmul.f32 %v1449, 1.442695
      %v1497 = vpow.pop %v1496
      %v1498 = vmul.f32 %v1450, 1.442695
      %v1499 = vpow.pop %v1498
      %v1500 = vmul.f32 %v1451, 1.442695
      %v1501 = vpow.pop %v1500
      %v1502 = vmul.f32 %v1452, 1.442695
      %v1503 = vpow.pop %v1502
      %v1504 = vmul.f32 %v1453, 1.442695
      %v1505 = vpow.pop %v1504
      %v1506 = vmul.f32 %v1454, 1.442695
      %v1507 = vpow.pop %v1506
      %v1508 = vmul.f32 %v1455, 1.442695
      %v1509 = vpow.pop %v1508
      %v1510 = vmul.f32 %v1456, 1.442695
      %v1511 = vpow.pop %v1510
      %v1512 = vmul.f32 %v1457, 1.442695
      %v1513 = vpow.pop %v1512
      %v1514 = vmul.f32 %v1458, 1.442695
      %v1515 = vpow.pop %v1514
      %v1516 = vmul.f32 %v1459, 1.442695
      %v1517 = vpow.pop %v1516
      %v1518 = vmul.f32 %v1460, 1.442695
      %v1519 = vpow.pop %v1518
      %v1520 = vmul.f32 %v1461, 1.442695
      %v1521 = vpow.pop %v1520
      %v1522 = vmul.f32 %v1462, 1.442695
      %v1523 = vpow.pop %v1522
      %v1524 = vmul.f32 %v1463, 1.442695
      %v1525 = vpow.pop %v1524
      %v1526 = vmul.f32 %v1464, 1.442695
      %v1527 = vpow.pop %v1526
      %v1528 = vmul.f32 %v1465, 1.442695
      %v1529 = vpow.pop %v1528
      %1530 = vmatprep.subr.mxu0 0.0
      %1531 = vmatpush1.msra.mxu0 %v1467
      %1532 = vmatprep.subr.mxu0 0.0
      %1533 = vmatpush1.msra.mxu0 %v1469
      %1534 = vmatprep.subr.mxu0 0.0
      %1535 = vmatpush1.msra.mxu0 %v1471
      %1536 = vmatprep.subr.mxu0 0.0
      %1537 = vmatpush1.msra.mxu0 %v1473
      %1538 = vmatprep.subr.mxu0 0.0
      %1539 = vmatpush1.msra.mxu0 %v1475
      %1540 = vmatprep.subr.mxu0 0.0
      %1541 = vmatpush1.msra.mxu0 %v1477
      %1542 = vmatprep.subr.mxu0 0.0
      %1543 = vmatpush1.msra.mxu0 %v1479
      %1544 = vmatprep.subr.mxu0 0.0
      %1545 = vmatpush1.msra.mxu0 %v1481
      %1546 = vmatprep.subr.mxu0 0.0
      %1547 = vmatpush1.msra.mxu0 %v1483
      %1548 = vmatprep.subr.mxu0 0.0
      %1549 = vmatpush1.msra.mxu0 %v1485
      %1550 = vmatprep.subr.mxu0 0.0
      %1551 = vmatpush1.msra.mxu0 %v1487
      %1552 = vmatprep.subr.mxu0 0.0
      %1553 = vmatpush1.msra.mxu0 %v1489
      %1554 = vmatprep.subr.mxu0 0.0
      %1555 = vmatpush1.msra.mxu0 %v1491
      %1556 = vmatprep.subr.mxu0 0.0
      %1557 = vmatpush1.msra.mxu0 %v1493
      %1558 = vmatprep.subr.mxu0 0.0
      %1559 = vmatpush1.msra.mxu0 %v1495
      %1560 = vmatprep.subr.mxu0 0.0
      %1561 = vmatpush1.msra.mxu0 %v1497
      %1562 = vmatprep.subr.mxu0 0.0
      %1563 = vmatpush1.msra.mxu0 %v1499
      %1564 = vmatprep.subr.mxu0 0.0
      %1565 = vmatpush1.msra.mxu0 %v1501
      %1566 = vmatprep.subr.mxu0 0.0
      %1567 = vmatpush1.msra.mxu0 %v1503
      %1568 = vmatprep.subr.mxu0 0.0
      %1569 = vmatpush1.msra.mxu0 %v1505
      %1570 = vmatprep.subr.mxu0 0.0
      %1571 = vmatpush1.msra.mxu0 %v1507
      %1572 = vmatprep.subr.mxu0 0.0
      %1573 = vmatpush1.msra.mxu0 %v1509
      %1574 = vmatprep.subr.mxu0 0.0
      %1575 = vmatpush1.msra.mxu0 %v1511
      %1576 = vmatprep.subr.mxu0 0.0
      %1577 = vmatpush1.msra.mxu0 %v1513
      %1578 = vmatprep.subr.mxu0 0.0
      %1579 = vmatpush1.msra.mxu0 %v1515
      %1580 = vmatprep.subr.mxu0 0.0
      %1581 = vmatpush1.msra.mxu0 %v1517
      %1582 = vmatprep.subr.mxu0 0.0
      %1583 = vmatpush1.msra.mxu0 %v1519
      %1584 = vmatprep.subr.mxu0 0.0
      %1585 = vmatpush1.msra.mxu0 %v1521
      %1586 = vmatprep.subr.mxu0 0.0
      %1587 = vmatpush1.msra.mxu0 %v1523
      %1588 = vmatprep.subr.mxu0 0.0
      %1589 = vmatpush1.msra.mxu0 %v1525
      %1590 = vmatprep.subr.mxu0 0.0
      %1591 = vmatpush1.msra.mxu0 %v1527
      %1592 = vmatprep.subr.mxu0 0.0
      %1593 = vmatpush1.msra.mxu0 %v1529
      %1594 = vmatprep.mubr.f32.mxu0 %v567
      %1595 = vmatmul.mubr.f32.gmra.mrb[0].mxu0 %v566
      %v1596 = vpop.f32.mrb[0].mxu0
      %v1597 = vadd.f32 0.0, %v1596
      %v1598 = vpop.f32.mrb[0].mxu0
      %1599 = vdwg.mxu0
      %v1600 = vrcp.pop %v1597
      %v1601 = vmul.f32 1.0, %v1600
      %v1602 = vlaneseq
      %v1603 = vshrl.u32 %v1602, 7
      %v1604 = vsub.s32 4, %v1603
      %v1605 = vrot.slane %v1601, %v1604
      %v1606 = vmul.f32 %v1597, %v1605
      %1607 = vst [vmem:[#allocation3 + $0x8] sm:$0xf] %v1606
      %v1608 = vld [vmem:[#allocation2] sm:$0xf0]
      %v1609 = vld [vmem:[#allocation2 + $0x8] sm:$0xf0]
      %v1610 = vld [vmem:[#allocation2 + $0x40] sm:$0xf0]
      %v1611 = vld [vmem:[#allocation2 + $0x48] sm:$0xf0]
      %v1612 = vld [vmem:[#allocation2 + $0x80] sm:$0xe0]
      %v1613 = vld [vmem:[#allocation2 + $0x88] sm:$0xe0]
      %v1614 = vld [vmem:[#allocation2 + $0x90] sm:$0x3]
      %v1615 = vld [vmem:[#allocation2 + $0x98] sm:$0x3]
      %v1618 = vrot.slane %v1608, 4
      %v1619 = vrot.slane %v1609, 4
      %1622 = vxpose.xlu0.b32.start [1/16] %v1618, 128
      %1623 = vxpose.xlu0.b32.cont [2/16] 0.0, 128
      %1624 = vxpose.xlu0.b32.cont [3/16] 0.0, 128
      %1625 = vxpose.xlu0.b32.cont [4/16] 0.0, 128
      %1626 = vxpose.xlu0.b32.cont [5/16] 0.0, 128
      %1627 = vxpose.xlu0.b32.cont [6/16] 0.0, 128
      %1628 = vxpose.xlu0.b32.cont [7/16] 0.0, 128
      %1629 = vxpose.xlu0.b32.cont [8/16] 0.0, 128
      %1630 = vxpose.xlu0.b32.cont [9/16] 0.0, 128
      %1631 = vxpose.xlu0.b32.cont [10/16] 0.0, 128
      %1632 = vxpose.xlu0.b32.cont [11/16] 0.0, 128
      %1633 = vxpose.xlu0.b32.cont [12/16] 0.0, 128
      %1634 = vxpose.xlu0.b32.cont [13/16] 0.0, 128
      %1635 = vxpose.xlu0.b32.cont [14/16] 0.0, 128
      %1636 = vxpose.xlu0.b32.cont [15/16] 0.0, 128
      %1637 = vxpose.xlu0.b32.end [16/16] 0.0, 128
      %v1638 = vpop.trf.xlu0
      %v1639 = vpop.trf.xlu0
      %v1640 = vpop.trf.xlu0
      %v1641 = vpop.trf.xlu0
      %v1642 = vpop.trf.xlu0
      %v1643 = vpop.trf.xlu0
      %v1644 = vpop.trf.xlu0
      %v1645 = vpop.trf.xlu0
      %v1646 = vpop.trf.xlu0
      %v1647 = vpop.trf.xlu0
      %v1648 = vpop.trf.xlu0
      %v1649 = vpop.trf.xlu0
      %v1650 = vpop.trf.xlu0
      %v1651 = vpop.trf.xlu0
      %v1652 = vpop.trf.xlu0
      %v1653 = vpop.trf.xlu0
      %1654 = vxpose.xlu0.b32.start [1/16] %v1619, 128
      %1655 = vxpose.xlu0.b32.cont [2/16] 0.0, 128
      %1656 = vxpose.xlu0.b32.cont [3/16] 0.0, 128
      %1657 = vxpose.xlu0.b32.cont [4/16] 0.0, 128
      %1658 = vxpose.xlu0.b32.cont [5/16] 0.0, 128
      %1659 = vxpose.xlu0.b32.cont [6/16] 0.0, 128
      %1660 = vxpose.xlu0.b32.cont [7/16] 0.0, 128
      %1661 = vxpose.xlu0.b32.cont [8/16] 0.0, 128
      %1662 = vxpose.xlu0.b32.cont [9/16] 0.0, 128
      %1663 = vxpose.xlu0.b32.cont [10/16] 0.0, 128
      %1664 = vxpose.xlu0.b32.cont [11/16] 0.0, 128
      %1665 = vxpose.xlu0.b32.cont [12/16] 0.0, 128
      %1666 = vxpose.xlu0.b32.cont [13/16] 0.0, 128
      %1667 = vxpose.xlu0.b32.cont [14/16] 0.0, 128
      %1668 = vxpose.xlu0.b32.cont [15/16] 0.0, 128
      %1669 = vxpose.xlu0.b32.end [16/16] 0.0, 128
      %v1670 = vpop.trf.xlu0
      %v1671 = vpop.trf.xlu0
      %v1672 = vpop.trf.xlu0
      %v1673 = vpop.trf.xlu0
      %v1674 = vpop.trf.xlu0
      %v1675 = vpop.trf.xlu0
      %v1676 = vpop.trf.xlu0
      %v1677 = vpop.trf.xlu0
      %v1678 = vpop.trf.xlu0
      %v1679 = vpop.trf.xlu0
      %v1680 = vpop.trf.xlu0
      %v1681 = vpop.trf.xlu0
      %v1682 = vpop.trf.xlu0
      %v1683 = vpop.trf.xlu0
      %v1684 = vpop.trf.xlu0
      %v1685 = vpop.trf.xlu0
      %v1687 = vrot.slane %v1610, 4
      %v1689 = vsel %vm632, %v1638, 0
      %v1692 = vsel %vm632, %v1639, 0
      %v1695 = vsel %vm632, %v1640, 0
      %v1698 = vsel %vm632, %v1641, 0
      %v1701 = vsel %vm632, %v1642, 0
      %v1704 = vsel %vm632, %v1643, 0
      %v1707 = vsel %vm632, %v1644, 0
      %v1710 = vsel %vm632, %v1645, 0
      %v1713 = vsel %vm632, %v1646, 0
      %v1716 = vsel %vm632, %v1647, 0
      %v1719 = vsel %vm632, %v1648, 0
      %v1722 = vsel %vm632, %v1649, 0
      %v1725 = vsel %vm632, %v1650, 0
      %v1728 = vsel %vm632, %v1651, 0
      %v1731 = vsel %vm632, %v1652, 0
      %v1734 = vsel %vm632, %v1653, 0
      %v1737 = vsel %vm632, %v1670, 0
      %v1740 = vsel %vm632, %v1671, 0
      %v1743 = vsel %vm632, %v1672, 0
      %v1746 = vsel %vm632, %v1673, 0
      %v1749 = vsel %vm632, %v1674, 0
      %v1752 = vsel %vm632, %v1675, 0
      %v1755 = vsel %vm632, %v1676, 0
      %v1758 = vsel %vm632, %v1677, 0
      %v1761 = vsel %vm632, %v1678, 0
      %v1764 = vsel %vm632, %v1679, 0
      %v1767 = vsel %vm632, %v1680, 0
      %v1770 = vsel %vm632, %v1681, 0
      %v1773 = vsel %vm632, %v1682, 0
      %v1776 = vsel %vm632, %v1683, 0
      %v1779 = vsel %vm632, %v1684, 0
      %v1782 = vsel %vm632, %v1685, 0
      %v1784 = vsel %vm729, %v1687, 0
      %1786 = vmatprep.subr.mxu0 0.0
      %1787 = vmatpush1.msra.mxu0 %v1784
      %1788 = vmatprep.subr.mxu0 0.0
      %1789 = vmatpush1.msra.mxu0 0.0
      %1790 = vmatprep.subr.mxu0 0.0
      %1791 = vmatpush1.msra.mxu0 0.0
      %1792 = vmatprep.subr.mxu0 0.0
      %1793 = vmatpush1.msra.mxu0 0.0
      %1794 = vmatprep.subr.mxu0 0.0
      %1795 = vmatpush1.msra.mxu0 0.0
      %1796 = vmatprep.subr.mxu0 0.0
      %1797 = vmatpush1.msra.mxu0 0.0
      %1798 = vmatprep.subr.mxu0 0.0
      %1799 = vmatpush1.msra.mxu0 0.0
      %1800 = vmatprep.subr.mxu0 0.0
      %1801 = vmatpush1.msra.mxu0 0.0
      %1802 = vmatprep.subr.mxu0 0.0
      %1803 = vmatpush1.msra.mxu0 0.0
      %1804 = vmatprep.subr.mxu0 0.0
      %1805 = vmatpush1.msra.mxu0 0.0
      %1806 = vmatprep.subr.mxu0 0.0
      %1807 = vmatpush1.msra.mxu0 0.0
      %1808 = vmatprep.subr.mxu0 0.0
      %1809 = vmatpush1.msra.mxu0 0.0
      %1810 = vmatprep.subr.mxu0 0.0
      %1811 = vmatpush1.msra.mxu0 0.0
      %1812 = vmatprep.subr.mxu0 0.0
      %1813 = vmatpush1.msra.mxu0 0.0
      %1814 = vmatprep.subr.mxu0 0.0
      %1815 = vmatpush1.msra.mxu0 0.0
      %1816 = vmatprep.subr.mxu0 0.0
      %1817 = vmatpush1.msra.mxu0 0.0
      %1818 = vmatprep.subr.mxu0 0.0
      %1819 = vmatpush1.msra.mxu0 0.0
      %1820 = vmatprep.subr.mxu0 0.0
      %1821 = vmatpush1.msra.mxu0 0.0
      %1822 = vmatprep.subr.mxu0 0.0
      %1823 = vmatpush1.msra.mxu0 0.0
      %1824 = vmatprep.subr.mxu0 0.0
      %1825 = vmatpush1.msra.mxu0 0.0
      %1826 = vmatprep.subr.mxu0 0.0
      %1827 = vmatpush1.msra.mxu0 0.0
      %1828 = vmatprep.subr.mxu0 0.0
      %1829 = vmatpush1.msra.mxu0 0.0
      %1830 = vmatprep.subr.mxu0 0.0
      %1831 = vmatpush1.msra.mxu0 0.0
      %1832 = vmatprep.subr.mxu0 0.0
      %1833 = vmatpush1.msra.mxu0 0.0
      %1834 = vmatprep.subr.mxu0 0.0
      %1835 = vmatpush1.msra.mxu0 0.0
      %1836 = vmatprep.subr.mxu0 0.0
      %1837 = vmatpush1.msra.mxu0 0.0
      %1838 = vmatprep.subr.mxu0 0.0
      %1839 = vmatpush1.msra.mxu0 0.0
      %1840 = vmatprep.subr.mxu0 0.0
      %1841 = vmatpush1.msra.mxu0 0.0
      %1842 = vmatprep.subr.mxu0 0.0
      %1843 = vmatpush1.msra.mxu0 0.0
      %1844 = vmatprep.subr.mxu0 0.0
      %1845 = vmatpush1.msra.mxu0 0.0
      %1846 = vmatprep.subr.mxu0 0.0
      %1847 = vmatpush1.msra.mxu0 0.0
      %1848 = vmatprep.subr.mxu0 0.0
      %1849 = vmatpush1.msra.mxu0 0.0
      %1850 = vmatprep.mubr.f32.mxu0 0.0
      %1851 = vmatmul.mubr.f32.gmra.mrb[0].mxu0 %v1689
      %v1852 = vpop.f32.mrb[0].mxu0
      %v1853 = vadd.f32 0.0, %v1852
      %v1854 = vpop.f32.mrb[0].mxu0
      %1855 = vmatprep.mubr.f32.mxu0 0.0
      %1856 = vmatmul.mubr.f32.gmra.mrb[0].mxu0 %v1692
      %v1857 = vpop.f32.mrb[0].mxu0
      %v1858 = vadd.f32 0.0, %v1857
      %v1859 = vpop.f32.mrb[0].mxu0
      %1860 = vmatprep.mubr.f32.mxu0 0.0
      %1861 = vmatmul.mubr.f32.gmra.mrb[0].mxu0 %v1695
      %v1862 = vpop.f32.mrb[0].mxu0
      %v1863 = vadd.f32 0.0, %v1862
      %v1864 = vpop.f32.mrb[0].mxu0
      %1865 = vmatprep.mubr.f32.mxu0 0.0
      %1866 = vmatmul.mubr.f32.gmra.mrb[0].mxu0 %v1698
      %v1867 = vpop.f32.mrb[0].mxu0
      %v1868 = vadd.f32 0.0, %v1867
      %v1869 = vpop.f32.mrb[0].mxu0
      %1870 = vmatprep.mubr.f32.mxu0 0.0
      %1871 = vmatmul.mubr.f32.gmra.mrb[0].mxu0 %v1701
      %v1872 = vpop.f32.mrb[0].mxu0
      %v1873 = vadd.f32 0.0, %v1872
      %v1874 = vpop.f32.mrb[0].mxu0
      %1875 = vmatprep.mubr.f32.mxu0 0.0
      %1876 = vmatmul.mubr.f32.gmra.mrb[0].mxu0 %v1704
      %v1877 = vpop.f32.mrb[0].mxu0
      %v1878 = vadd.f32 0.0, %v1877
      %v1879 = vpop.f32.mrb[0].mxu0
      %1880 = vmatprep.mubr.f32.mxu0 0.0
      %1881 = vmatmul.mubr.f32.gmra.mrb[0].mxu0 %v1707
      %v1882 = vpop.f32.mrb[0].mxu0
      %v1883 = vadd.f32 0.0, %v1882
      %v1884 = vpop.f32.mrb[0].mxu0
      %1885 = vmatprep.mubr.f32.mxu0 0.0
      %1886 = vmatmul.mubr.f32.gmra.mrb[0].mxu0 %v1710
      %v1887 = vpop.f32.mrb[0].mxu0
      %v1888 = vadd.f32 0.0, %v1887
      %v1889 = vpop.f32.mrb[0].mxu0
      %1890 = vmatprep.mubr.f32.mxu0 0.0
      %1891 = vmatmul.mubr.f32.gmra.mrb[0].mxu0 %v1713
      %v1892 = vpop.f32.mrb[0].mxu0
      %v1893 = vadd.f32 0.0, %v1892
      %v1894 = vpop.f32.mrb[0].mxu0
      %1895 = vmatprep.mubr.f32.mxu0 0.0
      %1896 = vmatmul.mubr.f32.gmra.mrb[0].mxu0 %v1716
      %v1897 = vpop.f32.mrb[0].mxu0
      %v1898 = vadd.f32 0.0, %v1897
      %v1899 = vpop.f32.mrb[0].mxu0
      %1900 = vmatprep.mubr.f32.mxu0 0.0
      %1901 = vmatmul.mubr.f32.gmra.mrb[0].mxu0 %v1719
      %v1902 = vpop.f32.mrb[0].mxu0
      %v1903 = vadd.f32 0.0, %v1902
      %v1904 = vpop.f32.mrb[0].mxu0
      %1905 = vmatprep.mubr.f32.mxu0 0.0
      %1906 = vmatmul.mubr.f32.gmra.mrb[0].mxu0 %v1722
      %v1907 = vpop.f32.mrb[0].mxu0
      %v1908 = vadd.f32 0.0, %v1907
      %v1909 = vpop.f32.mrb[0].mxu0
      %1910 = vmatprep.mubr.f32.mxu0 0.0
      %1911 = vmatmul.mubr.f32.gmra.mrb[0].mxu0 %v1725
      %v1912 = vpop.f32.mrb[0].mxu0
      %v1913 = vadd.f32 0.0, %v1912
      %v1914 = vpop.f32.mrb[0].mxu0
      %1915 = vmatprep.mubr.f32.mxu0 0.0
      %1916 = vmatmul.mubr.f32.gmra.mrb[0].mxu0 %v1728
      %v1917 = vpop.f32.mrb[0].mxu0
      %v1918 = vadd.f32 0.0, %v1917
      %v1919 = vpop.f32.mrb[0].mxu0
      %1920 = vmatprep.mubr.f32.mxu0 0.0
      %1921 = vmatmul.mubr.f32.gmra.mrb[0].mxu0 %v1731
      %v1922 = vpop.f32.mrb[0].mxu0
      %v1923 = vadd.f32 0.0, %v1922
      %v1924 = vpop.f32.mrb[0].mxu0
      %1925 = vmatprep.mubr.f32.mxu0 0.0
      %1926 = vmatmul.mubr.f32.gmra.mrb[0].mxu0 %v1734
      %v1927 = vpop.f32.mrb[0].mxu0
      %v1928 = vadd.f32 0.0, %v1927
      %v1929 = vpop.f32.mrb[0].mxu0
      %1930 = vmatprep.mubr.f32.mxu0 0.0
      %1931 = vmatmul.mubr.f32.gmra.mrb[0].mxu0 %v1737
      %v1932 = vpop.f32.mrb[0].mxu0
      %v1933 = vadd.f32 0.0, %v1932
      %v1934 = vpop.f32.mrb[0].mxu0
      %1935 = vmatprep.mubr.f32.mxu0 0.0
      %1936 = vmatmul.mubr.f32.gmra.mrb[0].mxu0 %v1740
      %v1937 = vpop.f32.mrb[0].mxu0
      %v1938 = vadd.f32 0.0, %v1937
      %v1939 = vpop.f32.mrb[0].mxu0
      %1940 = vmatprep.mubr.f32.mxu0 0.0
      %1941 = vmatmul.mubr.f32.gmra.mrb[0].mxu0 %v1743
      %v1942 = vpop.f32.mrb[0].mxu0
      %v1943 = vadd.f32 0.0, %v1942
      %v1944 = vpop.f32.mrb[0].mxu0
      %1945 = vmatprep.mubr.f32.mxu0 0.0
      %1946 = vmatmul.mubr.f32.gmra.mrb[0].mxu0 %v1746
      %v1947 = vpop.f32.mrb[0].mxu0
      %v1948 = vadd.f32 0.0, %v1947
      %v1949 = vpop.f32.mrb[0].mxu0
      %1950 = vmatprep.mubr.f32.mxu0 0.0
      %1951 = vmatmul.mubr.f32.gmra.mrb[0].mxu0 %v1749
      %v1952 = vpop.f32.mrb[0].mxu0
      %v1953 = vadd.f32 0.0, %v1952
      %v1954 = vpop.f32.mrb[0].mxu0
      %1955 = vmatprep.mubr.f32.mxu0 0.0
      %1956 = vmatmul.mubr.f32.gmra.mrb[0].mxu0 %v1752
      %v1957 = vpop.f32.mrb[0].mxu0
      %v1958 = vadd.f32 0.0, %v1957
      %v1959 = vpop.f32.mrb[0].mxu0
      %1960 = vmatprep.mubr.f32.mxu0 0.0
      %1961 = vmatmul.mubr.f32.gmra.mrb[0].mxu0 %v1755
      %v1962 = vpop.f32.mrb[0].mxu0
      %v1963 = vadd.f32 0.0, %v1962
      %v1964 = vpop.f32.mrb[0].mxu0
      %1965 = vmatprep.mubr.f32.mxu0 0.0
      %1966 = vmatmul.mubr.f32.gmra.mrb[0].mxu0 %v1758
      %v1967 = vpop.f32.mrb[0].mxu0
      %v1968 = vadd.f32 0.0, %v1967
      %v1969 = vpop.f32.mrb[0].mxu0
      %1970 = vmatprep.mubr.f32.mxu0 0.0
      %1971 = vmatmul.mubr.f32.gmra.mrb[0].mxu0 %v1761
      %v1972 = vpop.f32.mrb[0].mxu0
      %v1973 = vadd.f32 0.0, %v1972
      %v1974 = vpop.f32.mrb[0].mxu0
      %1975 = vmatprep.mubr.f32.mxu0 0.0
      %1976 = vmatmul.mubr.f32.gmra.mrb[0].mxu0 %v1764
      %v1977 = vpop.f32.mrb[0].mxu0
      %v1978 = vadd.f32 0.0, %v1977
      %v1979 = vpop.f32.mrb[0].mxu0
      %1980 = vmatprep.mubr.f32.mxu0 0.0
      %1981 = vmatmul.mubr.f32.gmra.mrb[0].mxu0 %v1767
      %v1982 = vpop.f32.mrb[0].mxu0
      %v1983 = vadd.f32 0.0, %v1982
      %v1984 = vpop.f32.mrb[0].mxu0
      %1985 = vmatprep.mubr.f32.mxu0 0.0
      %1986 = vmatmul.mubr.f32.gmra.mrb[0].mxu0 %v1770
      %v1987 = vpop.f32.mrb[0].mxu0
      %v1988 = vadd.f32 0.0, %v1987
      %v1989 = vpop.f32.mrb[0].mxu0
      %1990 = vmatprep.mubr.f32.mxu0 0.0
      %1991 = vmatmul.mubr.f32.gmra.mrb[0].mxu0 %v1773
      %v1992 = vpop.f32.mrb[0].mxu0
      %v1993 = vadd.f32 0.0, %v1992
      %v1994 = vpop.f32.mrb[0].mxu0
      %1995 = vmatprep.mubr.f32.mxu0 0.0
      %1996 = vmatmul.mubr.f32.gmra.mrb[0].mxu0 %v1776
      %v1997 = vpop.f32.mrb[0].mxu0
      %v1998 = vadd.f32 0.0, %v1997
      %v1999 = vpop.f32.mrb[0].mxu0
      %2000 = vmatprep.mubr.f32.mxu0 0.0
      %2001 = vmatmul.mubr.f32.gmra.mrb[0].mxu0 %v1779
      %v2002 = vpop.f32.mrb[0].mxu0
      %v2003 = vadd.f32 0.0, %v2002
      %v2004 = vpop.f32.mrb[0].mxu0
      %2005 = vmatprep.mubr.f32.mxu0 0.0
      %2006 = vmatmul.mubr.f32.gmra.mrb[0].mxu0 %v1782
      %v2007 = vpop.f32.mrb[0].mxu0
      %v2008 = vadd.f32 0.0, %v2007
      %v2009 = vpop.f32.mrb[0].mxu0
      %2010 = vdwg.mxu0
      %v2011 = vmax.f32 %v1853, %v1873
      %v2012 = vmax.f32 %v1858, %v1878
      %v2013 = vmax.f32 %v1863, %v1883
      %v2014 = vmax.f32 %v1868, %v1888
      %v2015 = vmax.f32 %v2011, %v1893
      %v2016 = vmax.f32 %v2012, %v1898
      %v2017 = vmax.f32 %v2013, %v1903
      %v2018 = vmax.f32 %v2014, %v1908
      %v2019 = vmax.f32 %v2015, %v1913
      %v2020 = vmax.f32 %v2016, %v1918
      %v2021 = vmax.f32 %v2017, %v1923
      %v2022 = vmax.f32 %v2018, %v1928
      %v2023 = vmax.f32 %v2019, %v1933
      %v2024 = vmax.f32 %v2020, %v1938
      %v2025 = vmax.f32 %v2021, %v1943
      %v2026 = vmax.f32 %v2022, %v1948
      %v2027 = vmax.f32 %v2023, %v1953
      %v2028 = vmax.f32 %v2024, %v1958
      %v2029 = vmax.f32 %v2025, %v1963
      %v2030 = vmax.f32 %v2026, %v1968
      %v2031 = vmax.f32 %v2027, %v1973
      %v2032 = vmax.f32 %v2028, %v1978
      %v2033 = vmax.f32 %v2029, %v1983
      %v2034 = vmax.f32 %v2030, %v1988
      %v2035 = vmax.f32 %v2031, %v1993
      %v2036 = vmax.f32 %v2032, %v1998
      %v2037 = vmax.f32 %v2033, %v2003
      %v2038 = vmax.f32 %v2034, %v2008
      %v2039 = vmax.f32 %v2035, %v2036
      %v2040 = vmax.f32 %v2037, %v2038
      %v2041 = vmax.f32 %v2039, %v2040
      %v2042 = vrot.slane %v2041, 4
      %v2043 = vmax.f32 %v2041, %v2042
      %v2044 = vrot.slane %v2043, 2
      %v2045 = vmax.f32 %v2043, %v2044
      %v2046 = vrot.slane %v2045, 1
      %v2047 = vmax.f32 %v2045, %v2046
      %v2048 = vsub.f32 %v1853, %v2047
      %v2049 = vsub.f32 %v1858, %v2047
      %v2050 = vsub.f32 %v1863, %v2047
      %v2051 = vsub.f32 %v1868, %v2047
      %v2052 = vsub.f32 %v1873, %v2047
      %v2053 = vsub.f32 %v1878, %v2047
      %v2054 = vsub.f32 %v1883, %v2047
      %v2055 = vsub.f32 %v1888, %v2047
      %v2056 = vsub.f32 %v1893, %v2047
      %v2057 = vsub.f32 %v1898, %v2047
      %v2058 = vsub.f32 %v1903, %v2047
      %v2059 = vsub.f32 %v1908, %v2047
      %v2060 = vsub.f32 %v1913, %v2047
      %v2061 = vsub.f32 %v1918, %v2047
      %v2062 = vsub.f32 %v1923, %v2047
      %v2063 = vsub.f32 %v1928, %v2047
      %v2064 = vsub.f32 %v1933, %v2047
      %v2065 = vsub.f32 %v1938, %v2047
      %v2066 = vsub.f32 %v1943, %v2047
      %v2067 = vsub.f32 %v1948, %v2047
      %v2068 = vsub.f32 %v1953, %v2047
      %v2069 = vsub.f32 %v1958, %v2047
      %v2070 = vsub.f32 %v1963, %v2047
      %v2071 = vsub.f32 %v1968, %v2047
      %v2072 = vsub.f32 %v1973, %v2047
      %v2073 = vsub.f32 %v1978, %v2047
      %v2074 = vsub.f32 %v1983, %v2047
      %v2075 = vsub.f32 %v1988, %v2047
      %v2076 = vsub.f32 %v1993, %v2047
      %v2077 = vsub.f32 %v1998, %v2047
      %v2078 = vsub.f32 %v2003, %v2047
      %v2079 = vsub.f32 %v2008, %v2047
      %v2080 = vmul.f32 %v2048, 1.442695
      %v2081 = vpow.pop %v2080
      %v2082 = vmul.f32 %v2049, 1.442695
      %v2083 = vpow.pop %v2082
      %v2084 = vmul.f32 %v2050, 1.442695
      %v2085 = vpow.pop %v2084
      %v2086 = vmul.f32 %v2051, 1.442695
      %v2087 = vpow.pop %v2086
      %v2088 = vmul.f32 %v2052, 1.442695
      %v2089 = vpow.pop %v2088
      %v2090 = vmul.f32 %v2053, 1.442695
      %v2091 = vpow.pop %v2090
      %v2092 = vmul.f32 %v2054, 1.442695
      %v2093 = vpow.pop %v2092
      %v2094 = vmul.f32 %v2055, 1.442695
      %v2095 = vpow.pop %v2094
      %v2096 = vmul.f32 %v2056, 1.442695
      %v2097 = vpow.pop %v2096
      %v2098 = vmul.f32 %v2057, 1.442695
      %v2099 = vpow.pop %v2098
      %v2100 = vmul.f32 %v2058, 1.442695
      %v2101 = vpow.pop %v2100
      %v2102 = vmul.f32 %v2059, 1.442695
      %v2103 = vpow.pop %v2102
      %v2104 = vmul.f32 %v2060, 1.442695
      %v2105 = vpow.pop %v2104
      %v2106 = vmul.f32 %v2061, 1.442695
      %v2107 = vpow.pop %v2106
      %v2108 = vmul.f32 %v2062, 1.442695
      %v2109 = vpow.pop %v2108
      %v2110 = vmul.f32 %v2063, 1.442695
      %v2111 = vpow.pop %v2110
      %v2112 = vmul.f32 %v2064, 1.442695
      %v2113 = vpow.pop %v2112
      %v2114 = vmul.f32 %v2065, 1.442695
      %v2115 = vpow.pop %v2114
      %v2116 = vmul.f32 %v2066, 1.442695
      %v2117 = vpow.pop %v2116
      %v2118 = vmul.f32 %v2067, 1.442695
      %v2119 = vpow.pop %v2118
      %v2120 = vmul.f32 %v2068, 1.442695
      %v2121 = vpow.pop %v2120
      %v2122 = vmul.f32 %v2069, 1.442695
      %v2123 = vpow.pop %v2122
      %v2124 = vmul.f32 %v2070, 1.442695
      %v2125 = vpow.pop %v2124
      %v2126 = vmul.f32 %v2071, 1.442695
      %v2127 = vpow.pop %v2126
      %v2128 = vmul.f32 %v2072, 1.442695
      %v2129 = vpow.pop %v2128
      %v2130 = vmul.f32 %v2073, 1.442695
      %v2131 = vpow.pop %v2130
      %v2132 = vmul.f32 %v2074, 1.442695
      %v2133 = vpow.pop %v2132
      %v2134 = vmul.f32 %v2075, 1.442695
      %v2135 = vpow.pop %v2134
      %v2136 = vmul.f32 %v2076, 1.442695
      %v2137 = vpow.pop %v2136
      %v2138 = vmul.f32 %v2077, 1.442695
      %v2139 = vpow.pop %v2138
      %v2140 = vmul.f32 %v2078, 1.442695
      %v2141 = vpow.pop %v2140
      %v2142 = vmul.f32 %v2079, 1.442695
      %v2143 = vpow.pop %v2142
      %vm2148 = vcmask 1042432
      %v2149 = vrot.slane %v1612, 5
      %v2150 = vrot.slane %v1614, 5
      %v2151 = vsel %vm2148, %v2149, %v2150
      %v2152 = vrot.slane %v1613, 5
      %v2153 = vrot.slane %v1615, 5
      %v2154 = vsel %vm2148, %v2152, %v2153
      %2157 = vmatprep.subr.mxu0 0.0
      %2158 = vmatpush1.msra.mxu0 %v2081
      %2159 = vmatprep.subr.mxu0 0.0
      %2160 = vmatpush1.msra.mxu0 %v2083
      %2161 = vmatprep.subr.mxu0 0.0
      %2162 = vmatpush1.msra.mxu0 %v2085
      %2163 = vmatprep.subr.mxu0 0.0
      %2164 = vmatpush1.msra.mxu0 %v2087
      %2165 = vmatprep.subr.mxu0 0.0
      %2166 = vmatpush1.msra.mxu0 %v2089
      %2167 = vmatprep.subr.mxu0 0.0
      %2168 = vmatpush1.msra.mxu0 %v2091
      %2169 = vmatprep.subr.mxu0 0.0
      %2170 = vmatpush1.msra.mxu0 %v2093
      %2171 = vmatprep.subr.mxu0 0.0
      %2172 = vmatpush1.msra.mxu0 %v2095
      %2173 = vmatprep.subr.mxu0 0.0
      %2174 = vmatpush1.msra.mxu0 %v2097
      %2175 = vmatprep.subr.mxu0 0.0
      %2176 = vmatpush1.msra.mxu0 %v2099
      %2177 = vmatprep.subr.mxu0 0.0
      %2178 = vmatpush1.msra.mxu0 %v2101
      %2179 = vmatprep.subr.mxu0 0.0
      %2180 = vmatpush1.msra.mxu0 %v2103
      %2181 = vmatprep.subr.mxu0 0.0
      %2182 = vmatpush1.msra.mxu0 %v2105
      %2183 = vmatprep.subr.mxu0 0.0
      %2184 = vmatpush1.msra.mxu0 %v2107
      %2185 = vmatprep.subr.mxu0 0.0
      %2186 = vmatpush1.msra.mxu0 %v2109
      %2187 = vmatprep.subr.mxu0 0.0
      %2188 = vmatpush1.msra.mxu0 %v2111
      %2189 = vmatprep.subr.mxu0 0.0
      %2190 = vmatpush1.msra.mxu0 %v2113
      %2191 = vmatprep.subr.mxu0 0.0
      %2192 = vmatpush1.msra.mxu0 %v2115
      %2193 = vmatprep.subr.mxu0 0.0
      %2194 = vmatpush1.msra.mxu0 %v2117
      %2195 = vmatprep.subr.mxu0 0.0
      %2196 = vmatpush1.msra.mxu0 %v2119
      %2197 = vmatprep.subr.mxu0 0.0
      %2198 = vmatpush1.msra.mxu0 %v2121
      %2199 = vmatprep.subr.mxu0 0.0
      %2200 = vmatpush1.msra.mxu0 %v2123
      %2201 = vmatprep.subr.mxu0 0.0
      %2202 = vmatpush1.msra.mxu0 %v2125
      %2203 = vmatprep.subr.mxu0 0.0
      %2204 = vmatpush1.msra.mxu0 %v2127
      %2205 = vmatprep.subr.mxu0 0.0
      %2206 = vmatpush1.msra.mxu0 %v2129
      %2207 = vmatprep.subr.mxu0 0.0
      %2208 = vmatpush1.msra.mxu0 %v2131
      %2209 = vmatprep.subr.mxu0 0.0
      %2210 = vmatpush1.msra.mxu0 %v2133
      %2211 = vmatprep.subr.mxu0 0.0
      %2212 = vmatpush1.msra.mxu0 %v2135
      %2213 = vmatprep.subr.mxu0 0.0
      %2214 = vmatpush1.msra.mxu0 %v2137
      %2215 = vmatprep.subr.mxu0 0.0
      %2216 = vmatpush1.msra.mxu0 %v2139
      %2217 = vmatprep.subr.mxu0 0.0
      %2218 = vmatpush1.msra.mxu0 %v2141
      %2219 = vmatprep.subr.mxu0 0.0
      %2220 = vmatpush1.msra.mxu0 %v2143
      %2221 = vmatprep.mubr.f32.mxu0 %v2154
      %2222 = vmatmul.mubr.f32.gmra.mrb[0].mxu0 %v2151
      %v2223 = vpop.f32.mrb[0].mxu0
      %v2224 = vadd.f32 0.0, %v2223
      %v2225 = vpop.f32.mrb[0].mxu0
      %2226 = vdwg.mxu0
      %v2227 = vrcp.pop %v2224
      %v2228 = vmul.f32 1.0, %v2227
      %v2229 = vlaneseq
      %v2230 = vshrl.u32 %v2229, 7
      %v2231 = vsub.s32 4, %v2230
      %v2232 = vrot.slane %v2228, %v2231
      %v2233 = vmul.f32 %v2224, %v2232
      %v2235 = vrot.slane %v2233, 4
      %2237 = vst [vmem:[#allocation3] sm:$0xf0] %v2235
      %v2239 = vrot.slane %v1611, 4
      %v2240 = vsel %vm729, %v2239, 0
      %2242 = vmatprep.subr.mxu0 0.0
      %2243 = vmatpush1.msra.mxu0 %v2240
      %2244 = vmatprep.subr.mxu0 0.0
      %2245 = vmatpush1.msra.mxu0 0.0
      %2246 = vmatprep.subr.mxu0 0.0
      %2247 = vmatpush1.msra.mxu0 0.0
      %2248 = vmatprep.subr.mxu0 0.0
      %2249 = vmatpush1.msra.mxu0 0.0
      %2250 = vmatprep.subr.mxu0 0.0
      %2251 = vmatpush1.msra.mxu0 0.0
      %2252 = vmatprep.subr.mxu0 0.0
      %2253 = vmatpush1.msra.mxu0 0.0
      %2254 = vmatprep.subr.mxu0 0.0
      %2255 = vmatpush1.msra.mxu0 0.0
      %2256 = vmatprep.subr.mxu0 0.0
      %2257 = vmatpush1.msra.mxu0 0.0
      %2258 = vmatprep.subr.mxu0 0.0
      %2259 = vmatpush1.msra.mxu0 0.0
      %2260 = vmatprep.subr.mxu0 0.0
      %2261 = vmatpush1.msra.mxu0 0.0
      %2262 = vmatprep.subr.mxu0 0.0
      %2263 = vmatpush1.msra.mxu0 0.0
      %2264 = vmatprep.subr.mxu0 0.0
      %2265 = vmatpush1.msra.mxu0 0.0
      %2266 = vmatprep.subr.mxu0 0.0
      %2267 = vmatpush1.msra.mxu0 0.0
      %2268 = vmatprep.subr.mxu0 0.0
      %2269 = vmatpush1.msra.mxu0 0.0
      %2270 = vmatprep.subr.mxu0 0.0
      %2271 = vmatpush1.msra.mxu0 0.0
      %2272 = vmatprep.subr.mxu0 0.0
      %2273 = vmatpush1.msra.mxu0 0.0
      %2274 = vmatprep.subr.mxu0 0.0
      %2275 = vmatpush1.msra.mxu0 0.0
      %2276 = vmatprep.subr.mxu0 0.0
      %2277 = vmatpush1.msra.mxu0 0.0
      %2278 = vmatprep.subr.mxu0 0.0
      %2279 = vmatpush1.msra.mxu0 0.0
      %2280 = vmatprep.subr.mxu0 0.0
      %2281 = vmatpush1.msra.mxu0 0.0
      %2282 = vmatprep.subr.mxu0 0.0
      %2283 = vmatpush1.msra.mxu0 0.0
      %2284 = vmatprep.subr.mxu0 0.0
      %2285 = vmatpush1.msra.mxu0 0.0
      %2286 = vmatprep.subr.mxu0 0.0
      %2287 = vmatpush1.msra.mxu0 0.0
      %2288 = vmatprep.subr.mxu0 0.0
      %2289 = vmatpush1.msra.mxu0 0.0
      %2290 = vmatprep.subr.mxu0 0.0
      %2291 = vmatpush1.msra.mxu0 0.0
      %2292 = vmatprep.subr.mxu0 0.0
      %2293 = vmatpush1.msra.mxu0 0.0
      %2294 = vmatprep.subr.mxu0 0.0
      %2295 = vmatpush1.msra.mxu0 0.0
      %2296 = vmatprep.subr.mxu0 0.0
      %2297 = vmatpush1.msra.mxu0 0.0
      %2298 = vmatprep.subr.mxu0 0.0
      %2299 = vmatpush1.msra.mxu0 0.0
      %2300 = vmatprep.subr.mxu0 0.0
      %2301 = vmatpush1.msra.mxu0 0.0
      %2302 = vmatprep.subr.mxu0 0.0
      %2303 = vmatpush1.msra.mxu0 0.0
      %2304 = vmatprep.subr.mxu0 0.0
      %2305 = vmatpush1.msra.mxu0 0.0
      %2306 = vmatprep.mubr.f32.mxu0 0.0
      %2307 = vmatmul.mubr.f32.gmra.mrb[0].mxu0 %v1689
      %v2308 = vpop.f32.mrb[0].mxu0
      %v2309 = vadd.f32 0.0, %v2308
      %v2310 = vpop.f32.mrb[0].mxu0
      %2311 = vmatprep.mubr.f32.mxu0 0.0
      %2312 = vmatmul.mubr.f32.gmra.mrb[0].mxu0 %v1692
      %v2313 = vpop.f32.mrb[0].mxu0
      %v2314 = vadd.f32 0.0, %v2313
      %v2315 = vpop.f32.mrb[0].mxu0
      %2316 = vmatprep.mubr.f32.mxu0 0.0
      %2317 = vmatmul.mubr.f32.gmra.mrb[0].mxu0 %v1695
      %v2318 = vpop.f32.mrb[0].mxu0
      %v2319 = vadd.f32 0.0, %v2318
      %v2320 = vpop.f32.mrb[0].mxu0
      %2321 = vmatprep.mubr.f32.mxu0 0.0
      %2322 = vmatmul.mubr.f32.gmra.mrb[0].mxu0 %v1698
      %v2323 = vpop.f32.mrb[0].mxu0
      %v2324 = vadd.f32 0.0, %v2323
      %v2325 = vpop.f32.mrb[0].mxu0
      %2326 = vmatprep.mubr.f32.mxu0 0.0
      %2327 = vmatmul.mubr.f32.gmra.mrb[0].mxu0 %v1701
      %v2328 = vpop.f32.mrb[0].mxu0
      %v2329 = vadd.f32 0.0, %v2328
      %v2330 = vpop.f32.mrb[0].mxu0
      %2331 = vmatprep.mubr.f32.mxu0 0.0
      %2332 = vmatmul.mubr.f32.gmra.mrb[0].mxu0 %v1704
      %v2333 = vpop.f32.mrb[0].mxu0
      %v2334 = vadd.f32 0.0, %v2333
      %v2335 = vpop.f32.mrb[0].mxu0
      %2336 = vmatprep.mubr.f32.mxu0 0.0
      %2337 = vmatmul.mubr.f32.gmra.mrb[0].mxu0 %v1707
      %v2338 = vpop.f32.mrb[0].mxu0
      %v2339 = vadd.f32 0.0, %v2338
      %v2340 = vpop.f32.mrb[0].mxu0
      %2341 = vmatprep.mubr.f32.mxu0 0.0
      %2342 = vmatmul.mubr.f32.gmra.mrb[0].mxu0 %v1710
      %v2343 = vpop.f32.mrb[0].mxu0
      %v2344 = vadd.f32 0.0, %v2343
      %v2345 = vpop.f32.mrb[0].mxu0
      %2346 = vmatprep.mubr.f32.mxu0 0.0
      %2347 = vmatmul.mubr.f32.gmra.mrb[0].mxu0 %v1713
      %v2348 = vpop.f32.mrb[0].mxu0
      %v2349 = vadd.f32 0.0, %v2348
      %v2350 = vpop.f32.mrb[0].mxu0
      %2351 = vmatprep.mubr.f32.mxu0 0.0
      %2352 = vmatmul.mubr.f32.gmra.mrb[0].mxu0 %v1716
      %v2353 = vpop.f32.mrb[0].mxu0
      %v2354 = vadd.f32 0.0, %v2353
      %v2355 = vpop.f32.mrb[0].mxu0
      %2356 = vmatprep.mubr.f32.mxu0 0.0
      %2357 = vmatmul.mubr.f32.gmra.mrb[0].mxu0 %v1719
      %v2358 = vpop.f32.mrb[0].mxu0
      %v2359 = vadd.f32 0.0, %v2358
      %v2360 = vpop.f32.mrb[0].mxu0
      %2361 = vmatprep.mubr.f32.mxu0 0.0
      %2362 = vmatmul.mubr.f32.gmra.mrb[0].mxu0 %v1722
      %v2363 = vpop.f32.mrb[0].mxu0
      %v2364 = vadd.f32 0.0, %v2363
      %v2365 = vpop.f32.mrb[0].mxu0
      %2366 = vmatprep.mubr.f32.mxu0 0.0
      %2367 = vmatmul.mubr.f32.gmra.mrb[0].mxu0 %v1725
      %v2368 = vpop.f32.mrb[0].mxu0
      %v2369 = vadd.f32 0.0, %v2368
      %v2370 = vpop.f32.mrb[0].mxu0
      %2371 = vmatprep.mubr.f32.mxu0 0.0
      %2372 = vmatmul.mubr.f32.gmra.mrb[0].mxu0 %v1728
      %v2373 = vpop.f32.mrb[0].mxu0
      %v2374 = vadd.f32 0.0, %v2373
      %v2375 = vpop.f32.mrb[0].mxu0
      %2376 = vmatprep.mubr.f32.mxu0 0.0
      %2377 = vmatmul.mubr.f32.gmra.mrb[0].mxu0 %v1731
      %v2378 = vpop.f32.mrb[0].mxu0
      %v2379 = vadd.f32 0.0, %v2378
      %v2380 = vpop.f32.mrb[0].mxu0
      %2381 = vmatprep.mubr.f32.mxu0 0.0
      %2382 = vmatmul.mubr.f32.gmra.mrb[0].mxu0 %v1734
      %v2383 = vpop.f32.mrb[0].mxu0
      %v2384 = vadd.f32 0.0, %v2383
      %v2385 = vpop.f32.mrb[0].mxu0
      %2386 = vmatprep.mubr.f32.mxu0 0.0
      %2387 = vmatmul.mubr.f32.gmra.mrb[0].mxu0 %v1737
      %v2388 = vpop.f32.mrb[0].mxu0
      %v2389 = vadd.f32 0.0, %v2388
      %v2390 = vpop.f32.mrb[0].mxu0
      %2391 = vmatprep.mubr.f32.mxu0 0.0
      %2392 = vmatmul.mubr.f32.gmra.mrb[0].mxu0 %v1740
      %v2393 = vpop.f32.mrb[0].mxu0
      %v2394 = vadd.f32 0.0, %v2393
      %v2395 = vpop.f32.mrb[0].mxu0
      %2396 = vmatprep.mubr.f32.mxu0 0.0
      %2397 = vmatmul.mubr.f32.gmra.mrb[0].mxu0 %v1743
      %v2398 = vpop.f32.mrb[0].mxu0
      %v2399 = vadd.f32 0.0, %v2398
      %v2400 = vpop.f32.mrb[0].mxu0
      %2401 = vmatprep.mubr.f32.mxu0 0.0
      %2402 = vmatmul.mubr.f32.gmra.mrb[0].mxu0 %v1746
      %v2403 = vpop.f32.mrb[0].mxu0
      %v2404 = vadd.f32 0.0, %v2403
      %v2405 = vpop.f32.mrb[0].mxu0
      %2406 = vmatprep.mubr.f32.mxu0 0.0
      %2407 = vmatmul.mubr.f32.gmra.mrb[0].mxu0 %v1749
      %v2408 = vpop.f32.mrb[0].mxu0
      %v2409 = vadd.f32 0.0, %v2408
      %v2410 = vpop.f32.mrb[0].mxu0
      %2411 = vmatprep.mubr.f32.mxu0 0.0
      %2412 = vmatmul.mubr.f32.gmra.mrb[0].mxu0 %v1752
      %v2413 = vpop.f32.mrb[0].mxu0
      %v2414 = vadd.f32 0.0, %v2413
      %v2415 = vpop.f32.mrb[0].mxu0
      %2416 = vmatprep.mubr.f32.mxu0 0.0
      %2417 = vmatmul.mubr.f32.gmra.mrb[0].mxu0 %v1755
      %v2418 = vpop.f32.mrb[0].mxu0
      %v2419 = vadd.f32 0.0, %v2418
      %v2420 = vpop.f32.mrb[0].mxu0
      %2421 = vmatprep.mubr.f32.mxu0 0.0
      %2422 = vmatmul.mubr.f32.gmra.mrb[0].mxu0 %v1758
      %v2423 = vpop.f32.mrb[0].mxu0
      %v2424 = vadd.f32 0.0, %v2423
      %v2425 = vpop.f32.mrb[0].mxu0
      %2426 = vmatprep.mubr.f32.mxu0 0.0
      %2427 = vmatmul.mubr.f32.gmra.mrb[0].mxu0 %v1761
      %v2428 = vpop.f32.mrb[0].mxu0
      %v2429 = vadd.f32 0.0, %v2428
      %v2430 = vpop.f32.mrb[0].mxu0
      %2431 = vmatprep.mubr.f32.mxu0 0.0
      %2432 = vmatmul.mubr.f32.gmra.mrb[0].mxu0 %v1764
      %v2433 = vpop.f32.mrb[0].mxu0
      %v2434 = vadd.f32 0.0, %v2433
      %v2435 = vpop.f32.mrb[0].mxu0
      %2436 = vmatprep.mubr.f32.mxu0 0.0
      %2437 = vmatmul.mubr.f32.gmra.mrb[0].mxu0 %v1767
      %v2438 = vpop.f32.mrb[0].mxu0
      %v2439 = vadd.f32 0.0, %v2438
      %v2440 = vpop.f32.mrb[0].mxu0
      %2441 = vmatprep.mubr.f32.mxu0 0.0
      %2442 = vmatmul.mubr.f32.gmra.mrb[0].mxu0 %v1770
      %v2443 = vpop.f32.mrb[0].mxu0
      %v2444 = vadd.f32 0.0, %v2443
      %v2445 = vpop.f32.mrb[0].mxu0
      %2446 = vmatprep.mubr.f32.mxu0 0.0
      %2447 = vmatmul.mubr.f32.gmra.mrb[0].mxu0 %v1773
      %v2448 = vpop.f32.mrb[0].mxu0
      %v2449 = vadd.f32 0.0, %v2448
      %v2450 = vpop.f32.mrb[0].mxu0
      %2451 = vmatprep.mubr.f32.mxu0 0.0
      %2452 = vmatmul.mubr.f32.gmra.mrb[0].mxu0 %v1776
      %v2453 = vpop.f32.mrb[0].mxu0
      %v2454 = vadd.f32 0.0, %v2453
      %v2455 = vpop.f32.mrb[0].mxu0
      %2456 = vmatprep.mubr.f32.mxu0 0.0
      %2457 = vmatmul.mubr.f32.gmra.mrb[0].mxu0 %v1779
      %v2458 = vpop.f32.mrb[0].mxu0
      %v2459 = vadd.f32 0.0, %v2458
      %v2460 = vpop.f32.mrb[0].mxu0
      %2461 = vmatprep.mubr.f32.mxu0 0.0
      %2462 = vmatmul.mubr.f32.gmra.mrb[0].mxu0 %v1782
      %v2463 = vpop.f32.mrb[0].mxu0
      %v2464 = vadd.f32 0.0, %v2463
      %v2465 = vpop.f32.mrb[0].mxu0
      %2466 = vdwg.mxu0
      %v2467 = vmax.f32 %v2309, %v2329
      %v2468 = vmax.f32 %v2314, %v2334
      %v2469 = vmax.f32 %v2319, %v2339
      %v2470 = vmax.f32 %v2324, %v2344
      %v2471 = vmax.f32 %v2467, %v2349
      %v2472 = vmax.f32 %v2468, %v2354
      %v2473 = vmax.f32 %v2469, %v2359
      %v2474 = vmax.f32 %v2470, %v2364
      %v2475 = vmax.f32 %v2471, %v2369
      %v2476 = vmax.f32 %v2472, %v2374
      %v2477 = vmax.f32 %v2473, %v2379
      %v2478 = vmax.f32 %v2474, %v2384
      %v2479 = vmax.f32 %v2475, %v2389
      %v2480 = vmax.f32 %v2476, %v2394
      %v2481 = vmax.f32 %v2477, %v2399
      %v2482 = vmax.f32 %v2478, %v2404
      %v2483 = vmax.f32 %v2479, %v2409
      %v2484 = vmax.f32 %v2480, %v2414
      %v2485 = vmax.f32 %v2481, %v2419
      %v2486 = vmax.f32 %v2482, %v2424
      %v2487 = vmax.f32 %v2483, %v2429
      %v2488 = vmax.f32 %v2484, %v2434
      %v2489 = vmax.f32 %v2485, %v2439
      %v2490 = vmax.f32 %v2486, %v2444
      %v2491 = vmax.f32 %v2487, %v2449
      %v2492 = vmax.f32 %v2488, %v2454
      %v2493 = vmax.f32 %v2489, %v2459
      %v2494 = vmax.f32 %v2490, %v2464
      %v2495 = vmax.f32 %v2491, %v2492
      %v2496 = vmax.f32 %v2493, %v2494
      %v2497 = vmax.f32 %v2495, %v2496
      %v2498 = vrot.slane %v2497, 4
      %v2499 = vmax.f32 %v2497, %v2498
      %v2500 = vrot.slane %v2499, 2
      %v2501 = vmax.f32 %v2499, %v2500
      %v2502 = vrot.slane %v2501, 1
      %v2503 = vmax.f32 %v2501, %v2502
      %v2504 = vsub.f32 %v2309, %v2503
      %v2505 = vsub.f32 %v2314, %v2503
      %v2506 = vsub.f32 %v2319, %v2503
      %v2507 = vsub.f32 %v2324, %v2503
      %v2508 = vsub.f32 %v2329, %v2503
      %v2509 = vsub.f32 %v2334, %v2503
      %v2510 = vsub.f32 %v2339, %v2503
      %v2511 = vsub.f32 %v2344, %v2503
      %v2512 = vsub.f32 %v2349, %v2503
      %v2513 = vsub.f32 %v2354, %v2503
      %v2514 = vsub.f32 %v2359, %v2503
      %v2515 = vsub.f32 %v2364, %v2503
      %v2516 = vsub.f32 %v2369, %v2503
      %v2517 = vsub.f32 %v2374, %v2503
      %v2518 = vsub.f32 %v2379, %v2503
      %v2519 = vsub.f32 %v2384, %v2503
      %v2520 = vsub.f32 %v2389, %v2503
      %v2521 = vsub.f32 %v2394, %v2503
      %v2522 = vsub.f32 %v2399, %v2503
      %v2523 = vsub.f32 %v2404, %v2503
      %v2524 = vsub.f32 %v2409, %v2503
      %v2525 = vsub.f32 %v2414, %v2503
      %v2526 = vsub.f32 %v2419, %v2503
      %v2527 = vsub.f32 %v2424, %v2503
      %v2528 = vsub.f32 %v2429, %v2503
      %v2529 = vsub.f32 %v2434, %v2503
      %v2530 = vsub.f32 %v2439, %v2503
      %v2531 = vsub.f32 %v2444, %v2503
      %v2532 = vsub.f32 %v2449, %v2503
      %v2533 = vsub.f32 %v2454, %v2503
      %v2534 = vsub.f32 %v2459, %v2503
      %v2535 = vsub.f32 %v2464, %v2503
      %v2536 = vmul.f32 %v2504, 1.442695
      %v2537 = vpow.pop %v2536
      %v2538 = vmul.f32 %v2505, 1.442695
      %v2539 = vpow.pop %v2538
      %v2540 = vmul.f32 %v2506, 1.442695
      %v2541 = vpow.pop %v2540
      %v2542 = vmul.f32 %v2507, 1.442695
      %v2543 = vpow.pop %v2542
      %v2544 = vmul.f32 %v2508, 1.442695
      %v2545 = vpow.pop %v2544
      %v2546 = vmul.f32 %v2509, 1.442695
      %v2547 = vpow.pop %v2546
      %v2548 = vmul.f32 %v2510, 1.442695
      %v2549 = vpow.pop %v2548
      %v2550 = vmul.f32 %v2511, 1.442695
      %v2551 = vpow.pop %v2550
      %v2552 = vmul.f32 %v2512, 1.442695
      %v2553 = vpow.pop %v2552
      %v2554 = vmul.f32 %v2513, 1.442695
      %v2555 = vpow.pop %v2554
      %v2556 = vmul.f32 %v2514, 1.442695
      %v2557 = vpow.pop %v2556
      %v2558 = vmul.f32 %v2515, 1.442695
      %v2559 = vpow.pop %v2558
      %v2560 = vmul.f32 %v2516, 1.442695
      %v2561 = vpow.pop %v2560
      %v2562 = vmul.f32 %v2517, 1.442695
      %v2563 = vpow.pop %v2562
      %v2564 = vmul.f32 %v2518, 1.442695
      %v2565 = vpow.pop %v2564
      %v2566 = vmul.f32 %v2519, 1.442695
      %v2567 = vpow.pop %v2566
      %v2568 = vmul.f32 %v2520, 1.442695
      %v2569 = vpow.pop %v2568
      %v2570 = vmul.f32 %v2521, 1.442695
      %v2571 = vpow.pop %v2570
      %v2572 = vmul.f32 %v2522, 1.442695
      %v2573 = vpow.pop %v2572
      %v2574 = vmul.f32 %v2523, 1.442695
      %v2575 = vpow.pop %v2574
      %v2576 = vmul.f32 %v2524, 1.442695
      %v2577 = vpow.pop %v2576
      %v2578 = vmul.f32 %v2525, 1.442695
      %v2579 = vpow.pop %v2578
      %v2580 = vmul.f32 %v2526, 1.442695
      %v2581 = vpow.pop %v2580
      %v2582 = vmul.f32 %v2527, 1.442695
      %v2583 = vpow.pop %v2582
      %v2584 = vmul.f32 %v2528, 1.442695
      %v2585 = vpow.pop %v2584
      %v2586 = vmul.f32 %v2529, 1.442695
      %v2587 = vpow.pop %v2586
      %v2588 = vmul.f32 %v2530, 1.442695
      %v2589 = vpow.pop %v2588
      %v2590 = vmul.f32 %v2531, 1.442695
      %v2591 = vpow.pop %v2590
      %v2592 = vmul.f32 %v2532, 1.442695
      %v2593 = vpow.pop %v2592
      %v2594 = vmul.f32 %v2533, 1.442695
      %v2595 = vpow.pop %v2594
      %v2596 = vmul.f32 %v2534, 1.442695
      %v2597 = vpow.pop %v2596
      %v2598 = vmul.f32 %v2535, 1.442695
      %v2599 = vpow.pop %v2598
      %2600 = vmatprep.subr.mxu0 0.0
      %2601 = vmatpush1.msra.mxu0 %v2537
      %2602 = vmatprep.subr.mxu0 0.0
      %2603 = vmatpush1.msra.mxu0 %v2539
      %2604 = vmatprep.subr.mxu0 0.0
      %2605 = vmatpush1.msra.mxu0 %v2541
      %2606 = vmatprep.subr.mxu0 0.0
      %2607 = vmatpush1.msra.mxu0 %v2543
      %2608 = vmatprep.subr.mxu0 0.0
      %2609 = vmatpush1.msra.mxu0 %v2545
      %2610 = vmatprep.subr.mxu0 0.0
      %2611 = vmatpush1.msra.mxu0 %v2547
      %2612 = vmatprep.subr.mxu0 0.0
      %2613 = vmatpush1.msra.mxu0 %v2549
      %2614 = vmatprep.subr.mxu0 0.0
      %2615 = vmatpush1.msra.mxu0 %v2551
      %2616 = vmatprep.subr.mxu0 0.0
      %2617 = vmatpush1.msra.mxu0 %v2553
      %2618 = vmatprep.subr.mxu0 0.0
      %2619 = vmatpush1.msra.mxu0 %v2555
      %2620 = vmatprep.subr.mxu0 0.0
      %2621 = vmatpush1.msra.mxu0 %v2557
      %2622 = vmatprep.subr.mxu0 0.0
      %2623 = vmatpush1.msra.mxu0 %v2559
      %2624 = vmatprep.subr.mxu0 0.0
      %2625 = vmatpush1.msra.mxu0 %v2561
      %2626 = vmatprep.subr.mxu0 0.0
      %2627 = vmatpush1.msra.mxu0 %v2563
      %2628 = vmatprep.subr.mxu0 0.0
      %2629 = vmatpush1.msra.mxu0 %v2565
      %2630 = vmatprep.subr.mxu0 0.0
      %2631 = vmatpush1.msra.mxu0 %v2567
      %2632 = vmatprep.subr.mxu0 0.0
      %2633 = vmatpush1.msra.mxu0 %v2569
      %2634 = vmatprep.subr.mxu0 0.0
      %2635 = vmatpush1.msra.mxu0 %v2571
      %2636 = vmatprep.subr.mxu0 0.0
      %2637 = vmatpush1.msra.mxu0 %v2573
      %2638 = vmatprep.subr.mxu0 0.0
      %2639 = vmatpush1.msra.mxu0 %v2575
      %2640 = vmatprep.subr.mxu0 0.0
      %2641 = vmatpush1.msra.mxu0 %v2577
      %2642 = vmatprep.subr.mxu0 0.0
      %2643 = vmatpush1.msra.mxu0 %v2579
      %2644 = vmatprep.subr.mxu0 0.0
      %2645 = vmatpush1.msra.mxu0 %v2581
      %2646 = vmatprep.subr.mxu0 0.0
      %2647 = vmatpush1.msra.mxu0 %v2583
      %2648 = vmatprep.subr.mxu0 0.0
      %2649 = vmatpush1.msra.mxu0 %v2585
      %2650 = vmatprep.subr.mxu0 0.0
      %2651 = vmatpush1.msra.mxu0 %v2587
      %2652 = vmatprep.subr.mxu0 0.0
      %2653 = vmatpush1.msra.mxu0 %v2589
      %2654 = vmatprep.subr.mxu0 0.0
      %2655 = vmatpush1.msra.mxu0 %v2591
      %2656 = vmatprep.subr.mxu0 0.0
      %2657 = vmatpush1.msra.mxu0 %v2593
      %2658 = vmatprep.subr.mxu0 0.0
      %2659 = vmatpush1.msra.mxu0 %v2595
      %2660 = vmatprep.subr.mxu0 0.0
      %2661 = vmatpush1.msra.mxu0 %v2597
      %2662 = vmatprep.subr.mxu0 0.0
      %2663 = vmatpush1.msra.mxu0 %v2599
      %2664 = vmatprep.mubr.f32.mxu0 %v2154
      %2665 = vmatmul.mubr.f32.gmra.mrb[0].mxu0 %v2151
      %v2666 = vpop.f32.mrb[0].mxu0
      %v2667 = vadd.f32 0.0, %v2666
      %v2668 = vpop.f32.mrb[0].mxu0
      %2669 = vdwg.mxu0
      %v2670 = vrcp.pop %v2667
      %v2671 = vmul.f32 1.0, %v2670
      %v2672 = vlaneseq
      %v2673 = vshrl.u32 %v2672, 7
      %v2674 = vsub.s32 4, %v2673
      %v2675 = vrot.slane %v2671, %v2674
      %v2676 = vmul.f32 %v2667, %v2675
      %v2678 = vrot.slane %v2676, 4
      %2680 = vst [vmem:[#allocation3 + $0x8] sm:$0xf0] %v2678
      %v2681 = vld [vmem:[#allocation2 + $0x10] sm:$0xf]
      %v2682 = vld [vmem:[#allocation2 + $0x18] sm:$0xf]
      %v2683 = vld [vmem:[#allocation2 + $0x50] sm:$0xf]
      %v2684 = vld [vmem:[#allocation2 + $0x58] sm:$0xf]
      %v2685 = vld [vmem:[#allocation2 + $0x90] sm:$0x7c]
      %v2686 = vld [vmem:[#allocation2 + $0x98] sm:$0x7c]
      %2687 = vxpose.xlu0.b32.start [1/16] %v2681, 128
      %2688 = vxpose.xlu0.b32.cont [2/16] 0.0, 128
      %2689 = vxpose.xlu0.b32.cont [3/16] 0.0, 128
      %2690 = vxpose.xlu0.b32.cont [4/16] 0.0, 128
      %2691 = vxpose.xlu0.b32.cont [5/16] 0.0, 128
      %2692 = vxpose.xlu0.b32.cont [6/16] 0.0, 128
      %2693 = vxpose.xlu0.b32.cont [7/16] 0.0, 128
      %2694 = vxpose.xlu0.b32.cont [8/16] 0.0, 128
      %2695 = vxpose.xlu0.b32.cont [9/16] 0.0, 128
      %2696 = vxpose.xlu0.b32.cont [10/16] 0.0, 128
      %2697 = vxpose.xlu0.b32.cont [11/16] 0.0, 128
      %2698 = vxpose.xlu0.b32.cont [12/16] 0.0, 128
      %2699 = vxpose.xlu0.b32.cont [13/16] 0.0, 128
      %2700 = vxpose.xlu0.b32.cont [14/16] 0.0, 128
      %2701 = vxpose.xlu0.b32.cont [15/16] 0.0, 128
      %2702 = vxpose.xlu0.b32.end [16/16] 0.0, 128
      %v2703 = vpop.trf.xlu0
      %v2704 = vpop.trf.xlu0
      %v2705 = vpop.trf.xlu0
      %v2706 = vpop.trf.xlu0
      %v2707 = vpop.trf.xlu0
      %v2708 = vpop.trf.xlu0
      %v2709 = vpop.trf.xlu0
      %v2710 = vpop.trf.xlu0
      %v2711 = vpop.trf.xlu0
      %v2712 = vpop.trf.xlu0
      %v2713 = vpop.trf.xlu0
      %v2714 = vpop.trf.xlu0
      %v2715 = vpop.trf.xlu0
      %v2716 = vpop.trf.xlu0
      %v2717 = vpop.trf.xlu0
      %v2718 = vpop.trf.xlu0
      %2719 = vxpose.xlu0.b32.start [1/16] %v2682, 128
      %2720 = vxpose.xlu0.b32.cont [2/16] 0.0, 128
      %2721 = vxpose.xlu0.b32.cont [3/16] 0.0, 128
      %2722 = vxpose.xlu0.b32.cont [4/16] 0.0, 128
      %2723 = vxpose.xlu0.b32.cont [5/16] 0.0, 128
      %2724 = vxpose.xlu0.b32.cont [6/16] 0.0, 128
      %2725 = vxpose.xlu0.b32.cont [7/16] 0.0, 128
      %2726 = vxpose.xlu0.b32.cont [8/16] 0.0, 128
      %2727 = vxpose.xlu0.b32.cont [9/16] 0.0, 128
      %2728 = vxpose.xlu0.b32.cont [10/16] 0.0, 128
      %2729 = vxpose.xlu0.b32.cont [11/16] 0.0, 128
      %2730 = vxpose.xlu0.b32.cont [12/16] 0.0, 128
      %2731 = vxpose.xlu0.b32.cont [13/16] 0.0, 128
      %2732 = vxpose.xlu0.b32.cont [14/16] 0.0, 128
      %2733 = vxpose.xlu0.b32.cont [15/16] 0.0, 128
      %2734 = vxpose.xlu0.b32.end [16/16] 0.0, 128
      %v2735 = vpop.trf.xlu0
      %v2736 = vpop.trf.xlu0
      %v2737 = vpop.trf.xlu0
      %v2738 = vpop.trf.xlu0
      %v2739 = vpop.trf.xlu0
      %v2740 = vpop.trf.xlu0
      %v2741 = vpop.trf.xlu0
      %v2742 = vpop.trf.xlu0
      %v2743 = vpop.trf.xlu0
      %v2744 = vpop.trf.xlu0
      %v2745 = vpop.trf.xlu0
      %v2746 = vpop.trf.xlu0
      %v2747 = vpop.trf.xlu0
      %v2748 = vpop.trf.xlu0
      %v2749 = vpop.trf.xlu0
      %v2750 = vpop.trf.xlu0
      %v2752 = vsel %vm632, %v2703, 0
      %v2755 = vsel %vm632, %v2704, 0
      %v2758 = vsel %vm632, %v2705, 0
      %v2761 = vsel %vm632, %v2706, 0
      %v2764 = vsel %vm632, %v2707, 0
      %v2767 = vsel %vm632, %v2708, 0
      %v2770 = vsel %vm632, %v2709, 0
      %v2773 = vsel %vm632, %v2710, 0
      %v2776 = vsel %vm632, %v2711, 0
      %v2779 = vsel %vm632, %v2712, 0
      %v2782 = vsel %vm632, %v2713, 0
      %v2785 = vsel %vm632, %v2714, 0
      %v2788 = vsel %vm632, %v2715, 0
      %v2791 = vsel %vm632, %v2716, 0
      %v2794 = vsel %vm632, %v2717, 0
      %v2797 = vsel %vm632, %v2718, 0
      %v2800 = vsel %vm632, %v2735, 0
      %v2803 = vsel %vm632, %v2736, 0
      %v2806 = vsel %vm632, %v2737, 0
      %v2809 = vsel %vm632, %v2738, 0
      %v2812 = vsel %vm632, %v2739, 0
      %v2815 = vsel %vm632, %v2740, 0
      %v2818 = vsel %vm632, %v2741, 0
      %v2821 = vsel %vm632, %v2742, 0
      %v2824 = vsel %vm632, %v2743, 0
      %v2827 = vsel %vm632, %v2744, 0
      %v2830 = vsel %vm632, %v2745, 0
      %v2833 = vsel %vm632, %v2746, 0
      %v2836 = vsel %vm632, %v2747, 0
      %v2839 = vsel %vm632, %v2748, 0
      %v2842 = vsel %vm632, %v2749, 0
      %v2845 = vsel %vm632, %v2750, 0
      %v2848 = vsel %vm729, %v2683, 0
      %2850 = vmatprep.subr.mxu0 0.0
      %2851 = vmatpush1.msra.mxu0 %v2848
      %2852 = vmatprep.subr.mxu0 0.0
      %2853 = vmatpush1.msra.mxu0 0.0
      %2854 = vmatprep.subr.mxu0 0.0
      %2855 = vmatpush1.msra.mxu0 0.0
      %2856 = vmatprep.subr.mxu0 0.0
      %2857 = vmatpush1.msra.mxu0 0.0
      %2858 = vmatprep.subr.mxu0 0.0
      %2859 = vmatpush1.msra.mxu0 0.0
      %2860 = vmatprep.subr.mxu0 0.0
      %2861 = vmatpush1.msra.mxu0 0.0
      %2862 = vmatprep.subr.mxu0 0.0
      %2863 = vmatpush1.msra.mxu0 0.0
      %2864 = vmatprep.subr.mxu0 0.0
      %2865 = vmatpush1.msra.mxu0 0.0
      %2866 = vmatprep.subr.mxu0 0.0
      %2867 = vmatpush1.msra.mxu0 0.0
      %2868 = vmatprep.subr.mxu0 0.0
      %2869 = vmatpush1.msra.mxu0 0.0
      %2870 = vmatprep.subr.mxu0 0.0
      %2871 = vmatpush1.msra.mxu0 0.0
      %2872 = vmatprep.subr.mxu0 0.0
      %2873 = vmatpush1.msra.mxu0 0.0
      %2874 = vmatprep.subr.mxu0 0.0
      %2875 = vmatpush1.msra.mxu0 0.0
      %2876 = vmatprep.subr.mxu0 0.0
      %2877 = vmatpush1.msra.mxu0 0.0
      %2878 = vmatprep.subr.mxu0 0.0
      %2879 = vmatpush1.msra.mxu0 0.0
      %2880 = vmatprep.subr.mxu0 0.0
      %2881 = vmatpush1.msra.mxu0 0.0
      %2882 = vmatprep.subr.mxu0 0.0
      %2883 = vmatpush1.msra.mxu0 0.0
      %2884 = vmatprep.subr.mxu0 0.0
      %2885 = vmatpush1.msra.mxu0 0.0
      %2886 = vmatprep.subr.mxu0 0.0
      %2887 = vmatpush1.msra.mxu0 0.0
      %2888 = vmatprep.subr.mxu0 0.0
      %2889 = vmatpush1.msra.mxu0 0.0
      %2890 = vmatprep.subr.mxu0 0.0
      %2891 = vmatpush1.msra.mxu0 0.0
      %2892 = vmatprep.subr.mxu0 0.0
      %2893 = vmatpush1.msra.mxu0 0.0
      %2894 = vmatprep.subr.mxu0 0.0
      %2895 = vmatpush1.msra.mxu0 0.0
      %2896 = vmatprep.subr.mxu0 0.0
      %2897 = vmatpush1.msra.mxu0 0.0
      %2898 = vmatprep.subr.mxu0 0.0
      %2899 = vmatpush1.msra.mxu0 0.0
      %2900 = vmatprep.subr.mxu0 0.0
      %2901 = vmatpush1.msra.mxu0 0.0
      %2902 = vmatprep.subr.mxu0 0.0
      %2903 = vmatpush1.msra.mxu0 0.0
      %2904 = vmatprep.subr.mxu0 0.0
      %2905 = vmatpush1.msra.mxu0 0.0
      %2906 = vmatprep.subr.mxu0 0.0
      %2907 = vmatpush1.msra.mxu0 0.0
      %2908 = vmatprep.subr.mxu0 0.0
      %2909 = vmatpush1.msra.mxu0 0.0
      %2910 = vmatprep.subr.mxu0 0.0
      %2911 = vmatpush1.msra.mxu0 0.0
      %2912 = vmatprep.subr.mxu0 0.0
      %2913 = vmatpush1.msra.mxu0 0.0
      %2914 = vmatprep.mubr.f32.mxu0 0.0
      %2915 = vmatmul.mubr.f32.gmra.mrb[0].mxu0 %v2752
      %v2916 = vpop.f32.mrb[0].mxu0
      %v2917 = vadd.f32 0.0, %v2916
      %v2918 = vpop.f32.mrb[0].mxu0
      %2919 = vmatprep.mubr.f32.mxu0 0.0
      %2920 = vmatmul.mubr.f32.gmra.mrb[0].mxu0 %v2755
      %v2921 = vpop.f32.mrb[0].mxu0
      %v2922 = vadd.f32 0.0, %v2921
      %v2923 = vpop.f32.mrb[0].mxu0
      %2924 = vmatprep.mubr.f32.mxu0 0.0
      %2925 = vmatmul.mubr.f32.gmra.mrb[0].mxu0 %v2758
      %v2926 = vpop.f32.mrb[0].mxu0
      %v2927 = vadd.f32 0.0, %v2926
      %v2928 = vpop.f32.mrb[0].mxu0
      %2929 = vmatprep.mubr.f32.mxu0 0.0
      %2930 = vmatmul.mubr.f32.gmra.mrb[0].mxu0 %v2761
      %v2931 = vpop.f32.mrb[0].mxu0
      %v2932 = vadd.f32 0.0, %v2931
      %v2933 = vpop.f32.mrb[0].mxu0
      %2934 = vmatprep.mubr.f32.mxu0 0.0
      %2935 = vmatmul.mubr.f32.gmra.mrb[0].mxu0 %v2764
      %v2936 = vpop.f32.mrb[0].mxu0
      %v2937 = vadd.f32 0.0, %v2936
      %v2938 = vpop.f32.mrb[0].mxu0
      %2939 = vmatprep.mubr.f32.mxu0 0.0
      %2940 = vmatmul.mubr.f32.gmra.mrb[0].mxu0 %v2767
      %v2941 = vpop.f32.mrb[0].mxu0
      %v2942 = vadd.f32 0.0, %v2941
      %v2943 = vpop.f32.mrb[0].mxu0
      %2944 = vmatprep.mubr.f32.mxu0 0.0
      %2945 = vmatmul.mubr.f32.gmra.mrb[0].mxu0 %v2770
      %v2946 = vpop.f32.mrb[0].mxu0
      %v2947 = vadd.f32 0.0, %v2946
      %v2948 = vpop.f32.mrb[0].mxu0
      %2949 = vmatprep.mubr.f32.mxu0 0.0
      %2950 = vmatmul.mubr.f32.gmra.mrb[0].mxu0 %v2773
      %v2951 = vpop.f32.mrb[0].mxu0
      %v2952 = vadd.f32 0.0, %v2951
      %v2953 = vpop.f32.mrb[0].mxu0
      %2954 = vmatprep.mubr.f32.mxu0 0.0
      %2955 = vmatmul.mubr.f32.gmra.mrb[0].mxu0 %v2776
      %v2956 = vpop.f32.mrb[0].mxu0
      %v2957 = vadd.f32 0.0, %v2956
      %v2958 = vpop.f32.mrb[0].mxu0
      %2959 = vmatprep.mubr.f32.mxu0 0.0
      %2960 = vmatmul.mubr.f32.gmra.mrb[0].mxu0 %v2779
      %v2961 = vpop.f32.mrb[0].mxu0
      %v2962 = vadd.f32 0.0, %v2961
      %v2963 = vpop.f32.mrb[0].mxu0
      %2964 = vmatprep.mubr.f32.mxu0 0.0
      %2965 = vmatmul.mubr.f32.gmra.mrb[0].mxu0 %v2782
      %v2966 = vpop.f32.mrb[0].mxu0
      %v2967 = vadd.f32 0.0, %v2966
      %v2968 = vpop.f32.mrb[0].mxu0
      %2969 = vmatprep.mubr.f32.mxu0 0.0
      %2970 = vmatmul.mubr.f32.gmra.mrb[0].mxu0 %v2785
      %v2971 = vpop.f32.mrb[0].mxu0
      %v2972 = vadd.f32 0.0, %v2971
      %v2973 = vpop.f32.mrb[0].mxu0
      %2974 = vmatprep.mubr.f32.mxu0 0.0
      %2975 = vmatmul.mubr.f32.gmra.mrb[0].mxu0 %v2788
      %v2976 = vpop.f32.mrb[0].mxu0
      %v2977 = vadd.f32 0.0, %v2976
      %v2978 = vpop.f32.mrb[0].mxu0
      %2979 = vmatprep.mubr.f32.mxu0 0.0
      %2980 = vmatmul.mubr.f32.gmra.mrb[0].mxu0 %v2791
      %v2981 = vpop.f32.mrb[0].mxu0
      %v2982 = vadd.f32 0.0, %v2981
      %v2983 = vpop.f32.mrb[0].mxu0
      %2984 = vmatprep.mubr.f32.mxu0 0.0
      %2985 = vmatmul.mubr.f32.gmra.mrb[0].mxu0 %v2794
      %v2986 = vpop.f32.mrb[0].mxu0
      %v2987 = vadd.f32 0.0, %v2986
      %v2988 = vpop.f32.mrb[0].mxu0
      %2989 = vmatprep.mubr.f32.mxu0 0.0
      %2990 = vmatmul.mubr.f32.gmra.mrb[0].mxu0 %v2797
      %v2991 = vpop.f32.mrb[0].mxu0
      %v2992 = vadd.f32 0.0, %v2991
      %v2993 = vpop.f32.mrb[0].mxu0
      %2994 = vmatprep.mubr.f32.mxu0 0.0
      %2995 = vmatmul.mubr.f32.gmra.mrb[0].mxu0 %v2800
      %v2996 = vpop.f32.mrb[0].mxu0
      %v2997 = vadd.f32 0.0, %v2996
      %v2998 = vpop.f32.mrb[0].mxu0
      %2999 = vmatprep.mubr.f32.mxu0 0.0
      %3000 = vmatmul.mubr.f32.gmra.mrb[0].mxu0 %v2803
      %v3001 = vpop.f32.mrb[0].mxu0
      %v3002 = vadd.f32 0.0, %v3001
      %v3003 = vpop.f32.mrb[0].mxu0
      %3004 = vmatprep.mubr.f32.mxu0 0.0
      %3005 = vmatmul.mubr.f32.gmra.mrb[0].mxu0 %v2806
      %v3006 = vpop.f32.mrb[0].mxu0
      %v3007 = vadd.f32 0.0, %v3006
      %v3008 = vpop.f32.mrb[0].mxu0
      %3009 = vmatprep.mubr.f32.mxu0 0.0
      %3010 = vmatmul.mubr.f32.gmra.mrb[0].mxu0 %v2809
      %v3011 = vpop.f32.mrb[0].mxu0
      %v3012 = vadd.f32 0.0, %v3011
      %v3013 = vpop.f32.mrb[0].mxu0
      %3014 = vmatprep.mubr.f32.mxu0 0.0
      %3015 = vmatmul.mubr.f32.gmra.mrb[0].mxu0 %v2812
      %v3016 = vpop.f32.mrb[0].mxu0
      %v3017 = vadd.f32 0.0, %v3016
      %v3018 = vpop.f32.mrb[0].mxu0
      %3019 = vmatprep.mubr.f32.mxu0 0.0
      %3020 = vmatmul.mubr.f32.gmra.mrb[0].mxu0 %v2815
      %v3021 = vpop.f32.mrb[0].mxu0
      %v3022 = vadd.f32 0.0, %v3021
      %v3023 = vpop.f32.mrb[0].mxu0
      %3024 = vmatprep.mubr.f32.mxu0 0.0
      %3025 = vmatmul.mubr.f32.gmra.mrb[0].mxu0 %v2818
      %v3026 = vpop.f32.mrb[0].mxu0
      %v3027 = vadd.f32 0.0, %v3026
      %v3028 = vpop.f32.mrb[0].mxu0
      %3029 = vmatprep.mubr.f32.mxu0 0.0
      %3030 = vmatmul.mubr.f32.gmra.mrb[0].mxu0 %v2821
      %v3031 = vpop.f32.mrb[0].mxu0
      %v3032 = vadd.f32 0.0, %v3031
      %v3033 = vpop.f32.mrb[0].mxu0
      %3034 = vmatprep.mubr.f32.mxu0 0.0
      %3035 = vmatmul.mubr.f32.gmra.mrb[0].mxu0 %v2824
      %v3036 = vpop.f32.mrb[0].mxu0
      %v3037 = vadd.f32 0.0, %v3036
      %v3038 = vpop.f32.mrb[0].mxu0
      %3039 = vmatprep.mubr.f32.mxu0 0.0
      %3040 = vmatmul.mubr.f32.gmra.mrb[0].mxu0 %v2827
      %v3041 = vpop.f32.mrb[0].mxu0
      %v3042 = vadd.f32 0.0, %v3041
      %v3043 = vpop.f32.mrb[0].mxu0
      %3044 = vmatprep.mubr.f32.mxu0 0.0
      %3045 = vmatmul.mubr.f32.gmra.mrb[0].mxu0 %v2830
      %v3046 = vpop.f32.mrb[0].mxu0
      %v3047 = vadd.f32 0.0, %v3046
      %v3048 = vpop.f32.mrb[0].mxu0
      %3049 = vmatprep.mubr.f32.mxu0 0.0
      %3050 = vmatmul.mubr.f32.gmra.mrb[0].mxu0 %v2833
      %v3051 = vpop.f32.mrb[0].mxu0
      %v3052 = vadd.f32 0.0, %v3051
      %v3053 = vpop.f32.mrb[0].mxu0
      %3054 = vmatprep.mubr.f32.mxu0 0.0
      %3055 = vmatmul.mubr.f32.gmra.mrb[0].mxu0 %v2836
      %v3056 = vpop.f32.mrb[0].mxu0
      %v3057 = vadd.f32 0.0, %v3056
      %v3058 = vpop.f32.mrb[0].mxu0
      %3059 = vmatprep.mubr.f32.mxu0 0.0
      %3060 = vmatmul.mubr.f32.gmra.mrb[0].mxu0 %v2839
      %v3061 = vpop.f32.mrb[0].mxu0
      %v3062 = vadd.f32 0.0, %v3061
      %v3063 = vpop.f32.mrb[0].mxu0
      %3064 = vmatprep.mubr.f32.mxu0 0.0
      %3065 = vmatmul.mubr.f32.gmra.mrb[0].mxu0 %v2842
      %v3066 = vpop.f32.mrb[0].mxu0
      %v3067 = vadd.f32 0.0, %v3066
      %v3068 = vpop.f32.mrb[0].mxu0
      %3069 = vmatprep.mubr.f32.mxu0 0.0
      %3070 = vmatmul.mubr.f32.gmra.mrb[0].mxu0 %v2845
      %v3071 = vpop.f32.mrb[0].mxu0
      %v3072 = vadd.f32 0.0, %v3071
      %v3073 = vpop.f32.mrb[0].mxu0
      %3074 = vdwg.mxu0
      %v3075 = vmax.f32 %v2917, %v2937
      %v3076 = vmax.f32 %v2922, %v2942
      %v3077 = vmax.f32 %v2927, %v2947
      %v3078 = vmax.f32 %v2932, %v2952
      %v3079 = vmax.f32 %v3075, %v2957
      %v3080 = vmax.f32 %v3076, %v2962
      %v3081 = vmax.f32 %v3077, %v2967
      %v3082 = vmax.f32 %v3078, %v2972
      %v3083 = vmax.f32 %v3079, %v2977
      %v3084 = vmax.f32 %v3080, %v2982
      %v3085 = vmax.f32 %v3081, %v2987
      %v3086 = vmax.f32 %v3082, %v2992
      %v3087 = vmax.f32 %v3083, %v2997
      %v3088 = vmax.f32 %v3084, %v3002
      %v3089 = vmax.f32 %v3085, %v3007
      %v3090 = vmax.f32 %v3086, %v3012
      %v3091 = vmax.f32 %v3087, %v3017
      %v3092 = vmax.f32 %v3088, %v3022
      %v3093 = vmax.f32 %v3089, %v3027
      %v3094 = vmax.f32 %v3090, %v3032
      %v3095 = vmax.f32 %v3091, %v3037
      %v3096 = vmax.f32 %v3092, %v3042
      %v3097 = vmax.f32 %v3093, %v3047
      %v3098 = vmax.f32 %v3094, %v3052
      %v3099 = vmax.f32 %v3095, %v3057
      %v3100 = vmax.f32 %v3096, %v3062
      %v3101 = vmax.f32 %v3097, %v3067
      %v3102 = vmax.f32 %v3098, %v3072
      %v3103 = vmax.f32 %v3099, %v3100
      %v3104 = vmax.f32 %v3101, %v3102
      %v3105 = vmax.f32 %v3103, %v3104
      %v3106 = vrot.slane %v3105, 4
      %v3107 = vmax.f32 %v3105, %v3106
      %v3108 = vrot.slane %v3107, 2
      %v3109 = vmax.f32 %v3107, %v3108
      %v3110 = vrot.slane %v3109, 1
      %v3111 = vmax.f32 %v3109, %v3110
      %v3112 = vsub.f32 %v2917, %v3111
      %v3113 = vsub.f32 %v2922, %v3111
      %v3114 = vsub.f32 %v2927, %v3111
      %v3115 = vsub.f32 %v2932, %v3111
      %v3116 = vsub.f32 %v2937, %v3111
      %v3117 = vsub.f32 %v2942, %v3111
      %v3118 = vsub.f32 %v2947, %v3111
      %v3119 = vsub.f32 %v2952, %v3111
      %v3120 = vsub.f32 %v2957, %v3111
      %v3121 = vsub.f32 %v2962, %v3111
      %v3122 = vsub.f32 %v2967, %v3111
      %v3123 = vsub.f32 %v2972, %v3111
      %v3124 = vsub.f32 %v2977, %v3111
      %v3125 = vsub.f32 %v2982, %v3111
      %v3126 = vsub.f32 %v2987, %v3111
      %v3127 = vsub.f32 %v2992, %v3111
      %v3128 = vsub.f32 %v2997, %v3111
      %v3129 = vsub.f32 %v3002, %v3111
      %v3130 = vsub.f32 %v3007, %v3111
      %v3131 = vsub.f32 %v3012, %v3111
      %v3132 = vsub.f32 %v3017, %v3111
      %v3133 = vsub.f32 %v3022, %v3111
      %v3134 = vsub.f32 %v3027, %v3111
      %v3135 = vsub.f32 %v3032, %v3111
      %v3136 = vsub.f32 %v3037, %v3111
      %v3137 = vsub.f32 %v3042, %v3111
      %v3138 = vsub.f32 %v3047, %v3111
      %v3139 = vsub.f32 %v3052, %v3111
      %v3140 = vsub.f32 %v3057, %v3111
      %v3141 = vsub.f32 %v3062, %v3111
      %v3142 = vsub.f32 %v3067, %v3111
      %v3143 = vsub.f32 %v3072, %v3111
      %v3144 = vmul.f32 %v3112, 1.442695
      %v3145 = vpow.pop %v3144
      %v3146 = vmul.f32 %v3113, 1.442695
      %v3147 = vpow.pop %v3146
      %v3148 = vmul.f32 %v3114, 1.442695
      %v3149 = vpow.pop %v3148
      %v3150 = vmul.f32 %v3115, 1.442695
      %v3151 = vpow.pop %v3150
      %v3152 = vmul.f32 %v3116, 1.442695
      %v3153 = vpow.pop %v3152
      %v3154 = vmul.f32 %v3117, 1.442695
      %v3155 = vpow.pop %v3154
      %v3156 = vmul.f32 %v3118, 1.442695
      %v3157 = vpow.pop %v3156
      %v3158 = vmul.f32 %v3119, 1.442695
      %v3159 = vpow.pop %v3158
      %v3160 = vmul.f32 %v3120, 1.442695
      %v3161 = vpow.pop %v3160
      %v3162 = vmul.f32 %v3121, 1.442695
      %v3163 = vpow.pop %v3162
      %v3164 = vmul.f32 %v3122, 1.442695
      %v3165 = vpow.pop %v3164
      %v3166 = vmul.f32 %v3123, 1.442695
      %v3167 = vpow.pop %v3166
      %v3168 = vmul.f32 %v3124, 1.442695
      %v3169 = vpow.pop %v3168
      %v3170 = vmul.f32 %v3125, 1.442695
      %v3171 = vpow.pop %v3170
      %v3172 = vmul.f32 %v3126, 1.442695
      %v3173 = vpow.pop %v3172
      %v3174 = vmul.f32 %v3127, 1.442695
      %v3175 = vpow.pop %v3174
      %v3176 = vmul.f32 %v3128, 1.442695
      %v3177 = vpow.pop %v3176
      %v3178 = vmul.f32 %v3129, 1.442695
      %v3179 = vpow.pop %v3178
      %v3180 = vmul.f32 %v3130, 1.442695
      %v3181 = vpow.pop %v3180
      %v3182 = vmul.f32 %v3131, 1.442695
      %v3183 = vpow.pop %v3182
      %v3184 = vmul.f32 %v3132, 1.442695
      %v3185 = vpow.pop %v3184
      %v3186 = vmul.f32 %v3133, 1.442695
      %v3187 = vpow.pop %v3186
      %v3188 = vmul.f32 %v3134, 1.442695
      %v3189 = vpow.pop %v3188
      %v3190 = vmul.f32 %v3135, 1.442695
      %v3191 = vpow.pop %v3190
      %v3192 = vmul.f32 %v3136, 1.442695
      %v3193 = vpow.pop %v3192
      %v3194 = vmul.f32 %v3137, 1.442695
      %v3195 = vpow.pop %v3194
      %v3196 = vmul.f32 %v3138, 1.442695
      %v3197 = vpow.pop %v3196
      %v3198 = vmul.f32 %v3139, 1.442695
      %v3199 = vpow.pop %v3198
      %v3200 = vmul.f32 %v3140, 1.442695
      %v3201 = vpow.pop %v3200
      %v3202 = vmul.f32 %v3141, 1.442695
      %v3203 = vpow.pop %v3202
      %v3204 = vmul.f32 %v3142, 1.442695
      %v3205 = vpow.pop %v3204
      %v3206 = vmul.f32 %v3143, 1.442695
      %v3207 = vpow.pop %v3206
      %v3210 = vrot.slane %v2685, 2
      %v3211 = vrot.slane %v2686, 2
      %3214 = vmatprep.subr.mxu0 0.0
      %3215 = vmatpush1.msra.mxu0 %v3145
      %3216 = vmatprep.subr.mxu0 0.0
      %3217 = vmatpush1.msra.mxu0 %v3147
      %3218 = vmatprep.subr.mxu0 0.0
      %3219 = vmatpush1.msra.mxu0 %v3149
      %3220 = vmatprep.subr.mxu0 0.0
      %3221 = vmatpush1.msra.mxu0 %v3151
      %3222 = vmatprep.subr.mxu0 0.0
      %3223 = vmatpush1.msra.mxu0 %v3153
      %3224 = vmatprep.subr.mxu0 0.0
      %3225 = vmatpush1.msra.mxu0 %v3155
      %3226 = vmatprep.subr.mxu0 0.0
      %3227 = vmatpush1.msra.mxu0 %v3157
      %3228 = vmatprep.subr.mxu0 0.0
      %3229 = vmatpush1.msra.mxu0 %v3159
      %3230 = vmatprep.subr.mxu0 0.0
      %3231 = vmatpush1.msra.mxu0 %v3161
      %3232 = vmatprep.subr.mxu0 0.0
      %3233 = vmatpush1.msra.mxu0 %v3163
      %3234 = vmatprep.subr.mxu0 0.0
      %3235 = vmatpush1.msra.mxu0 %v3165
      %3236 = vmatprep.subr.mxu0 0.0
      %3237 = vmatpush1.msra.mxu0 %v3167
      %3238 = vmatprep.subr.mxu0 0.0
      %3239 = vmatpush1.msra.mxu0 %v3169
      %3240 = vmatprep.subr.mxu0 0.0
      %3241 = vmatpush1.msra.mxu0 %v3171
      %3242 = vmatprep.subr.mxu0 0.0
      %3243 = vmatpush1.msra.mxu0 %v3173
      %3244 = vmatprep.subr.mxu0 0.0
      %3245 = vmatpush1.msra.mxu0 %v3175
      %3246 = vmatprep.subr.mxu0 0.0
      %3247 = vmatpush1.msra.mxu0 %v3177
      %3248 = vmatprep.subr.mxu0 0.0
      %3249 = vmatpush1.msra.mxu0 %v3179
      %3250 = vmatprep.subr.mxu0 0.0
      %3251 = vmatpush1.msra.mxu0 %v3181
      %3252 = vmatprep.subr.mxu0 0.0
      %3253 = vmatpush1.msra.mxu0 %v3183
      %3254 = vmatprep.subr.mxu0 0.0
      %3255 = vmatpush1.msra.mxu0 %v3185
      %3256 = vmatprep.subr.mxu0 0.0
      %3257 = vmatpush1.msra.mxu0 %v3187
      %3258 = vmatprep.subr.mxu0 0.0
      %3259 = vmatpush1.msra.mxu0 %v3189
      %3260 = vmatprep.subr.mxu0 0.0
      %3261 = vmatpush1.msra.mxu0 %v3191
      %3262 = vmatprep.subr.mxu0 0.0
      %3263 = vmatpush1.msra.mxu0 %v3193
      %3264 = vmatprep.subr.mxu0 0.0
      %3265 = vmatpush1.msra.mxu0 %v3195
      %3266 = vmatprep.subr.mxu0 0.0
      %3267 = vmatpush1.msra.mxu0 %v3197
      %3268 = vmatprep.subr.mxu0 0.0
      %3269 = vmatpush1.msra.mxu0 %v3199
      %3270 = vmatprep.subr.mxu0 0.0
      %3271 = vmatpush1.msra.mxu0 %v3201
      %3272 = vmatprep.subr.mxu0 0.0
      %3273 = vmatpush1.msra.mxu0 %v3203
      %3274 = vmatprep.subr.mxu0 0.0
      %3275 = vmatpush1.msra.mxu0 %v3205
      %3276 = vmatprep.subr.mxu0 0.0
      %3277 = vmatpush1.msra.mxu0 %v3207
      %3278 = vmatprep.mubr.f32.mxu0 %v3211
      %3279 = vmatmul.mubr.f32.gmra.mrb[0].mxu0 %v3210
      %v3280 = vpop.f32.mrb[0].mxu0
      %v3281 = vadd.f32 0.0, %v3280
      %v3282 = vpop.f32.mrb[0].mxu0
      %3283 = vdwg.mxu0
      %v3284 = vrcp.pop %v3281
      %v3285 = vmul.f32 1.0, %v3284
      %v3286 = vlaneseq
      %v3287 = vshrl.u32 %v3286, 7
      %v3288 = vsub.s32 4, %v3287
      %v3289 = vrot.slane %v3285, %v3288
      %v3290 = vmul.f32 %v3281, %v3289
      %3291 = vst [vmem:[#allocation3 + $0x10] sm:$0xf] %v3290
      %v3293 = vsel %vm729, %v2684, 0
      %3295 = vmatprep.subr.mxu0 0.0
      %3296 = vmatpush1.msra.mxu0 %v3293
      %3297 = vmatprep.subr.mxu0 0.0
      %3298 = vmatpush1.msra.mxu0 0.0
      %3299 = vmatprep.subr.mxu0 0.0
      %3300 = vmatpush1.msra.mxu0 0.0
      %3301 = vmatprep.subr.mxu0 0.0
      %3302 = vmatpush1.msra.mxu0 0.0
      %3303 = vmatprep.subr.mxu0 0.0
      %3304 = vmatpush1.msra.mxu0 0.0
      %3305 = vmatprep.subr.mxu0 0.0
      %3306 = vmatpush1.msra.mxu0 0.0
      %3307 = vmatprep.subr.mxu0 0.0
      %3308 = vmatpush1.msra.mxu0 0.0
      %3309 = vmatprep.subr.mxu0 0.0
      %3310 = vmatpush1.msra.mxu0 0.0
      %3311 = vmatprep.subr.mxu0 0.0
      %3312 = vmatpush1.msra.mxu0 0.0
      %3313 = vmatprep.subr.mxu0 0.0
      %3314 = vmatpush1.msra.mxu0 0.0
      %3315 = vmatprep.subr.mxu0 0.0
      %3316 = vmatpush1.msra.mxu0 0.0
      %3317 = vmatprep.subr.mxu0 0.0
      %3318 = vmatpush1.msra.mxu0 0.0
      %3319 = vmatprep.subr.mxu0 0.0
      %3320 = vmatpush1.msra.mxu0 0.0
      %3321 = vmatprep.subr.mxu0 0.0
      %3322 = vmatpush1.msra.mxu0 0.0
      %3323 = vmatprep.subr.mxu0 0.0
      %3324 = vmatpush1.msra.mxu0 0.0
      %3325 = vmatprep.subr.mxu0 0.0
      %3326 = vmatpush1.msra.mxu0 0.0
      %3327 = vmatprep.subr.mxu0 0.0
      %3328 = vmatpush1.msra.mxu0 0.0
      %3329 = vmatprep.subr.mxu0 0.0
      %3330 = vmatpush1.msra.mxu0 0.0
      %3331 = vmatprep.subr.mxu0 0.0
      %3332 = vmatpush1.msra.mxu0 0.0
      %3333 = vmatprep.subr.mxu0 0.0
      %3334 = vmatpush1.msra.mxu0 0.0
      %3335 = vmatprep.subr.mxu0 0.0
      %3336 = vmatpush1.msra.mxu0 0.0
      %3337 = vmatprep.subr.mxu0 0.0
      %3338 = vmatpush1.msra.mxu0 0.0
      %3339 = vmatprep.subr.mxu0 0.0
      %3340 = vmatpush1.msra.mxu0 0.0
      %3341 = vmatprep.subr.mxu0 0.0
      %3342 = vmatpush1.msra.mxu0 0.0
      %3343 = vmatprep.subr.mxu0 0.0
      %3344 = vmatpush1.msra.mxu0 0.0
      %3345 = vmatprep.subr.mxu0 0.0
      %3346 = vmatpush1.msra.mxu0 0.0
      %3347 = vmatprep.subr.mxu0 0.0
      %3348 = vmatpush1.msra.mxu0 0.0
      %3349 = vmatprep.subr.mxu0 0.0
      %3350 = vmatpush1.msra.mxu0 0.0
      %3351 = vmatprep.subr.mxu0 0.0
      %3352 = vmatpush1.msra.mxu0 0.0
      %3353 = vmatprep.subr.mxu0 0.0
      %3354 = vmatpush1.msra.mxu0 0.0
      %3355 = vmatprep.subr.mxu0 0.0
      %3356 = vmatpush1.msra.mxu0 0.0
      %3357 = vmatprep.subr.mxu0 0.0
      %3358 = vmatpush1.msra.mxu0 0.0
      %3359 = vmatprep.mubr.f32.mxu0 0.0
      %3360 = vmatmul.mubr.f32.gmra.mrb[0].mxu0 %v2752
      %v3361 = vpop.f32.mrb[0].mxu0
      %v3362 = vadd.f32 0.0, %v3361
      %v3363 = vpop.f32.mrb[0].mxu0
      %3364 = vmatprep.mubr.f32.mxu0 0.0
      %3365 = vmatmul.mubr.f32.gmra.mrb[0].mxu0 %v2755
      %v3366 = vpop.f32.mrb[0].mxu0
      %v3367 = vadd.f32 0.0, %v3366
      %v3368 = vpop.f32.mrb[0].mxu0
      %3369 = vmatprep.mubr.f32.mxu0 0.0
      %3370 = vmatmul.mubr.f32.gmra.mrb[0].mxu0 %v2758
      %v3371 = vpop.f32.mrb[0].mxu0
      %v3372 = vadd.f32 0.0, %v3371
      %v3373 = vpop.f32.mrb[0].mxu0
      %3374 = vmatprep.mubr.f32.mxu0 0.0
      %3375 = vmatmul.mubr.f32.gmra.mrb[0].mxu0 %v2761
      %v3376 = vpop.f32.mrb[0].mxu0
      %v3377 = vadd.f32 0.0, %v3376
      %v3378 = vpop.f32.mrb[0].mxu0
      %3379 = vmatprep.mubr.f32.mxu0 0.0
      %3380 = vmatmul.mubr.f32.gmra.mrb[0].mxu0 %v2764
      %v3381 = vpop.f32.mrb[0].mxu0
      %v3382 = vadd.f32 0.0, %v3381
      %v3383 = vpop.f32.mrb[0].mxu0
      %3384 = vmatprep.mubr.f32.mxu0 0.0
      %3385 = vmatmul.mubr.f32.gmra.mrb[0].mxu0 %v2767
      %v3386 = vpop.f32.mrb[0].mxu0
      %v3387 = vadd.f32 0.0, %v3386
      %v3388 = vpop.f32.mrb[0].mxu0
      %3389 = vmatprep.mubr.f32.mxu0 0.0
      %3390 = vmatmul.mubr.f32.gmra.mrb[0].mxu0 %v2770
      %v3391 = vpop.f32.mrb[0].mxu0
      %v3392 = vadd.f32 0.0, %v3391
      %v3393 = vpop.f32.mrb[0].mxu0
      %3394 = vmatprep.mubr.f32.mxu0 0.0
      %3395 = vmatmul.mubr.f32.gmra.mrb[0].mxu0 %v2773
      %v3396 = vpop.f32.mrb[0].mxu0
      %v3397 = vadd.f32 0.0, %v3396
      %v3398 = vpop.f32.mrb[0].mxu0
      %3399 = vmatprep.mubr.f32.mxu0 0.0
      %3400 = vmatmul.mubr.f32.gmra.mrb[0].mxu0 %v2776
      %v3401 = vpop.f32.mrb[0].mxu0
      %v3402 = vadd.f32 0.0, %v3401
      %v3403 = vpop.f32.mrb[0].mxu0
      %3404 = vmatprep.mubr.f32.mxu0 0.0
      %3405 = vmatmul.mubr.f32.gmra.mrb[0].mxu0 %v2779
      %v3406 = vpop.f32.mrb[0].mxu0
      %v3407 = vadd.f32 0.0, %v3406
      %v3408 = vpop.f32.mrb[0].mxu0
      %3409 = vmatprep.mubr.f32.mxu0 0.0
      %3410 = vmatmul.mubr.f32.gmra.mrb[0].mxu0 %v2782
      %v3411 = vpop.f32.mrb[0].mxu0
      %v3412 = vadd.f32 0.0, %v3411
      %v3413 = vpop.f32.mrb[0].mxu0
      %3414 = vmatprep.mubr.f32.mxu0 0.0
      %3415 = vmatmul.mubr.f32.gmra.mrb[0].mxu0 %v2785
      %v3416 = vpop.f32.mrb[0].mxu0
      %v3417 = vadd.f32 0.0, %v3416
      %v3418 = vpop.f32.mrb[0].mxu0
      %3419 = vmatprep.mubr.f32.mxu0 0.0
      %3420 = vmatmul.mubr.f32.gmra.mrb[0].mxu0 %v2788
      %v3421 = vpop.f32.mrb[0].mxu0
      %v3422 = vadd.f32 0.0, %v3421
      %v3423 = vpop.f32.mrb[0].mxu0
      %3424 = vmatprep.mubr.f32.mxu0 0.0
      %3425 = vmatmul.mubr.f32.gmra.mrb[0].mxu0 %v2791
      %v3426 = vpop.f32.mrb[0].mxu0
      %v3427 = vadd.f32 0.0, %v3426
      %v3428 = vpop.f32.mrb[0].mxu0
      %3429 = vmatprep.mubr.f32.mxu0 0.0
      %3430 = vmatmul.mubr.f32.gmra.mrb[0].mxu0 %v2794
      %v3431 = vpop.f32.mrb[0].mxu0
      %v3432 = vadd.f32 0.0, %v3431
      %v3433 = vpop.f32.mrb[0].mxu0
      %3434 = vmatprep.mubr.f32.mxu0 0.0
      %3435 = vmatmul.mubr.f32.gmra.mrb[0].mxu0 %v2797
      %v3436 = vpop.f32.mrb[0].mxu0
      %v3437 = vadd.f32 0.0, %v3436
      %v3438 = vpop.f32.mrb[0].mxu0
      %3439 = vmatprep.mubr.f32.mxu0 0.0
      %3440 = vmatmul.mubr.f32.gmra.mrb[0].mxu0 %v2800
      %v3441 = vpop.f32.mrb[0].mxu0
      %v3442 = vadd.f32 0.0, %v3441
      %v3443 = vpop.f32.mrb[0].mxu0
      %3444 = vmatprep.mubr.f32.mxu0 0.0
      %3445 = vmatmul.mubr.f32.gmra.mrb[0].mxu0 %v2803
      %v3446 = vpop.f32.mrb[0].mxu0
      %v3447 = vadd.f32 0.0, %v3446
      %v3448 = vpop.f32.mrb[0].mxu0
      %3449 = vmatprep.mubr.f32.mxu0 0.0
      %3450 = vmatmul.mubr.f32.gmra.mrb[0].mxu0 %v2806
      %v3451 = vpop.f32.mrb[0].mxu0
      %v3452 = vadd.f32 0.0, %v3451
      %v3453 = vpop.f32.mrb[0].mxu0
      %3454 = vmatprep.mubr.f32.mxu0 0.0
      %3455 = vmatmul.mubr.f32.gmra.mrb[0].mxu0 %v2809
      %v3456 = vpop.f32.mrb[0].mxu0
      %v3457 = vadd.f32 0.0, %v3456
      %v3458 = vpop.f32.mrb[0].mxu0
      %3459 = vmatprep.mubr.f32.mxu0 0.0
      %3460 = vmatmul.mubr.f32.gmra.mrb[0].mxu0 %v2812
      %v3461 = vpop.f32.mrb[0].mxu0
      %v3462 = vadd.f32 0.0, %v3461
      %v3463 = vpop.f32.mrb[0].mxu0
      %3464 = vmatprep.mubr.f32.mxu0 0.0
      %3465 = vmatmul.mubr.f32.gmra.mrb[0].mxu0 %v2815
      %v3466 = vpop.f32.mrb[0].mxu0
      %v3467 = vadd.f32 0.0, %v3466
      %v3468 = vpop.f32.mrb[0].mxu0
      %3469 = vmatprep.mubr.f32.mxu0 0.0
      %3470 = vmatmul.mubr.f32.gmra.mrb[0].mxu0 %v2818
      %v3471 = vpop.f32.mrb[0].mxu0
      %v3472 = vadd.f32 0.0, %v3471
      %v3473 = vpop.f32.mrb[0].mxu0
      %3474 = vmatprep.mubr.f32.mxu0 0.0
      %3475 = vmatmul.mubr.f32.gmra.mrb[0].mxu0 %v2821
      %v3476 = vpop.f32.mrb[0].mxu0
      %v3477 = vadd.f32 0.0, %v3476
      %v3478 = vpop.f32.mrb[0].mxu0
      %3479 = vmatprep.mubr.f32.mxu0 0.0
      %3480 = vmatmul.mubr.f32.gmra.mrb[0].mxu0 %v2824
      %v3481 = vpop.f32.mrb[0].mxu0
      %v3482 = vadd.f32 0.0, %v3481
      %v3483 = vpop.f32.mrb[0].mxu0
      %3484 = vmatprep.mubr.f32.mxu0 0.0
      %3485 = vmatmul.mubr.f32.gmra.mrb[0].mxu0 %v2827
      %v3486 = vpop.f32.mrb[0].mxu0
      %v3487 = vadd.f32 0.0, %v3486
      %v3488 = vpop.f32.mrb[0].mxu0
      %3489 = vmatprep.mubr.f32.mxu0 0.0
      %3490 = vmatmul.mubr.f32.gmra.mrb[0].mxu0 %v2830
      %v3491 = vpop.f32.mrb[0].mxu0
      %v3492 = vadd.f32 0.0, %v3491
      %v3493 = vpop.f32.mrb[0].mxu0
      %3494 = vmatprep.mubr.f32.mxu0 0.0
      %3495 = vmatmul.mubr.f32.gmra.mrb[0].mxu0 %v2833
      %v3496 = vpop.f32.mrb[0].mxu0
      %v3497 = vadd.f32 0.0, %v3496
      %v3498 = vpop.f32.mrb[0].mxu0
      %3499 = vmatprep.mubr.f32.mxu0 0.0
      %3500 = vmatmul.mubr.f32.gmra.mrb[0].mxu0 %v2836
      %v3501 = vpop.f32.mrb[0].mxu0
      %v3502 = vadd.f32 0.0, %v3501
      %v3503 = vpop.f32.mrb[0].mxu0
      %3504 = vmatprep.mubr.f32.mxu0 0.0
      %3505 = vmatmul.mubr.f32.gmra.mrb[0].mxu0 %v2839
      %v3506 = vpop.f32.mrb[0].mxu0
      %v3507 = vadd.f32 0.0, %v3506
      %v3508 = vpop.f32.mrb[0].mxu0
      %3509 = vmatprep.mubr.f32.mxu0 0.0
      %3510 = vmatmul.mubr.f32.gmra.mrb[0].mxu0 %v2842
      %v3511 = vpop.f32.mrb[0].mxu0
      %v3512 = vadd.f32 0.0, %v3511
      %v3513 = vpop.f32.mrb[0].mxu0
      %3514 = vmatprep.mubr.f32.mxu0 0.0
      %3515 = vmatmul.mubr.f32.gmra.mrb[0].mxu0 %v2845
      %v3516 = vpop.f32.mrb[0].mxu0
      %v3517 = vadd.f32 0.0, %v3516
      %v3518 = vpop.f32.mrb[0].mxu0
      %3519 = vdwg.mxu0
      %v3520 = vmax.f32 %v3362, %v3382
      %v3521 = vmax.f32 %v3367, %v3387
      %v3522 = vmax.f32 %v3372, %v3392
      %v3523 = vmax.f32 %v3377, %v3397
      %v3524 = vmax.f32 %v3520, %v3402
      %v3525 = vmax.f32 %v3521, %v3407
      %v3526 = vmax.f32 %v3522, %v3412
      %v3527 = vmax.f32 %v3523, %v3417
      %v3528 = vmax.f32 %v3524, %v3422
      %v3529 = vmax.f32 %v3525, %v3427
      %v3530 = vmax.f32 %v3526, %v3432
      %v3531 = vmax.f32 %v3527, %v3437
      %v3532 = vmax.f32 %v3528, %v3442
      %v3533 = vmax.f32 %v3529, %v3447
      %v3534 = vmax.f32 %v3530, %v3452
      %v3535 = vmax.f32 %v3531, %v3457
      %v3536 = vmax.f32 %v3532, %v3462
      %v3537 = vmax.f32 %v3533, %v3467
      %v3538 = vmax.f32 %v3534, %v3472
      %v3539 = vmax.f32 %v3535, %v3477
      %v3540 = vmax.f32 %v3536, %v3482
      %v3541 = vmax.f32 %v3537, %v3487
      %v3542 = vmax.f32 %v3538, %v3492
      %v3543 = vmax.f32 %v3539, %v3497
      %v3544 = vmax.f32 %v3540, %v3502
      %v3545 = vmax.f32 %v3541, %v3507
      %v3546 = vmax.f32 %v3542, %v3512
      %v3547 = vmax.f32 %v3543, %v3517
      %v3548 = vmax.f32 %v3544, %v3545
      %v3549 = vmax.f32 %v3546, %v3547
      %v3550 = vmax.f32 %v3548, %v3549
      %v3551 = vrot.slane %v3550, 4
      %v3552 = vmax.f32 %v3550, %v3551
      %v3553 = vrot.slane %v3552, 2
      %v3554 = vmax.f32 %v3552, %v3553
      %v3555 = vrot.slane %v3554, 1
      %v3556 = vmax.f32 %v3554, %v3555
      %v3557 = vsub.f32 %v3362, %v3556
      %v3558 = vsub.f32 %v3367, %v3556
      %v3559 = vsub.f32 %v3372, %v3556
      %v3560 = vsub.f32 %v3377, %v3556
      %v3561 = vsub.f32 %v3382, %v3556
      %v3562 = vsub.f32 %v3387, %v3556
      %v3563 = vsub.f32 %v3392, %v3556
      %v3564 = vsub.f32 %v3397, %v3556
      %v3565 = vsub.f32 %v3402, %v3556
      %v3566 = vsub.f32 %v3407, %v3556
      %v3567 = vsub.f32 %v3412, %v3556
      %v3568 = vsub.f32 %v3417, %v3556
      %v3569 = vsub.f32 %v3422, %v3556
      %v3570 = vsub.f32 %v3427, %v3556
      %v3571 = vsub.f32 %v3432, %v3556
      %v3572 = vsub.f32 %v3437, %v3556
      %v3573 = vsub.f32 %v3442, %v3556
      %v3574 = vsub.f32 %v3447, %v3556
      %v3575 = vsub.f32 %v3452, %v3556
      %v3576 = vsub.f32 %v3457, %v3556
      %v3577 = vsub.f32 %v3462, %v3556
      %v3578 = vsub.f32 %v3467, %v3556
      %v3579 = vsub.f32 %v3472, %v3556
      %v3580 = vsub.f32 %v3477, %v3556
      %v3581 = vsub.f32 %v3482, %v3556
      %v3582 = vsub.f32 %v3487, %v3556
      %v3583 = vsub.f32 %v3492, %v3556
      %v3584 = vsub.f32 %v3497, %v3556
      %v3585 = vsub.f32 %v3502, %v3556
      %v3586 = vsub.f32 %v3507, %v3556
      %v3587 = vsub.f32 %v3512, %v3556
      %v3588 = vsub.f32 %v3517, %v3556
      %v3589 = vmul.f32 %v3557, 1.442695
      %v3590 = vpow.pop %v3589
      %v3591 = vmul.f32 %v3558, 1.442695
      %v3592 = vpow.pop %v3591
      %v3593 = vmul.f32 %v3559, 1.442695
      %v3594 = vpow.pop %v3593
      %v3595 = vmul.f32 %v3560, 1.442695
      %v3596 = vpow.pop %v3595
      %v3597 = vmul.f32 %v3561, 1.442695
      %v3598 = vpow.pop %v3597
      %v3599 = vmul.f32 %v3562, 1.442695
      %v3600 = vpow.pop %v3599
      %v3601 = vmul.f32 %v3563, 1.442695
      %v3602 = vpow.pop %v3601
      %v3603 = vmul.f32 %v3564, 1.442695
      %v3604 = vpow.pop %v3603
      %v3605 = vmul.f32 %v3565, 1.442695
      %v3606 = vpow.pop %v3605
      %v3607 = vmul.f32 %v3566, 1.442695
      %v3608 = vpow.pop %v3607
      %v3609 = vmul.f32 %v3567, 1.442695
      %v3610 = vpow.pop %v3609
      %v3611 = vmul.f32 %v3568, 1.442695
      %v3612 = vpow.pop %v3611
      %v3613 = vmul.f32 %v3569, 1.442695
      %v3614 = vpow.pop %v3613
      %v3615 = vmul.f32 %v3570, 1.442695
      %v3616 = vpow.pop %v3615
      %v3617 = vmul.f32 %v3571, 1.442695
      %v3618 = vpow.pop %v3617
      %v3619 = vmul.f32 %v3572, 1.442695
      %v3620 = vpow.pop %v3619
      %v3621 = vmul.f32 %v3573, 1.442695
      %v3622 = vpow.pop %v3621
      %v3623 = vmul.f32 %v3574, 1.442695
      %v3624 = vpow.pop %v3623
      %v3625 = vmul.f32 %v3575, 1.442695
      %v3626 = vpow.pop %v3625
      %v3627 = vmul.f32 %v3576, 1.442695
      %v3628 = vpow.pop %v3627
      %v3629 = vmul.f32 %v3577, 1.442695
      %v3630 = vpow.pop %v3629
      %v3631 = vmul.f32 %v3578, 1.442695
      %v3632 = vpow.pop %v3631
      %v3633 = vmul.f32 %v3579, 1.442695
      %v3634 = vpow.pop %v3633
      %v3635 = vmul.f32 %v3580, 1.442695
      %v3636 = vpow.pop %v3635
      %v3637 = vmul.f32 %v3581, 1.442695
      %v3638 = vpow.pop %v3637
      %v3639 = vmul.f32 %v3582, 1.442695
      %v3640 = vpow.pop %v3639
      %v3641 = vmul.f32 %v3583, 1.442695
      %v3642 = vpow.pop %v3641
      %v3643 = vmul.f32 %v3584, 1.442695
      %v3644 = vpow.pop %v3643
      %v3645 = vmul.f32 %v3585, 1.442695
      %v3646 = vpow.pop %v3645
      %v3647 = vmul.f32 %v3586, 1.442695
      %v3648 = vpow.pop %v3647
      %v3649 = vmul.f32 %v3587, 1.442695
      %v3650 = vpow.pop %v3649
      %v3651 = vmul.f32 %v3588, 1.442695
      %v3652 = vpow.pop %v3651
      %3653 = vmatprep.subr.mxu0 0.0
      %3654 = vmatpush1.msra.mxu0 %v3590
      %3655 = vmatprep.subr.mxu0 0.0
      %3656 = vmatpush1.msra.mxu0 %v3592
      %3657 = vmatprep.subr.mxu0 0.0
      %3658 = vmatpush1.msra.mxu0 %v3594
      %3659 = vmatprep.subr.mxu0 0.0
      %3660 = vmatpush1.msra.mxu0 %v3596
      %3661 = vmatprep.subr.mxu0 0.0
      %3662 = vmatpush1.msra.mxu0 %v3598
      %3663 = vmatprep.subr.mxu0 0.0
      %3664 = vmatpush1.msra.mxu0 %v3600
      %3665 = vmatprep.subr.mxu0 0.0
      %3666 = vmatpush1.msra.mxu0 %v3602
      %3667 = vmatprep.subr.mxu0 0.0
      %3668 = vmatpush1.msra.mxu0 %v3604
      %3669 = vmatprep.subr.mxu0 0.0
      %3670 = vmatpush1.msra.mxu0 %v3606
      %3671 = vmatprep.subr.mxu0 0.0
      %3672 = vmatpush1.msra.mxu0 %v3608
      %3673 = vmatprep.subr.mxu0 0.0
      %3674 = vmatpush1.msra.mxu0 %v3610
      %3675 = vmatprep.subr.mxu0 0.0
      %3676 = vmatpush1.msra.mxu0 %v3612
      %3677 = vmatprep.subr.mxu0 0.0
      %3678 = vmatpush1.msra.mxu0 %v3614
      %3679 = vmatprep.subr.mxu0 0.0
      %3680 = vmatpush1.msra.mxu0 %v3616
      %3681 = vmatprep.subr.mxu0 0.0
      %3682 = vmatpush1.msra.mxu0 %v3618
      %3683 = vmatprep.subr.mxu0 0.0
      %3684 = vmatpush1.msra.mxu0 %v3620
      %3685 = vmatprep.subr.mxu0 0.0
      %3686 = vmatpush1.msra.mxu0 %v3622
      %3687 = vmatprep.subr.mxu0 0.0
      %3688 = vmatpush1.msra.mxu0 %v3624
      %3689 = vmatprep.subr.mxu0 0.0
      %3690 = vmatpush1.msra.mxu0 %v3626
      %3691 = vmatprep.subr.mxu0 0.0
      %3692 = vmatpush1.msra.mxu0 %v3628
      %3693 = vmatprep.subr.mxu0 0.0
      %3694 = vmatpush1.msra.mxu0 %v3630
      %3695 = vmatprep.subr.mxu0 0.0
      %3696 = vmatpush1.msra.mxu0 %v3632
      %3697 = vmatprep.subr.mxu0 0.0
      %3698 = vmatpush1.msra.mxu0 %v3634
      %3699 = vmatprep.subr.mxu0 0.0
      %3700 = vmatpush1.msra.mxu0 %v3636
      %3701 = vmatprep.subr.mxu0 0.0
      %3702 = vmatpush1.msra.mxu0 %v3638
      %3703 = vmatprep.subr.mxu0 0.0
      %3704 = vmatpush1.msra.mxu0 %v3640
      %3705 = vmatprep.subr.mxu0 0.0
      %3706 = vmatpush1.msra.mxu0 %v3642
      %3707 = vmatprep.subr.mxu0 0.0
      %3708 = vmatpush1.msra.mxu0 %v3644
      %3709 = vmatprep.subr.mxu0 0.0
      %3710 = vmatpush1.msra.mxu0 %v3646
      %3711 = vmatprep.subr.mxu0 0.0
      %3712 = vmatpush1.msra.mxu0 %v3648
      %3713 = vmatprep.subr.mxu0 0.0
      %3714 = vmatpush1.msra.mxu0 %v3650
      %3715 = vmatprep.subr.mxu0 0.0
      %3716 = vmatpush1.msra.mxu0 %v3652
      %3717 = vmatprep.mubr.f32.mxu0 %v3211
      %3718 = vmatmul.mubr.f32.gmra.mrb[0].mxu0 %v3210
      %v3719 = vpop.f32.mrb[0].mxu0
      %v3720 = vadd.f32 0.0, %v3719
      %v3721 = vpop.f32.mrb[0].mxu0
      %3722 = vdwg.mxu0
      %v3723 = vrcp.pop %v3720
      %v3724 = vmul.f32 1.0, %v3723
      %v3725 = vlaneseq
      %v3726 = vshrl.u32 %v3725, 7
      %v3727 = vsub.s32 4, %v3726
      %v3728 = vrot.slane %v3724, %v3727
      %v3729 = vmul.f32 %v3720, %v3728
      %3730 = vst [vmem:[#allocation3 + $0x18] sm:$0xf] %v3729
      %v3731 = vld [vmem:[#allocation2 + $0x10] sm:$0xf0]
      %v3732 = vld [vmem:[#allocation2 + $0x18] sm:$0xf0]
      %v3733 = vld [vmem:[#allocation2 + $0x50] sm:$0xf0]
      %v3734 = vld [vmem:[#allocation2 + $0x58] sm:$0xf0]
      %v3735 = vld [vmem:[#allocation2 + $0x90] sm:$0x80]
      %v3736 = vld [vmem:[#allocation2 + $0x98] sm:$0x80]
      %v3737 = vld [vmem:[#allocation2 + $0xa0] sm:$0xf]
      %v3738 = vld [vmem:[#allocation2 + $0xa8] sm:$0xf]
      %v3741 = vrot.slane %v3731, 4
      %v3742 = vrot.slane %v3732, 4
      %3745 = vxpose.xlu0.b32.start [1/16] %v3741, 128
      %3746 = vxpose.xlu0.b32.cont [2/16] 0.0, 128
      %3747 = vxpose.xlu0.b32.cont [3/16] 0.0, 128
      %3748 = vxpose.xlu0.b32.cont [4/16] 0.0, 128
      %3749 = vxpose.xlu0.b32.cont [5/16] 0.0, 128
      %3750 = vxpose.xlu0.b32.cont [6/16] 0.0, 128
      %3751 = vxpose.xlu0.b32.cont [7/16] 0.0, 128
      %3752 = vxpose.xlu0.b32.cont [8/16] 0.0, 128
      %3753 = vxpose.xlu0.b32.cont [9/16] 0.0, 128
      %3754 = vxpose.xlu0.b32.cont [10/16] 0.0, 128
      %3755 = vxpose.xlu0.b32.cont [11/16] 0.0, 128
      %3756 = vxpose.xlu0.b32.cont [12/16] 0.0, 128
      %3757 = vxpose.xlu0.b32.cont [13/16] 0.0, 128
      %3758 = vxpose.xlu0.b32.cont [14/16] 0.0, 128
      %3759 = vxpose.xlu0.b32.cont [15/16] 0.0, 128
      %3760 = vxpose.xlu0.b32.end [16/16] 0.0, 128
      %v3761 = vpop.trf.xlu0
      %v3762 = vpop.trf.xlu0
      %v3763 = vpop.trf.xlu0
      %v3764 = vpop.trf.xlu0
      %v3765 = vpop.trf.xlu0
      %v3766 = vpop.trf.xlu0
      %v3767 = vpop.trf.xlu0
      %v3768 = vpop.trf.xlu0
      %v3769 = vpop.trf.xlu0
      %v3770 = vpop.trf.xlu0
      %v3771 = vpop.trf.xlu0
      %v3772 = vpop.trf.xlu0
      %v3773 = vpop.trf.xlu0
      %v3774 = vpop.trf.xlu0
      %v3775 = vpop.trf.xlu0
      %v3776 = vpop.trf.xlu0
      %3777 = vxpose.xlu0.b32.start [1/16] %v3742, 128
      %3778 = vxpose.xlu0.b32.cont [2/16] 0.0, 128
      %3779 = vxpose.xlu0.b32.cont [3/16] 0.0, 128
      %3780 = vxpose.xlu0.b32.cont [4/16] 0.0, 128
      %3781 = vxpose.xlu0.b32.cont [5/16] 0.0, 128
      %3782 = vxpose.xlu0.b32.cont [6/16] 0.0, 128
      %3783 = vxpose.xlu0.b32.cont [7/16] 0.0, 128
      %3784 = vxpose.xlu0.b32.cont [8/16] 0.0, 128
      %3785 = vxpose.xlu0.b32.cont [9/16] 0.0, 128
      %3786 = vxpose.xlu0.b32.cont [10/16] 0.0, 128
      %3787 = vxpose.xlu0.b32.cont [11/16] 0.0, 128
      %3788 = vxpose.xlu0.b32.cont [12/16] 0.0, 128
      %3789 = vxpose.xlu0.b32.cont [13/16] 0.0, 128
      %3790 = vxpose.xlu0.b32.cont [14/16] 0.0, 128
      %3791 = vxpose.xlu0.b32.cont [15/16] 0.0, 128
      %3792 = vxpose.xlu0.b32.end [16/16] 0.0, 128
      %v3793 = vpop.trf.xlu0
      %v3794 = vpop.trf.xlu0
      %v3795 = vpop.trf.xlu0
      %v3796 = vpop.trf.xlu0
      %v3797 = vpop.trf.xlu0
      %v3798 = vpop.trf.xlu0
      %v3799 = vpop.trf.xlu0
      %v3800 = vpop.trf.xlu0
      %v3801 = vpop.trf.xlu0
      %v3802 = vpop.trf.xlu0
      %v3803 = vpop.trf.xlu0
      %v3804 = vpop.trf.xlu0
      %v3805 = vpop.trf.xlu0
      %v3806 = vpop.trf.xlu0
      %v3807 = vpop.trf.xlu0
      %v3808 = vpop.trf.xlu0
      %v3810 = vrot.slane %v3733, 4
      %v3812 = vsel %vm632, %v3761, 0
      %v3815 = vsel %vm632, %v3762, 0
      %v3818 = vsel %vm632, %v3763, 0
      %v3821 = vsel %vm632, %v3764, 0
      %v3824 = vsel %vm632, %v3765, 0
      %v3827 = vsel %vm632, %v3766, 0
      %v3830 = vsel %vm632, %v3767, 0
      %v3833 = vsel %vm632, %v3768, 0
      %v3836 = vsel %vm632, %v3769, 0
      %v3839 = vsel %vm632, %v3770, 0
      %v3842 = vsel %vm632, %v3771, 0
      %v3845 = vsel %vm632, %v3772, 0
      %v3848 = vsel %vm632, %v3773, 0
      %v3851 = vsel %vm632, %v3774, 0
      %v3854 = vsel %vm632, %v3775, 0
      %v3857 = vsel %vm632, %v3776, 0
      %v3860 = vsel %vm632, %v3793, 0
      %v3863 = vsel %vm632, %v3794, 0
      %v3866 = vsel %vm632, %v3795, 0
      %v3869 = vsel %vm632, %v3796, 0
      %v3872 = vsel %vm632, %v3797, 0
      %v3875 = vsel %vm632, %v3798, 0
      %v3878 = vsel %vm632, %v3799, 0
      %v3881 = vsel %vm632, %v3800, 0
      %v3884 = vsel %vm632, %v3801, 0
      %v3887 = vsel %vm632, %v3802, 0
      %v3890 = vsel %vm632, %v3803, 0
      %v3893 = vsel %vm632, %v3804, 0
      %v3896 = vsel %vm632, %v3805, 0
      %v3899 = vsel %vm632, %v3806, 0
      %v3902 = vsel %vm632, %v3807, 0
      %v3905 = vsel %vm632, %v3808, 0
      %v3907 = vsel %vm729, %v3810, 0
      %3909 = vmatprep.subr.mxu0 0.0
      %3910 = vmatpush1.msra.mxu0 %v3907
      %3911 = vmatprep.subr.mxu0 0.0
      %3912 = vmatpush1.msra.mxu0 0.0
      %3913 = vmatprep.subr.mxu0 0.0
      %3914 = vmatpush1.msra.mxu0 0.0
      %3915 = vmatprep.subr.mxu0 0.0
      %3916 = vmatpush1.msra.mxu0 0.0
      %3917 = vmatprep.subr.mxu0 0.0
      %3918 = vmatpush1.msra.mxu0 0.0
      %3919 = vmatprep.subr.mxu0 0.0
      %3920 = vmatpush1.msra.mxu0 0.0
      %3921 = vmatprep.subr.mxu0 0.0
      %3922 = vmatpush1.msra.mxu0 0.0
      %3923 = vmatprep.subr.mxu0 0.0
      %3924 = vmatpush1.msra.mxu0 0.0
      %3925 = vmatprep.subr.mxu0 0.0
      %3926 = vmatpush1.msra.mxu0 0.0
      %3927 = vmatprep.subr.mxu0 0.0
      %3928 = vmatpush1.msra.mxu0 0.0
      %3929 = vmatprep.subr.mxu0 0.0
      %3930 = vmatpush1.msra.mxu0 0.0
      %3931 = vmatprep.subr.mxu0 0.0
      %3932 = vmatpush1.msra.mxu0 0.0
      %3933 = vmatprep.subr.mxu0 0.0
      %3934 = vmatpush1.msra.mxu0 0.0
      %3935 = vmatprep.subr.mxu0 0.0
      %3936 = vmatpush1.msra.mxu0 0.0
      %3937 = vmatprep.subr.mxu0 0.0
      %3938 = vmatpush1.msra.mxu0 0.0
      %3939 = vmatprep.subr.mxu0 0.0
      %3940 = vmatpush1.msra.mxu0 0.0
      %3941 = vmatprep.subr.mxu0 0.0
      %3942 = vmatpush1.msra.mxu0 0.0
      %3943 = vmatprep.subr.mxu0 0.0
      %3944 = vmatpush1.msra.mxu0 0.0
      %3945 = vmatprep.subr.mxu0 0.0
      %3946 = vmatpush1.msra.mxu0 0.0
      %3947 = vmatprep.subr.mxu0 0.0
      %3948 = vmatpush1.msra.mxu0 0.0
      %3949 = vmatprep.subr.mxu0 0.0
      %3950 = vmatpush1.msra.mxu0 0.0
      %3951 = vmatprep.subr.mxu0 0.0
      %3952 = vmatpush1.msra.mxu0 0.0
      %3953 = vmatprep.subr.mxu0 0.0
      %3954 = vmatpush1.msra.mxu0 0.0
      %3955 = vmatprep.subr.mxu0 0.0
      %3956 = vmatpush1.msra.mxu0 0.0
      %3957 = vmatprep.subr.mxu0 0.0
      %3958 = vmatpush1.msra.mxu0 0.0
      %3959 = vmatprep.subr.mxu0 0.0
      %3960 = vmatpush1.msra.mxu0 0.0
      %3961 = vmatprep.subr.mxu0 0.0
      %3962 = vmatpush1.msra.mxu0 0.0
      %3963 = vmatprep.subr.mxu0 0.0
      %3964 = vmatpush1.msra.mxu0 0.0
      %3965 = vmatprep.subr.mxu0 0.0
      %3966 = vmatpush1.msra.mxu0 0.0
      %3967 = vmatprep.subr.mxu0 0.0
      %3968 = vmatpush1.msra.mxu0 0.0
      %3969 = vmatprep.subr.mxu0 0.0
      %3970 = vmatpush1.msra.mxu0 0.0
      %3971 = vmatprep.subr.mxu0 0.0
      %3972 = vmatpush1.msra.mxu0 0.0
      %3973 = vmatprep.mubr.f32.mxu0 0.0
      %3974 = vmatmul.mubr.f32.gmra.mrb[0].mxu0 %v3812
      %v3975 = vpop.f32.mrb[0].mxu0
      %v3976 = vadd.f32 0.0, %v3975
      %v3977 = vpop.f32.mrb[0].mxu0
      %3978 = vmatprep.mubr.f32.mxu0 0.0
      %3979 = vmatmul.mubr.f32.gmra.mrb[0].mxu0 %v3815
      %v3980 = vpop.f32.mrb[0].mxu0
      %v3981 = vadd.f32 0.0, %v3980
      %v3982 = vpop.f32.mrb[0].mxu0
      %3983 = vmatprep.mubr.f32.mxu0 0.0
      %3984 = vmatmul.mubr.f32.gmra.mrb[0].mxu0 %v3818
      %v3985 = vpop.f32.mrb[0].mxu0
      %v3986 = vadd.f32 0.0, %v3985
      %v3987 = vpop.f32.mrb[0].mxu0
      %3988 = vmatprep.mubr.f32.mxu0 0.0
      %3989 = vmatmul.mubr.f32.gmra.mrb[0].mxu0 %v3821
      %v3990 = vpop.f32.mrb[0].mxu0
      %v3991 = vadd.f32 0.0, %v3990
      %v3992 = vpop.f32.mrb[0].mxu0
      %3993 = vmatprep.mubr.f32.mxu0 0.0
      %3994 = vmatmul.mubr.f32.gmra.mrb[0].mxu0 %v3824
      %v3995 = vpop.f32.mrb[0].mxu0
      %v3996 = vadd.f32 0.0, %v3995
      %v3997 = vpop.f32.mrb[0].mxu0
      %3998 = vmatprep.mubr.f32.mxu0 0.0
      %3999 = vmatmul.mubr.f32.gmra.mrb[0].mxu0 %v3827
      %v4000 = vpop.f32.mrb[0].mxu0
      %v4001 = vadd.f32 0.0, %v4000
      %v4002 = vpop.f32.mrb[0].mxu0
      %4003 = vmatprep.mubr.f32.mxu0 0.0
      %4004 = vmatmul.mubr.f32.gmra.mrb[0].mxu0 %v3830
      %v4005 = vpop.f32.mrb[0].mxu0
      %v4006 = vadd.f32 0.0, %v4005
      %v4007 = vpop.f32.mrb[0].mxu0
      %4008 = vmatprep.mubr.f32.mxu0 0.0
      %4009 = vmatmul.mubr.f32.gmra.mrb[0].mxu0 %v3833
      %v4010 = vpop.f32.mrb[0].mxu0
      %v4011 = vadd.f32 0.0, %v4010
      %v4012 = vpop.f32.mrb[0].mxu0
      %4013 = vmatprep.mubr.f32.mxu0 0.0
      %4014 = vmatmul.mubr.f32.gmra.mrb[0].mxu0 %v3836
      %v4015 = vpop.f32.mrb[0].mxu0
      %v4016 = vadd.f32 0.0, %v4015
      %v4017 = vpop.f32.mrb[0].mxu0
      %4018 = vmatprep.mubr.f32.mxu0 0.0
      %4019 = vmatmul.mubr.f32.gmra.mrb[0].mxu0 %v3839
      %v4020 = vpop.f32.mrb[0].mxu0
      %v4021 = vadd.f32 0.0, %v4020
      %v4022 = vpop.f32.mrb[0].mxu0
      %4023 = vmatprep.mubr.f32.mxu0 0.0
      %4024 = vmatmul.mubr.f32.gmra.mrb[0].mxu0 %v3842
      %v4025 = vpop.f32.mrb[0].mxu0
      %v4026 = vadd.f32 0.0, %v4025
      %v4027 = vpop.f32.mrb[0].mxu0
      %4028 = vmatprep.mubr.f32.mxu0 0.0
      %4029 = vmatmul.mubr.f32.gmra.mrb[0].mxu0 %v3845
      %v4030 = vpop.f32.mrb[0].mxu0
      %v4031 = vadd.f32 0.0, %v4030
      %v4032 = vpop.f32.mrb[0].mxu0
      %4033 = vmatprep.mubr.f32.mxu0 0.0
      %4034 = vmatmul.mubr.f32.gmra.mrb[0].mxu0 %v3848
      %v4035 = vpop.f32.mrb[0].mxu0
      %v4036 = vadd.f32 0.0, %v4035
      %v4037 = vpop.f32.mrb[0].mxu0
      %4038 = vmatprep.mubr.f32.mxu0 0.0
      %4039 = vmatmul.mubr.f32.gmra.mrb[0].mxu0 %v3851
      %v4040 = vpop.f32.mrb[0].mxu0
      %v4041 = vadd.f32 0.0, %v4040
      %v4042 = vpop.f32.mrb[0].mxu0
      %4043 = vmatprep.mubr.f32.mxu0 0.0
      %4044 = vmatmul.mubr.f32.gmra.mrb[0].mxu0 %v3854
      %v4045 = vpop.f32.mrb[0].mxu0
      %v4046 = vadd.f32 0.0, %v4045
      %v4047 = vpop.f32.mrb[0].mxu0
      %4048 = vmatprep.mubr.f32.mxu0 0.0
      %4049 = vmatmul.mubr.f32.gmra.mrb[0].mxu0 %v3857
      %v4050 = vpop.f32.mrb[0].mxu0
      %v4051 = vadd.f32 0.0, %v4050
      %v4052 = vpop.f32.mrb[0].mxu0
      %4053 = vmatprep.mubr.f32.mxu0 0.0
      %4054 = vmatmul.mubr.f32.gmra.mrb[0].mxu0 %v3860
      %v4055 = vpop.f32.mrb[0].mxu0
      %v4056 = vadd.f32 0.0, %v4055
      %v4057 = vpop.f32.mrb[0].mxu0
      %4058 = vmatprep.mubr.f32.mxu0 0.0
      %4059 = vmatmul.mubr.f32.gmra.mrb[0].mxu0 %v3863
      %v4060 = vpop.f32.mrb[0].mxu0
      %v4061 = vadd.f32 0.0, %v4060
      %v4062 = vpop.f32.mrb[0].mxu0
      %4063 = vmatprep.mubr.f32.mxu0 0.0
      %4064 = vmatmul.mubr.f32.gmra.mrb[0].mxu0 %v3866
      %v4065 = vpop.f32.mrb[0].mxu0
      %v4066 = vadd.f32 0.0, %v4065
      %v4067 = vpop.f32.mrb[0].mxu0
      %4068 = vmatprep.mubr.f32.mxu0 0.0
      %4069 = vmatmul.mubr.f32.gmra.mrb[0].mxu0 %v3869
      %v4070 = vpop.f32.mrb[0].mxu0
      %v4071 = vadd.f32 0.0, %v4070
      %v4072 = vpop.f32.mrb[0].mxu0
      %4073 = vmatprep.mubr.f32.mxu0 0.0
      %4074 = vmatmul.mubr.f32.gmra.mrb[0].mxu0 %v3872
      %v4075 = vpop.f32.mrb[0].mxu0
      %v4076 = vadd.f32 0.0, %v4075
      %v4077 = vpop.f32.mrb[0].mxu0
      %4078 = vmatprep.mubr.f32.mxu0 0.0
      %4079 = vmatmul.mubr.f32.gmra.mrb[0].mxu0 %v3875
      %v4080 = vpop.f32.mrb[0].mxu0
      %v4081 = vadd.f32 0.0, %v4080
      %v4082 = vpop.f32.mrb[0].mxu0
      %4083 = vmatprep.mubr.f32.mxu0 0.0
      %4084 = vmatmul.mubr.f32.gmra.mrb[0].mxu0 %v3878
      %v4085 = vpop.f32.mrb[0].mxu0
      %v4086 = vadd.f32 0.0, %v4085
      %v4087 = vpop.f32.mrb[0].mxu0
      %4088 = vmatprep.mubr.f32.mxu0 0.0
      %4089 = vmatmul.mubr.f32.gmra.mrb[0].mxu0 %v3881
      %v4090 = vpop.f32.mrb[0].mxu0
      %v4091 = vadd.f32 0.0, %v4090
      %v4092 = vpop.f32.mrb[0].mxu0
      %4093 = vmatprep.mubr.f32.mxu0 0.0
      %4094 = vmatmul.mubr.f32.gmra.mrb[0].mxu0 %v3884
      %v4095 = vpop.f32.mrb[0].mxu0
      %v4096 = vadd.f32 0.0, %v4095
      %v4097 = vpop.f32.mrb[0].mxu0
      %4098 = vmatprep.mubr.f32.mxu0 0.0
      %4099 = vmatmul.mubr.f32.gmra.mrb[0].mxu0 %v3887
      %v4100 = vpop.f32.mrb[0].mxu0
      %v4101 = vadd.f32 0.0, %v4100
      %v4102 = vpop.f32.mrb[0].mxu0
      %4103 = vmatprep.mubr.f32.mxu0 0.0
      %4104 = vmatmul.mubr.f32.gmra.mrb[0].mxu0 %v3890
      %v4105 = vpop.f32.mrb[0].mxu0
      %v4106 = vadd.f32 0.0, %v4105
      %v4107 = vpop.f32.mrb[0].mxu0
      %4108 = vmatprep.mubr.f32.mxu0 0.0
      %4109 = vmatmul.mubr.f32.gmra.mrb[0].mxu0 %v3893
      %v4110 = vpop.f32.mrb[0].mxu0
      %v4111 = vadd.f32 0.0, %v4110
      %v4112 = vpop.f32.mrb[0].mxu0
      %4113 = vmatprep.mubr.f32.mxu0 0.0
      %4114 = vmatmul.mubr.f32.gmra.mrb[0].mxu0 %v3896
      %v4115 = vpop.f32.mrb[0].mxu0
      %v4116 = vadd.f32 0.0, %v4115
      %v4117 = vpop.f32.mrb[0].mxu0
      %4118 = vmatprep.mubr.f32.mxu0 0.0
      %4119 = vmatmul.mubr.f32.gmra.mrb[0].mxu0 %v3899
      %v4120 = vpop.f32.mrb[0].mxu0
      %v4121 = vadd.f32 0.0, %v4120
      %v4122 = vpop.f32.mrb[0].mxu0
      %4123 = vmatprep.mubr.f32.mxu0 0.0
      %4124 = vmatmul.mubr.f32.gmra.mrb[0].mxu0 %v3902
      %v4125 = vpop.f32.mrb[0].mxu0
      %v4126 = vadd.f32 0.0, %v4125
      %v4127 = vpop.f32.mrb[0].mxu0
      %4128 = vmatprep.mubr.f32.mxu0 0.0
      %4129 = vmatmul.mubr.f32.gmra.mrb[0].mxu0 %v3905
      %v4130 = vpop.f32.mrb[0].mxu0
      %v4131 = vadd.f32 0.0, %v4130
      %v4132 = vpop.f32.mrb[0].mxu0
      %4133 = vdwg.mxu0
      %v4134 = vmax.f32 %v3976, %v3996
      %v4135 = vmax.f32 %v3981, %v4001
      %v4136 = vmax.f32 %v3986, %v4006
      %v4137 = vmax.f32 %v3991, %v4011
      %v4138 = vmax.f32 %v4134, %v4016
      %v4139 = vmax.f32 %v4135, %v4021
      %v4140 = vmax.f32 %v4136, %v4026
      %v4141 = vmax.f32 %v4137, %v4031
      %v4142 = vmax.f32 %v4138, %v4036
      %v4143 = vmax.f32 %v4139, %v4041
      %v4144 = vmax.f32 %v4140, %v4046
      %v4145 = vmax.f32 %v4141, %v4051
      %v4146 = vmax.f32 %v4142, %v4056
      %v4147 = vmax.f32 %v4143, %v4061
      %v4148 = vmax.f32 %v4144, %v4066
      %v4149 = vmax.f32 %v4145, %v4071
      %v4150 = vmax.f32 %v4146, %v4076
      %v4151 = vmax.f32 %v4147, %v4081
      %v4152 = vmax.f32 %v4148, %v4086
      %v4153 = vmax.f32 %v4149, %v4091
      %v4154 = vmax.f32 %v4150, %v4096
      %v4155 = vmax.f32 %v4151, %v4101
      %v4156 = vmax.f32 %v4152, %v4106
      %v4157 = vmax.f32 %v4153, %v4111
      %v4158 = vmax.f32 %v4154, %v4116
      %v4159 = vmax.f32 %v4155, %v4121
      %v4160 = vmax.f32 %v4156, %v4126
      %v4161 = vmax.f32 %v4157, %v4131
      %v4162 = vmax.f32 %v4158, %v4159
      %v4163 = vmax.f32 %v4160, %v4161
      %v4164 = vmax.f32 %v4162, %v4163
      %v4165 = vrot.slane %v4164, 4
      %v4166 = vmax.f32 %v4164, %v4165
      %v4167 = vrot.slane %v4166, 2
      %v4168 = vmax.f32 %v4166, %v4167
      %v4169 = vrot.slane %v4168, 1
      %v4170 = vmax.f32 %v4168, %v4169
      %v4171 = vsub.f32 %v3976, %v4170
      %v4172 = vsub.f32 %v3981, %v4170
      %v4173 = vsub.f32 %v3986, %v4170
      %v4174 = vsub.f32 %v3991, %v4170
      %v4175 = vsub.f32 %v3996, %v4170
      %v4176 = vsub.f32 %v4001, %v4170
      %v4177 = vsub.f32 %v4006, %v4170
      %v4178 = vsub.f32 %v4011, %v4170
      %v4179 = vsub.f32 %v4016, %v4170
      %v4180 = vsub.f32 %v4021, %v4170
      %v4181 = vsub.f32 %v4026, %v4170
      %v4182 = vsub.f32 %v4031, %v4170
      %v4183 = vsub.f32 %v4036, %v4170
      %v4184 = vsub.f32 %v4041, %v4170
      %v4185 = vsub.f32 %v4046, %v4170
      %v4186 = vsub.f32 %v4051, %v4170
      %v4187 = vsub.f32 %v4056, %v4170
      %v4188 = vsub.f32 %v4061, %v4170
      %v4189 = vsub.f32 %v4066, %v4170
      %v4190 = vsub.f32 %v4071, %v4170
      %v4191 = vsub.f32 %v4076, %v4170
      %v4192 = vsub.f32 %v4081, %v4170
      %v4193 = vsub.f32 %v4086, %v4170
      %v4194 = vsub.f32 %v4091, %v4170
      %v4195 = vsub.f32 %v4096, %v4170
      %v4196 = vsub.f32 %v4101, %v4170
      %v4197 = vsub.f32 %v4106, %v4170
      %v4198 = vsub.f32 %v4111, %v4170
      %v4199 = vsub.f32 %v4116, %v4170
      %v4200 = vsub.f32 %v4121, %v4170
      %v4201 = vsub.f32 %v4126, %v4170
      %v4202 = vsub.f32 %v4131, %v4170
      %v4203 = vmul.f32 %v4171, 1.442695
      %v4204 = vpow.pop %v4203
      %v4205 = vmul.f32 %v4172, 1.442695
      %v4206 = vpow.pop %v4205
      %v4207 = vmul.f32 %v4173, 1.442695
      %v4208 = vpow.pop %v4207
      %v4209 = vmul.f32 %v4174, 1.442695
      %v4210 = vpow.pop %v4209
      %v4211 = vmul.f32 %v4175, 1.442695
      %v4212 = vpow.pop %v4211
      %v4213 = vmul.f32 %v4176, 1.442695
      %v4214 = vpow.pop %v4213
      %v4215 = vmul.f32 %v4177, 1.442695
      %v4216 = vpow.pop %v4215
      %v4217 = vmul.f32 %v4178, 1.442695
      %v4218 = vpow.pop %v4217
      %v4219 = vmul.f32 %v4179, 1.442695
      %v4220 = vpow.pop %v4219
      %v4221 = vmul.f32 %v4180, 1.442695
      %v4222 = vpow.pop %v4221
      %v4223 = vmul.f32 %v4181, 1.442695
      %v4224 = vpow.pop %v4223
      %v4225 = vmul.f32 %v4182, 1.442695
      %v4226 = vpow.pop %v4225
      %v4227 = vmul.f32 %v4183, 1.442695
      %v4228 = vpow.pop %v4227
      %v4229 = vmul.f32 %v4184, 1.442695
      %v4230 = vpow.pop %v4229
      %v4231 = vmul.f32 %v4185, 1.442695
      %v4232 = vpow.pop %v4231
      %v4233 = vmul.f32 %v4186, 1.442695
      %v4234 = vpow.pop %v4233
      %v4235 = vmul.f32 %v4187, 1.442695
      %v4236 = vpow.pop %v4235
      %v4237 = vmul.f32 %v4188, 1.442695
      %v4238 = vpow.pop %v4237
      %v4239 = vmul.f32 %v4189, 1.442695
      %v4240 = vpow.pop %v4239
      %v4241 = vmul.f32 %v4190, 1.442695
      %v4242 = vpow.pop %v4241
      %v4243 = vmul.f32 %v4191, 1.442695
      %v4244 = vpow.pop %v4243
      %v4245 = vmul.f32 %v4192, 1.442695
      %v4246 = vpow.pop %v4245
      %v4247 = vmul.f32 %v4193, 1.442695
      %v4248 = vpow.pop %v4247
      %v4249 = vmul.f32 %v4194, 1.442695
      %v4250 = vpow.pop %v4249
      %v4251 = vmul.f32 %v4195, 1.442695
      %v4252 = vpow.pop %v4251
      %v4253 = vmul.f32 %v4196, 1.442695
      %v4254 = vpow.pop %v4253
      %v4255 = vmul.f32 %v4197, 1.442695
      %v4256 = vpow.pop %v4255
      %v4257 = vmul.f32 %v4198, 1.442695
      %v4258 = vpow.pop %v4257
      %v4259 = vmul.f32 %v4199, 1.442695
      %v4260 = vpow.pop %v4259
      %v4261 = vmul.f32 %v4200, 1.442695
      %v4262 = vpow.pop %v4261
      %v4263 = vmul.f32 %v4201, 1.442695
      %v4264 = vpow.pop %v4263
      %v4265 = vmul.f32 %v4202, 1.442695
      %v4266 = vpow.pop %v4265
      %vm4271 = vcmask 1040384
      %v4272 = vrot.slane %v3735, 7
      %v4273 = vrot.slane %v3737, 7
      %v4274 = vsel %vm4271, %v4272, %v4273
      %v4275 = vrot.slane %v3736, 7
      %v4276 = vrot.slane %v3738, 7
      %v4277 = vsel %vm4271, %v4275, %v4276
      %4280 = vmatprep.subr.mxu0 0.0
      %4281 = vmatpush1.msra.mxu0 %v4204
      %4282 = vmatprep.subr.mxu0 0.0
      %4283 = vmatpush1.msra.mxu0 %v4206
      %4284 = vmatprep.subr.mxu0 0.0
      %4285 = vmatpush1.msra.mxu0 %v4208
      %4286 = vmatprep.subr.mxu0 0.0
      %4287 = vmatpush1.msra.mxu0 %v4210
      %4288 = vmatprep.subr.mxu0 0.0
      %4289 = vmatpush1.msra.mxu0 %v4212
      %4290 = vmatprep.subr.mxu0 0.0
      %4291 = vmatpush1.msra.mxu0 %v4214
      %4292 = vmatprep.subr.mxu0 0.0
      %4293 = vmatpush1.msra.mxu0 %v4216
      %4294 = vmatprep.subr.mxu0 0.0
      %4295 = vmatpush1.msra.mxu0 %v4218
      %4296 = vmatprep.subr.mxu0 0.0
      %4297 = vmatpush1.msra.mxu0 %v4220
      %4298 = vmatprep.subr.mxu0 0.0
      %4299 = vmatpush1.msra.mxu0 %v4222
      %4300 = vmatprep.subr.mxu0 0.0
      %4301 = vmatpush1.msra.mxu0 %v4224
      %4302 = vmatprep.subr.mxu0 0.0
      %4303 = vmatpush1.msra.mxu0 %v4226
      %4304 = vmatprep.subr.mxu0 0.0
      %4305 = vmatpush1.msra.mxu0 %v4228
      %4306 = vmatprep.subr.mxu0 0.0
      %4307 = vmatpush1.msra.mxu0 %v4230
      %4308 = vmatprep.subr.mxu0 0.0
      %4309 = vmatpush1.msra.mxu0 %v4232
      %4310 = vmatprep.subr.mxu0 0.0
      %4311 = vmatpush1.msra.mxu0 %v4234
      %4312 = vmatprep.subr.mxu0 0.0
      %4313 = vmatpush1.msra.mxu0 %v4236
      %4314 = vmatprep.subr.mxu0 0.0
      %4315 = vmatpush1.msra.mxu0 %v4238
      %4316 = vmatprep.subr.mxu0 0.0
      %4317 = vmatpush1.msra.mxu0 %v4240
      %4318 = vmatprep.subr.mxu0 0.0
      %4319 = vmatpush1.msra.mxu0 %v4242
      %4320 = vmatprep.subr.mxu0 0.0
      %4321 = vmatpush1.msra.mxu0 %v4244
      %4322 = vmatprep.subr.mxu0 0.0
      %4323 = vmatpush1.msra.mxu0 %v4246
      %4324 = vmatprep.subr.mxu0 0.0
      %4325 = vmatpush1.msra.mxu0 %v4248
      %4326 = vmatprep.subr.mxu0 0.0
      %4327 = vmatpush1.msra.mxu0 %v4250
      %4328 = vmatprep.subr.mxu0 0.0
      %4329 = vmatpush1.msra.mxu0 %v4252
      %4330 = vmatprep.subr.mxu0 0.0
      %4331 = vmatpush1.msra.mxu0 %v4254
      %4332 = vmatprep.subr.mxu0 0.0
      %4333 = vmatpush1.msra.mxu0 %v4256
      %4334 = vmatprep.subr.mxu0 0.0
      %4335 = vmatpush1.msra.mxu0 %v4258
      %4336 = vmatprep.subr.mxu0 0.0
      %4337 = vmatpush1.msra.mxu0 %v4260
      %4338 = vmatprep.subr.mxu0 0.0
      %4339 = vmatpush1.msra.mxu0 %v4262
      %4340 = vmatprep.subr.mxu0 0.0
      %4341 = vmatpush1.msra.mxu0 %v4264
      %4342 = vmatprep.subr.mxu0 0.0
      %4343 = vmatpush1.msra.mxu0 %v4266
      %4344 = vmatprep.mubr.f32.mxu0 %v4277
      %4345 = vmatmul.mubr.f32.gmra.mrb[0].mxu0 %v4274
      %v4346 = vpop.f32.mrb[0].mxu0
      %v4347 = vadd.f32 0.0, %v4346
      %v4348 = vpop.f32.mrb[0].mxu0
      %4349 = vdwg.mxu0
      %v4350 = vrcp.pop %v4347
      %v4351 = vmul.f32 1.0, %v4350
      %v4352 = vlaneseq
      %v4353 = vshrl.u32 %v4352, 7
      %v4354 = vsub.s32 4, %v4353
      %v4355 = vrot.slane %v4351, %v4354
      %v4356 = vmul.f32 %v4347, %v4355
      %v4358 = vrot.slane %v4356, 4
      %4360 = vst [vmem:[#allocation3 + $0x10] sm:$0xf0] %v4358
      %v4362 = vrot.slane %v3734, 4
      %v4363 = vsel %vm729, %v4362, 0
      %4365 = vmatprep.subr.mxu0 0.0
      %4366 = vmatpush1.msra.mxu0 %v4363
      %4367 = vmatprep.subr.mxu0 0.0
      %4368 = vmatpush1.msra.mxu0 0.0
      %4369 = vmatprep.subr.mxu0 0.0
      %4370 = vmatpush1.msra.mxu0 0.0
      %4371 = vmatprep.subr.mxu0 0.0
      %4372 = vmatpush1.msra.mxu0 0.0
      %4373 = vmatprep.subr.mxu0 0.0
      %4374 = vmatpush1.msra.mxu0 0.0
      %4375 = vmatprep.subr.mxu0 0.0
      %4376 = vmatpush1.msra.mxu0 0.0
      %4377 = vmatprep.subr.mxu0 0.0
      %4378 = vmatpush1.msra.mxu0 0.0
      %4379 = vmatprep.subr.mxu0 0.0
      %4380 = vmatpush1.msra.mxu0 0.0
      %4381 = vmatprep.subr.mxu0 0.0
      %4382 = vmatpush1.msra.mxu0 0.0
      %4383 = vmatprep.subr.mxu0 0.0
      %4384 = vmatpush1.msra.mxu0 0.0
      %4385 = vmatprep.subr.mxu0 0.0
      %4386 = vmatpush1.msra.mxu0 0.0
      %4387 = vmatprep.subr.mxu0 0.0
      %4388 = vmatpush1.msra.mxu0 0.0
      %4389 = vmatprep.subr.mxu0 0.0
      %4390 = vmatpush1.msra.mxu0 0.0
      %4391 = vmatprep.subr.mxu0 0.0
      %4392 = vmatpush1.msra.mxu0 0.0
      %4393 = vmatprep.subr.mxu0 0.0
      %4394 = vmatpush1.msra.mxu0 0.0
      %4395 = vmatprep.subr.mxu0 0.0
      %4396 = vmatpush1.msra.mxu0 0.0
      %4397 = vmatprep.subr.mxu0 0.0
      %4398 = vmatpush1.msra.mxu0 0.0
      %4399 = vmatprep.subr.mxu0 0.0
      %4400 = vmatpush1.msra.mxu0 0.0
      %4401 = vmatprep.subr.mxu0 0.0
      %4402 = vmatpush1.msra.mxu0 0.0
      %4403 = vmatprep.subr.mxu0 0.0
      %4404 = vmatpush1.msra.mxu0 0.0
      %4405 = vmatprep.subr.mxu0 0.0
      %4406 = vmatpush1.msra.mxu0 0.0
      %4407 = vmatprep.subr.mxu0 0.0
      %4408 = vmatpush1.msra.mxu0 0.0
      %4409 = vmatprep.subr.mxu0 0.0
      %4410 = vmatpush1.msra.mxu0 0.0
      %4411 = vmatprep.subr.mxu0 0.0
      %4412 = vmatpush1.msra.mxu0 0.0
      %4413 = vmatprep.subr.mxu0 0.0
      %4414 = vmatpush1.msra.mxu0 0.0
      %4415 = vmatprep.subr.mxu0 0.0
      %4416 = vmatpush1.msra.mxu0 0.0
      %4417 = vmatprep.subr.mxu0 0.0
      %4418 = vmatpush1.msra.mxu0 0.0
      %4419 = vmatprep.subr.mxu0 0.0
      %4420 = vmatpush1.msra.mxu0 0.0
      %4421 = vmatprep.subr.mxu0 0.0
      %4422 = vmatpush1.msra.mxu0 0.0
      %4423 = vmatprep.subr.mxu0 0.0
      %4424 = vmatpush1.msra.mxu0 0.0
      %4425 = vmatprep.subr.mxu0 0.0
      %4426 = vmatpush1.msra.mxu0 0.0
      %4427 = vmatprep.subr.mxu0 0.0
      %4428 = vmatpush1.msra.mxu0 0.0
      %4429 = vmatprep.mubr.f32.mxu0 0.0
      %4430 = vmatmul.mubr.f32.gmra.mrb[0].mxu0 %v3812
      %v4431 = vpop.f32.mrb[0].mxu0
      %v4432 = vadd.f32 0.0, %v4431
      %v4433 = vpop.f32.mrb[0].mxu0
      %4434 = vmatprep.mubr.f32.mxu0 0.0
      %4435 = vmatmul.mubr.f32.gmra.mrb[0].mxu0 %v3815
      %v4436 = vpop.f32.mrb[0].mxu0
      %v4437 = vadd.f32 0.0, %v4436
      %v4438 = vpop.f32.mrb[0].mxu0
      %4439 = vmatprep.mubr.f32.mxu0 0.0
      %4440 = vmatmul.mubr.f32.gmra.mrb[0].mxu0 %v3818
      %v4441 = vpop.f32.mrb[0].mxu0
      %v4442 = vadd.f32 0.0, %v4441
      %v4443 = vpop.f32.mrb[0].mxu0
      %4444 = vmatprep.mubr.f32.mxu0 0.0
      %4445 = vmatmul.mubr.f32.gmra.mrb[0].mxu0 %v3821
      %v4446 = vpop.f32.mrb[0].mxu0
      %v4447 = vadd.f32 0.0, %v4446
      %v4448 = vpop.f32.mrb[0].mxu0
      %4449 = vmatprep.mubr.f32.mxu0 0.0
      %4450 = vmatmul.mubr.f32.gmra.mrb[0].mxu0 %v3824
      %v4451 = vpop.f32.mrb[0].mxu0
      %v4452 = vadd.f32 0.0, %v4451
      %v4453 = vpop.f32.mrb[0].mxu0
      %4454 = vmatprep.mubr.f32.mxu0 0.0
      %4455 = vmatmul.mubr.f32.gmra.mrb[0].mxu0 %v3827
      %v4456 = vpop.f32.mrb[0].mxu0
      %v4457 = vadd.f32 0.0, %v4456
      %v4458 = vpop.f32.mrb[0].mxu0
      %4459 = vmatprep.mubr.f32.mxu0 0.0
      %4460 = vmatmul.mubr.f32.gmra.mrb[0].mxu0 %v3830
      %v4461 = vpop.f32.mrb[0].mxu0
      %v4462 = vadd.f32 0.0, %v4461
      %v4463 = vpop.f32.mrb[0].mxu0
      %4464 = vmatprep.mubr.f32.mxu0 0.0
      %4465 = vmatmul.mubr.f32.gmra.mrb[0].mxu0 %v3833
      %v4466 = vpop.f32.mrb[0].mxu0
      %v4467 = vadd.f32 0.0, %v4466
      %v4468 = vpop.f32.mrb[0].mxu0
      %4469 = vmatprep.mubr.f32.mxu0 0.0
      %4470 = vmatmul.mubr.f32.gmra.mrb[0].mxu0 %v3836
      %v4471 = vpop.f32.mrb[0].mxu0
      %v4472 = vadd.f32 0.0, %v4471
      %v4473 = vpop.f32.mrb[0].mxu0
      %4474 = vmatprep.mubr.f32.mxu0 0.0
      %4475 = vmatmul.mubr.f32.gmra.mrb[0].mxu0 %v3839
      %v4476 = vpop.f32.mrb[0].mxu0
      %v4477 = vadd.f32 0.0, %v4476
      %v4478 = vpop.f32.mrb[0].mxu0
      %4479 = vmatprep.mubr.f32.mxu0 0.0
      %4480 = vmatmul.mubr.f32.gmra.mrb[0].mxu0 %v3842
      %v4481 = vpop.f32.mrb[0].mxu0
      %v4482 = vadd.f32 0.0, %v4481
      %v4483 = vpop.f32.mrb[0].mxu0
      %4484 = vmatprep.mubr.f32.mxu0 0.0
      %4485 = vmatmul.mubr.f32.gmra.mrb[0].mxu0 %v3845
      %v4486 = vpop.f32.mrb[0].mxu0
      %v4487 = vadd.f32 0.0, %v4486
      %v4488 = vpop.f32.mrb[0].mxu0
      %4489 = vmatprep.mubr.f32.mxu0 0.0
      %4490 = vmatmul.mubr.f32.gmra.mrb[0].mxu0 %v3848
      %v4491 = vpop.f32.mrb[0].mxu0
      %v4492 = vadd.f32 0.0, %v4491
      %v4493 = vpop.f32.mrb[0].mxu0
      %4494 = vmatprep.mubr.f32.mxu0 0.0
      %4495 = vmatmul.mubr.f32.gmra.mrb[0].mxu0 %v3851
      %v4496 = vpop.f32.mrb[0].mxu0
      %v4497 = vadd.f32 0.0, %v4496
      %v4498 = vpop.f32.mrb[0].mxu0
      %4499 = vmatprep.mubr.f32.mxu0 0.0
      %4500 = vmatmul.mubr.f32.gmra.mrb[0].mxu0 %v3854
      %v4501 = vpop.f32.mrb[0].mxu0
      %v4502 = vadd.f32 0.0, %v4501
      %v4503 = vpop.f32.mrb[0].mxu0
      %4504 = vmatprep.mubr.f32.mxu0 0.0
      %4505 = vmatmul.mubr.f32.gmra.mrb[0].mxu0 %v3857
      %v4506 = vpop.f32.mrb[0].mxu0
      %v4507 = vadd.f32 0.0, %v4506
      %v4508 = vpop.f32.mrb[0].mxu0
      %4509 = vmatprep.mubr.f32.mxu0 0.0
      %4510 = vmatmul.mubr.f32.gmra.mrb[0].mxu0 %v3860
      %v4511 = vpop.f32.mrb[0].mxu0
      %v4512 = vadd.f32 0.0, %v4511
      %v4513 = vpop.f32.mrb[0].mxu0
      %4514 = vmatprep.mubr.f32.mxu0 0.0
      %4515 = vmatmul.mubr.f32.gmra.mrb[0].mxu0 %v3863
      %v4516 = vpop.f32.mrb[0].mxu0
      %v4517 = vadd.f32 0.0, %v4516
      %v4518 = vpop.f32.mrb[0].mxu0
      %4519 = vmatprep.mubr.f32.mxu0 0.0
      %4520 = vmatmul.mubr.f32.gmra.mrb[0].mxu0 %v3866
      %v4521 = vpop.f32.mrb[0].mxu0
      %v4522 = vadd.f32 0.0, %v4521
      %v4523 = vpop.f32.mrb[0].mxu0
      %4524 = vmatprep.mubr.f32.mxu0 0.0
      %4525 = vmatmul.mubr.f32.gmra.mrb[0].mxu0 %v3869
      %v4526 = vpop.f32.mrb[0].mxu0
      %v4527 = vadd.f32 0.0, %v4526
      %v4528 = vpop.f32.mrb[0].mxu0
      %4529 = vmatprep.mubr.f32.mxu0 0.0
      %4530 = vmatmul.mubr.f32.gmra.mrb[0].mxu0 %v3872
      %v4531 = vpop.f32.mrb[0].mxu0
      %v4532 = vadd.f32 0.0, %v4531
      %v4533 = vpop.f32.mrb[0].mxu0
      %4534 = vmatprep.mubr.f32.mxu0 0.0
      %4535 = vmatmul.mubr.f32.gmra.mrb[0].mxu0 %v3875
      %v4536 = vpop.f32.mrb[0].mxu0
      %v4537 = vadd.f32 0.0, %v4536
      %v4538 = vpop.f32.mrb[0].mxu0
      %4539 = vmatprep.mubr.f32.mxu0 0.0
      %4540 = vmatmul.mubr.f32.gmra.mrb[0].mxu0 %v3878
      %v4541 = vpop.f32.mrb[0].mxu0
      %v4542 = vadd.f32 0.0, %v4541
      %v4543 = vpop.f32.mrb[0].mxu0
      %4544 = vmatprep.mubr.f32.mxu0 0.0
      %4545 = vmatmul.mubr.f32.gmra.mrb[0].mxu0 %v3881
      %v4546 = vpop.f32.mrb[0].mxu0
      %v4547 = vadd.f32 0.0, %v4546
      %v4548 = vpop.f32.mrb[0].mxu0
      %4549 = vmatprep.mubr.f32.mxu0 0.0
      %4550 = vmatmul.mubr.f32.gmra.mrb[0].mxu0 %v3884
      %v4551 = vpop.f32.mrb[0].mxu0
      %v4552 = vadd.f32 0.0, %v4551
      %v4553 = vpop.f32.mrb[0].mxu0
      %4554 = vmatprep.mubr.f32.mxu0 0.0
      %4555 = vmatmul.mubr.f32.gmra.mrb[0].mxu0 %v3887
      %v4556 = vpop.f32.mrb[0].mxu0
      %v4557 = vadd.f32 0.0, %v4556
      %v4558 = vpop.f32.mrb[0].mxu0
      %4559 = vmatprep.mubr.f32.mxu0 0.0
      %4560 = vmatmul.mubr.f32.gmra.mrb[0].mxu0 %v3890
      %v4561 = vpop.f32.mrb[0].mxu0
      %v4562 = vadd.f32 0.0, %v4561
      %v4563 = vpop.f32.mrb[0].mxu0
      %4564 = vmatprep.mubr.f32.mxu0 0.0
      %4565 = vmatmul.mubr.f32.gmra.mrb[0].mxu0 %v3893
      %v4566 = vpop.f32.mrb[0].mxu0
      %v4567 = vadd.f32 0.0, %v4566
      %v4568 = vpop.f32.mrb[0].mxu0
      %4569 = vmatprep.mubr.f32.mxu0 0.0
      %4570 = vmatmul.mubr.f32.gmra.mrb[0].mxu0 %v3896
      %v4571 = vpop.f32.mrb[0].mxu0
      %v4572 = vadd.f32 0.0, %v4571
      %v4573 = vpop.f32.mrb[0].mxu0
      %4574 = vmatprep.mubr.f32.mxu0 0.0
      %4575 = vmatmul.mubr.f32.gmra.mrb[0].mxu0 %v3899
      %v4576 = vpop.f32.mrb[0].mxu0
      %v4577 = vadd.f32 0.0, %v4576
      %v4578 = vpop.f32.mrb[0].mxu0
      %4579 = vmatprep.mubr.f32.mxu0 0.0
      %4580 = vmatmul.mubr.f32.gmra.mrb[0].mxu0 %v3902
      %v4581 = vpop.f32.mrb[0].mxu0
      %v4582 = vadd.f32 0.0, %v4581
      %v4583 = vpop.f32.mrb[0].mxu0
      %4584 = vmatprep.mubr.f32.mxu0 0.0
      %4585 = vmatmul.mubr.f32.gmra.mrb[0].mxu0 %v3905
      %v4586 = vpop.f32.mrb[0].mxu0
      %v4587 = vadd.f32 0.0, %v4586
      %v4588 = vpop.f32.mrb[0].mxu0
      %4589 = vdwg.mxu0
      %v4590 = vmax.f32 %v4432, %v4452
      %v4591 = vmax.f32 %v4437, %v4457
      %v4592 = vmax.f32 %v4442, %v4462
      %v4593 = vmax.f32 %v4447, %v4467
      %v4594 = vmax.f32 %v4590, %v4472
      %v4595 = vmax.f32 %v4591, %v4477
      %v4596 = vmax.f32 %v4592, %v4482
      %v4597 = vmax.f32 %v4593, %v4487
      %v4598 = vmax.f32 %v4594, %v4492
      %v4599 = vmax.f32 %v4595, %v4497
      %v4600 = vmax.f32 %v4596, %v4502
      %v4601 = vmax.f32 %v4597, %v4507
      %v4602 = vmax.f32 %v4598, %v4512
      %v4603 = vmax.f32 %v4599, %v4517
      %v4604 = vmax.f32 %v4600, %v4522
      %v4605 = vmax.f32 %v4601, %v4527
      %v4606 = vmax.f32 %v4602, %v4532
      %v4607 = vmax.f32 %v4603, %v4537
      %v4608 = vmax.f32 %v4604, %v4542
      %v4609 = vmax.f32 %v4605, %v4547
      %v4610 = vmax.f32 %v4606, %v4552
      %v4611 = vmax.f32 %v4607, %v4557
      %v4612 = vmax.f32 %v4608, %v4562
      %v4613 = vmax.f32 %v4609, %v4567
      %v4614 = vmax.f32 %v4610, %v4572
      %v4615 = vmax.f32 %v4611, %v4577
      %v4616 = vmax.f32 %v4612, %v4582
      %v4617 = vmax.f32 %v4613, %v4587
      %v4618 = vmax.f32 %v4614, %v4615
      %v4619 = vmax.f32 %v4616, %v4617
      %v4620 = vmax.f32 %v4618, %v4619
      %v4621 = vrot.slane %v4620, 4
      %v4622 = vmax.f32 %v4620, %v4621
      %v4623 = vrot.slane %v4622, 2
      %v4624 = vmax.f32 %v4622, %v4623
      %v4625 = vrot.slane %v4624, 1
      %v4626 = vmax.f32 %v4624, %v4625
      %v4627 = vsub.f32 %v4432, %v4626
      %v4628 = vsub.f32 %v4437, %v4626
      %v4629 = vsub.f32 %v4442, %v4626
      %v4630 = vsub.f32 %v4447, %v4626
      %v4631 = vsub.f32 %v4452, %v4626
      %v4632 = vsub.f32 %v4457, %v4626
      %v4633 = vsub.f32 %v4462, %v4626
      %v4634 = vsub.f32 %v4467, %v4626
      %v4635 = vsub.f32 %v4472, %v4626
      %v4636 = vsub.f32 %v4477, %v4626
      %v4637 = vsub.f32 %v4482, %v4626
      %v4638 = vsub.f32 %v4487, %v4626
      %v4639 = vsub.f32 %v4492, %v4626
      %v4640 = vsub.f32 %v4497, %v4626
      %v4641 = vsub.f32 %v4502, %v4626
      %v4642 = vsub.f32 %v4507, %v4626
      %v4643 = vsub.f32 %v4512, %v4626
      %v4644 = vsub.f32 %v4517, %v4626
      %v4645 = vsub.f32 %v4522, %v4626
      %v4646 = vsub.f32 %v4527, %v4626
      %v4647 = vsub.f32 %v4532, %v4626
      %v4648 = vsub.f32 %v4537, %v4626
      %v4649 = vsub.f32 %v4542, %v4626
      %v4650 = vsub.f32 %v4547, %v4626
      %v4651 = vsub.f32 %v4552, %v4626
      %v4652 = vsub.f32 %v4557, %v4626
      %v4653 = vsub.f32 %v4562, %v4626
      %v4654 = vsub.f32 %v4567, %v4626
      %v4655 = vsub.f32 %v4572, %v4626
      %v4656 = vsub.f32 %v4577, %v4626
      %v4657 = vsub.f32 %v4582, %v4626
      %v4658 = vsub.f32 %v4587, %v4626
      %v4659 = vmul.f32 %v4627, 1.442695
      %v4660 = vpow.pop %v4659
      %v4661 = vmul.f32 %v4628, 1.442695
      %v4662 = vpow.pop %v4661
      %v4663 = vmul.f32 %v4629, 1.442695
      %v4664 = vpow.pop %v4663
      %v4665 = vmul.f32 %v4630, 1.442695
      %v4666 = vpow.pop %v4665
      %v4667 = vmul.f32 %v4631, 1.442695
      %v4668 = vpow.pop %v4667
      %v4669 = vmul.f32 %v4632, 1.442695
      %v4670 = vpow.pop %v4669
      %v4671 = vmul.f32 %v4633, 1.442695
      %v4672 = vpow.pop %v4671
      %v4673 = vmul.f32 %v4634, 1.442695
      %v4674 = vpow.pop %v4673
      %v4675 = vmul.f32 %v4635, 1.442695
      %v4676 = vpow.pop %v4675
      %v4677 = vmul.f32 %v4636, 1.442695
      %v4678 = vpow.pop %v4677
      %v4679 = vmul.f32 %v4637, 1.442695
      %v4680 = vpow.pop %v4679
      %v4681 = vmul.f32 %v4638, 1.442695
      %v4682 = vpow.pop %v4681
      %v4683 = vmul.f32 %v4639, 1.442695
      %v4684 = vpow.pop %v4683
      %v4685 = vmul.f32 %v4640, 1.442695
      %v4686 = vpow.pop %v4685
      %v4687 = vmul.f32 %v4641, 1.442695
      %v4688 = vpow.pop %v4687
      %v4689 = vmul.f32 %v4642, 1.442695
      %v4690 = vpow.pop %v4689
      %v4691 = vmul.f32 %v4643, 1.442695
      %v4692 = vpow.pop %v4691
      %v4693 = vmul.f32 %v4644, 1.442695
      %v4694 = vpow.pop %v4693
      %v4695 = vmul.f32 %v4645, 1.442695
      %v4696 = vpow.pop %v4695
      %v4697 = vmul.f32 %v4646, 1.442695
      %v4698 = vpow.pop %v4697
      %v4699 = vmul.f32 %v4647, 1.442695
      %v4700 = vpow.pop %v4699
      %v4701 = vmul.f32 %v4648, 1.442695
      %v4702 = vpow.pop %v4701
      %v4703 = vmul.f32 %v4649, 1.442695
      %v4704 = vpow.pop %v4703
      %v4705 = vmul.f32 %v4650, 1.442695
      %v4706 = vpow.pop %v4705
      %v4707 = vmul.f32 %v4651, 1.442695
      %v4708 = vpow.pop %v4707
      %v4709 = vmul.f32 %v4652, 1.442695
      %v4710 = vpow.pop %v4709
      %v4711 = vmul.f32 %v4653, 1.442695
      %v4712 = vpow.pop %v4711
      %v4713 = vmul.f32 %v4654, 1.442695
      %v4714 = vpow.pop %v4713
      %v4715 = vmul.f32 %v4655, 1.442695
      %v4716 = vpow.pop %v4715
      %v4717 = vmul.f32 %v4656, 1.442695
      %v4718 = vpow.pop %v4717
      %v4719 = vmul.f32 %v4657, 1.442695
      %v4720 = vpow.pop %v4719
      %v4721 = vmul.f32 %v4658, 1.442695
      %v4722 = vpow.pop %v4721
      %4723 = vmatprep.subr.mxu0 0.0
      %4724 = vmatpush1.msra.mxu0 %v4660
      %4725 = vmatprep.subr.mxu0 0.0
      %4726 = vmatpush1.msra.mxu0 %v4662
      %4727 = vmatprep.subr.mxu0 0.0
      %4728 = vmatpush1.msra.mxu0 %v4664
      %4729 = vmatprep.subr.mxu0 0.0
      %4730 = vmatpush1.msra.mxu0 %v4666
      %4731 = vmatprep.subr.mxu0 0.0
      %4732 = vmatpush1.msra.mxu0 %v4668
      %4733 = vmatprep.subr.mxu0 0.0
      %4734 = vmatpush1.msra.mxu0 %v4670
      %4735 = vmatprep.subr.mxu0 0.0
      %4736 = vmatpush1.msra.mxu0 %v4672
      %4737 = vmatprep.subr.mxu0 0.0
      %4738 = vmatpush1.msra.mxu0 %v4674
      %4739 = vmatprep.subr.mxu0 0.0
      %4740 = vmatpush1.msra.mxu0 %v4676
      %4741 = vmatprep.subr.mxu0 0.0
      %4742 = vmatpush1.msra.mxu0 %v4678
      %4743 = vmatprep.subr.mxu0 0.0
      %4744 = vmatpush1.msra.mxu0 %v4680
      %4745 = vmatprep.subr.mxu0 0.0
      %4746 = vmatpush1.msra.mxu0 %v4682
      %4747 = vmatprep.subr.mxu0 0.0
      %4748 = vmatpush1.msra.mxu0 %v4684
      %4749 = vmatprep.subr.mxu0 0.0
      %4750 = vmatpush1.msra.mxu0 %v4686
      %4751 = vmatprep.subr.mxu0 0.0
      %4752 = vmatpush1.msra.mxu0 %v4688
      %4753 = vmatprep.subr.mxu0 0.0
      %4754 = vmatpush1.msra.mxu0 %v4690
      %4755 = vmatprep.subr.mxu0 0.0
      %4756 = vmatpush1.msra.mxu0 %v4692
      %4757 = vmatprep.subr.mxu0 0.0
      %4758 = vmatpush1.msra.mxu0 %v4694
      %4759 = vmatprep.subr.mxu0 0.0
      %4760 = vmatpush1.msra.mxu0 %v4696
      %4761 = vmatprep.subr.mxu0 0.0
      %4762 = vmatpush1.msra.mxu0 %v4698
      %4763 = vmatprep.subr.mxu0 0.0
      %4764 = vmatpush1.msra.mxu0 %v4700
      %4765 = vmatprep.subr.mxu0 0.0
      %4766 = vmatpush1.msra.mxu0 %v4702
      %4767 = vmatprep.subr.mxu0 0.0
      %4768 = vmatpush1.msra.mxu0 %v4704
      %4769 = vmatprep.subr.mxu0 0.0
      %4770 = vmatpush1.msra.mxu0 %v4706
      %4771 = vmatprep.subr.mxu0 0.0
      %4772 = vmatpush1.msra.mxu0 %v4708
      %4773 = vmatprep.subr.mxu0 0.0
      %4774 = vmatpush1.msra.mxu0 %v4710
      %4775 = vmatprep.subr.mxu0 0.0
      %4776 = vmatpush1.msra.mxu0 %v4712
      %4777 = vmatprep.subr.mxu0 0.0
      %4778 = vmatpush1.msra.mxu0 %v4714
      %4779 = vmatprep.subr.mxu0 0.0
      %4780 = vmatpush1.msra.mxu0 %v4716
      %4781 = vmatprep.subr.mxu0 0.0
      %4782 = vmatpush1.msra.mxu0 %v4718
      %4783 = vmatprep.subr.mxu0 0.0
      %4784 = vmatpush1.msra.mxu0 %v4720
      %4785 = vmatprep.subr.mxu0 0.0
      %4786 = vmatpush1.msra.mxu0 %v4722
      %4787 = vmatprep.mubr.f32.mxu0 %v4277
      %4788 = vmatmul.mubr.f32.gmra.mrb[0].mxu0 %v4274
      %v4789 = vpop.f32.mrb[0].mxu0
      %v4790 = vadd.f32 0.0, %v4789
      %v4791 = vpop.f32.mrb[0].mxu0
      %4792 = vdwg.mxu0
      %v4793 = vrcp.pop %v4790
      %v4794 = vmul.f32 1.0, %v4793
      %v4795 = vlaneseq
      %v4796 = vshrl.u32 %v4795, 7
      %v4797 = vsub.s32 4, %v4796
      %v4798 = vrot.slane %v4794, %v4797
      %v4799 = vmul.f32 %v4790, %v4798
      %v4801 = vrot.slane %v4799, 4
      %4803 = vst [vmem:[#allocation3 + $0x18] sm:$0xf0] %v4801
      %v4804 = vld [vmem:[#allocation2 + $0x20] sm:$0xf]
      %v4805 = vld [vmem:[#allocation2 + $0x28] sm:$0xf]
      %v4806 = vld [vmem:[#allocation2 + $0x60] sm:$0xf]
      %v4807 = vld [vmem:[#allocation2 + $0x68] sm:$0xf]
      %v4808 = vld [vmem:[#allocation2 + $0xa0] sm:$0xf0]
      %v4809 = vld [vmem:[#allocation2 + $0xa8] sm:$0xf0]
      %v4810 = vld [vmem:[#allocation2 + $0xb0] sm:$0x1]
      %v4811 = vld [vmem:[#allocation2 + $0xb8] sm:$0x1]
      %4812 = vxpose.xlu0.b32.start [1/16] %v4804, 128
      %4813 = vxpose.xlu0.b32.cont [2/16] 0.0, 128
      %4814 = vxpose.xlu0.b32.cont [3/16] 0.0, 128
      %4815 = vxpose.xlu0.b32.cont [4/16] 0.0, 128
      %4816 = vxpose.xlu0.b32.cont [5/16] 0.0, 128
      %4817 = vxpose.xlu0.b32.cont [6/16] 0.0, 128
      %4818 = vxpose.xlu0.b32.cont [7/16] 0.0, 128
      %4819 = vxpose.xlu0.b32.cont [8/16] 0.0, 128
      %4820 = vxpose.xlu0.b32.cont [9/16] 0.0, 128
      %4821 = vxpose.xlu0.b32.cont [10/16] 0.0, 128
      %4822 = vxpose.xlu0.b32.cont [11/16] 0.0, 128
      %4823 = vxpose.xlu0.b32.cont [12/16] 0.0, 128
      %4824 = vxpose.xlu0.b32.cont [13/16] 0.0, 128
      %4825 = vxpose.xlu0.b32.cont [14/16] 0.0, 128
      %4826 = vxpose.xlu0.b32.cont [15/16] 0.0, 128
      %4827 = vxpose.xlu0.b32.end [16/16] 0.0, 128
      %v4828 = vpop.trf.xlu0
      %v4829 = vpop.trf.xlu0
      %v4830 = vpop.trf.xlu0
      %v4831 = vpop.trf.xlu0
      %v4832 = vpop.trf.xlu0
      %v4833 = vpop.trf.xlu0
      %v4834 = vpop.trf.xlu0
      %v4835 = vpop.trf.xlu0
      %v4836 = vpop.trf.xlu0
      %v4837 = vpop.trf.xlu0
      %v4838 = vpop.trf.xlu0
      %v4839 = vpop.trf.xlu0
      %v4840 = vpop.trf.xlu0
      %v4841 = vpop.trf.xlu0
      %v4842 = vpop.trf.xlu0
      %v4843 = vpop.trf.xlu0
      %4844 = vxpose.xlu0.b32.start [1/16] %v4805, 128
      %4845 = vxpose.xlu0.b32.cont [2/16] 0.0, 128
      %4846 = vxpose.xlu0.b32.cont [3/16] 0.0, 128
      %4847 = vxpose.xlu0.b32.cont [4/16] 0.0, 128
      %4848 = vxpose.xlu0.b32.cont [5/16] 0.0, 128
      %4849 = vxpose.xlu0.b32.cont [6/16] 0.0, 128
      %4850 = vxpose.xlu0.b32.cont [7/16] 0.0, 128
      %4851 = vxpose.xlu0.b32.cont [8/16] 0.0, 128
      %4852 = vxpose.xlu0.b32.cont [9/16] 0.0, 128
      %4853 = vxpose.xlu0.b32.cont [10/16] 0.0, 128
      %4854 = vxpose.xlu0.b32.cont [11/16] 0.0, 128
      %4855 = vxpose.xlu0.b32.cont [12/16] 0.0, 128
      %4856 = vxpose.xlu0.b32.cont [13/16] 0.0, 128
      %4857 = vxpose.xlu0.b32.cont [14/16] 0.0, 128
      %4858 = vxpose.xlu0.b32.cont [15/16] 0.0, 128
      %4859 = vxpose.xlu0.b32.end [16/16] 0.0, 128
      %v4860 = vpop.trf.xlu0
      %v4861 = vpop.trf.xlu0
      %v4862 = vpop.trf.xlu0
      %v4863 = vpop.trf.xlu0
      %v4864 = vpop.trf.xlu0
      %v4865 = vpop.trf.xlu0
      %v4866 = vpop.trf.xlu0
      %v4867 = vpop.trf.xlu0
      %v4868 = vpop.trf.xlu0
      %v4869 = vpop.trf.xlu0
      %v4870 = vpop.trf.xlu0
      %v4871 = vpop.trf.xlu0
      %v4872 = vpop.trf.xlu0
      %v4873 = vpop.trf.xlu0
      %v4874 = vpop.trf.xlu0
      %v4875 = vpop.trf.xlu0
      %v4877 = vsel %vm632, %v4828, 0
      %v4880 = vsel %vm632, %v4829, 0
      %v4883 = vsel %vm632, %v4830, 0
      %v4886 = vsel %vm632, %v4831, 0
      %v4889 = vsel %vm632, %v4832, 0
      %v4892 = vsel %vm632, %v4833, 0
      %v4895 = vsel %vm632, %v4834, 0
      %v4898 = vsel %vm632, %v4835, 0
      %v4901 = vsel %vm632, %v4836, 0
      %v4904 = vsel %vm632, %v4837, 0
      %v4907 = vsel %vm632, %v4838, 0
      %v4910 = vsel %vm632, %v4839, 0
      %v4913 = vsel %vm632, %v4840, 0
      %v4916 = vsel %vm632, %v4841, 0
      %v4919 = vsel %vm632, %v4842, 0
      %v4922 = vsel %vm632, %v4843, 0
      %v4925 = vsel %vm632, %v4860, 0
      %v4928 = vsel %vm632, %v4861, 0
      %v4931 = vsel %vm632, %v4862, 0
      %v4934 = vsel %vm632, %v4863, 0
      %v4937 = vsel %vm632, %v4864, 0
      %v4940 = vsel %vm632, %v4865, 0
      %v4943 = vsel %vm632, %v4866, 0
      %v4946 = vsel %vm632, %v4867, 0
      %v4949 = vsel %vm632, %v4868, 0
      %v4952 = vsel %vm632, %v4869, 0
      %v4955 = vsel %vm632, %v4870, 0
      %v4958 = vsel %vm632, %v4871, 0
      %v4961 = vsel %vm632, %v4872, 0
      %v4964 = vsel %vm632, %v4873, 0
      %v4967 = vsel %vm632, %v4874, 0
      %v4970 = vsel %vm632, %v4875, 0
      %v4973 = vsel %vm729, %v4806, 0
      %4975 = vmatprep.subr.mxu0 0.0
      %4976 = vmatpush1.msra.mxu0 %v4973
      %4977 = vmatprep.subr.mxu0 0.0
      %4978 = vmatpush1.msra.mxu0 0.0
      %4979 = vmatprep.subr.mxu0 0.0
      %4980 = vmatpush1.msra.mxu0 0.0
      %4981 = vmatprep.subr.mxu0 0.0
      %4982 = vmatpush1.msra.mxu0 0.0
      %4983 = vmatprep.subr.mxu0 0.0
      %4984 = vmatpush1.msra.mxu0 0.0
      %4985 = vmatprep.subr.mxu0 0.0
      %4986 = vmatpush1.msra.mxu0 0.0
      %4987 = vmatprep.subr.mxu0 0.0
      %4988 = vmatpush1.msra.mxu0 0.0
      %4989 = vmatprep.subr.mxu0 0.0
      %4990 = vmatpush1.msra.mxu0 0.0
      %4991 = vmatprep.subr.mxu0 0.0
      %4992 = vmatpush1.msra.mxu0 0.0
      %4993 = vmatprep.subr.mxu0 0.0
      %4994 = vmatpush1.msra.mxu0 0.0
      %4995 = vmatprep.subr.mxu0 0.0
      %4996 = vmatpush1.msra.mxu0 0.0
      %4997 = vmatprep.subr.mxu0 0.0
      %4998 = vmatpush1.msra.mxu0 0.0
      %4999 = vmatprep.subr.mxu0 0.0
      %5000 = vmatpush1.msra.mxu0 0.0
      %5001 = vmatprep.subr.mxu0 0.0
      %5002 = vmatpush1.msra.mxu0 0.0
      %5003 = vmatprep.subr.mxu0 0.0
      %5004 = vmatpush1.msra.mxu0 0.0
      %5005 = vmatprep.subr.mxu0 0.0
      %5006 = vmatpush1.msra.mxu0 0.0
      %5007 = vmatprep.subr.mxu0 0.0
      %5008 = vmatpush1.msra.mxu0 0.0
      %5009 = vmatprep.subr.mxu0 0.0
      %5010 = vmatpush1.msra.mxu0 0.0
      %5011 = vmatprep.subr.mxu0 0.0
      %5012 = vmatpush1.msra.mxu0 0.0
      %5013 = vmatprep.subr.mxu0 0.0
      %5014 = vmatpush1.msra.mxu0 0.0
      %5015 = vmatprep.subr.mxu0 0.0
      %5016 = vmatpush1.msra.mxu0 0.0
      %5017 = vmatprep.subr.mxu0 0.0
      %5018 = vmatpush1.msra.mxu0 0.0
      %5019 = vmatprep.subr.mxu0 0.0
      %5020 = vmatpush1.msra.mxu0 0.0
      %5021 = vmatprep.subr.mxu0 0.0
      %5022 = vmatpush1.msra.mxu0 0.0
      %5023 = vmatprep.subr.mxu0 0.0
      %5024 = vmatpush1.msra.mxu0 0.0
      %5025 = vmatprep.subr.mxu0 0.0
      %5026 = vmatpush1.msra.mxu0 0.0
      %5027 = vmatprep.subr.mxu0 0.0
      %5028 = vmatpush1.msra.mxu0 0.0
      %5029 = vmatprep.subr.mxu0 0.0
      %5030 = vmatpush1.msra.mxu0 0.0
      %5031 = vmatprep.subr.mxu0 0.0
      %5032 = vmatpush1.msra.mxu0 0.0
      %5033 = vmatprep.subr.mxu0 0.0
      %5034 = vmatpush1.msra.mxu0 0.0
      %5035 = vmatprep.subr.mxu0 0.0
      %5036 = vmatpush1.msra.mxu0 0.0
      %5037 = vmatprep.subr.mxu0 0.0
      %5038 = vmatpush1.msra.mxu0 0.0
      %5039 = vmatprep.mubr.f32.mxu0 0.0
      %5040 = vmatmul.mubr.f32.gmra.mrb[0].mxu0 %v4877
      %v5041 = vpop.f32.mrb[0].mxu0
      %v5042 = vadd.f32 0.0, %v5041
      %v5043 = vpop.f32.mrb[0].mxu0
      %5044 = vmatprep.mubr.f32.mxu0 0.0
      %5045 = vmatmul.mubr.f32.gmra.mrb[0].mxu0 %v4880
      %v5046 = vpop.f32.mrb[0].mxu0
      %v5047 = vadd.f32 0.0, %v5046
      %v5048 = vpop.f32.mrb[0].mxu0
      %5049 = vmatprep.mubr.f32.mxu0 0.0
      %5050 = vmatmul.mubr.f32.gmra.mrb[0].mxu0 %v4883
      %v5051 = vpop.f32.mrb[0].mxu0
      %v5052 = vadd.f32 0.0, %v5051
      %v5053 = vpop.f32.mrb[0].mxu0
      %5054 = vmatprep.mubr.f32.mxu0 0.0
      %5055 = vmatmul.mubr.f32.gmra.mrb[0].mxu0 %v4886
      %v5056 = vpop.f32.mrb[0].mxu0
      %v5057 = vadd.f32 0.0, %v5056
      %v5058 = vpop.f32.mrb[0].mxu0
      %5059 = vmatprep.mubr.f32.mxu0 0.0
      %5060 = vmatmul.mubr.f32.gmra.mrb[0].mxu0 %v4889
      %v5061 = vpop.f32.mrb[0].mxu0
      %v5062 = vadd.f32 0.0, %v5061
      %v5063 = vpop.f32.mrb[0].mxu0
      %5064 = vmatprep.mubr.f32.mxu0 0.0
      %5065 = vmatmul.mubr.f32.gmra.mrb[0].mxu0 %v4892
      %v5066 = vpop.f32.mrb[0].mxu0
      %v5067 = vadd.f32 0.0, %v5066
      %v5068 = vpop.f32.mrb[0].mxu0
      %5069 = vmatprep.mubr.f32.mxu0 0.0
      %5070 = vmatmul.mubr.f32.gmra.mrb[0].mxu0 %v4895
      %v5071 = vpop.f32.mrb[0].mxu0
      %v5072 = vadd.f32 0.0, %v5071
      %v5073 = vpop.f32.mrb[0].mxu0
      %5074 = vmatprep.mubr.f32.mxu0 0.0
      %5075 = vmatmul.mubr.f32.gmra.mrb[0].mxu0 %v4898
      %v5076 = vpop.f32.mrb[0].mxu0
      %v5077 = vadd.f32 0.0, %v5076
      %v5078 = vpop.f32.mrb[0].mxu0
      %5079 = vmatprep.mubr.f32.mxu0 0.0
      %5080 = vmatmul.mubr.f32.gmra.mrb[0].mxu0 %v4901
      %v5081 = vpop.f32.mrb[0].mxu0
      %v5082 = vadd.f32 0.0, %v5081
      %v5083 = vpop.f32.mrb[0].mxu0
      %5084 = vmatprep.mubr.f32.mxu0 0.0
      %5085 = vmatmul.mubr.f32.gmra.mrb[0].mxu0 %v4904
      %v5086 = vpop.f32.mrb[0].mxu0
      %v5087 = vadd.f32 0.0, %v5086
      %v5088 = vpop.f32.mrb[0].mxu0
      %5089 = vmatprep.mubr.f32.mxu0 0.0
      %5090 = vmatmul.mubr.f32.gmra.mrb[0].mxu0 %v4907
      %v5091 = vpop.f32.mrb[0].mxu0
      %v5092 = vadd.f32 0.0, %v5091
      %v5093 = vpop.f32.mrb[0].mxu0
      %5094 = vmatprep.mubr.f32.mxu0 0.0
      %5095 = vmatmul.mubr.f32.gmra.mrb[0].mxu0 %v4910
      %v5096 = vpop.f32.mrb[0].mxu0
      %v5097 = vadd.f32 0.0, %v5096
      %v5098 = vpop.f32.mrb[0].mxu0
      %5099 = vmatprep.mubr.f32.mxu0 0.0
      %5100 = vmatmul.mubr.f32.gmra.mrb[0].mxu0 %v4913
      %v5101 = vpop.f32.mrb[0].mxu0
      %v5102 = vadd.f32 0.0, %v5101
      %v5103 = vpop.f32.mrb[0].mxu0
      %5104 = vmatprep.mubr.f32.mxu0 0.0
      %5105 = vmatmul.mubr.f32.gmra.mrb[0].mxu0 %v4916
      %v5106 = vpop.f32.mrb[0].mxu0
      %v5107 = vadd.f32 0.0, %v5106
      %v5108 = vpop.f32.mrb[0].mxu0
      %5109 = vmatprep.mubr.f32.mxu0 0.0
      %5110 = vmatmul.mubr.f32.gmra.mrb[0].mxu0 %v4919
      %v5111 = vpop.f32.mrb[0].mxu0
      %v5112 = vadd.f32 0.0, %v5111
      %v5113 = vpop.f32.mrb[0].mxu0
      %5114 = vmatprep.mubr.f32.mxu0 0.0
      %5115 = vmatmul.mubr.f32.gmra.mrb[0].mxu0 %v4922
      %v5116 = vpop.f32.mrb[0].mxu0
      %v5117 = vadd.f32 0.0, %v5116
      %v5118 = vpop.f32.mrb[0].mxu0
      %5119 = vmatprep.mubr.f32.mxu0 0.0
      %5120 = vmatmul.mubr.f32.gmra.mrb[0].mxu0 %v4925
      %v5121 = vpop.f32.mrb[0].mxu0
      %v5122 = vadd.f32 0.0, %v5121
      %v5123 = vpop.f32.mrb[0].mxu0
      %5124 = vmatprep.mubr.f32.mxu0 0.0
      %5125 = vmatmul.mubr.f32.gmra.mrb[0].mxu0 %v4928
      %v5126 = vpop.f32.mrb[0].mxu0
      %v5127 = vadd.f32 0.0, %v5126
      %v5128 = vpop.f32.mrb[0].mxu0
      %5129 = vmatprep.mubr.f32.mxu0 0.0
      %5130 = vmatmul.mubr.f32.gmra.mrb[0].mxu0 %v4931
      %v5131 = vpop.f32.mrb[0].mxu0
      %v5132 = vadd.f32 0.0, %v5131
      %v5133 = vpop.f32.mrb[0].mxu0
      %5134 = vmatprep.mubr.f32.mxu0 0.0
      %5135 = vmatmul.mubr.f32.gmra.mrb[0].mxu0 %v4934
      %v5136 = vpop.f32.mrb[0].mxu0
      %v5137 = vadd.f32 0.0, %v5136
      %v5138 = vpop.f32.mrb[0].mxu0
      %5139 = vmatprep.mubr.f32.mxu0 0.0
      %5140 = vmatmul.mubr.f32.gmra.mrb[0].mxu0 %v4937
      %v5141 = vpop.f32.mrb[0].mxu0
      %v5142 = vadd.f32 0.0, %v5141
      %v5143 = vpop.f32.mrb[0].mxu0
      %5144 = vmatprep.mubr.f32.mxu0 0.0
      %5145 = vmatmul.mubr.f32.gmra.mrb[0].mxu0 %v4940
      %v5146 = vpop.f32.mrb[0].mxu0
      %v5147 = vadd.f32 0.0, %v5146
      %v5148 = vpop.f32.mrb[0].mxu0
      %5149 = vmatprep.mubr.f32.mxu0 0.0
      %5150 = vmatmul.mubr.f32.gmra.mrb[0].mxu0 %v4943
      %v5151 = vpop.f32.mrb[0].mxu0
      %v5152 = vadd.f32 0.0, %v5151
      %v5153 = vpop.f32.mrb[0].mxu0
      %5154 = vmatprep.mubr.f32.mxu0 0.0
      %5155 = vmatmul.mubr.f32.gmra.mrb[0].mxu0 %v4946
      %v5156 = vpop.f32.mrb[0].mxu0
      %v5157 = vadd.f32 0.0, %v5156
      %v5158 = vpop.f32.mrb[0].mxu0
      %5159 = vmatprep.mubr.f32.mxu0 0.0
      %5160 = vmatmul.mubr.f32.gmra.mrb[0].mxu0 %v4949
      %v5161 = vpop.f32.mrb[0].mxu0
      %v5162 = vadd.f32 0.0, %v5161
      %v5163 = vpop.f32.mrb[0].mxu0
      %5164 = vmatprep.mubr.f32.mxu0 0.0
      %5165 = vmatmul.mubr.f32.gmra.mrb[0].mxu0 %v4952
      %v5166 = vpop.f32.mrb[0].mxu0
      %v5167 = vadd.f32 0.0, %v5166
      %v5168 = vpop.f32.mrb[0].mxu0
      %5169 = vmatprep.mubr.f32.mxu0 0.0
      %5170 = vmatmul.mubr.f32.gmra.mrb[0].mxu0 %v4955
      %v5171 = vpop.f32.mrb[0].mxu0
      %v5172 = vadd.f32 0.0, %v5171
      %v5173 = vpop.f32.mrb[0].mxu0
      %5174 = vmatprep.mubr.f32.mxu0 0.0
      %5175 = vmatmul.mubr.f32.gmra.mrb[0].mxu0 %v4958
      %v5176 = vpop.f32.mrb[0].mxu0
      %v5177 = vadd.f32 0.0, %v5176
      %v5178 = vpop.f32.mrb[0].mxu0
      %5179 = vmatprep.mubr.f32.mxu0 0.0
      %5180 = vmatmul.mubr.f32.gmra.mrb[0].mxu0 %v4961
      %v5181 = vpop.f32.mrb[0].mxu0
      %v5182 = vadd.f32 0.0, %v5181
      %v5183 = vpop.f32.mrb[0].mxu0
      %5184 = vmatprep.mubr.f32.mxu0 0.0
      %5185 = vmatmul.mubr.f32.gmra.mrb[0].mxu0 %v4964
      %v5186 = vpop.f32.mrb[0].mxu0
      %v5187 = vadd.f32 0.0, %v5186
      %v5188 = vpop.f32.mrb[0].mxu0
      %5189 = vmatprep.mubr.f32.mxu0 0.0
      %5190 = vmatmul.mubr.f32.gmra.mrb[0].mxu0 %v4967
      %v5191 = vpop.f32.mrb[0].mxu0
      %v5192 = vadd.f32 0.0, %v5191
      %v5193 = vpop.f32.mrb[0].mxu0
      %5194 = vmatprep.mubr.f32.mxu0 0.0
      %5195 = vmatmul.mubr.f32.gmra.mrb[0].mxu0 %v4970
      %v5196 = vpop.f32.mrb[0].mxu0
      %v5197 = vadd.f32 0.0, %v5196
      %v5198 = vpop.f32.mrb[0].mxu0
      %5199 = vdwg.mxu0
      %v5200 = vmax.f32 %v5042, %v5062
      %v5201 = vmax.f32 %v5047, %v5067
      %v5202 = vmax.f32 %v5052, %v5072
      %v5203 = vmax.f32 %v5057, %v5077
      %v5204 = vmax.f32 %v5200, %v5082
      %v5205 = vmax.f32 %v5201, %v5087
      %v5206 = vmax.f32 %v5202, %v5092
      %v5207 = vmax.f32 %v5203, %v5097
      %v5208 = vmax.f32 %v5204, %v5102
      %v5209 = vmax.f32 %v5205, %v5107
      %v5210 = vmax.f32 %v5206, %v5112
      %v5211 = vmax.f32 %v5207, %v5117
      %v5212 = vmax.f32 %v5208, %v5122
      %v5213 = vmax.f32 %v5209, %v5127
      %v5214 = vmax.f32 %v5210, %v5132
      %v5215 = vmax.f32 %v5211, %v5137
      %v5216 = vmax.f32 %v5212, %v5142
      %v5217 = vmax.f32 %v5213, %v5147
      %v5218 = vmax.f32 %v5214, %v5152
      %v5219 = vmax.f32 %v5215, %v5157
      %v5220 = vmax.f32 %v5216, %v5162
      %v5221 = vmax.f32 %v5217, %v5167
      %v5222 = vmax.f32 %v5218, %v5172
      %v5223 = vmax.f32 %v5219, %v5177
      %v5224 = vmax.f32 %v5220, %v5182
      %v5225 = vmax.f32 %v5221, %v5187
      %v5226 = vmax.f32 %v5222, %v5192
      %v5227 = vmax.f32 %v5223, %v5197
      %v5228 = vmax.f32 %v5224, %v5225
      %v5229 = vmax.f32 %v5226, %v5227
      %v5230 = vmax.f32 %v5228, %v5229
      %v5231 = vrot.slane %v5230, 4
      %v5232 = vmax.f32 %v5230, %v5231
      %v5233 = vrot.slane %v5232, 2
      %v5234 = vmax.f32 %v5232, %v5233
      %v5235 = vrot.slane %v5234, 1
      %v5236 = vmax.f32 %v5234, %v5235
      %v5237 = vsub.f32 %v5042, %v5236
      %v5238 = vsub.f32 %v5047, %v5236
      %v5239 = vsub.f32 %v5052, %v5236
      %v5240 = vsub.f32 %v5057, %v5236
      %v5241 = vsub.f32 %v5062, %v5236
      %v5242 = vsub.f32 %v5067, %v5236
      %v5243 = vsub.f32 %v5072, %v5236
      %v5244 = vsub.f32 %v5077, %v5236
      %v5245 = vsub.f32 %v5082, %v5236
      %v5246 = vsub.f32 %v5087, %v5236
      %v5247 = vsub.f32 %v5092, %v5236
      %v5248 = vsub.f32 %v5097, %v5236
      %v5249 = vsub.f32 %v5102, %v5236
      %v5250 = vsub.f32 %v5107, %v5236
      %v5251 = vsub.f32 %v5112, %v5236
      %v5252 = vsub.f32 %v5117, %v5236
      %v5253 = vsub.f32 %v5122, %v5236
      %v5254 = vsub.f32 %v5127, %v5236
      %v5255 = vsub.f32 %v5132, %v5236
      %v5256 = vsub.f32 %v5137, %v5236
      %v5257 = vsub.f32 %v5142, %v5236
      %v5258 = vsub.f32 %v5147, %v5236
      %v5259 = vsub.f32 %v5152, %v5236
      %v5260 = vsub.f32 %v5157, %v5236
      %v5261 = vsub.f32 %v5162, %v5236
      %v5262 = vsub.f32 %v5167, %v5236
      %v5263 = vsub.f32 %v5172, %v5236
      %v5264 = vsub.f32 %v5177, %v5236
      %v5265 = vsub.f32 %v5182, %v5236
      %v5266 = vsub.f32 %v5187, %v5236
      %v5267 = vsub.f32 %v5192, %v5236
      %v5268 = vsub.f32 %v5197, %v5236
      %v5269 = vmul.f32 %v5237, 1.442695
      %v5270 = vpow.pop %v5269
      %v5271 = vmul.f32 %v5238, 1.442695
      %v5272 = vpow.pop %v5271
      %v5273 = vmul.f32 %v5239, 1.442695
      %v5274 = vpow.pop %v5273
      %v5275 = vmul.f32 %v5240, 1.442695
      %v5276 = vpow.pop %v5275
      %v5277 = vmul.f32 %v5241, 1.442695
      %v5278 = vpow.pop %v5277
      %v5279 = vmul.f32 %v5242, 1.442695
      %v5280 = vpow.pop %v5279
      %v5281 = vmul.f32 %v5243, 1.442695
      %v5282 = vpow.pop %v5281
      %v5283 = vmul.f32 %v5244, 1.442695
      %v5284 = vpow.pop %v5283
      %v5285 = vmul.f32 %v5245, 1.442695
      %v5286 = vpow.pop %v5285
      %v5287 = vmul.f32 %v5246, 1.442695
      %v5288 = vpow.pop %v5287
      %v5289 = vmul.f32 %v5247, 1.442695
      %v5290 = vpow.pop %v5289
      %v5291 = vmul.f32 %v5248, 1.442695
      %v5292 = vpow.pop %v5291
      %v5293 = vmul.f32 %v5249, 1.442695
      %v5294 = vpow.pop %v5293
      %v5295 = vmul.f32 %v5250, 1.442695
      %v5296 = vpow.pop %v5295
      %v5297 = vmul.f32 %v5251, 1.442695
      %v5298 = vpow.pop %v5297
      %v5299 = vmul.f32 %v5252, 1.442695
      %v5300 = vpow.pop %v5299
      %v5301 = vmul.f32 %v5253, 1.442695
      %v5302 = vpow.pop %v5301
      %v5303 = vmul.f32 %v5254, 1.442695
      %v5304 = vpow.pop %v5303
      %v5305 = vmul.f32 %v5255, 1.442695
      %v5306 = vpow.pop %v5305
      %v5307 = vmul.f32 %v5256, 1.442695
      %v5308 = vpow.pop %v5307
      %v5309 = vmul.f32 %v5257, 1.442695
      %v5310 = vpow.pop %v5309
      %v5311 = vmul.f32 %v5258, 1.442695
      %v5312 = vpow.pop %v5311
      %v5313 = vmul.f32 %v5259, 1.442695
      %v5314 = vpow.pop %v5313
      %v5315 = vmul.f32 %v5260, 1.442695
      %v5316 = vpow.pop %v5315
      %v5317 = vmul.f32 %v5261, 1.442695
      %v5318 = vpow.pop %v5317
      %v5319 = vmul.f32 %v5262, 1.442695
      %v5320 = vpow.pop %v5319
      %v5321 = vmul.f32 %v5263, 1.442695
      %v5322 = vpow.pop %v5321
      %v5323 = vmul.f32 %v5264, 1.442695
      %v5324 = vpow.pop %v5323
      %v5325 = vmul.f32 %v5265, 1.442695
      %v5326 = vpow.pop %v5325
      %v5327 = vmul.f32 %v5266, 1.442695
      %v5328 = vpow.pop %v5327
      %v5329 = vmul.f32 %v5267, 1.442695
      %v5330 = vpow.pop %v5329
      %v5331 = vmul.f32 %v5268, 1.442695
      %v5332 = vpow.pop %v5331
      %v5337 = vrot.slane %v4808, 4
      %v5338 = vrot.slane %v4810, 4
      %v5339 = vsel %vm729, %v5337, %v5338
      %v5340 = vrot.slane %v4809, 4
      %v5341 = vrot.slane %v4811, 4
      %v5342 = vsel %vm729, %v5340, %v5341
      %5345 = vmatprep.subr.mxu0 0.0
      %5346 = vmatpush1.msra.mxu0 %v5270
      %5347 = vmatprep.subr.mxu0 0.0
      %5348 = vmatpush1.msra.mxu0 %v5272
      %5349 = vmatprep.subr.mxu0 0.0
      %5350 = vmatpush1.msra.mxu0 %v5274
      %5351 = vmatprep.subr.mxu0 0.0
      %5352 = vmatpush1.msra.mxu0 %v5276
      %5353 = vmatprep.subr.mxu0 0.0
      %5354 = vmatpush1.msra.mxu0 %v5278
      %5355 = vmatprep.subr.mxu0 0.0
      %5356 = vmatpush1.msra.mxu0 %v5280
      %5357 = vmatprep.subr.mxu0 0.0
      %5358 = vmatpush1.msra.mxu0 %v5282
      %5359 = vmatprep.subr.mxu0 0.0
      %5360 = vmatpush1.msra.mxu0 %v5284
      %5361 = vmatprep.subr.mxu0 0.0
      %5362 = vmatpush1.msra.mxu0 %v5286
      %5363 = vmatprep.subr.mxu0 0.0
      %5364 = vmatpush1.msra.mxu0 %v5288
      %5365 = vmatprep.subr.mxu0 0.0
      %5366 = vmatpush1.msra.mxu0 %v5290
      %5367 = vmatprep.subr.mxu0 0.0
      %5368 = vmatpush1.msra.mxu0 %v5292
      %5369 = vmatprep.subr.mxu0 0.0
      %5370 = vmatpush1.msra.mxu0 %v5294
      %5371 = vmatprep.subr.mxu0 0.0
      %5372 = vmatpush1.msra.mxu0 %v5296
      %5373 = vmatprep.subr.mxu0 0.0
      %5374 = vmatpush1.msra.mxu0 %v5298
      %5375 = vmatprep.subr.mxu0 0.0
      %5376 = vmatpush1.msra.mxu0 %v5300
      %5377 = vmatprep.subr.mxu0 0.0
      %5378 = vmatpush1.msra.mxu0 %v5302
      %5379 = vmatprep.subr.mxu0 0.0
      %5380 = vmatpush1.msra.mxu0 %v5304
      %5381 = vmatprep.subr.mxu0 0.0
      %5382 = vmatpush1.msra.mxu0 %v5306
      %5383 = vmatprep.subr.mxu0 0.0
      %5384 = vmatpush1.msra.mxu0 %v5308
      %5385 = vmatprep.subr.mxu0 0.0
      %5386 = vmatpush1.msra.mxu0 %v5310
      %5387 = vmatprep.subr.mxu0 0.0
      %5388 = vmatpush1.msra.mxu0 %v5312
      %5389 = vmatprep.subr.mxu0 0.0
      %5390 = vmatpush1.msra.mxu0 %v5314
      %5391 = vmatprep.subr.mxu0 0.0
      %5392 = vmatpush1.msra.mxu0 %v5316
      %5393 = vmatprep.subr.mxu0 0.0
      %5394 = vmatpush1.msra.mxu0 %v5318
      %5395 = vmatprep.subr.mxu0 0.0
      %5396 = vmatpush1.msra.mxu0 %v5320
      %5397 = vmatprep.subr.mxu0 0.0
      %5398 = vmatpush1.msra.mxu0 %v5322
      %5399 = vmatprep.subr.mxu0 0.0
      %5400 = vmatpush1.msra.mxu0 %v5324
      %5401 = vmatprep.subr.mxu0 0.0
      %5402 = vmatpush1.msra.mxu0 %v5326
      %5403 = vmatprep.subr.mxu0 0.0
      %5404 = vmatpush1.msra.mxu0 %v5328
      %5405 = vmatprep.subr.mxu0 0.0
      %5406 = vmatpush1.msra.mxu0 %v5330
      %5407 = vmatprep.subr.mxu0 0.0
      %5408 = vmatpush1.msra.mxu0 %v5332
      %5409 = vmatprep.mubr.f32.mxu0 %v5342
      %5410 = vmatmul.mubr.f32.gmra.mrb[0].mxu0 %v5339
      %v5411 = vpop.f32.mrb[0].mxu0
      %v5412 = vadd.f32 0.0, %v5411
      %v5413 = vpop.f32.mrb[0].mxu0
      %5414 = vdwg.mxu0
      %v5415 = vrcp.pop %v5412
      %v5416 = vmul.f32 1.0, %v5415
      %v5417 = vlaneseq
      %v5418 = vshrl.u32 %v5417, 7
      %v5419 = vsub.s32 4, %v5418
      %v5420 = vrot.slane %v5416, %v5419
      %v5421 = vmul.f32 %v5412, %v5420
      %5422 = vst [vmem:[#allocation3 + $0x20] sm:$0xf] %v5421
      %v5424 = vsel %vm729, %v4807, 0
      %5426 = vmatprep.subr.mxu0 0.0
      %5427 = vmatpush1.msra.mxu0 %v5424
      %5428 = vmatprep.subr.mxu0 0.0
      %5429 = vmatpush1.msra.mxu0 0.0
      %5430 = vmatprep.subr.mxu0 0.0
      %5431 = vmatpush1.msra.mxu0 0.0
      %5432 = vmatprep.subr.mxu0 0.0
      %5433 = vmatpush1.msra.mxu0 0.0
      %5434 = vmatprep.subr.mxu0 0.0
      %5435 = vmatpush1.msra.mxu0 0.0
      %5436 = vmatprep.subr.mxu0 0.0
      %5437 = vmatpush1.msra.mxu0 0.0
      %5438 = vmatprep.subr.mxu0 0.0
      %5439 = vmatpush1.msra.mxu0 0.0
      %5440 = vmatprep.subr.mxu0 0.0
      %5441 = vmatpush1.msra.mxu0 0.0
      %5442 = vmatprep.subr.mxu0 0.0
      %5443 = vmatpush1.msra.mxu0 0.0
      %5444 = vmatprep.subr.mxu0 0.0
      %5445 = vmatpush1.msra.mxu0 0.0
      %5446 = vmatprep.subr.mxu0 0.0
      %5447 = vmatpush1.msra.mxu0 0.0
      %5448 = vmatprep.subr.mxu0 0.0
      %5449 = vmatpush1.msra.mxu0 0.0
      %5450 = vmatprep.subr.mxu0 0.0
      %5451 = vmatpush1.msra.mxu0 0.0
      %5452 = vmatprep.subr.mxu0 0.0
      %5453 = vmatpush1.msra.mxu0 0.0
      %5454 = vmatprep.subr.mxu0 0.0
      %5455 = vmatpush1.msra.mxu0 0.0
      %5456 = vmatprep.subr.mxu0 0.0
      %5457 = vmatpush1.msra.mxu0 0.0
      %5458 = vmatprep.subr.mxu0 0.0
      %5459 = vmatpush1.msra.mxu0 0.0
      %5460 = vmatprep.subr.mxu0 0.0
      %5461 = vmatpush1.msra.mxu0 0.0
      %5462 = vmatprep.subr.mxu0 0.0
      %5463 = vmatpush1.msra.mxu0 0.0
      %5464 = vmatprep.subr.mxu0 0.0
      %5465 = vmatpush1.msra.mxu0 0.0
      %5466 = vmatprep.subr.mxu0 0.0
      %5467 = vmatpush1.msra.mxu0 0.0
      %5468 = vmatprep.subr.mxu0 0.0
      %5469 = vmatpush1.msra.mxu0 0.0
      %5470 = vmatprep.subr.mxu0 0.0
      %5471 = vmatpush1.msra.mxu0 0.0
      %5472 = vmatprep.subr.mxu0 0.0
      %5473 = vmatpush1.msra.mxu0 0.0
      %5474 = vmatprep.subr.mxu0 0.0
      %5475 = vmatpush1.msra.mxu0 0.0
      %5476 = vmatprep.subr.mxu0 0.0
      %5477 = vmatpush1.msra.mxu0 0.0
      %5478 = vmatprep.subr.mxu0 0.0
      %5479 = vmatpush1.msra.mxu0 0.0
      %5480 = vmatprep.subr.mxu0 0.0
      %5481 = vmatpush1.msra.mxu0 0.0
      %5482 = vmatprep.subr.mxu0 0.0
      %5483 = vmatpush1.msra.mxu0 0.0
      %5484 = vmatprep.subr.mxu0 0.0
      %5485 = vmatpush1.msra.mxu0 0.0
      %5486 = vmatprep.subr.mxu0 0.0
      %5487 = vmatpush1.msra.mxu0 0.0
      %5488 = vmatprep.subr.mxu0 0.0
      %5489 = vmatpush1.msra.mxu0 0.0
      %5490 = vmatprep.mubr.f32.mxu0 0.0
      %5491 = vmatmul.mubr.f32.gmra.mrb[0].mxu0 %v4877
      %v5492 = vpop.f32.mrb[0].mxu0
      %v5493 = vadd.f32 0.0, %v5492
      %v5494 = vpop.f32.mrb[0].mxu0
      %5495 = vmatprep.mubr.f32.mxu0 0.0
      %5496 = vmatmul.mubr.f32.gmra.mrb[0].mxu0 %v4880
      %v5497 = vpop.f32.mrb[0].mxu0
      %v5498 = vadd.f32 0.0, %v5497
      %v5499 = vpop.f32.mrb[0].mxu0
      %5500 = vmatprep.mubr.f32.mxu0 0.0
      %5501 = vmatmul.mubr.f32.gmra.mrb[0].mxu0 %v4883
      %v5502 = vpop.f32.mrb[0].mxu0
      %v5503 = vadd.f32 0.0, %v5502
      %v5504 = vpop.f32.mrb[0].mxu0
      %5505 = vmatprep.mubr.f32.mxu0 0.0
      %5506 = vmatmul.mubr.f32.gmra.mrb[0].mxu0 %v4886
      %v5507 = vpop.f32.mrb[0].mxu0
      %v5508 = vadd.f32 0.0, %v5507
      %v5509 = vpop.f32.mrb[0].mxu0
      %5510 = vmatprep.mubr.f32.mxu0 0.0
      %5511 = vmatmul.mubr.f32.gmra.mrb[0].mxu0 %v4889
      %v5512 = vpop.f32.mrb[0].mxu0
      %v5513 = vadd.f32 0.0, %v5512
      %v5514 = vpop.f32.mrb[0].mxu0
      %5515 = vmatprep.mubr.f32.mxu0 0.0
      %5516 = vmatmul.mubr.f32.gmra.mrb[0].mxu0 %v4892
      %v5517 = vpop.f32.mrb[0].mxu0
      %v5518 = vadd.f32 0.0, %v5517
      %v5519 = vpop.f32.mrb[0].mxu0
      %5520 = vmatprep.mubr.f32.mxu0 0.0
      %5521 = vmatmul.mubr.f32.gmra.mrb[0].mxu0 %v4895
      %v5522 = vpop.f32.mrb[0].mxu0
      %v5523 = vadd.f32 0.0, %v5522
      %v5524 = vpop.f32.mrb[0].mxu0
      %5525 = vmatprep.mubr.f32.mxu0 0.0
      %5526 = vmatmul.mubr.f32.gmra.mrb[0].mxu0 %v4898
      %v5527 = vpop.f32.mrb[0].mxu0
      %v5528 = vadd.f32 0.0, %v5527
      %v5529 = vpop.f32.mrb[0].mxu0
      %5530 = vmatprep.mubr.f32.mxu0 0.0
      %5531 = vmatmul.mubr.f32.gmra.mrb[0].mxu0 %v4901
      %v5532 = vpop.f32.mrb[0].mxu0
      %v5533 = vadd.f32 0.0, %v5532
      %v5534 = vpop.f32.mrb[0].mxu0
      %5535 = vmatprep.mubr.f32.mxu0 0.0
      %5536 = vmatmul.mubr.f32.gmra.mrb[0].mxu0 %v4904
      %v5537 = vpop.f32.mrb[0].mxu0
      %v5538 = vadd.f32 0.0, %v5537
      %v5539 = vpop.f32.mrb[0].mxu0
      %5540 = vmatprep.mubr.f32.mxu0 0.0
      %5541 = vmatmul.mubr.f32.gmra.mrb[0].mxu0 %v4907
      %v5542 = vpop.f32.mrb[0].mxu0
      %v5543 = vadd.f32 0.0, %v5542
      %v5544 = vpop.f32.mrb[0].mxu0
      %5545 = vmatprep.mubr.f32.mxu0 0.0
      %5546 = vmatmul.mubr.f32.gmra.mrb[0].mxu0 %v4910
      %v5547 = vpop.f32.mrb[0].mxu0
      %v5548 = vadd.f32 0.0, %v5547
      %v5549 = vpop.f32.mrb[0].mxu0
      %5550 = vmatprep.mubr.f32.mxu0 0.0
      %5551 = vmatmul.mubr.f32.gmra.mrb[0].mxu0 %v4913
      %v5552 = vpop.f32.mrb[0].mxu0
      %v5553 = vadd.f32 0.0, %v5552
      %v5554 = vpop.f32.mrb[0].mxu0
      %5555 = vmatprep.mubr.f32.mxu0 0.0
      %5556 = vmatmul.mubr.f32.gmra.mrb[0].mxu0 %v4916
      %v5557 = vpop.f32.mrb[0].mxu0
      %v5558 = vadd.f32 0.0, %v5557
      %v5559 = vpop.f32.mrb[0].mxu0
      %5560 = vmatprep.mubr.f32.mxu0 0.0
      %5561 = vmatmul.mubr.f32.gmra.mrb[0].mxu0 %v4919
      %v5562 = vpop.f32.mrb[0].mxu0
      %v5563 = vadd.f32 0.0, %v5562
      %v5564 = vpop.f32.mrb[0].mxu0
      %5565 = vmatprep.mubr.f32.mxu0 0.0
      %5566 = vmatmul.mubr.f32.gmra.mrb[0].mxu0 %v4922
      %v5567 = vpop.f32.mrb[0].mxu0
      %v5568 = vadd.f32 0.0, %v5567
      %v5569 = vpop.f32.mrb[0].mxu0
      %5570 = vmatprep.mubr.f32.mxu0 0.0
      %5571 = vmatmul.mubr.f32.gmra.mrb[0].mxu0 %v4925
      %v5572 = vpop.f32.mrb[0].mxu0
      %v5573 = vadd.f32 0.0, %v5572
      %v5574 = vpop.f32.mrb[0].mxu0
      %5575 = vmatprep.mubr.f32.mxu0 0.0
      %5576 = vmatmul.mubr.f32.gmra.mrb[0].mxu0 %v4928
      %v5577 = vpop.f32.mrb[0].mxu0
      %v5578 = vadd.f32 0.0, %v5577
      %v5579 = vpop.f32.mrb[0].mxu0
      %5580 = vmatprep.mubr.f32.mxu0 0.0
      %5581 = vmatmul.mubr.f32.gmra.mrb[0].mxu0 %v4931
      %v5582 = vpop.f32.mrb[0].mxu0
      %v5583 = vadd.f32 0.0, %v5582
      %v5584 = vpop.f32.mrb[0].mxu0
      %5585 = vmatprep.mubr.f32.mxu0 0.0
      %5586 = vmatmul.mubr.f32.gmra.mrb[0].mxu0 %v4934
      %v5587 = vpop.f32.mrb[0].mxu0
      %v5588 = vadd.f32 0.0, %v5587
      %v5589 = vpop.f32.mrb[0].mxu0
      %5590 = vmatprep.mubr.f32.mxu0 0.0
      %5591 = vmatmul.mubr.f32.gmra.mrb[0].mxu0 %v4937
      %v5592 = vpop.f32.mrb[0].mxu0
      %v5593 = vadd.f32 0.0, %v5592
      %v5594 = vpop.f32.mrb[0].mxu0
      %5595 = vmatprep.mubr.f32.mxu0 0.0
      %5596 = vmatmul.mubr.f32.gmra.mrb[0].mxu0 %v4940
      %v5597 = vpop.f32.mrb[0].mxu0
      %v5598 = vadd.f32 0.0, %v5597
      %v5599 = vpop.f32.mrb[0].mxu0
      %5600 = vmatprep.mubr.f32.mxu0 0.0
      %5601 = vmatmul.mubr.f32.gmra.mrb[0].mxu0 %v4943
      %v5602 = vpop.f32.mrb[0].mxu0
      %v5603 = vadd.f32 0.0, %v5602
      %v5604 = vpop.f32.mrb[0].mxu0
      %5605 = vmatprep.mubr.f32.mxu0 0.0
      %5606 = vmatmul.mubr.f32.gmra.mrb[0].mxu0 %v4946
      %v5607 = vpop.f32.mrb[0].mxu0
      %v5608 = vadd.f32 0.0, %v5607
      %v5609 = vpop.f32.mrb[0].mxu0
      %5610 = vmatprep.mubr.f32.mxu0 0.0
      %5611 = vmatmul.mubr.f32.gmra.mrb[0].mxu0 %v4949
      %v5612 = vpop.f32.mrb[0].mxu0
      %v5613 = vadd.f32 0.0, %v5612
      %v5614 = vpop.f32.mrb[0].mxu0
      %5615 = vmatprep.mubr.f32.mxu0 0.0
      %5616 = vmatmul.mubr.f32.gmra.mrb[0].mxu0 %v4952
      %v5617 = vpop.f32.mrb[0].mxu0
      %v5618 = vadd.f32 0.0, %v5617
      %v5619 = vpop.f32.mrb[0].mxu0
      %5620 = vmatprep.mubr.f32.mxu0 0.0
      %5621 = vmatmul.mubr.f32.gmra.mrb[0].mxu0 %v4955
      %v5622 = vpop.f32.mrb[0].mxu0
      %v5623 = vadd.f32 0.0, %v5622
      %v5624 = vpop.f32.mrb[0].mxu0
      %5625 = vmatprep.mubr.f32.mxu0 0.0
      %5626 = vmatmul.mubr.f32.gmra.mrb[0].mxu0 %v4958
      %v5627 = vpop.f32.mrb[0].mxu0
      %v5628 = vadd.f32 0.0, %v5627
      %v5629 = vpop.f32.mrb[0].mxu0
      %5630 = vmatprep.mubr.f32.mxu0 0.0
      %5631 = vmatmul.mubr.f32.gmra.mrb[0].mxu0 %v4961
      %v5632 = vpop.f32.mrb[0].mxu0
      %v5633 = vadd.f32 0.0, %v5632
      %v5634 = vpop.f32.mrb[0].mxu0
      %5635 = vmatprep.mubr.f32.mxu0 0.0
      %5636 = vmatmul.mubr.f32.gmra.mrb[0].mxu0 %v4964
      %v5637 = vpop.f32.mrb[0].mxu0
      %v5638 = vadd.f32 0.0, %v5637
      %v5639 = vpop.f32.mrb[0].mxu0
      %5640 = vmatprep.mubr.f32.mxu0 0.0
      %5641 = vmatmul.mubr.f32.gmra.mrb[0].mxu0 %v4967
      %v5642 = vpop.f32.mrb[0].mxu0
      %v5643 = vadd.f32 0.0, %v5642
      %v5644 = vpop.f32.mrb[0].mxu0
      %5645 = vmatprep.mubr.f32.mxu0 0.0
      %5646 = vmatmul.mubr.f32.gmra.mrb[0].mxu0 %v4970
      %v5647 = vpop.f32.mrb[0].mxu0
      %v5648 = vadd.f32 0.0, %v5647
      %v5649 = vpop.f32.mrb[0].mxu0
      %5650 = vdwg.mxu0
      %v5651 = vmax.f32 %v5493, %v5513
      %v5652 = vmax.f32 %v5498, %v5518
      %v5653 = vmax.f32 %v5503, %v5523
      %v5654 = vmax.f32 %v5508, %v5528
      %v5655 = vmax.f32 %v5651, %v5533
      %v5656 = vmax.f32 %v5652, %v5538
      %v5657 = vmax.f32 %v5653, %v5543
      %v5658 = vmax.f32 %v5654, %v5548
      %v5659 = vmax.f32 %v5655, %v5553
      %v5660 = vmax.f32 %v5656, %v5558
      %v5661 = vmax.f32 %v5657, %v5563
      %v5662 = vmax.f32 %v5658, %v5568
      %v5663 = vmax.f32 %v5659, %v5573
      %v5664 = vmax.f32 %v5660, %v5578
      %v5665 = vmax.f32 %v5661, %v5583
      %v5666 = vmax.f32 %v5662, %v5588
      %v5667 = vmax.f32 %v5663, %v5593
      %v5668 = vmax.f32 %v5664, %v5598
      %v5669 = vmax.f32 %v5665, %v5603
      %v5670 = vmax.f32 %v5666, %v5608
      %v5671 = vmax.f32 %v5667, %v5613
      %v5672 = vmax.f32 %v5668, %v5618
      %v5673 = vmax.f32 %v5669, %v5623
      %v5674 = vmax.f32 %v5670, %v5628
      %v5675 = vmax.f32 %v5671, %v5633
      %v5676 = vmax.f32 %v5672, %v5638
      %v5677 = vmax.f32 %v5673, %v5643
      %v5678 = vmax.f32 %v5674, %v5648
      %v5679 = vmax.f32 %v5675, %v5676
      %v5680 = vmax.f32 %v5677, %v5678
      %v5681 = vmax.f32 %v5679, %v5680
      %v5682 = vrot.slane %v5681, 4
      %v5683 = vmax.f32 %v5681, %v5682
      %v5684 = vrot.slane %v5683, 2
      %v5685 = vmax.f32 %v5683, %v5684
      %v5686 = vrot.slane %v5685, 1
      %v5687 = vmax.f32 %v5685, %v5686
      %v5688 = vsub.f32 %v5493, %v5687
      %v5689 = vsub.f32 %v5498, %v5687
      %v5690 = vsub.f32 %v5503, %v5687
      %v5691 = vsub.f32 %v5508, %v5687
      %v5692 = vsub.f32 %v5513, %v5687
      %v5693 = vsub.f32 %v5518, %v5687
      %v5694 = vsub.f32 %v5523, %v5687
      %v5695 = vsub.f32 %v5528, %v5687
      %v5696 = vsub.f32 %v5533, %v5687
      %v5697 = vsub.f32 %v5538, %v5687
      %v5698 = vsub.f32 %v5543, %v5687
      %v5699 = vsub.f32 %v5548, %v5687
      %v5700 = vsub.f32 %v5553, %v5687
      %v5701 = vsub.f32 %v5558, %v5687
      %v5702 = vsub.f32 %v5563, %v5687
      %v5703 = vsub.f32 %v5568, %v5687
      %v5704 = vsub.f32 %v5573, %v5687
      %v5705 = vsub.f32 %v5578, %v5687
      %v5706 = vsub.f32 %v5583, %v5687
      %v5707 = vsub.f32 %v5588, %v5687
      %v5708 = vsub.f32 %v5593, %v5687
      %v5709 = vsub.f32 %v5598, %v5687
      %v5710 = vsub.f32 %v5603, %v5687
      %v5711 = vsub.f32 %v5608, %v5687
      %v5712 = vsub.f32 %v5613, %v5687
      %v5713 = vsub.f32 %v5618, %v5687
      %v5714 = vsub.f32 %v5623, %v5687
      %v5715 = vsub.f32 %v5628, %v5687
      %v5716 = vsub.f32 %v5633, %v5687
      %v5717 = vsub.f32 %v5638, %v5687
      %v5718 = vsub.f32 %v5643, %v5687
      %v5719 = vsub.f32 %v5648, %v5687
      %v5720 = vmul.f32 %v5688, 1.442695
      %v5721 = vpow.pop %v5720
      %v5722 = vmul.f32 %v5689, 1.442695
      %v5723 = vpow.pop %v5722
      %v5724 = vmul.f32 %v5690, 1.442695
      %v5725 = vpow.pop %v5724
      %v5726 = vmul.f32 %v5691, 1.442695
      %v5727 = vpow.pop %v5726
      %v5728 = vmul.f32 %v5692, 1.442695
      %v5729 = vpow.pop %v5728
      %v5730 = vmul.f32 %v5693, 1.442695
      %v5731 = vpow.pop %v5730
      %v5732 = vmul.f32 %v5694, 1.442695
      %v5733 = vpow.pop %v5732
      %v5734 = vmul.f32 %v5695, 1.442695
      %v5735 = vpow.pop %v5734
      %v5736 = vmul.f32 %v5696, 1.442695
      %v5737 = vpow.pop %v5736
      %v5738 = vmul.f32 %v5697, 1.442695
      %v5739 = vpow.pop %v5738
      %v5740 = vmul.f32 %v5698, 1.442695
      %v5741 = vpow.pop %v5740
      %v5742 = vmul.f32 %v5699, 1.442695
      %v5743 = vpow.pop %v5742
      %v5744 = vmul.f32 %v5700, 1.442695
      %v5745 = vpow.pop %v5744
      %v5746 = vmul.f32 %v5701, 1.442695
      %v5747 = vpow.pop %v5746
      %v5748 = vmul.f32 %v5702, 1.442695
      %v5749 = vpow.pop %v5748
      %v5750 = vmul.f32 %v5703, 1.442695
      %v5751 = vpow.pop %v5750
      %v5752 = vmul.f32 %v5704, 1.442695
      %v5753 = vpow.pop %v5752
      %v5754 = vmul.f32 %v5705, 1.442695
      %v5755 = vpow.pop %v5754
      %v5756 = vmul.f32 %v5706, 1.442695
      %v5757 = vpow.pop %v5756
      %v5758 = vmul.f32 %v5707, 1.442695
      %v5759 = vpow.pop %v5758
      %v5760 = vmul.f32 %v5708, 1.442695
      %v5761 = vpow.pop %v5760
      %v5762 = vmul.f32 %v5709, 1.442695
      %v5763 = vpow.pop %v5762
      %v5764 = vmul.f32 %v5710, 1.442695
      %v5765 = vpow.pop %v5764
      %v5766 = vmul.f32 %v5711, 1.442695
      %v5767 = vpow.pop %v5766
      %v5768 = vmul.f32 %v5712, 1.442695
      %v5769 = vpow.pop %v5768
      %v5770 = vmul.f32 %v5713, 1.442695
      %v5771 = vpow.pop %v5770
      %v5772 = vmul.f32 %v5714, 1.442695
      %v5773 = vpow.pop %v5772
      %v5774 = vmul.f32 %v5715, 1.442695
      %v5775 = vpow.pop %v5774
      %v5776 = vmul.f32 %v5716, 1.442695
      %v5777 = vpow.pop %v5776
      %v5778 = vmul.f32 %v5717, 1.442695
      %v5779 = vpow.pop %v5778
      %v5780 = vmul.f32 %v5718, 1.442695
      %v5781 = vpow.pop %v5780
      %v5782 = vmul.f32 %v5719, 1.442695
      %v5783 = vpow.pop %v5782
      %5784 = vmatprep.subr.mxu0 0.0
      %5785 = vmatpush1.msra.mxu0 %v5721
      %5786 = vmatprep.subr.mxu0 0.0
      %5787 = vmatpush1.msra.mxu0 %v5723
      %5788 = vmatprep.subr.mxu0 0.0
      %5789 = vmatpush1.msra.mxu0 %v5725
      %5790 = vmatprep.subr.mxu0 0.0
      %5791 = vmatpush1.msra.mxu0 %v5727
      %5792 = vmatprep.subr.mxu0 0.0
      %5793 = vmatpush1.msra.mxu0 %v5729
      %5794 = vmatprep.subr.mxu0 0.0
      %5795 = vmatpush1.msra.mxu0 %v5731
      %5796 = vmatprep.subr.mxu0 0.0
      %5797 = vmatpush1.msra.mxu0 %v5733
      %5798 = vmatprep.subr.mxu0 0.0
      %5799 = vmatpush1.msra.mxu0 %v5735
      %5800 = vmatprep.subr.mxu0 0.0
      %5801 = vmatpush1.msra.mxu0 %v5737
      %5802 = vmatprep.subr.mxu0 0.0
      %5803 = vmatpush1.msra.mxu0 %v5739
      %5804 = vmatprep.subr.mxu0 0.0
      %5805 = vmatpush1.msra.mxu0 %v5741
      %5806 = vmatprep.subr.mxu0 0.0
      %5807 = vmatpush1.msra.mxu0 %v5743
      %5808 = vmatprep.subr.mxu0 0.0
      %5809 = vmatpush1.msra.mxu0 %v5745
      %5810 = vmatprep.subr.mxu0 0.0
      %5811 = vmatpush1.msra.mxu0 %v5747
      %5812 = vmatprep.subr.mxu0 0.0
      %5813 = vmatpush1.msra.mxu0 %v5749
      %5814 = vmatprep.subr.mxu0 0.0
      %5815 = vmatpush1.msra.mxu0 %v5751
      %5816 = vmatprep.subr.mxu0 0.0
      %5817 = vmatpush1.msra.mxu0 %v5753
      %5818 = vmatprep.subr.mxu0 0.0
      %5819 = vmatpush1.msra.mxu0 %v5755
      %5820 = vmatprep.subr.mxu0 0.0
      %5821 = vmatpush1.msra.mxu0 %v5757
      %5822 = vmatprep.subr.mxu0 0.0
      %5823 = vmatpush1.msra.mxu0 %v5759
      %5824 = vmatprep.subr.mxu0 0.0
      %5825 = vmatpush1.msra.mxu0 %v5761
      %5826 = vmatprep.subr.mxu0 0.0
      %5827 = vmatpush1.msra.mxu0 %v5763
      %5828 = vmatprep.subr.mxu0 0.0
      %5829 = vmatpush1.msra.mxu0 %v5765
      %5830 = vmatprep.subr.mxu0 0.0
      %5831 = vmatpush1.msra.mxu0 %v5767
      %5832 = vmatprep.subr.mxu0 0.0
      %5833 = vmatpush1.msra.mxu0 %v5769
      %5834 = vmatprep.subr.mxu0 0.0
      %5835 = vmatpush1.msra.mxu0 %v5771
      %5836 = vmatprep.subr.mxu0 0.0
      %5837 = vmatpush1.msra.mxu0 %v5773
      %5838 = vmatprep.subr.mxu0 0.0
      %5839 = vmatpush1.msra.mxu0 %v5775
      %5840 = vmatprep.subr.mxu0 0.0
      %5841 = vmatpush1.msra.mxu0 %v5777
      %5842 = vmatprep.subr.mxu0 0.0
      %5843 = vmatpush1.msra.mxu0 %v5779
      %5844 = vmatprep.subr.mxu0 0.0
      %5845 = vmatpush1.msra.mxu0 %v5781
      %5846 = vmatprep.subr.mxu0 0.0
      %5847 = vmatpush1.msra.mxu0 %v5783
      %5848 = vmatprep.mubr.f32.mxu0 %v5342
      %5849 = vmatmul.mubr.f32.gmra.mrb[0].mxu0 %v5339
      %v5850 = vpop.f32.mrb[0].mxu0
      %v5851 = vadd.f32 0.0, %v5850
      %v5852 = vpop.f32.mrb[0].mxu0
      %5853 = vdwg.mxu0
      %v5854 = vrcp.pop %v5851
      %v5855 = vmul.f32 1.0, %v5854
      %v5856 = vlaneseq
      %v5857 = vshrl.u32 %v5856, 7
      %v5858 = vsub.s32 4, %v5857
      %v5859 = vrot.slane %v5855, %v5858
      %v5860 = vmul.f32 %v5851, %v5859
      %5861 = vst [vmem:[#allocation3 + $0x28] sm:$0xf] %v5860
      %v5862 = vld [vmem:[#allocation2 + $0x20] sm:$0xf0]
      %v5863 = vld [vmem:[#allocation2 + $0x28] sm:$0xf0]
      %v5864 = vld [vmem:[#allocation2 + $0x60] sm:$0xf0]
      %v5865 = vld [vmem:[#allocation2 + $0x68] sm:$0xf0]
      %v5866 = vld [vmem:[#allocation2 + $0xb0] sm:$0x3e]
      %v5867 = vld [vmem:[#allocation2 + $0xb8] sm:$0x3e]
      %v5870 = vrot.slane %v5862, 4
      %v5871 = vrot.slane %v5863, 4
      %5874 = vxpose.xlu0.b32.start [1/16] %v5870, 128
      %5875 = vxpose.xlu0.b32.cont [2/16] 0.0, 128
      %5876 = vxpose.xlu0.b32.cont [3/16] 0.0, 128
      %5877 = vxpose.xlu0.b32.cont [4/16] 0.0, 128
      %5878 = vxpose.xlu0.b32.cont [5/16] 0.0, 128
      %5879 = vxpose.xlu0.b32.cont [6/16] 0.0, 128
      %5880 = vxpose.xlu0.b32.cont [7/16] 0.0, 128
      %5881 = vxpose.xlu0.b32.cont [8/16] 0.0, 128
      %5882 = vxpose.xlu0.b32.cont [9/16] 0.0, 128
      %5883 = vxpose.xlu0.b32.cont [10/16] 0.0, 128
      %5884 = vxpose.xlu0.b32.cont [11/16] 0.0, 128
      %5885 = vxpose.xlu0.b32.cont [12/16] 0.0, 128
      %5886 = vxpose.xlu0.b32.cont [13/16] 0.0, 128
      %5887 = vxpose.xlu0.b32.cont [14/16] 0.0, 128
      %5888 = vxpose.xlu0.b32.cont [15/16] 0.0, 128
      %5889 = vxpose.xlu0.b32.end [16/16] 0.0, 128
      %v5890 = vpop.trf.xlu0
      %v5891 = vpop.trf.xlu0
      %v5892 = vpop.trf.xlu0
      %v5893 = vpop.trf.xlu0
      %v5894 = vpop.trf.xlu0
      %v5895 = vpop.trf.xlu0
      %v5896 = vpop.trf.xlu0
      %v5897 = vpop.trf.xlu0
      %v5898 = vpop.trf.xlu0
      %v5899 = vpop.trf.xlu0
      %v5900 = vpop.trf.xlu0
      %v5901 = vpop.trf.xlu0
      %v5902 = vpop.trf.xlu0
      %v5903 = vpop.trf.xlu0
      %v5904 = vpop.trf.xlu0
      %v5905 = vpop.trf.xlu0
      %5906 = vxpose.xlu0.b32.start [1/16] %v5871, 128
      %5907 = vxpose.xlu0.b32.cont [2/16] 0.0, 128
      %5908 = vxpose.xlu0.b32.cont [3/16] 0.0, 128
      %5909 = vxpose.xlu0.b32.cont [4/16] 0.0, 128
      %5910 = vxpose.xlu0.b32.cont [5/16] 0.0, 128
      %5911 = vxpose.xlu0.b32.cont [6/16] 0.0, 128
      %5912 = vxpose.xlu0.b32.cont [7/16] 0.0, 128
      %5913 = vxpose.xlu0.b32.cont [8/16] 0.0, 128
      %5914 = vxpose.xlu0.b32.cont [9/16] 0.0, 128
      %5915 = vxpose.xlu0.b32.cont [10/16] 0.0, 128
      %5916 = vxpose.xlu0.b32.cont [11/16] 0.0, 128
      %5917 = vxpose.xlu0.b32.cont [12/16] 0.0, 128
      %5918 = vxpose.xlu0.b32.cont [13/16] 0.0, 128
      %5919 = vxpose.xlu0.b32.cont [14/16] 0.0, 128
      %5920 = vxpose.xlu0.b32.cont [15/16] 0.0, 128
      %5921 = vxpose.xlu0.b32.end [16/16] 0.0, 128
      %v5922 = vpop.trf.xlu0
      %v5923 = vpop.trf.xlu0
      %v5924 = vpop.trf.xlu0
      %v5925 = vpop.trf.xlu0
      %v5926 = vpop.trf.xlu0
      %v5927 = vpop.trf.xlu0
      %v5928 = vpop.trf.xlu0
      %v5929 = vpop.trf.xlu0
      %v5930 = vpop.trf.xlu0
      %v5931 = vpop.trf.xlu0
      %v5932 = vpop.trf.xlu0
      %v5933 = vpop.trf.xlu0
      %v5934 = vpop.trf.xlu0
      %v5935 = vpop.trf.xlu0
      %v5936 = vpop.trf.xlu0
      %v5937 = vpop.trf.xlu0
      %v5939 = vrot.slane %v5864, 4
      %v5941 = vsel %vm632, %v5890, 0
      %v5944 = vsel %vm632, %v5891, 0
      %v5947 = vsel %vm632, %v5892, 0
      %v5950 = vsel %vm632, %v5893, 0
      %v5953 = vsel %vm632, %v5894, 0
      %v5956 = vsel %vm632, %v5895, 0
      %v5959 = vsel %vm632, %v5896, 0
      %v5962 = vsel %vm632, %v5897, 0
      %v5965 = vsel %vm632, %v5898, 0
      %v5968 = vsel %vm632, %v5899, 0
      %v5971 = vsel %vm632, %v5900, 0
      %v5974 = vsel %vm632, %v5901, 0
      %v5977 = vsel %vm632, %v5902, 0
      %v5980 = vsel %vm632, %v5903, 0
      %v5983 = vsel %vm632, %v5904, 0
      %v5986 = vsel %vm632, %v5905, 0
      %v5989 = vsel %vm632, %v5922, 0
      %v5992 = vsel %vm632, %v5923, 0
      %v5995 = vsel %vm632, %v5924, 0
      %v5998 = vsel %vm632, %v5925, 0
      %v6001 = vsel %vm632, %v5926, 0
      %v6004 = vsel %vm632, %v5927, 0
      %v6007 = vsel %vm632, %v5928, 0
      %v6010 = vsel %vm632, %v5929, 0
      %v6013 = vsel %vm632, %v5930, 0
      %v6016 = vsel %vm632, %v5931, 0
      %v6019 = vsel %vm632, %v5932, 0
      %v6022 = vsel %vm632, %v5933, 0
      %v6025 = vsel %vm632, %v5934, 0
      %v6028 = vsel %vm632, %v5935, 0
      %v6031 = vsel %vm632, %v5936, 0
      %v6034 = vsel %vm632, %v5937, 0
      %v6036 = vsel %vm729, %v5939, 0
      %6038 = vmatprep.subr.mxu0 0.0
      %6039 = vmatpush1.msra.mxu0 %v6036
      %6040 = vmatprep.subr.mxu0 0.0
      %6041 = vmatpush1.msra.mxu0 0.0
      %6042 = vmatprep.subr.mxu0 0.0
      %6043 = vmatpush1.msra.mxu0 0.0
      %6044 = vmatprep.subr.mxu0 0.0
      %6045 = vmatpush1.msra.mxu0 0.0
      %6046 = vmatprep.subr.mxu0 0.0
      %6047 = vmatpush1.msra.mxu0 0.0
      %6048 = vmatprep.subr.mxu0 0.0
      %6049 = vmatpush1.msra.mxu0 0.0
      %6050 = vmatprep.subr.mxu0 0.0
      %6051 = vmatpush1.msra.mxu0 0.0
      %6052 = vmatprep.subr.mxu0 0.0
      %6053 = vmatpush1.msra.mxu0 0.0
      %6054 = vmatprep.subr.mxu0 0.0
      %6055 = vmatpush1.msra.mxu0 0.0
      %6056 = vmatprep.subr.mxu0 0.0
      %6057 = vmatpush1.msra.mxu0 0.0
      %6058 = vmatprep.subr.mxu0 0.0
      %6059 = vmatpush1.msra.mxu0 0.0
      %6060 = vmatprep.subr.mxu0 0.0
      %6061 = vmatpush1.msra.mxu0 0.0
      %6062 = vmatprep.subr.mxu0 0.0
      %6063 = vmatpush1.msra.mxu0 0.0
      %6064 = vmatprep.subr.mxu0 0.0
      %6065 = vmatpush1.msra.mxu0 0.0
      %6066 = vmatprep.subr.mxu0 0.0
      %6067 = vmatpush1.msra.mxu0 0.0
      %6068 = vmatprep.subr.mxu0 0.0
      %6069 = vmatpush1.msra.mxu0 0.0
      %6070 = vmatprep.subr.mxu0 0.0
      %6071 = vmatpush1.msra.mxu0 0.0
      %6072 = vmatprep.subr.mxu0 0.0
      %6073 = vmatpush1.msra.mxu0 0.0
      %6074 = vmatprep.subr.mxu0 0.0
      %6075 = vmatpush1.msra.mxu0 0.0
      %6076 = vmatprep.subr.mxu0 0.0
      %6077 = vmatpush1.msra.mxu0 0.0
      %6078 = vmatprep.subr.mxu0 0.0
      %6079 = vmatpush1.msra.mxu0 0.0
      %6080 = vmatprep.subr.mxu0 0.0
      %6081 = vmatpush1.msra.mxu0 0.0
      %6082 = vmatprep.subr.mxu0 0.0
      %6083 = vmatpush1.msra.mxu0 0.0
      %6084 = vmatprep.subr.mxu0 0.0
      %6085 = vmatpush1.msra.mxu0 0.0
      %6086 = vmatprep.subr.mxu0 0.0
      %6087 = vmatpush1.msra.mxu0 0.0
      %6088 = vmatprep.subr.mxu0 0.0
      %6089 = vmatpush1.msra.mxu0 0.0
      %6090 = vmatprep.subr.mxu0 0.0
      %6091 = vmatpush1.msra.mxu0 0.0
      %6092 = vmatprep.subr.mxu0 0.0
      %6093 = vmatpush1.msra.mxu0 0.0
      %6094 = vmatprep.subr.mxu0 0.0
      %6095 = vmatpush1.msra.mxu0 0.0
      %6096 = vmatprep.subr.mxu0 0.0
      %6097 = vmatpush1.msra.mxu0 0.0
      %6098 = vmatprep.subr.mxu0 0.0
      %6099 = vmatpush1.msra.mxu0 0.0
      %6100 = vmatprep.subr.mxu0 0.0
      %6101 = vmatpush1.msra.mxu0 0.0
      %6102 = vmatprep.mubr.f32.mxu0 0.0
      %6103 = vmatmul.mubr.f32.gmra.mrb[0].mxu0 %v5941
      %v6104 = vpop.f32.mrb[0].mxu0
      %v6105 = vadd.f32 0.0, %v6104
      %v6106 = vpop.f32.mrb[0].mxu0
      %6107 = vmatprep.mubr.f32.mxu0 0.0
      %6108 = vmatmul.mubr.f32.gmra.mrb[0].mxu0 %v5944
      %v6109 = vpop.f32.mrb[0].mxu0
      %v6110 = vadd.f32 0.0, %v6109
      %v6111 = vpop.f32.mrb[0].mxu0
      %6112 = vmatprep.mubr.f32.mxu0 0.0
      %6113 = vmatmul.mubr.f32.gmra.mrb[0].mxu0 %v5947
      %v6114 = vpop.f32.mrb[0].mxu0
      %v6115 = vadd.f32 0.0, %v6114
      %v6116 = vpop.f32.mrb[0].mxu0
      %6117 = vmatprep.mubr.f32.mxu0 0.0
      %6118 = vmatmul.mubr.f32.gmra.mrb[0].mxu0 %v5950
      %v6119 = vpop.f32.mrb[0].mxu0
      %v6120 = vadd.f32 0.0, %v6119
      %v6121 = vpop.f32.mrb[0].mxu0
      %6122 = vmatprep.mubr.f32.mxu0 0.0
      %6123 = vmatmul.mubr.f32.gmra.mrb[0].mxu0 %v5953
      %v6124 = vpop.f32.mrb[0].mxu0
      %v6125 = vadd.f32 0.0, %v6124
      %v6126 = vpop.f32.mrb[0].mxu0
      %6127 = vmatprep.mubr.f32.mxu0 0.0
      %6128 = vmatmul.mubr.f32.gmra.mrb[0].mxu0 %v5956
      %v6129 = vpop.f32.mrb[0].mxu0
      %v6130 = vadd.f32 0.0, %v6129
      %v6131 = vpop.f32.mrb[0].mxu0
      %6132 = vmatprep.mubr.f32.mxu0 0.0
      %6133 = vmatmul.mubr.f32.gmra.mrb[0].mxu0 %v5959
      %v6134 = vpop.f32.mrb[0].mxu0
      %v6135 = vadd.f32 0.0, %v6134
      %v6136 = vpop.f32.mrb[0].mxu0
      %6137 = vmatprep.mubr.f32.mxu0 0.0
      %6138 = vmatmul.mubr.f32.gmra.mrb[0].mxu0 %v5962
      %v6139 = vpop.f32.mrb[0].mxu0
      %v6140 = vadd.f32 0.0, %v6139
      %v6141 = vpop.f32.mrb[0].mxu0
      %6142 = vmatprep.mubr.f32.mxu0 0.0
      %6143 = vmatmul.mubr.f32.gmra.mrb[0].mxu0 %v5965
      %v6144 = vpop.f32.mrb[0].mxu0
      %v6145 = vadd.f32 0.0, %v6144
      %v6146 = vpop.f32.mrb[0].mxu0
      %6147 = vmatprep.mubr.f32.mxu0 0.0
      %6148 = vmatmul.mubr.f32.gmra.mrb[0].mxu0 %v5968
      %v6149 = vpop.f32.mrb[0].mxu0
      %v6150 = vadd.f32 0.0, %v6149
      %v6151 = vpop.f32.mrb[0].mxu0
      %6152 = vmatprep.mubr.f32.mxu0 0.0
      %6153 = vmatmul.mubr.f32.gmra.mrb[0].mxu0 %v5971
      %v6154 = vpop.f32.mrb[0].mxu0
      %v6155 = vadd.f32 0.0, %v6154
      %v6156 = vpop.f32.mrb[0].mxu0
      %6157 = vmatprep.mubr.f32.mxu0 0.0
      %6158 = vmatmul.mubr.f32.gmra.mrb[0].mxu0 %v5974
      %v6159 = vpop.f32.mrb[0].mxu0
      %v6160 = vadd.f32 0.0, %v6159
      %v6161 = vpop.f32.mrb[0].mxu0
      %6162 = vmatprep.mubr.f32.mxu0 0.0
      %6163 = vmatmul.mubr.f32.gmra.mrb[0].mxu0 %v5977
      %v6164 = vpop.f32.mrb[0].mxu0
      %v6165 = vadd.f32 0.0, %v6164
      %v6166 = vpop.f32.mrb[0].mxu0
      %6167 = vmatprep.mubr.f32.mxu0 0.0
      %6168 = vmatmul.mubr.f32.gmra.mrb[0].mxu0 %v5980
      %v6169 = vpop.f32.mrb[0].mxu0
      %v6170 = vadd.f32 0.0, %v6169
      %v6171 = vpop.f32.mrb[0].mxu0
      %6172 = vmatprep.mubr.f32.mxu0 0.0
      %6173 = vmatmul.mubr.f32.gmra.mrb[0].mxu0 %v5983
      %v6174 = vpop.f32.mrb[0].mxu0
      %v6175 = vadd.f32 0.0, %v6174
      %v6176 = vpop.f32.mrb[0].mxu0
      %6177 = vmatprep.mubr.f32.mxu0 0.0
      %6178 = vmatmul.mubr.f32.gmra.mrb[0].mxu0 %v5986
      %v6179 = vpop.f32.mrb[0].mxu0
      %v6180 = vadd.f32 0.0, %v6179
      %v6181 = vpop.f32.mrb[0].mxu0
      %6182 = vmatprep.mubr.f32.mxu0 0.0
      %6183 = vmatmul.mubr.f32.gmra.mrb[0].mxu0 %v5989
      %v6184 = vpop.f32.mrb[0].mxu0
      %v6185 = vadd.f32 0.0, %v6184
      %v6186 = vpop.f32.mrb[0].mxu0
      %6187 = vmatprep.mubr.f32.mxu0 0.0
      %6188 = vmatmul.mubr.f32.gmra.mrb[0].mxu0 %v5992
      %v6189 = vpop.f32.mrb[0].mxu0
      %v6190 = vadd.f32 0.0, %v6189
      %v6191 = vpop.f32.mrb[0].mxu0
      %6192 = vmatprep.mubr.f32.mxu0 0.0
      %6193 = vmatmul.mubr.f32.gmra.mrb[0].mxu0 %v5995
      %v6194 = vpop.f32.mrb[0].mxu0
      %v6195 = vadd.f32 0.0, %v6194
      %v6196 = vpop.f32.mrb[0].mxu0
      %6197 = vmatprep.mubr.f32.mxu0 0.0
      %6198 = vmatmul.mubr.f32.gmra.mrb[0].mxu0 %v5998
      %v6199 = vpop.f32.mrb[0].mxu0
      %v6200 = vadd.f32 0.0, %v6199
      %v6201 = vpop.f32.mrb[0].mxu0
      %6202 = vmatprep.mubr.f32.mxu0 0.0
      %6203 = vmatmul.mubr.f32.gmra.mrb[0].mxu0 %v6001
      %v6204 = vpop.f32.mrb[0].mxu0
      %v6205 = vadd.f32 0.0, %v6204
      %v6206 = vpop.f32.mrb[0].mxu0
      %6207 = vmatprep.mubr.f32.mxu0 0.0
      %6208 = vmatmul.mubr.f32.gmra.mrb[0].mxu0 %v6004
      %v6209 = vpop.f32.mrb[0].mxu0
      %v6210 = vadd.f32 0.0, %v6209
      %v6211 = vpop.f32.mrb[0].mxu0
      %6212 = vmatprep.mubr.f32.mxu0 0.0
      %6213 = vmatmul.mubr.f32.gmra.mrb[0].mxu0 %v6007
      %v6214 = vpop.f32.mrb[0].mxu0
      %v6215 = vadd.f32 0.0, %v6214
      %v6216 = vpop.f32.mrb[0].mxu0
      %6217 = vmatprep.mubr.f32.mxu0 0.0
      %6218 = vmatmul.mubr.f32.gmra.mrb[0].mxu0 %v6010
      %v6219 = vpop.f32.mrb[0].mxu0
      %v6220 = vadd.f32 0.0, %v6219
      %v6221 = vpop.f32.mrb[0].mxu0
      %6222 = vmatprep.mubr.f32.mxu0 0.0
      %6223 = vmatmul.mubr.f32.gmra.mrb[0].mxu0 %v6013
      %v6224 = vpop.f32.mrb[0].mxu0
      %v6225 = vadd.f32 0.0, %v6224
      %v6226 = vpop.f32.mrb[0].mxu0
      %6227 = vmatprep.mubr.f32.mxu0 0.0
      %6228 = vmatmul.mubr.f32.gmra.mrb[0].mxu0 %v6016
      %v6229 = vpop.f32.mrb[0].mxu0
      %v6230 = vadd.f32 0.0, %v6229
      %v6231 = vpop.f32.mrb[0].mxu0
      %6232 = vmatprep.mubr.f32.mxu0 0.0
      %6233 = vmatmul.mubr.f32.gmra.mrb[0].mxu0 %v6019
      %v6234 = vpop.f32.mrb[0].mxu0
      %v6235 = vadd.f32 0.0, %v6234
      %v6236 = vpop.f32.mrb[0].mxu0
      %6237 = vmatprep.mubr.f32.mxu0 0.0
      %6238 = vmatmul.mubr.f32.gmra.mrb[0].mxu0 %v6022
      %v6239 = vpop.f32.mrb[0].mxu0
      %v6240 = vadd.f32 0.0, %v6239
      %v6241 = vpop.f32.mrb[0].mxu0
      %6242 = vmatprep.mubr.f32.mxu0 0.0
      %6243 = vmatmul.mubr.f32.gmra.mrb[0].mxu0 %v6025
      %v6244 = vpop.f32.mrb[0].mxu0
      %v6245 = vadd.f32 0.0, %v6244
      %v6246 = vpop.f32.mrb[0].mxu0
      %6247 = vmatprep.mubr.f32.mxu0 0.0
      %6248 = vmatmul.mubr.f32.gmra.mrb[0].mxu0 %v6028
      %v6249 = vpop.f32.mrb[0].mxu0
      %v6250 = vadd.f32 0.0, %v6249
      %v6251 = vpop.f32.mrb[0].mxu0
      %6252 = vmatprep.mubr.f32.mxu0 0.0
      %6253 = vmatmul.mubr.f32.gmra.mrb[0].mxu0 %v6031
      %v6254 = vpop.f32.mrb[0].mxu0
      %v6255 = vadd.f32 0.0, %v6254
      %v6256 = vpop.f32.mrb[0].mxu0
      %6257 = vmatprep.mubr.f32.mxu0 0.0
      %6258 = vmatmul.mubr.f32.gmra.mrb[0].mxu0 %v6034
      %v6259 = vpop.f32.mrb[0].mxu0
      %v6260 = vadd.f32 0.0, %v6259
      %v6261 = vpop.f32.mrb[0].mxu0
      %6262 = vdwg.mxu0
      %v6263 = vmax.f32 %v6105, %v6125
      %v6264 = vmax.f32 %v6110, %v6130
      %v6265 = vmax.f32 %v6115, %v6135
      %v6266 = vmax.f32 %v6120, %v6140
      %v6267 = vmax.f32 %v6263, %v6145
      %v6268 = vmax.f32 %v6264, %v6150
      %v6269 = vmax.f32 %v6265, %v6155
      %v6270 = vmax.f32 %v6266, %v6160
      %v6271 = vmax.f32 %v6267, %v6165
      %v6272 = vmax.f32 %v6268, %v6170
      %v6273 = vmax.f32 %v6269, %v6175
      %v6274 = vmax.f32 %v6270, %v6180
      %v6275 = vmax.f32 %v6271, %v6185
      %v6276 = vmax.f32 %v6272, %v6190
      %v6277 = vmax.f32 %v6273, %v6195
      %v6278 = vmax.f32 %v6274, %v6200
      %v6279 = vmax.f32 %v6275, %v6205
      %v6280 = vmax.f32 %v6276, %v6210
      %v6281 = vmax.f32 %v6277, %v6215
      %v6282 = vmax.f32 %v6278, %v6220
      %v6283 = vmax.f32 %v6279, %v6225
      %v6284 = vmax.f32 %v6280, %v6230
      %v6285 = vmax.f32 %v6281, %v6235
      %v6286 = vmax.f32 %v6282, %v6240
      %v6287 = vmax.f32 %v6283, %v6245
      %v6288 = vmax.f32 %v6284, %v6250
      %v6289 = vmax.f32 %v6285, %v6255
      %v6290 = vmax.f32 %v6286, %v6260
      %v6291 = vmax.f32 %v6287, %v6288
      %v6292 = vmax.f32 %v6289, %v6290
      %v6293 = vmax.f32 %v6291, %v6292
      %v6294 = vrot.slane %v6293, 4
      %v6295 = vmax.f32 %v6293, %v6294
      %v6296 = vrot.slane %v6295, 2
      %v6297 = vmax.f32 %v6295, %v6296
      %v6298 = vrot.slane %v6297, 1
      %v6299 = vmax.f32 %v6297, %v6298
      %v6300 = vsub.f32 %v6105, %v6299
      %v6301 = vsub.f32 %v6110, %v6299
      %v6302 = vsub.f32 %v6115, %v6299
      %v6303 = vsub.f32 %v6120, %v6299
      %v6304 = vsub.f32 %v6125, %v6299
      %v6305 = vsub.f32 %v6130, %v6299
      %v6306 = vsub.f32 %v6135, %v6299
      %v6307 = vsub.f32 %v6140, %v6299
      %v6308 = vsub.f32 %v6145, %v6299
      %v6309 = vsub.f32 %v6150, %v6299
      %v6310 = vsub.f32 %v6155, %v6299
      %v6311 = vsub.f32 %v6160, %v6299
      %v6312 = vsub.f32 %v6165, %v6299
      %v6313 = vsub.f32 %v6170, %v6299
      %v6314 = vsub.f32 %v6175, %v6299
      %v6315 = vsub.f32 %v6180, %v6299
      %v6316 = vsub.f32 %v6185, %v6299
      %v6317 = vsub.f32 %v6190, %v6299
      %v6318 = vsub.f32 %v6195, %v6299
      %v6319 = vsub.f32 %v6200, %v6299
      %v6320 = vsub.f32 %v6205, %v6299
      %v6321 = vsub.f32 %v6210, %v6299
      %v6322 = vsub.f32 %v6215, %v6299
      %v6323 = vsub.f32 %v6220, %v6299
      %v6324 = vsub.f32 %v6225, %v6299
      %v6325 = vsub.f32 %v6230, %v6299
      %v6326 = vsub.f32 %v6235, %v6299
      %v6327 = vsub.f32 %v6240, %v6299
      %v6328 = vsub.f32 %v6245, %v6299
      %v6329 = vsub.f32 %v6250, %v6299
      %v6330 = vsub.f32 %v6255, %v6299
      %v6331 = vsub.f32 %v6260, %v6299
      %v6332 = vmul.f32 %v6300, 1.442695
      %v6333 = vpow.pop %v6332
      %v6334 = vmul.f32 %v6301, 1.442695
      %v6335 = vpow.pop %v6334
      %v6336 = vmul.f32 %v6302, 1.442695
      %v6337 = vpow.pop %v6336
      %v6338 = vmul.f32 %v6303, 1.442695
      %v6339 = vpow.pop %v6338
      %v6340 = vmul.f32 %v6304, 1.442695
      %v6341 = vpow.pop %v6340
      %v6342 = vmul.f32 %v6305, 1.442695
      %v6343 = vpow.pop %v6342
      %v6344 = vmul.f32 %v6306, 1.442695
      %v6345 = vpow.pop %v6344
      %v6346 = vmul.f32 %v6307, 1.442695
      %v6347 = vpow.pop %v6346
      %v6348 = vmul.f32 %v6308, 1.442695
      %v6349 = vpow.pop %v6348
      %v6350 = vmul.f32 %v6309, 1.442695
      %v6351 = vpow.pop %v6350
      %v6352 = vmul.f32 %v6310, 1.442695
      %v6353 = vpow.pop %v6352
      %v6354 = vmul.f32 %v6311, 1.442695
      %v6355 = vpow.pop %v6354
      %v6356 = vmul.f32 %v6312, 1.442695
      %v6357 = vpow.pop %v6356
      %v6358 = vmul.f32 %v6313, 1.442695
      %v6359 = vpow.pop %v6358
      %v6360 = vmul.f32 %v6314, 1.442695
      %v6361 = vpow.pop %v6360
      %v6362 = vmul.f32 %v6315, 1.442695
      %v6363 = vpow.pop %v6362
      %v6364 = vmul.f32 %v6316, 1.442695
      %v6365 = vpow.pop %v6364
      %v6366 = vmul.f32 %v6317, 1.442695
      %v6367 = vpow.pop %v6366
      %v6368 = vmul.f32 %v6318, 1.442695
      %v6369 = vpow.pop %v6368
      %v6370 = vmul.f32 %v6319, 1.442695
      %v6371 = vpow.pop %v6370
      %v6372 = vmul.f32 %v6320, 1.442695
      %v6373 = vpow.pop %v6372
      %v6374 = vmul.f32 %v6321, 1.442695
      %v6375 = vpow.pop %v6374
      %v6376 = vmul.f32 %v6322, 1.442695
      %v6377 = vpow.pop %v6376
      %v6378 = vmul.f32 %v6323, 1.442695
      %v6379 = vpow.pop %v6378
      %v6380 = vmul.f32 %v6324, 1.442695
      %v6381 = vpow.pop %v6380
      %v6382 = vmul.f32 %v6325, 1.442695
      %v6383 = vpow.pop %v6382
      %v6384 = vmul.f32 %v6326, 1.442695
      %v6385 = vpow.pop %v6384
      %v6386 = vmul.f32 %v6327, 1.442695
      %v6387 = vpow.pop %v6386
      %v6388 = vmul.f32 %v6328, 1.442695
      %v6389 = vpow.pop %v6388
      %v6390 = vmul.f32 %v6329, 1.442695
      %v6391 = vpow.pop %v6390
      %v6392 = vmul.f32 %v6330, 1.442695
      %v6393 = vpow.pop %v6392
      %v6394 = vmul.f32 %v6331, 1.442695
      %v6395 = vpow.pop %v6394
      %v6398 = vrot.slane %v5866, 1
      %v6399 = vrot.slane %v5867, 1
      %6402 = vmatprep.subr.mxu0 0.0
      %6403 = vmatpush1.msra.mxu0 %v6333
      %6404 = vmatprep.subr.mxu0 0.0
      %6405 = vmatpush1.msra.mxu0 %v6335
      %6406 = vmatprep.subr.mxu0 0.0
      %6407 = vmatpush1.msra.mxu0 %v6337
      %6408 = vmatprep.subr.mxu0 0.0
      %6409 = vmatpush1.msra.mxu0 %v6339
      %6410 = vmatprep.subr.mxu0 0.0
      %6411 = vmatpush1.msra.mxu0 %v6341
      %6412 = vmatprep.subr.mxu0 0.0
      %6413 = vmatpush1.msra.mxu0 %v6343
      %6414 = vmatprep.subr.mxu0 0.0
      %6415 = vmatpush1.msra.mxu0 %v6345
      %6416 = vmatprep.subr.mxu0 0.0
      %6417 = vmatpush1.msra.mxu0 %v6347
      %6418 = vmatprep.subr.mxu0 0.0
      %6419 = vmatpush1.msra.mxu0 %v6349
      %6420 = vmatprep.subr.mxu0 0.0
      %6421 = vmatpush1.msra.mxu0 %v6351
      %6422 = vmatprep.subr.mxu0 0.0
      %6423 = vmatpush1.msra.mxu0 %v6353
      %6424 = vmatprep.subr.mxu0 0.0
      %6425 = vmatpush1.msra.mxu0 %v6355
      %6426 = vmatprep.subr.mxu0 0.0
      %6427 = vmatpush1.msra.mxu0 %v6357
      %6428 = vmatprep.subr.mxu0 0.0
      %6429 = vmatpush1.msra.mxu0 %v6359
      %6430 = vmatprep.subr.mxu0 0.0
      %6431 = vmatpush1.msra.mxu0 %v6361
      %6432 = vmatprep.subr.mxu0 0.0
      %6433 = vmatpush1.msra.mxu0 %v6363
      %6434 = vmatprep.subr.mxu0 0.0
      %6435 = vmatpush1.msra.mxu0 %v6365
      %6436 = vmatprep.subr.mxu0 0.0
      %6437 = vmatpush1.msra.mxu0 %v6367
      %6438 = vmatprep.subr.mxu0 0.0
      %6439 = vmatpush1.msra.mxu0 %v6369
      %6440 = vmatprep.subr.mxu0 0.0
      %6441 = vmatpush1.msra.mxu0 %v6371
      %6442 = vmatprep.subr.mxu0 0.0
      %6443 = vmatpush1.msra.mxu0 %v6373
      %6444 = vmatprep.subr.mxu0 0.0
      %6445 = vmatpush1.msra.mxu0 %v6375
      %6446 = vmatprep.subr.mxu0 0.0
      %6447 = vmatpush1.msra.mxu0 %v6377
      %6448 = vmatprep.subr.mxu0 0.0
      %6449 = vmatpush1.msra.mxu0 %v6379
      %6450 = vmatprep.subr.mxu0 0.0
      %6451 = vmatpush1.msra.mxu0 %v6381
      %6452 = vmatprep.subr.mxu0 0.0
      %6453 = vmatpush1.msra.mxu0 %v6383
      %6454 = vmatprep.subr.mxu0 0.0
      %6455 = vmatpush1.msra.mxu0 %v6385
      %6456 = vmatprep.subr.mxu0 0.0
      %6457 = vmatpush1.msra.mxu0 %v6387
      %6458 = vmatprep.subr.mxu0 0.0
      %6459 = vmatpush1.msra.mxu0 %v6389
      %6460 = vmatprep.subr.mxu0 0.0
      %6461 = vmatpush1.msra.mxu0 %v6391
      %6462 = vmatprep.subr.mxu0 0.0
      %6463 = vmatpush1.msra.mxu0 %v6393
      %6464 = vmatprep.subr.mxu0 0.0
      %6465 = vmatpush1.msra.mxu0 %v6395
      %6466 = vmatprep.mubr.f32.mxu0 %v6399
      %6467 = vmatmul.mubr.f32.gmra.mrb[0].mxu0 %v6398
      %v6468 = vpop.f32.mrb[0].mxu0
      %v6469 = vadd.f32 0.0, %v6468
      %v6470 = vpop.f32.mrb[0].mxu0
      %6471 = vdwg.mxu0
      %v6472 = vrcp.pop %v6469
      %v6473 = vmul.f32 1.0, %v6472
      %v6474 = vlaneseq
      %v6475 = vshrl.u32 %v6474, 7
      %v6476 = vsub.s32 4, %v6475
      %v6477 = vrot.slane %v6473, %v6476
      %v6478 = vmul.f32 %v6469, %v6477
      %v6480 = vrot.slane %v6478, 4
      %6482 = vst [vmem:[#allocation3 + $0x20] sm:$0xf0] %v6480
      %v6484 = vrot.slane %v5865, 4
      %v6485 = vsel %vm729, %v6484, 0
      %6487 = vmatprep.subr.mxu0 0.0
      %6488 = vmatpush1.msra.mxu0 %v6485
      %6489 = vmatprep.subr.mxu0 0.0
      %6490 = vmatpush1.msra.mxu0 0.0
      %6491 = vmatprep.subr.mxu0 0.0
      %6492 = vmatpush1.msra.mxu0 0.0
      %6493 = vmatprep.subr.mxu0 0.0
      %6494 = vmatpush1.msra.mxu0 0.0
      %6495 = vmatprep.subr.mxu0 0.0
      %6496 = vmatpush1.msra.mxu0 0.0
      %6497 = vmatprep.subr.mxu0 0.0
      %6498 = vmatpush1.msra.mxu0 0.0
      %6499 = vmatprep.subr.mxu0 0.0
      %6500 = vmatpush1.msra.mxu0 0.0
      %6501 = vmatprep.subr.mxu0 0.0
      %6502 = vmatpush1.msra.mxu0 0.0
      %6503 = vmatprep.subr.mxu0 0.0
      %6504 = vmatpush1.msra.mxu0 0.0
      %6505 = vmatprep.subr.mxu0 0.0
      %6506 = vmatpush1.msra.mxu0 0.0
      %6507 = vmatprep.subr.mxu0 0.0
      %6508 = vmatpush1.msra.mxu0 0.0
      %6509 = vmatprep.subr.mxu0 0.0
      %6510 = vmatpush1.msra.mxu0 0.0
      %6511 = vmatprep.subr.mxu0 0.0
      %6512 = vmatpush1.msra.mxu0 0.0
      %6513 = vmatprep.subr.mxu0 0.0
      %6514 = vmatpush1.msra.mxu0 0.0
      %6515 = vmatprep.subr.mxu0 0.0
      %6516 = vmatpush1.msra.mxu0 0.0
      %6517 = vmatprep.subr.mxu0 0.0
      %6518 = vmatpush1.msra.mxu0 0.0
      %6519 = vmatprep.subr.mxu0 0.0
      %6520 = vmatpush1.msra.mxu0 0.0
      %6521 = vmatprep.subr.mxu0 0.0
      %6522 = vmatpush1.msra.mxu0 0.0
      %6523 = vmatprep.subr.mxu0 0.0
      %6524 = vmatpush1.msra.mxu0 0.0
      %6525 = vmatprep.subr.mxu0 0.0
      %6526 = vmatpush1.msra.mxu0 0.0
      %6527 = vmatprep.subr.mxu0 0.0
      %6528 = vmatpush1.msra.mxu0 0.0
      %6529 = vmatprep.subr.mxu0 0.0
      %6530 = vmatpush1.msra.mxu0 0.0
      %6531 = vmatprep.subr.mxu0 0.0
      %6532 = vmatpush1.msra.mxu0 0.0
      %6533 = vmatprep.subr.mxu0 0.0
      %6534 = vmatpush1.msra.mxu0 0.0
      %6535 = vmatprep.subr.mxu0 0.0
      %6536 = vmatpush1.msra.mxu0 0.0
      %6537 = vmatprep.subr.mxu0 0.0
      %6538 = vmatpush1.msra.mxu0 0.0
      %6539 = vmatprep.subr.mxu0 0.0
      %6540 = vmatpush1.msra.mxu0 0.0
      %6541 = vmatprep.subr.mxu0 0.0
      %6542 = vmatpush1.msra.mxu0 0.0
      %6543 = vmatprep.subr.mxu0 0.0
      %6544 = vmatpush1.msra.mxu0 0.0
      %6545 = vmatprep.subr.mxu0 0.0
      %6546 = vmatpush1.msra.mxu0 0.0
      %6547 = vmatprep.subr.mxu0 0.0
      %6548 = vmatpush1.msra.mxu0 0.0
      %6549 = vmatprep.subr.mxu0 0.0
      %6550 = vmatpush1.msra.mxu0 0.0
      %6551 = vmatprep.mubr.f32.mxu0 0.0
      %6552 = vmatmul.mubr.f32.gmra.mrb[0].mxu0 %v5941
      %v6553 = vpop.f32.mrb[0].mxu0
      %v6554 = vadd.f32 0.0, %v6553
      %v6555 = vpop.f32.mrb[0].mxu0
      %6556 = vmatprep.mubr.f32.mxu0 0.0
      %6557 = vmatmul.mubr.f32.gmra.mrb[0].mxu0 %v5944
      %v6558 = vpop.f32.mrb[0].mxu0
      %v6559 = vadd.f32 0.0, %v6558
      %v6560 = vpop.f32.mrb[0].mxu0
      %6561 = vmatprep.mubr.f32.mxu0 0.0
      %6562 = vmatmul.mubr.f32.gmra.mrb[0].mxu0 %v5947
      %v6563 = vpop.f32.mrb[0].mxu0
      %v6564 = vadd.f32 0.0, %v6563
      %v6565 = vpop.f32.mrb[0].mxu0
      %6566 = vmatprep.mubr.f32.mxu0 0.0
      %6567 = vmatmul.mubr.f32.gmra.mrb[0].mxu0 %v5950
      %v6568 = vpop.f32.mrb[0].mxu0
      %v6569 = vadd.f32 0.0, %v6568
      %v6570 = vpop.f32.mrb[0].mxu0
      %6571 = vmatprep.mubr.f32.mxu0 0.0
      %6572 = vmatmul.mubr.f32.gmra.mrb[0].mxu0 %v5953
      %v6573 = vpop.f32.mrb[0].mxu0
      %v6574 = vadd.f32 0.0, %v6573
      %v6575 = vpop.f32.mrb[0].mxu0
      %6576 = vmatprep.mubr.f32.mxu0 0.0
      %6577 = vmatmul.mubr.f32.gmra.mrb[0].mxu0 %v5956
      %v6578 = vpop.f32.mrb[0].mxu0
      %v6579 = vadd.f32 0.0, %v6578
      %v6580 = vpop.f32.mrb[0].mxu0
      %6581 = vmatprep.mubr.f32.mxu0 0.0
      %6582 = vmatmul.mubr.f32.gmra.mrb[0].mxu0 %v5959
      %v6583 = vpop.f32.mrb[0].mxu0
      %v6584 = vadd.f32 0.0, %v6583
      %v6585 = vpop.f32.mrb[0].mxu0
      %6586 = vmatprep.mubr.f32.mxu0 0.0
      %6587 = vmatmul.mubr.f32.gmra.mrb[0].mxu0 %v5962
      %v6588 = vpop.f32.mrb[0].mxu0
      %v6589 = vadd.f32 0.0, %v6588
      %v6590 = vpop.f32.mrb[0].mxu0
      %6591 = vmatprep.mubr.f32.mxu0 0.0
      %6592 = vmatmul.mubr.f32.gmra.mrb[0].mxu0 %v5965
      %v6593 = vpop.f32.mrb[0].mxu0
      %v6594 = vadd.f32 0.0, %v6593
      %v6595 = vpop.f32.mrb[0].mxu0
      %6596 = vmatprep.mubr.f32.mxu0 0.0
      %6597 = vmatmul.mubr.f32.gmra.mrb[0].mxu0 %v5968
      %v6598 = vpop.f32.mrb[0].mxu0
      %v6599 = vadd.f32 0.0, %v6598
      %v6600 = vpop.f32.mrb[0].mxu0
      %6601 = vmatprep.mubr.f32.mxu0 0.0
      %6602 = vmatmul.mubr.f32.gmra.mrb[0].mxu0 %v5971
      %v6603 = vpop.f32.mrb[0].mxu0
      %v6604 = vadd.f32 0.0, %v6603
      %v6605 = vpop.f32.mrb[0].mxu0
      %6606 = vmatprep.mubr.f32.mxu0 0.0
      %6607 = vmatmul.mubr.f32.gmra.mrb[0].mxu0 %v5974
      %v6608 = vpop.f32.mrb[0].mxu0
      %v6609 = vadd.f32 0.0, %v6608
      %v6610 = vpop.f32.mrb[0].mxu0
      %6611 = vmatprep.mubr.f32.mxu0 0.0
      %6612 = vmatmul.mubr.f32.gmra.mrb[0].mxu0 %v5977
      %v6613 = vpop.f32.mrb[0].mxu0
      %v6614 = vadd.f32 0.0, %v6613
      %v6615 = vpop.f32.mrb[0].mxu0
      %6616 = vmatprep.mubr.f32.mxu0 0.0
      %6617 = vmatmul.mubr.f32.gmra.mrb[0].mxu0 %v5980
      %v6618 = vpop.f32.mrb[0].mxu0
      %v6619 = vadd.f32 0.0, %v6618
      %v6620 = vpop.f32.mrb[0].mxu0
      %6621 = vmatprep.mubr.f32.mxu0 0.0
      %6622 = vmatmul.mubr.f32.gmra.mrb[0].mxu0 %v5983
      %v6623 = vpop.f32.mrb[0].mxu0
      %v6624 = vadd.f32 0.0, %v6623
      %v6625 = vpop.f32.mrb[0].mxu0
      %6626 = vmatprep.mubr.f32.mxu0 0.0
      %6627 = vmatmul.mubr.f32.gmra.mrb[0].mxu0 %v5986
      %v6628 = vpop.f32.mrb[0].mxu0
      %v6629 = vadd.f32 0.0, %v6628
      %v6630 = vpop.f32.mrb[0].mxu0
      %6631 = vmatprep.mubr.f32.mxu0 0.0
      %6632 = vmatmul.mubr.f32.gmra.mrb[0].mxu0 %v5989
      %v6633 = vpop.f32.mrb[0].mxu0
      %v6634 = vadd.f32 0.0, %v6633
      %v6635 = vpop.f32.mrb[0].mxu0
      %6636 = vmatprep.mubr.f32.mxu0 0.0
      %6637 = vmatmul.mubr.f32.gmra.mrb[0].mxu0 %v5992
      %v6638 = vpop.f32.mrb[0].mxu0
      %v6639 = vadd.f32 0.0, %v6638
      %v6640 = vpop.f32.mrb[0].mxu0
      %6641 = vmatprep.mubr.f32.mxu0 0.0
      %6642 = vmatmul.mubr.f32.gmra.mrb[0].mxu0 %v5995
      %v6643 = vpop.f32.mrb[0].mxu0
      %v6644 = vadd.f32 0.0, %v6643
      %v6645 = vpop.f32.mrb[0].mxu0
      %6646 = vmatprep.mubr.f32.mxu0 0.0
      %6647 = vmatmul.mubr.f32.gmra.mrb[0].mxu0 %v5998
      %v6648 = vpop.f32.mrb[0].mxu0
      %v6649 = vadd.f32 0.0, %v6648
      %v6650 = vpop.f32.mrb[0].mxu0
      %6651 = vmatprep.mubr.f32.mxu0 0.0
      %6652 = vmatmul.mubr.f32.gmra.mrb[0].mxu0 %v6001
      %v6653 = vpop.f32.mrb[0].mxu0
      %v6654 = vadd.f32 0.0, %v6653
      %v6655 = vpop.f32.mrb[0].mxu0
      %6656 = vmatprep.mubr.f32.mxu0 0.0
      %6657 = vmatmul.mubr.f32.gmra.mrb[0].mxu0 %v6004
      %v6658 = vpop.f32.mrb[0].mxu0
      %v6659 = vadd.f32 0.0, %v6658
      %v6660 = vpop.f32.mrb[0].mxu0
      %6661 = vmatprep.mubr.f32.mxu0 0.0
      %6662 = vmatmul.mubr.f32.gmra.mrb[0].mxu0 %v6007
      %v6663 = vpop.f32.mrb[0].mxu0
      %v6664 = vadd.f32 0.0, %v6663
      %v6665 = vpop.f32.mrb[0].mxu0
      %6666 = vmatprep.mubr.f32.mxu0 0.0
      %6667 = vmatmul.mubr.f32.gmra.mrb[0].mxu0 %v6010
      %v6668 = vpop.f32.mrb[0].mxu0
      %v6669 = vadd.f32 0.0, %v6668
      %v6670 = vpop.f32.mrb[0].mxu0
      %6671 = vmatprep.mubr.f32.mxu0 0.0
      %6672 = vmatmul.mubr.f32.gmra.mrb[0].mxu0 %v6013
      %v6673 = vpop.f32.mrb[0].mxu0
      %v6674 = vadd.f32 0.0, %v6673
      %v6675 = vpop.f32.mrb[0].mxu0
      %6676 = vmatprep.mubr.f32.mxu0 0.0
      %6677 = vmatmul.mubr.f32.gmra.mrb[0].mxu0 %v6016
      %v6678 = vpop.f32.mrb[0].mxu0
      %v6679 = vadd.f32 0.0, %v6678
      %v6680 = vpop.f32.mrb[0].mxu0
      %6681 = vmatprep.mubr.f32.mxu0 0.0
      %6682 = vmatmul.mubr.f32.gmra.mrb[0].mxu0 %v6019
      %v6683 = vpop.f32.mrb[0].mxu0
      %v6684 = vadd.f32 0.0, %v6683
      %v6685 = vpop.f32.mrb[0].mxu0
      %6686 = vmatprep.mubr.f32.mxu0 0.0
      %6687 = vmatmul.mubr.f32.gmra.mrb[0].mxu0 %v6022
      %v6688 = vpop.f32.mrb[0].mxu0
      %v6689 = vadd.f32 0.0, %v6688
      %v6690 = vpop.f32.mrb[0].mxu0
      %6691 = vmatprep.mubr.f32.mxu0 0.0
      %6692 = vmatmul.mubr.f32.gmra.mrb[0].mxu0 %v6025
      %v6693 = vpop.f32.mrb[0].mxu0
      %v6694 = vadd.f32 0.0, %v6693
      %v6695 = vpop.f32.mrb[0].mxu0
      %6696 = vmatprep.mubr.f32.mxu0 0.0
      %6697 = vmatmul.mubr.f32.gmra.mrb[0].mxu0 %v6028
      %v6698 = vpop.f32.mrb[0].mxu0
      %v6699 = vadd.f32 0.0, %v6698
      %v6700 = vpop.f32.mrb[0].mxu0
      %6701 = vmatprep.mubr.f32.mxu0 0.0
      %6702 = vmatmul.mubr.f32.gmra.mrb[0].mxu0 %v6031
      %v6703 = vpop.f32.mrb[0].mxu0
      %v6704 = vadd.f32 0.0, %v6703
      %v6705 = vpop.f32.mrb[0].mxu0
      %6706 = vmatprep.mubr.f32.mxu0 0.0
      %6707 = vmatmul.mubr.f32.gmra.mrb[0].mxu0 %v6034
      %v6708 = vpop.f32.mrb[0].mxu0
      %v6709 = vadd.f32 0.0, %v6708
      %v6710 = vpop.f32.mrb[0].mxu0
      %6711 = vdwg.mxu0
      %v6712 = vmax.f32 %v6554, %v6574
      %v6713 = vmax.f32 %v6559, %v6579
      %v6714 = vmax.f32 %v6564, %v6584
      %v6715 = vmax.f32 %v6569, %v6589
      %v6716 = vmax.f32 %v6712, %v6594
      %v6717 = vmax.f32 %v6713, %v6599
      %v6718 = vmax.f32 %v6714, %v6604
      %v6719 = vmax.f32 %v6715, %v6609
      %v6720 = vmax.f32 %v6716, %v6614
      %v6721 = vmax.f32 %v6717, %v6619
      %v6722 = vmax.f32 %v6718, %v6624
      %v6723 = vmax.f32 %v6719, %v6629
      %v6724 = vmax.f32 %v6720, %v6634
      %v6725 = vmax.f32 %v6721, %v6639
      %v6726 = vmax.f32 %v6722, %v6644
      %v6727 = vmax.f32 %v6723, %v6649
      %v6728 = vmax.f32 %v6724, %v6654
      %v6729 = vmax.f32 %v6725, %v6659
      %v6730 = vmax.f32 %v6726, %v6664
      %v6731 = vmax.f32 %v6727, %v6669
      %v6732 = vmax.f32 %v6728, %v6674
      %v6733 = vmax.f32 %v6729, %v6679
      %v6734 = vmax.f32 %v6730, %v6684
      %v6735 = vmax.f32 %v6731, %v6689
      %v6736 = vmax.f32 %v6732, %v6694
      %v6737 = vmax.f32 %v6733, %v6699
      %v6738 = vmax.f32 %v6734, %v6704
      %v6739 = vmax.f32 %v6735, %v6709
      %v6740 = vmax.f32 %v6736, %v6737
      %v6741 = vmax.f32 %v6738, %v6739
      %v6742 = vmax.f32 %v6740, %v6741
      %v6743 = vrot.slane %v6742, 4
      %v6744 = vmax.f32 %v6742, %v6743
      %v6745 = vrot.slane %v6744, 2
      %v6746 = vmax.f32 %v6744, %v6745
      %v6747 = vrot.slane %v6746, 1
      %v6748 = vmax.f32 %v6746, %v6747
      %v6749 = vsub.f32 %v6554, %v6748
      %v6750 = vsub.f32 %v6559, %v6748
      %v6751 = vsub.f32 %v6564, %v6748
      %v6752 = vsub.f32 %v6569, %v6748
      %v6753 = vsub.f32 %v6574, %v6748
      %v6754 = vsub.f32 %v6579, %v6748
      %v6755 = vsub.f32 %v6584, %v6748
      %v6756 = vsub.f32 %v6589, %v6748
      %v6757 = vsub.f32 %v6594, %v6748
      %v6758 = vsub.f32 %v6599, %v6748
      %v6759 = vsub.f32 %v6604, %v6748
      %v6760 = vsub.f32 %v6609, %v6748
      %v6761 = vsub.f32 %v6614, %v6748
      %v6762 = vsub.f32 %v6619, %v6748
      %v6763 = vsub.f32 %v6624, %v6748
      %v6764 = vsub.f32 %v6629, %v6748
      %v6765 = vsub.f32 %v6634, %v6748
      %v6766 = vsub.f32 %v6639, %v6748
      %v6767 = vsub.f32 %v6644, %v6748
      %v6768 = vsub.f32 %v6649, %v6748
      %v6769 = vsub.f32 %v6654, %v6748
      %v6770 = vsub.f32 %v6659, %v6748
      %v6771 = vsub.f32 %v6664, %v6748
      %v6772 = vsub.f32 %v6669, %v6748
      %v6773 = vsub.f32 %v6674, %v6748
      %v6774 = vsub.f32 %v6679, %v6748
      %v6775 = vsub.f32 %v6684, %v6748
      %v6776 = vsub.f32 %v6689, %v6748
      %v6777 = vsub.f32 %v6694, %v6748
      %v6778 = vsub.f32 %v6699, %v6748
      %v6779 = vsub.f32 %v6704, %v6748
      %v6780 = vsub.f32 %v6709, %v6748
      %v6781 = vmul.f32 %v6749, 1.442695
      %v6782 = vpow.pop %v6781
      %v6783 = vmul.f32 %v6750, 1.442695
      %v6784 = vpow.pop %v6783
      %v6785 = vmul.f32 %v6751, 1.442695
      %v6786 = vpow.pop %v6785
      %v6787 = vmul.f32 %v6752, 1.442695
      %v6788 = vpow.pop %v6787
      %v6789 = vmul.f32 %v6753, 1.442695
      %v6790 = vpow.pop %v6789
      %v6791 = vmul.f32 %v6754, 1.442695
      %v6792 = vpow.pop %v6791
      %v6793 = vmul.f32 %v6755, 1.442695
      %v6794 = vpow.pop %v6793
      %v6795 = vmul.f32 %v6756, 1.442695
      %v6796 = vpow.pop %v6795
      %v6797 = vmul.f32 %v6757, 1.442695
      %v6798 = vpow.pop %v6797
      %v6799 = vmul.f32 %v6758, 1.442695
      %v6800 = vpow.pop %v6799
      %v6801 = vmul.f32 %v6759, 1.442695
      %v6802 = vpow.pop %v6801
      %v6803 = vmul.f32 %v6760, 1.442695
      %v6804 = vpow.pop %v6803
      %v6805 = vmul.f32 %v6761, 1.442695
      %v6806 = vpow.pop %v6805
      %v6807 = vmul.f32 %v6762, 1.442695
      %v6808 = vpow.pop %v6807
      %v6809 = vmul.f32 %v6763, 1.442695
      %v6810 = vpow.pop %v6809
      %v6811 = vmul.f32 %v6764, 1.442695
      %v6812 = vpow.pop %v6811
      %v6813 = vmul.f32 %v6765, 1.442695
      %v6814 = vpow.pop %v6813
      %v6815 = vmul.f32 %v6766, 1.442695
      %v6816 = vpow.pop %v6815
      %v6817 = vmul.f32 %v6767, 1.442695
      %v6818 = vpow.pop %v6817
      %v6819 = vmul.f32 %v6768, 1.442695
      %v6820 = vpow.pop %v6819
      %v6821 = vmul.f32 %v6769, 1.442695
      %v6822 = vpow.pop %v6821
      %v6823 = vmul.f32 %v6770, 1.442695
      %v6824 = vpow.pop %v6823
      %v6825 = vmul.f32 %v6771, 1.442695
      %v6826 = vpow.pop %v6825
      %v6827 = vmul.f32 %v6772, 1.442695
      %v6828 = vpow.pop %v6827
      %v6829 = vmul.f32 %v6773, 1.442695
      %v6830 = vpow.pop %v6829
      %v6831 = vmul.f32 %v6774, 1.442695
      %v6832 = vpow.pop %v6831
      %v6833 = vmul.f32 %v6775, 1.442695
      %v6834 = vpow.pop %v6833
      %v6835 = vmul.f32 %v6776, 1.442695
      %v6836 = vpow.pop %v6835
      %v6837 = vmul.f32 %v6777, 1.442695
      %v6838 = vpow.pop %v6837
      %v6839 = vmul.f32 %v6778, 1.442695
      %v6840 = vpow.pop %v6839
      %v6841 = vmul.f32 %v6779, 1.442695
      %v6842 = vpow.pop %v6841
      %v6843 = vmul.f32 %v6780, 1.442695
      %v6844 = vpow.pop %v6843
      %6845 = vmatprep.subr.mxu0 0.0
      %6846 = vmatpush1.msra.mxu0 %v6782
      %6847 = vmatprep.subr.mxu0 0.0
      %6848 = vmatpush1.msra.mxu0 %v6784
      %6849 = vmatprep.subr.mxu0 0.0
      %6850 = vmatpush1.msra.mxu0 %v6786
      %6851 = vmatprep.subr.mxu0 0.0
      %6852 = vmatpush1.msra.mxu0 %v6788
      %6853 = vmatprep.subr.mxu0 0.0
      %6854 = vmatpush1.msra.mxu0 %v6790
      %6855 = vmatprep.subr.mxu0 0.0
      %6856 = vmatpush1.msra.mxu0 %v6792
      %6857 = vmatprep.subr.mxu0 0.0
      %6858 = vmatpush1.msra.mxu0 %v6794
      %6859 = vmatprep.subr.mxu0 0.0
      %6860 = vmatpush1.msra.mxu0 %v6796
      %6861 = vmatprep.subr.mxu0 0.0
      %6862 = vmatpush1.msra.mxu0 %v6798
      %6863 = vmatprep.subr.mxu0 0.0
      %6864 = vmatpush1.msra.mxu0 %v6800
      %6865 = vmatprep.subr.mxu0 0.0
      %6866 = vmatpush1.msra.mxu0 %v6802
      %6867 = vmatprep.subr.mxu0 0.0
      %6868 = vmatpush1.msra.mxu0 %v6804
      %6869 = vmatprep.subr.mxu0 0.0
      %6870 = vmatpush1.msra.mxu0 %v6806
      %6871 = vmatprep.subr.mxu0 0.0
      %6872 = vmatpush1.msra.mxu0 %v6808
      %6873 = vmatprep.subr.mxu0 0.0
      %6874 = vmatpush1.msra.mxu0 %v6810
      %6875 = vmatprep.subr.mxu0 0.0
      %6876 = vmatpush1.msra.mxu0 %v6812
      %6877 = vmatprep.subr.mxu0 0.0
      %6878 = vmatpush1.msra.mxu0 %v6814
      %6879 = vmatprep.subr.mxu0 0.0
      %6880 = vmatpush1.msra.mxu0 %v6816
      %6881 = vmatprep.subr.mxu0 0.0
      %6882 = vmatpush1.msra.mxu0 %v6818
      %6883 = vmatprep.subr.mxu0 0.0
      %6884 = vmatpush1.msra.mxu0 %v6820
      %6885 = vmatprep.subr.mxu0 0.0
      %6886 = vmatpush1.msra.mxu0 %v6822
      %6887 = vmatprep.subr.mxu0 0.0
      %6888 = vmatpush1.msra.mxu0 %v6824
      %6889 = vmatprep.subr.mxu0 0.0
      %6890 = vmatpush1.msra.mxu0 %v6826
      %6891 = vmatprep.subr.mxu0 0.0
      %6892 = vmatpush1.msra.mxu0 %v6828
      %6893 = vmatprep.subr.mxu0 0.0
      %6894 = vmatpush1.msra.mxu0 %v6830
      %6895 = vmatprep.subr.mxu0 0.0
      %6896 = vmatpush1.msra.mxu0 %v6832
      %6897 = vmatprep.subr.mxu0 0.0
      %6898 = vmatpush1.msra.mxu0 %v6834
      %6899 = vmatprep.subr.mxu0 0.0
      %6900 = vmatpush1.msra.mxu0 %v6836
      %6901 = vmatprep.subr.mxu0 0.0
      %6902 = vmatpush1.msra.mxu0 %v6838
      %6903 = vmatprep.subr.mxu0 0.0
      %6904 = vmatpush1.msra.mxu0 %v6840
      %6905 = vmatprep.subr.mxu0 0.0
      %6906 = vmatpush1.msra.mxu0 %v6842
      %6907 = vmatprep.subr.mxu0 0.0
      %6908 = vmatpush1.msra.mxu0 %v6844
      %6909 = vmatprep.mubr.f32.mxu0 %v6399
      %6910 = vmatmul.mubr.f32.gmra.mrb[0].mxu0 %v6398
      %v6911 = vpop.f32.mrb[0].mxu0
      %v6912 = vadd.f32 0.0, %v6911
      %v6913 = vpop.f32.mrb[0].mxu0
      %6914 = vdwg.mxu0
      %v6915 = vrcp.pop %v6912
      %v6916 = vmul.f32 1.0, %v6915
      %v6917 = vlaneseq
      %v6918 = vshrl.u32 %v6917, 7
      %v6919 = vsub.s32 4, %v6918
      %v6920 = vrot.slane %v6916, %v6919
      %v6921 = vmul.f32 %v6912, %v6920
      %v6923 = vrot.slane %v6921, 4
      %6925 = vst [vmem:[#allocation3 + $0x28] sm:$0xf0] %v6923
      %v6926 = vld [vmem:[#allocation2 + $0x30] sm:$0xf]
      %v6927 = vld [vmem:[#allocation2 + $0x38] sm:$0xf]
      %v6928 = vld [vmem:[#allocation2 + $0x70] sm:$0xf]
      %v6929 = vld [vmem:[#allocation2 + $0x78] sm:$0xf]
      %v6930 = vld [vmem:[#allocation2 + $0xb0] sm:$0xc0]
      %v6931 = vld [vmem:[#allocation2 + $0xb8] sm:$0xc0]
      %v6932 = vld [vmem:[#allocation2 + $0xc0] sm:$0x7]
      %v6933 = vld [vmem:[#allocation2 + $0xc8] sm:$0x7]
      %6934 = vxpose.xlu0.b32.start [1/16] %v6926, 128
      %6935 = vxpose.xlu0.b32.cont [2/16] 0.0, 128
      %6936 = vxpose.xlu0.b32.cont [3/16] 0.0, 128
      %6937 = vxpose.xlu0.b32.cont [4/16] 0.0, 128
      %6938 = vxpose.xlu0.b32.cont [5/16] 0.0, 128
      %6939 = vxpose.xlu0.b32.cont [6/16] 0.0, 128
      %6940 = vxpose.xlu0.b32.cont [7/16] 0.0, 128
      %6941 = vxpose.xlu0.b32.cont [8/16] 0.0, 128
      %6942 = vxpose.xlu0.b32.cont [9/16] 0.0, 128
      %6943 = vxpose.xlu0.b32.cont [10/16] 0.0, 128
      %6944 = vxpose.xlu0.b32.cont [11/16] 0.0, 128
      %6945 = vxpose.xlu0.b32.cont [12/16] 0.0, 128
      %6946 = vxpose.xlu0.b32.cont [13/16] 0.0, 128
      %6947 = vxpose.xlu0.b32.cont [14/16] 0.0, 128
      %6948 = vxpose.xlu0.b32.cont [15/16] 0.0, 128
      %6949 = vxpose.xlu0.b32.end [16/16] 0.0, 128
      %v6950 = vpop.trf.xlu0
      %v6951 = vpop.trf.xlu0
      %v6952 = vpop.trf.xlu0
      %v6953 = vpop.trf.xlu0
      %v6954 = vpop.trf.xlu0
      %v6955 = vpop.trf.xlu0
      %v6956 = vpop.trf.xlu0
      %v6957 = vpop.trf.xlu0
      %v6958 = vpop.trf.xlu0
      %v6959 = vpop.trf.xlu0
      %v6960 = vpop.trf.xlu0
      %v6961 = vpop.trf.xlu0
      %v6962 = vpop.trf.xlu0
      %v6963 = vpop.trf.xlu0
      %v6964 = vpop.trf.xlu0
      %v6965 = vpop.trf.xlu0
      %6966 = vxpose.xlu0.b32.start [1/16] %v6927, 128
      %6967 = vxpose.xlu0.b32.cont [2/16] 0.0, 128
      %6968 = vxpose.xlu0.b32.cont [3/16] 0.0, 128
      %6969 = vxpose.xlu0.b32.cont [4/16] 0.0, 128
      %6970 = vxpose.xlu0.b32.cont [5/16] 0.0, 128
      %6971 = vxpose.xlu0.b32.cont [6/16] 0.0, 128
      %6972 = vxpose.xlu0.b32.cont [7/16] 0.0, 128
      %6973 = vxpose.xlu0.b32.cont [8/16] 0.0, 128
      %6974 = vxpose.xlu0.b32.cont [9/16] 0.0, 128
      %6975 = vxpose.xlu0.b32.cont [10/16] 0.0, 128
      %6976 = vxpose.xlu0.b32.cont [11/16] 0.0, 128
      %6977 = vxpose.xlu0.b32.cont [12/16] 0.0, 128
      %6978 = vxpose.xlu0.b32.cont [13/16] 0.0, 128
      %6979 = vxpose.xlu0.b32.cont [14/16] 0.0, 128
      %6980 = vxpose.xlu0.b32.cont [15/16] 0.0, 128
      %6981 = vxpose.xlu0.b32.end [16/16] 0.0, 128
      %v6982 = vpop.trf.xlu0
      %v6983 = vpop.trf.xlu0
      %v6984 = vpop.trf.xlu0
      %v6985 = vpop.trf.xlu0
      %v6986 = vpop.trf.xlu0
      %v6987 = vpop.trf.xlu0
      %v6988 = vpop.trf.xlu0
      %v6989 = vpop.trf.xlu0
      %v6990 = vpop.trf.xlu0
      %v6991 = vpop.trf.xlu0
      %v6992 = vpop.trf.xlu0
      %v6993 = vpop.trf.xlu0
      %v6994 = vpop.trf.xlu0
      %v6995 = vpop.trf.xlu0
      %v6996 = vpop.trf.xlu0
      %v6997 = vpop.trf.xlu0
      %v6999 = vsel %vm632, %v6950, 0
      %v7002 = vsel %vm632, %v6951, 0
      %v7005 = vsel %vm632, %v6952, 0
      %v7008 = vsel %vm632, %v6953, 0
      %v7011 = vsel %vm632, %v6954, 0
      %v7014 = vsel %vm632, %v6955, 0
      %v7017 = vsel %vm632, %v6956, 0
      %v7020 = vsel %vm632, %v6957, 0
      %v7023 = vsel %vm632, %v6958, 0
      %v7026 = vsel %vm632, %v6959, 0
      %v7029 = vsel %vm632, %v6960, 0
      %v7032 = vsel %vm632, %v6961, 0
      %v7035 = vsel %vm632, %v6962, 0
      %v7038 = vsel %vm632, %v6963, 0
      %v7041 = vsel %vm632, %v6964, 0
      %v7044 = vsel %vm632, %v6965, 0
      %v7047 = vsel %vm632, %v6982, 0
      %v7050 = vsel %vm632, %v6983, 0
      %v7053 = vsel %vm632, %v6984, 0
      %v7056 = vsel %vm632, %v6985, 0
      %v7059 = vsel %vm632, %v6986, 0
      %v7062 = vsel %vm632, %v6987, 0
      %v7065 = vsel %vm632, %v6988, 0
      %v7068 = vsel %vm632, %v6989, 0
      %v7071 = vsel %vm632, %v6990, 0
      %v7074 = vsel %vm632, %v6991, 0
      %v7077 = vsel %vm632, %v6992, 0
      %v7080 = vsel %vm632, %v6993, 0
      %v7083 = vsel %vm632, %v6994, 0
      %v7086 = vsel %vm632, %v6995, 0
      %v7089 = vsel %vm632, %v6996, 0
      %v7092 = vsel %vm632, %v6997, 0
      %v7095 = vsel %vm729, %v6928, 0
      %7097 = vmatprep.subr.mxu0 0.0
      %7098 = vmatpush1.msra.mxu0 %v7095
      %7099 = vmatprep.subr.mxu0 0.0
      %7100 = vmatpush1.msra.mxu0 0.0
      %7101 = vmatprep.subr.mxu0 0.0
      %7102 = vmatpush1.msra.mxu0 0.0
      %7103 = vmatprep.subr.mxu0 0.0
      %7104 = vmatpush1.msra.mxu0 0.0
      %7105 = vmatprep.subr.mxu0 0.0
      %7106 = vmatpush1.msra.mxu0 0.0
      %7107 = vmatprep.subr.mxu0 0.0
      %7108 = vmatpush1.msra.mxu0 0.0
      %7109 = vmatprep.subr.mxu0 0.0
      %7110 = vmatpush1.msra.mxu0 0.0
      %7111 = vmatprep.subr.mxu0 0.0
      %7112 = vmatpush1.msra.mxu0 0.0
      %7113 = vmatprep.subr.mxu0 0.0
      %7114 = vmatpush1.msra.mxu0 0.0
      %7115 = vmatprep.subr.mxu0 0.0
      %7116 = vmatpush1.msra.mxu0 0.0
      %7117 = vmatprep.subr.mxu0 0.0
      %7118 = vmatpush1.msra.mxu0 0.0
      %7119 = vmatprep.subr.mxu0 0.0
      %7120 = vmatpush1.msra.mxu0 0.0
      %7121 = vmatprep.subr.mxu0 0.0
      %7122 = vmatpush1.msra.mxu0 0.0
      %7123 = vmatprep.subr.mxu0 0.0
      %7124 = vmatpush1.msra.mxu0 0.0
      %7125 = vmatprep.subr.mxu0 0.0
      %7126 = vmatpush1.msra.mxu0 0.0
      %7127 = vmatprep.subr.mxu0 0.0
      %7128 = vmatpush1.msra.mxu0 0.0
      %7129 = vmatprep.subr.mxu0 0.0
      %7130 = vmatpush1.msra.mxu0 0.0
      %7131 = vmatprep.subr.mxu0 0.0
      %7132 = vmatpush1.msra.mxu0 0.0
      %7133 = vmatprep.subr.mxu0 0.0
      %7134 = vmatpush1.msra.mxu0 0.0
      %7135 = vmatprep.subr.mxu0 0.0
      %7136 = vmatpush1.msra.mxu0 0.0
      %7137 = vmatprep.subr.mxu0 0.0
      %7138 = vmatpush1.msra.mxu0 0.0
      %7139 = vmatprep.subr.mxu0 0.0
      %7140 = vmatpush1.msra.mxu0 0.0
      %7141 = vmatprep.subr.mxu0 0.0
      %7142 = vmatpush1.msra.mxu0 0.0
      %7143 = vmatprep.subr.mxu0 0.0
      %7144 = vmatpush1.msra.mxu0 0.0
      %7145 = vmatprep.subr.mxu0 0.0
      %7146 = vmatpush1.msra.mxu0 0.0
      %7147 = vmatprep.subr.mxu0 0.0
      %7148 = vmatpush1.msra.mxu0 0.0
      %7149 = vmatprep.subr.mxu0 0.0
      %7150 = vmatpush1.msra.mxu0 0.0
      %7151 = vmatprep.subr.mxu0 0.0
      %7152 = vmatpush1.msra.mxu0 0.0
      %7153 = vmatprep.subr.mxu0 0.0
      %7154 = vmatpush1.msra.mxu0 0.0
      %7155 = vmatprep.subr.mxu0 0.0
      %7156 = vmatpush1.msra.mxu0 0.0
      %7157 = vmatprep.subr.mxu0 0.0
      %7158 = vmatpush1.msra.mxu0 0.0
      %7159 = vmatprep.subr.mxu0 0.0
      %7160 = vmatpush1.msra.mxu0 0.0
      %7161 = vmatprep.mubr.f32.mxu0 0.0
      %7162 = vmatmul.mubr.f32.gmra.mrb[0].mxu0 %v6999
      %v7163 = vpop.f32.mrb[0].mxu0
      %v7164 = vadd.f32 0.0, %v7163
      %v7165 = vpop.f32.mrb[0].mxu0
      %7166 = vmatprep.mubr.f32.mxu0 0.0
      %7167 = vmatmul.mubr.f32.gmra.mrb[0].mxu0 %v7002
      %v7168 = vpop.f32.mrb[0].mxu0
      %v7169 = vadd.f32 0.0, %v7168
      %v7170 = vpop.f32.mrb[0].mxu0
      %7171 = vmatprep.mubr.f32.mxu0 0.0
      %7172 = vmatmul.mubr.f32.gmra.mrb[0].mxu0 %v7005
      %v7173 = vpop.f32.mrb[0].mxu0
      %v7174 = vadd.f32 0.0, %v7173
      %v7175 = vpop.f32.mrb[0].mxu0
      %7176 = vmatprep.mubr.f32.mxu0 0.0
      %7177 = vmatmul.mubr.f32.gmra.mrb[0].mxu0 %v7008
      %v7178 = vpop.f32.mrb[0].mxu0
      %v7179 = vadd.f32 0.0, %v7178
      %v7180 = vpop.f32.mrb[0].mxu0
      %7181 = vmatprep.mubr.f32.mxu0 0.0
      %7182 = vmatmul.mubr.f32.gmra.mrb[0].mxu0 %v7011
      %v7183 = vpop.f32.mrb[0].mxu0
      %v7184 = vadd.f32 0.0, %v7183
      %v7185 = vpop.f32.mrb[0].mxu0
      %7186 = vmatprep.mubr.f32.mxu0 0.0
      %7187 = vmatmul.mubr.f32.gmra.mrb[0].mxu0 %v7014
      %v7188 = vpop.f32.mrb[0].mxu0
      %v7189 = vadd.f32 0.0, %v7188
      %v7190 = vpop.f32.mrb[0].mxu0
      %7191 = vmatprep.mubr.f32.mxu0 0.0
      %7192 = vmatmul.mubr.f32.gmra.mrb[0].mxu0 %v7017
      %v7193 = vpop.f32.mrb[0].mxu0
      %v7194 = vadd.f32 0.0, %v7193
      %v7195 = vpop.f32.mrb[0].mxu0
      %7196 = vmatprep.mubr.f32.mxu0 0.0
      %7197 = vmatmul.mubr.f32.gmra.mrb[0].mxu0 %v7020
      %v7198 = vpop.f32.mrb[0].mxu0
      %v7199 = vadd.f32 0.0, %v7198
      %v7200 = vpop.f32.mrb[0].mxu0
      %7201 = vmatprep.mubr.f32.mxu0 0.0
      %7202 = vmatmul.mubr.f32.gmra.mrb[0].mxu0 %v7023
      %v7203 = vpop.f32.mrb[0].mxu0
      %v7204 = vadd.f32 0.0, %v7203
      %v7205 = vpop.f32.mrb[0].mxu0
      %7206 = vmatprep.mubr.f32.mxu0 0.0
      %7207 = vmatmul.mubr.f32.gmra.mrb[0].mxu0 %v7026
      %v7208 = vpop.f32.mrb[0].mxu0
      %v7209 = vadd.f32 0.0, %v7208
      %v7210 = vpop.f32.mrb[0].mxu0
      %7211 = vmatprep.mubr.f32.mxu0 0.0
      %7212 = vmatmul.mubr.f32.gmra.mrb[0].mxu0 %v7029
      %v7213 = vpop.f32.mrb[0].mxu0
      %v7214 = vadd.f32 0.0, %v7213
      %v7215 = vpop.f32.mrb[0].mxu0
      %7216 = vmatprep.mubr.f32.mxu0 0.0
      %7217 = vmatmul.mubr.f32.gmra.mrb[0].mxu0 %v7032
      %v7218 = vpop.f32.mrb[0].mxu0
      %v7219 = vadd.f32 0.0, %v7218
      %v7220 = vpop.f32.mrb[0].mxu0
      %7221 = vmatprep.mubr.f32.mxu0 0.0
      %7222 = vmatmul.mubr.f32.gmra.mrb[0].mxu0 %v7035
      %v7223 = vpop.f32.mrb[0].mxu0
      %v7224 = vadd.f32 0.0, %v7223
      %v7225 = vpop.f32.mrb[0].mxu0
      %7226 = vmatprep.mubr.f32.mxu0 0.0
      %7227 = vmatmul.mubr.f32.gmra.mrb[0].mxu0 %v7038
      %v7228 = vpop.f32.mrb[0].mxu0
      %v7229 = vadd.f32 0.0, %v7228
      %v7230 = vpop.f32.mrb[0].mxu0
      %7231 = vmatprep.mubr.f32.mxu0 0.0
      %7232 = vmatmul.mubr.f32.gmra.mrb[0].mxu0 %v7041
      %v7233 = vpop.f32.mrb[0].mxu0
      %v7234 = vadd.f32 0.0, %v7233
      %v7235 = vpop.f32.mrb[0].mxu0
      %7236 = vmatprep.mubr.f32.mxu0 0.0
      %7237 = vmatmul.mubr.f32.gmra.mrb[0].mxu0 %v7044
      %v7238 = vpop.f32.mrb[0].mxu0
      %v7239 = vadd.f32 0.0, %v7238
      %v7240 = vpop.f32.mrb[0].mxu0
      %7241 = vmatprep.mubr.f32.mxu0 0.0
      %7242 = vmatmul.mubr.f32.gmra.mrb[0].mxu0 %v7047
      %v7243 = vpop.f32.mrb[0].mxu0
      %v7244 = vadd.f32 0.0, %v7243
      %v7245 = vpop.f32.mrb[0].mxu0
      %7246 = vmatprep.mubr.f32.mxu0 0.0
      %7247 = vmatmul.mubr.f32.gmra.mrb[0].mxu0 %v7050
      %v7248 = vpop.f32.mrb[0].mxu0
      %v7249 = vadd.f32 0.0, %v7248
      %v7250 = vpop.f32.mrb[0].mxu0
      %7251 = vmatprep.mubr.f32.mxu0 0.0
      %7252 = vmatmul.mubr.f32.gmra.mrb[0].mxu0 %v7053
      %v7253 = vpop.f32.mrb[0].mxu0
      %v7254 = vadd.f32 0.0, %v7253
      %v7255 = vpop.f32.mrb[0].mxu0
      %7256 = vmatprep.mubr.f32.mxu0 0.0
      %7257 = vmatmul.mubr.f32.gmra.mrb[0].mxu0 %v7056
      %v7258 = vpop.f32.mrb[0].mxu0
      %v7259 = vadd.f32 0.0, %v7258
      %v7260 = vpop.f32.mrb[0].mxu0
      %7261 = vmatprep.mubr.f32.mxu0 0.0
      %7262 = vmatmul.mubr.f32.gmra.mrb[0].mxu0 %v7059
      %v7263 = vpop.f32.mrb[0].mxu0
      %v7264 = vadd.f32 0.0, %v7263
      %v7265 = vpop.f32.mrb[0].mxu0
      %7266 = vmatprep.mubr.f32.mxu0 0.0
      %7267 = vmatmul.mubr.f32.gmra.mrb[0].mxu0 %v7062
      %v7268 = vpop.f32.mrb[0].mxu0
      %v7269 = vadd.f32 0.0, %v7268
      %v7270 = vpop.f32.mrb[0].mxu0
      %7271 = vmatprep.mubr.f32.mxu0 0.0
      %7272 = vmatmul.mubr.f32.gmra.mrb[0].mxu0 %v7065
      %v7273 = vpop.f32.mrb[0].mxu0
      %v7274 = vadd.f32 0.0, %v7273
      %v7275 = vpop.f32.mrb[0].mxu0
      %7276 = vmatprep.mubr.f32.mxu0 0.0
      %7277 = vmatmul.mubr.f32.gmra.mrb[0].mxu0 %v7068
      %v7278 = vpop.f32.mrb[0].mxu0
      %v7279 = vadd.f32 0.0, %v7278
      %v7280 = vpop.f32.mrb[0].mxu0
      %7281 = vmatprep.mubr.f32.mxu0 0.0
      %7282 = vmatmul.mubr.f32.gmra.mrb[0].mxu0 %v7071
      %v7283 = vpop.f32.mrb[0].mxu0
      %v7284 = vadd.f32 0.0, %v7283
      %v7285 = vpop.f32.mrb[0].mxu0
      %7286 = vmatprep.mubr.f32.mxu0 0.0
      %7287 = vmatmul.mubr.f32.gmra.mrb[0].mxu0 %v7074
      %v7288 = vpop.f32.mrb[0].mxu0
      %v7289 = vadd.f32 0.0, %v7288
      %v7290 = vpop.f32.mrb[0].mxu0
      %7291 = vmatprep.mubr.f32.mxu0 0.0
      %7292 = vmatmul.mubr.f32.gmra.mrb[0].mxu0 %v7077
      %v7293 = vpop.f32.mrb[0].mxu0
      %v7294 = vadd.f32 0.0, %v7293
      %v7295 = vpop.f32.mrb[0].mxu0
      %7296 = vmatprep.mubr.f32.mxu0 0.0
      %7297 = vmatmul.mubr.f32.gmra.mrb[0].mxu0 %v7080
      %v7298 = vpop.f32.mrb[0].mxu0
      %v7299 = vadd.f32 0.0, %v7298
      %v7300 = vpop.f32.mrb[0].mxu0
      %7301 = vmatprep.mubr.f32.mxu0 0.0
      %7302 = vmatmul.mubr.f32.gmra.mrb[0].mxu0 %v7083
      %v7303 = vpop.f32.mrb[0].mxu0
      %v7304 = vadd.f32 0.0, %v7303
      %v7305 = vpop.f32.mrb[0].mxu0
      %7306 = vmatprep.mubr.f32.mxu0 0.0
      %7307 = vmatmul.mubr.f32.gmra.mrb[0].mxu0 %v7086
      %v7308 = vpop.f32.mrb[0].mxu0
      %v7309 = vadd.f32 0.0, %v7308
      %v7310 = vpop.f32.mrb[0].mxu0
      %7311 = vmatprep.mubr.f32.mxu0 0.0
      %7312 = vmatmul.mubr.f32.gmra.mrb[0].mxu0 %v7089
      %v7313 = vpop.f32.mrb[0].mxu0
      %v7314 = vadd.f32 0.0, %v7313
      %v7315 = vpop.f32.mrb[0].mxu0
      %7316 = vmatprep.mubr.f32.mxu0 0.0
      %7317 = vmatmul.mubr.f32.gmra.mrb[0].mxu0 %v7092
      %v7318 = vpop.f32.mrb[0].mxu0
      %v7319 = vadd.f32 0.0, %v7318
      %v7320 = vpop.f32.mrb[0].mxu0
      %7321 = vdwg.mxu0
      %v7322 = vmax.f32 %v7164, %v7184
      %v7323 = vmax.f32 %v7169, %v7189
      %v7324 = vmax.f32 %v7174, %v7194
      %v7325 = vmax.f32 %v7179, %v7199
      %v7326 = vmax.f32 %v7322, %v7204
      %v7327 = vmax.f32 %v7323, %v7209
      %v7328 = vmax.f32 %v7324, %v7214
      %v7329 = vmax.f32 %v7325, %v7219
      %v7330 = vmax.f32 %v7326, %v7224
      %v7331 = vmax.f32 %v7327, %v7229
      %v7332 = vmax.f32 %v7328, %v7234
      %v7333 = vmax.f32 %v7329, %v7239
      %v7334 = vmax.f32 %v7330, %v7244
      %v7335 = vmax.f32 %v7331, %v7249
      %v7336 = vmax.f32 %v7332, %v7254
      %v7337 = vmax.f32 %v7333, %v7259
      %v7338 = vmax.f32 %v7334, %v7264
      %v7339 = vmax.f32 %v7335, %v7269
      %v7340 = vmax.f32 %v7336, %v7274
      %v7341 = vmax.f32 %v7337, %v7279
      %v7342 = vmax.f32 %v7338, %v7284
      %v7343 = vmax.f32 %v7339, %v7289
      %v7344 = vmax.f32 %v7340, %v7294
      %v7345 = vmax.f32 %v7341, %v7299
      %v7346 = vmax.f32 %v7342, %v7304
      %v7347 = vmax.f32 %v7343, %v7309
      %v7348 = vmax.f32 %v7344, %v7314
      %v7349 = vmax.f32 %v7345, %v7319
      %v7350 = vmax.f32 %v7346, %v7347
      %v7351 = vmax.f32 %v7348, %v7349
      %v7352 = vmax.f32 %v7350, %v7351
      %v7353 = vrot.slane %v7352, 4
      %v7354 = vmax.f32 %v7352, %v7353
      %v7355 = vrot.slane %v7354, 2
      %v7356 = vmax.f32 %v7354, %v7355
      %v7357 = vrot.slane %v7356, 1
      %v7358 = vmax.f32 %v7356, %v7357
      %v7359 = vsub.f32 %v7164, %v7358
      %v7360 = vsub.f32 %v7169, %v7358
      %v7361 = vsub.f32 %v7174, %v7358
      %v7362 = vsub.f32 %v7179, %v7358
      %v7363 = vsub.f32 %v7184, %v7358
      %v7364 = vsub.f32 %v7189, %v7358
      %v7365 = vsub.f32 %v7194, %v7358
      %v7366 = vsub.f32 %v7199, %v7358
      %v7367 = vsub.f32 %v7204, %v7358
      %v7368 = vsub.f32 %v7209, %v7358
      %v7369 = vsub.f32 %v7214, %v7358
      %v7370 = vsub.f32 %v7219, %v7358
      %v7371 = vsub.f32 %v7224, %v7358
      %v7372 = vsub.f32 %v7229, %v7358
      %v7373 = vsub.f32 %v7234, %v7358
      %v7374 = vsub.f32 %v7239, %v7358
      %v7375 = vsub.f32 %v7244, %v7358
      %v7376 = vsub.f32 %v7249, %v7358
      %v7377 = vsub.f32 %v7254, %v7358
      %v7378 = vsub.f32 %v7259, %v7358
      %v7379 = vsub.f32 %v7264, %v7358
      %v7380 = vsub.f32 %v7269, %v7358
      %v7381 = vsub.f32 %v7274, %v7358
      %v7382 = vsub.f32 %v7279, %v7358
      %v7383 = vsub.f32 %v7284, %v7358
      %v7384 = vsub.f32 %v7289, %v7358
      %v7385 = vsub.f32 %v7294, %v7358
      %v7386 = vsub.f32 %v7299, %v7358
      %v7387 = vsub.f32 %v7304, %v7358
      %v7388 = vsub.f32 %v7309, %v7358
      %v7389 = vsub.f32 %v7314, %v7358
      %v7390 = vsub.f32 %v7319, %v7358
      %v7391 = vmul.f32 %v7359, 1.442695
      %v7392 = vpow.pop %v7391
      %v7393 = vmul.f32 %v7360, 1.442695
      %v7394 = vpow.pop %v7393
      %v7395 = vmul.f32 %v7361, 1.442695
      %v7396 = vpow.pop %v7395
      %v7397 = vmul.f32 %v7362, 1.442695
      %v7398 = vpow.pop %v7397
      %v7399 = vmul.f32 %v7363, 1.442695
      %v7400 = vpow.pop %v7399
      %v7401 = vmul.f32 %v7364, 1.442695
      %v7402 = vpow.pop %v7401
      %v7403 = vmul.f32 %v7365, 1.442695
      %v7404 = vpow.pop %v7403
      %v7405 = vmul.f32 %v7366, 1.442695
      %v7406 = vpow.pop %v7405
      %v7407 = vmul.f32 %v7367, 1.442695
      %v7408 = vpow.pop %v7407
      %v7409 = vmul.f32 %v7368, 1.442695
      %v7410 = vpow.pop %v7409
      %v7411 = vmul.f32 %v7369, 1.442695
      %v7412 = vpow.pop %v7411
      %v7413 = vmul.f32 %v7370, 1.442695
      %v7414 = vpow.pop %v7413
      %v7415 = vmul.f32 %v7371, 1.442695
      %v7416 = vpow.pop %v7415
      %v7417 = vmul.f32 %v7372, 1.442695
      %v7418 = vpow.pop %v7417
      %v7419 = vmul.f32 %v7373, 1.442695
      %v7420 = vpow.pop %v7419
      %v7421 = vmul.f32 %v7374, 1.442695
      %v7422 = vpow.pop %v7421
      %v7423 = vmul.f32 %v7375, 1.442695
      %v7424 = vpow.pop %v7423
      %v7425 = vmul.f32 %v7376, 1.442695
      %v7426 = vpow.pop %v7425
      %v7427 = vmul.f32 %v7377, 1.442695
      %v7428 = vpow.pop %v7427
      %v7429 = vmul.f32 %v7378, 1.442695
      %v7430 = vpow.pop %v7429
      %v7431 = vmul.f32 %v7379, 1.442695
      %v7432 = vpow.pop %v7431
      %v7433 = vmul.f32 %v7380, 1.442695
      %v7434 = vpow.pop %v7433
      %v7435 = vmul.f32 %v7381, 1.442695
      %v7436 = vpow.pop %v7435
      %v7437 = vmul.f32 %v7382, 1.442695
      %v7438 = vpow.pop %v7437
      %v7439 = vmul.f32 %v7383, 1.442695
      %v7440 = vpow.pop %v7439
      %v7441 = vmul.f32 %v7384, 1.442695
      %v7442 = vpow.pop %v7441
      %v7443 = vmul.f32 %v7385, 1.442695
      %v7444 = vpow.pop %v7443
      %v7445 = vmul.f32 %v7386, 1.442695
      %v7446 = vpow.pop %v7445
      %v7447 = vmul.f32 %v7387, 1.442695
      %v7448 = vpow.pop %v7447
      %v7449 = vmul.f32 %v7388, 1.442695
      %v7450 = vpow.pop %v7449
      %v7451 = vmul.f32 %v7389, 1.442695
      %v7452 = vpow.pop %v7451
      %v7453 = vmul.f32 %v7390, 1.442695
      %v7454 = vpow.pop %v7453
      %vm7459 = vcmask 1041408
      %v7460 = vrot.slane %v6930, 6
      %v7461 = vrot.slane %v6932, 6
      %v7462 = vsel %vm7459, %v7460, %v7461
      %v7463 = vrot.slane %v6931, 6
      %v7464 = vrot.slane %v6933, 6
      %v7465 = vsel %vm7459, %v7463, %v7464
      %7468 = vmatprep.subr.mxu0 0.0
      %7469 = vmatpush1.msra.mxu0 %v7392
      %7470 = vmatprep.subr.mxu0 0.0
      %7471 = vmatpush1.msra.mxu0 %v7394
      %7472 = vmatprep.subr.mxu0 0.0
      %7473 = vmatpush1.msra.mxu0 %v7396
      %7474 = vmatprep.subr.mxu0 0.0
      %7475 = vmatpush1.msra.mxu0 %v7398
      %7476 = vmatprep.subr.mxu0 0.0
      %7477 = vmatpush1.msra.mxu0 %v7400
      %7478 = vmatprep.subr.mxu0 0.0
      %7479 = vmatpush1.msra.mxu0 %v7402
      %7480 = vmatprep.subr.mxu0 0.0
      %7481 = vmatpush1.msra.mxu0 %v7404
      %7482 = vmatprep.subr.mxu0 0.0
      %7483 = vmatpush1.msra.mxu0 %v7406
      %7484 = vmatprep.subr.mxu0 0.0
      %7485 = vmatpush1.msra.mxu0 %v7408
      %7486 = vmatprep.subr.mxu0 0.0
      %7487 = vmatpush1.msra.mxu0 %v7410
      %7488 = vmatprep.subr.mxu0 0.0
      %7489 = vmatpush1.msra.mxu0 %v7412
      %7490 = vmatprep.subr.mxu0 0.0
      %7491 = vmatpush1.msra.mxu0 %v7414
      %7492 = vmatprep.subr.mxu0 0.0
      %7493 = vmatpush1.msra.mxu0 %v7416
      %7494 = vmatprep.subr.mxu0 0.0
      %7495 = vmatpush1.msra.mxu0 %v7418
      %7496 = vmatprep.subr.mxu0 0.0
      %7497 = vmatpush1.msra.mxu0 %v7420
      %7498 = vmatprep.subr.mxu0 0.0
      %7499 = vmatpush1.msra.mxu0 %v7422
      %7500 = vmatprep.subr.mxu0 0.0
      %7501 = vmatpush1.msra.mxu0 %v7424
      %7502 = vmatprep.subr.mxu0 0.0
      %7503 = vmatpush1.msra.mxu0 %v7426
      %7504 = vmatprep.subr.mxu0 0.0
      %7505 = vmatpush1.msra.mxu0 %v7428
      %7506 = vmatprep.subr.mxu0 0.0
      %7507 = vmatpush1.msra.mxu0 %v7430
      %7508 = vmatprep.subr.mxu0 0.0
      %7509 = vmatpush1.msra.mxu0 %v7432
      %7510 = vmatprep.subr.mxu0 0.0
      %7511 = vmatpush1.msra.mxu0 %v7434
      %7512 = vmatprep.subr.mxu0 0.0
      %7513 = vmatpush1.msra.mxu0 %v7436
      %7514 = vmatprep.subr.mxu0 0.0
      %7515 = vmatpush1.msra.mxu0 %v7438
      %7516 = vmatprep.subr.mxu0 0.0
      %7517 = vmatpush1.msra.mxu0 %v7440
      %7518 = vmatprep.subr.mxu0 0.0
      %7519 = vmatpush1.msra.mxu0 %v7442
      %7520 = vmatprep.subr.mxu0 0.0
      %7521 = vmatpush1.msra.mxu0 %v7444
      %7522 = vmatprep.subr.mxu0 0.0
      %7523 = vmatpush1.msra.mxu0 %v7446
      %7524 = vmatprep.subr.mxu0 0.0
      %7525 = vmatpush1.msra.mxu0 %v7448
      %7526 = vmatprep.subr.mxu0 0.0
      %7527 = vmatpush1.msra.mxu0 %v7450
      %7528 = vmatprep.subr.mxu0 0.0
      %7529 = vmatpush1.msra.mxu0 %v7452
      %7530 = vmatprep.subr.mxu0 0.0
      %7531 = vmatpush1.msra.mxu0 %v7454
      %7532 = vmatprep.mubr.f32.mxu0 %v7465
      %7533 = vmatmul.mubr.f32.gmra.mrb[0].mxu0 %v7462
      %v7534 = vpop.f32.mrb[0].mxu0
      %v7535 = vadd.f32 0.0, %v7534
      %v7536 = vpop.f32.mrb[0].mxu0
      %7537 = vdwg.mxu0
      %v7538 = vrcp.pop %v7535
      %v7539 = vmul.f32 1.0, %v7538
      %v7540 = vlaneseq
      %v7541 = vshrl.u32 %v7540, 7
      %v7542 = vsub.s32 4, %v7541
      %v7543 = vrot.slane %v7539, %v7542
      %v7544 = vmul.f32 %v7535, %v7543
      %7545 = vst [vmem:[#allocation3 + $0x30] sm:$0xf] %v7544
      %v7547 = vsel %vm729, %v6929, 0
      %7549 = vmatprep.subr.mxu0 0.0
      %7550 = vmatpush1.msra.mxu0 %v7547
      %7551 = vmatprep.subr.mxu0 0.0
      %7552 = vmatpush1.msra.mxu0 0.0
      %7553 = vmatprep.subr.mxu0 0.0
      %7554 = vmatpush1.msra.mxu0 0.0
      %7555 = vmatprep.subr.mxu0 0.0
      %7556 = vmatpush1.msra.mxu0 0.0
      %7557 = vmatprep.subr.mxu0 0.0
      %7558 = vmatpush1.msra.mxu0 0.0
      %7559 = vmatprep.subr.mxu0 0.0
      %7560 = vmatpush1.msra.mxu0 0.0
      %7561 = vmatprep.subr.mxu0 0.0
      %7562 = vmatpush1.msra.mxu0 0.0
      %7563 = vmatprep.subr.mxu0 0.0
      %7564 = vmatpush1.msra.mxu0 0.0
      %7565 = vmatprep.subr.mxu0 0.0
      %7566 = vmatpush1.msra.mxu0 0.0
      %7567 = vmatprep.subr.mxu0 0.0
      %7568 = vmatpush1.msra.mxu0 0.0
      %7569 = vmatprep.subr.mxu0 0.0
      %7570 = vmatpush1.msra.mxu0 0.0
      %7571 = vmatprep.subr.mxu0 0.0
      %7572 = vmatpush1.msra.mxu0 0.0
      %7573 = vmatprep.subr.mxu0 0.0
      %7574 = vmatpush1.msra.mxu0 0.0
      %7575 = vmatprep.subr.mxu0 0.0
      %7576 = vmatpush1.msra.mxu0 0.0
      %7577 = vmatprep.subr.mxu0 0.0
      %7578 = vmatpush1.msra.mxu0 0.0
      %7579 = vmatprep.subr.mxu0 0.0
      %7580 = vmatpush1.msra.mxu0 0.0
      %7581 = vmatprep.subr.mxu0 0.0
      %7582 = vmatpush1.msra.mxu0 0.0
      %7583 = vmatprep.subr.mxu0 0.0
      %7584 = vmatpush1.msra.mxu0 0.0
      %7585 = vmatprep.subr.mxu0 0.0
      %7586 = vmatpush1.msra.mxu0 0.0
      %7587 = vmatprep.subr.mxu0 0.0
      %7588 = vmatpush1.msra.mxu0 0.0
      %7589 = vmatprep.subr.mxu0 0.0
      %7590 = vmatpush1.msra.mxu0 0.0
      %7591 = vmatprep.subr.mxu0 0.0
      %7592 = vmatpush1.msra.mxu0 0.0
      %7593 = vmatprep.subr.mxu0 0.0
      %7594 = vmatpush1.msra.mxu0 0.0
      %7595 = vmatprep.subr.mxu0 0.0
      %7596 = vmatpush1.msra.mxu0 0.0
      %7597 = vmatprep.subr.mxu0 0.0
      %7598 = vmatpush1.msra.mxu0 0.0
      %7599 = vmatprep.subr.mxu0 0.0
      %7600 = vmatpush1.msra.mxu0 0.0
      %7601 = vmatprep.subr.mxu0 0.0
      %7602 = vmatpush1.msra.mxu0 0.0
      %7603 = vmatprep.subr.mxu0 0.0
      %7604 = vmatpush1.msra.mxu0 0.0
      %7605 = vmatprep.subr.mxu0 0.0
      %7606 = vmatpush1.msra.mxu0 0.0
      %7607 = vmatprep.subr.mxu0 0.0
      %7608 = vmatpush1.msra.mxu0 0.0
      %7609 = vmatprep.subr.mxu0 0.0
      %7610 = vmatpush1.msra.mxu0 0.0
      %7611 = vmatprep.subr.mxu0 0.0
      %7612 = vmatpush1.msra.mxu0 0.0
      %7613 = vmatprep.mubr.f32.mxu0 0.0
      %7614 = vmatmul.mubr.f32.gmra.mrb[0].mxu0 %v6999
      %v7615 = vpop.f32.mrb[0].mxu0
      %v7616 = vadd.f32 0.0, %v7615
      %v7617 = vpop.f32.mrb[0].mxu0
      %7618 = vmatprep.mubr.f32.mxu0 0.0
      %7619 = vmatmul.mubr.f32.gmra.mrb[0].mxu0 %v7002
      %v7620 = vpop.f32.mrb[0].mxu0
      %v7621 = vadd.f32 0.0, %v7620
      %v7622 = vpop.f32.mrb[0].mxu0
      %7623 = vmatprep.mubr.f32.mxu0 0.0
      %7624 = vmatmul.mubr.f32.gmra.mrb[0].mxu0 %v7005
      %v7625 = vpop.f32.mrb[0].mxu0
      %v7626 = vadd.f32 0.0, %v7625
      %v7627 = vpop.f32.mrb[0].mxu0
      %7628 = vmatprep.mubr.f32.mxu0 0.0
      %7629 = vmatmul.mubr.f32.gmra.mrb[0].mxu0 %v7008
      %v7630 = vpop.f32.mrb[0].mxu0
      %v7631 = vadd.f32 0.0, %v7630
      %v7632 = vpop.f32.mrb[0].mxu0
      %7633 = vmatprep.mubr.f32.mxu0 0.0
      %7634 = vmatmul.mubr.f32.gmra.mrb[0].mxu0 %v7011
      %v7635 = vpop.f32.mrb[0].mxu0
      %v7636 = vadd.f32 0.0, %v7635
      %v7637 = vpop.f32.mrb[0].mxu0
      %7638 = vmatprep.mubr.f32.mxu0 0.0
      %7639 = vmatmul.mubr.f32.gmra.mrb[0].mxu0 %v7014
      %v7640 = vpop.f32.mrb[0].mxu0
      %v7641 = vadd.f32 0.0, %v7640
      %v7642 = vpop.f32.mrb[0].mxu0
      %7643 = vmatprep.mubr.f32.mxu0 0.0
      %7644 = vmatmul.mubr.f32.gmra.mrb[0].mxu0 %v7017
      %v7645 = vpop.f32.mrb[0].mxu0
      %v7646 = vadd.f32 0.0, %v7645
      %v7647 = vpop.f32.mrb[0].mxu0
      %7648 = vmatprep.mubr.f32.mxu0 0.0
      %7649 = vmatmul.mubr.f32.gmra.mrb[0].mxu0 %v7020
      %v7650 = vpop.f32.mrb[0].mxu0
      %v7651 = vadd.f32 0.0, %v7650
      %v7652 = vpop.f32.mrb[0].mxu0
      %7653 = vmatprep.mubr.f32.mxu0 0.0
      %7654 = vmatmul.mubr.f32.gmra.mrb[0].mxu0 %v7023
      %v7655 = vpop.f32.mrb[0].mxu0
      %v7656 = vadd.f32 0.0, %v7655
      %v7657 = vpop.f32.mrb[0].mxu0
      %7658 = vmatprep.mubr.f32.mxu0 0.0
      %7659 = vmatmul.mubr.f32.gmra.mrb[0].mxu0 %v7026
      %v7660 = vpop.f32.mrb[0].mxu0
      %v7661 = vadd.f32 0.0, %v7660
      %v7662 = vpop.f32.mrb[0].mxu0
      %7663 = vmatprep.mubr.f32.mxu0 0.0
      %7664 = vmatmul.mubr.f32.gmra.mrb[0].mxu0 %v7029
      %v7665 = vpop.f32.mrb[0].mxu0
      %v7666 = vadd.f32 0.0, %v7665
      %v7667 = vpop.f32.mrb[0].mxu0
      %7668 = vmatprep.mubr.f32.mxu0 0.0
      %7669 = vmatmul.mubr.f32.gmra.mrb[0].mxu0 %v7032
      %v7670 = vpop.f32.mrb[0].mxu0
      %v7671 = vadd.f32 0.0, %v7670
      %v7672 = vpop.f32.mrb[0].mxu0
      %7673 = vmatprep.mubr.f32.mxu0 0.0
      %7674 = vmatmul.mubr.f32.gmra.mrb[0].mxu0 %v7035
      %v7675 = vpop.f32.mrb[0].mxu0
      %v7676 = vadd.f32 0.0, %v7675
      %v7677 = vpop.f32.mrb[0].mxu0
      %7678 = vmatprep.mubr.f32.mxu0 0.0
      %7679 = vmatmul.mubr.f32.gmra.mrb[0].mxu0 %v7038
      %v7680 = vpop.f32.mrb[0].mxu0
      %v7681 = vadd.f32 0.0, %v7680
      %v7682 = vpop.f32.mrb[0].mxu0
      %7683 = vmatprep.mubr.f32.mxu0 0.0
      %7684 = vmatmul.mubr.f32.gmra.mrb[0].mxu0 %v7041
      %v7685 = vpop.f32.mrb[0].mxu0
      %v7686 = vadd.f32 0.0, %v7685
      %v7687 = vpop.f32.mrb[0].mxu0
      %7688 = vmatprep.mubr.f32.mxu0 0.0
      %7689 = vmatmul.mubr.f32.gmra.mrb[0].mxu0 %v7044
      %v7690 = vpop.f32.mrb[0].mxu0
      %v7691 = vadd.f32 0.0, %v7690
      %v7692 = vpop.f32.mrb[0].mxu0
      %7693 = vmatprep.mubr.f32.mxu0 0.0
      %7694 = vmatmul.mubr.f32.gmra.mrb[0].mxu0 %v7047
      %v7695 = vpop.f32.mrb[0].mxu0
      %v7696 = vadd.f32 0.0, %v7695
      %v7697 = vpop.f32.mrb[0].mxu0
      %7698 = vmatprep.mubr.f32.mxu0 0.0
      %7699 = vmatmul.mubr.f32.gmra.mrb[0].mxu0 %v7050
      %v7700 = vpop.f32.mrb[0].mxu0
      %v7701 = vadd.f32 0.0, %v7700
      %v7702 = vpop.f32.mrb[0].mxu0
      %7703 = vmatprep.mubr.f32.mxu0 0.0
      %7704 = vmatmul.mubr.f32.gmra.mrb[0].mxu0 %v7053
      %v7705 = vpop.f32.mrb[0].mxu0
      %v7706 = vadd.f32 0.0, %v7705
      %v7707 = vpop.f32.mrb[0].mxu0
      %7708 = vmatprep.mubr.f32.mxu0 0.0
      %7709 = vmatmul.mubr.f32.gmra.mrb[0].mxu0 %v7056
      %v7710 = vpop.f32.mrb[0].mxu0
      %v7711 = vadd.f32 0.0, %v7710
      %v7712 = vpop.f32.mrb[0].mxu0
      %7713 = vmatprep.mubr.f32.mxu0 0.0
      %7714 = vmatmul.mubr.f32.gmra.mrb[0].mxu0 %v7059
      %v7715 = vpop.f32.mrb[0].mxu0
      %v7716 = vadd.f32 0.0, %v7715
      %v7717 = vpop.f32.mrb[0].mxu0
      %7718 = vmatprep.mubr.f32.mxu0 0.0
      %7719 = vmatmul.mubr.f32.gmra.mrb[0].mxu0 %v7062
      %v7720 = vpop.f32.mrb[0].mxu0
      %v7721 = vadd.f32 0.0, %v7720
      %v7722 = vpop.f32.mrb[0].mxu0
      %7723 = vmatprep.mubr.f32.mxu0 0.0
      %7724 = vmatmul.mubr.f32.gmra.mrb[0].mxu0 %v7065
      %v7725 = vpop.f32.mrb[0].mxu0
      %v7726 = vadd.f32 0.0, %v7725
      %v7727 = vpop.f32.mrb[0].mxu0
      %7728 = vmatprep.mubr.f32.mxu0 0.0
      %7729 = vmatmul.mubr.f32.gmra.mrb[0].mxu0 %v7068
      %v7730 = vpop.f32.mrb[0].mxu0
      %v7731 = vadd.f32 0.0, %v7730
      %v7732 = vpop.f32.mrb[0].mxu0
      %7733 = vmatprep.mubr.f32.mxu0 0.0
      %7734 = vmatmul.mubr.f32.gmra.mrb[0].mxu0 %v7071
      %v7735 = vpop.f32.mrb[0].mxu0
      %v7736 = vadd.f32 0.0, %v7735
      %v7737 = vpop.f32.mrb[0].mxu0
      %7738 = vmatprep.mubr.f32.mxu0 0.0
      %7739 = vmatmul.mubr.f32.gmra.mrb[0].mxu0 %v7074
      %v7740 = vpop.f32.mrb[0].mxu0
      %v7741 = vadd.f32 0.0, %v7740
      %v7742 = vpop.f32.mrb[0].mxu0
      %7743 = vmatprep.mubr.f32.mxu0 0.0
      %7744 = vmatmul.mubr.f32.gmra.mrb[0].mxu0 %v7077
      %v7745 = vpop.f32.mrb[0].mxu0
      %v7746 = vadd.f32 0.0, %v7745
      %v7747 = vpop.f32.mrb[0].mxu0
      %7748 = vmatprep.mubr.f32.mxu0 0.0
      %7749 = vmatmul.mubr.f32.gmra.mrb[0].mxu0 %v7080
      %v7750 = vpop.f32.mrb[0].mxu0
      %v7751 = vadd.f32 0.0, %v7750
      %v7752 = vpop.f32.mrb[0].mxu0
      %7753 = vmatprep.mubr.f32.mxu0 0.0
      %7754 = vmatmul.mubr.f32.gmra.mrb[0].mxu0 %v7083
      %v7755 = vpop.f32.mrb[0].mxu0
      %v7756 = vadd.f32 0.0, %v7755
      %v7757 = vpop.f32.mrb[0].mxu0
      %7758 = vmatprep.mubr.f32.mxu0 0.0
      %7759 = vmatmul.mubr.f32.gmra.mrb[0].mxu0 %v7086
      %v7760 = vpop.f32.mrb[0].mxu0
      %v7761 = vadd.f32 0.0, %v7760
      %v7762 = vpop.f32.mrb[0].mxu0
      %7763 = vmatprep.mubr.f32.mxu0 0.0
      %7764 = vmatmul.mubr.f32.gmra.mrb[0].mxu0 %v7089
      %v7765 = vpop.f32.mrb[0].mxu0
      %v7766 = vadd.f32 0.0, %v7765
      %v7767 = vpop.f32.mrb[0].mxu0
      %7768 = vmatprep.mubr.f32.mxu0 0.0
      %7769 = vmatmul.mubr.f32.gmra.mrb[0].mxu0 %v7092
      %v7770 = vpop.f32.mrb[0].mxu0
      %v7771 = vadd.f32 0.0, %v7770
      %v7772 = vpop.f32.mrb[0].mxu0
      %7773 = vdwg.mxu0
      %v7774 = vmax.f32 %v7616, %v7636
      %v7775 = vmax.f32 %v7621, %v7641
      %v7776 = vmax.f32 %v7626, %v7646
      %v7777 = vmax.f32 %v7631, %v7651
      %v7778 = vmax.f32 %v7774, %v7656
      %v7779 = vmax.f32 %v7775, %v7661
      %v7780 = vmax.f32 %v7776, %v7666
      %v7781 = vmax.f32 %v7777, %v7671
      %v7782 = vmax.f32 %v7778, %v7676
      %v7783 = vmax.f32 %v7779, %v7681
      %v7784 = vmax.f32 %v7780, %v7686
      %v7785 = vmax.f32 %v7781, %v7691
      %v7786 = vmax.f32 %v7782, %v7696
      %v7787 = vmax.f32 %v7783, %v7701
      %v7788 = vmax.f32 %v7784, %v7706
      %v7789 = vmax.f32 %v7785, %v7711
      %v7790 = vmax.f32 %v7786, %v7716
      %v7791 = vmax.f32 %v7787, %v7721
      %v7792 = vmax.f32 %v7788, %v7726
      %v7793 = vmax.f32 %v7789, %v7731
      %v7794 = vmax.f32 %v7790, %v7736
      %v7795 = vmax.f32 %v7791, %v7741
      %v7796 = vmax.f32 %v7792, %v7746
      %v7797 = vmax.f32 %v7793, %v7751
      %v7798 = vmax.f32 %v7794, %v7756
      %v7799 = vmax.f32 %v7795, %v7761
      %v7800 = vmax.f32 %v7796, %v7766
      %v7801 = vmax.f32 %v7797, %v7771
      %v7802 = vmax.f32 %v7798, %v7799
      %v7803 = vmax.f32 %v7800, %v7801
      %v7804 = vmax.f32 %v7802, %v7803
      %v7805 = vrot.slane %v7804, 4
      %v7806 = vmax.f32 %v7804, %v7805
      %v7807 = vrot.slane %v7806, 2
      %v7808 = vmax.f32 %v7806, %v7807
      %v7809 = vrot.slane %v7808, 1
      %v7810 = vmax.f32 %v7808, %v7809
      %v7811 = vsub.f32 %v7616, %v7810
      %v7812 = vsub.f32 %v7621, %v7810
      %v7813 = vsub.f32 %v7626, %v7810
      %v7814 = vsub.f32 %v7631, %v7810
      %v7815 = vsub.f32 %v7636, %v7810
      %v7816 = vsub.f32 %v7641, %v7810
      %v7817 = vsub.f32 %v7646, %v7810
      %v7818 = vsub.f32 %v7651, %v7810
      %v7819 = vsub.f32 %v7656, %v7810
      %v7820 = vsub.f32 %v7661, %v7810
      %v7821 = vsub.f32 %v7666, %v7810
      %v7822 = vsub.f32 %v7671, %v7810
      %v7823 = vsub.f32 %v7676, %v7810
      %v7824 = vsub.f32 %v7681, %v7810
      %v7825 = vsub.f32 %v7686, %v7810
      %v7826 = vsub.f32 %v7691, %v7810
      %v7827 = vsub.f32 %v7696, %v7810
      %v7828 = vsub.f32 %v7701, %v7810
      %v7829 = vsub.f32 %v7706, %v7810
      %v7830 = vsub.f32 %v7711, %v7810
      %v7831 = vsub.f32 %v7716, %v7810
      %v7832 = vsub.f32 %v7721, %v7810
      %v7833 = vsub.f32 %v7726, %v7810
      %v7834 = vsub.f32 %v7731, %v7810
      %v7835 = vsub.f32 %v7736, %v7810
      %v7836 = vsub.f32 %v7741, %v7810
      %v7837 = vsub.f32 %v7746, %v7810
      %v7838 = vsub.f32 %v7751, %v7810
      %v7839 = vsub.f32 %v7756, %v7810
      %v7840 = vsub.f32 %v7761, %v7810
      %v7841 = vsub.f32 %v7766, %v7810
      %v7842 = vsub.f32 %v7771, %v7810
      %v7843 = vmul.f32 %v7811, 1.442695
      %v7844 = vpow.pop %v7843
      %v7845 = vmul.f32 %v7812, 1.442695
      %v7846 = vpow.pop %v7845
      %v7847 = vmul.f32 %v7813, 1.442695
      %v7848 = vpow.pop %v7847
      %v7849 = vmul.f32 %v7814, 1.442695
      %v7850 = vpow.pop %v7849
      %v7851 = vmul.f32 %v7815, 1.442695
      %v7852 = vpow.pop %v7851
      %v7853 = vmul.f32 %v7816, 1.442695
      %v7854 = vpow.pop %v7853
      %v7855 = vmul.f32 %v7817, 1.442695
      %v7856 = vpow.pop %v7855
      %v7857 = vmul.f32 %v7818, 1.442695
      %v7858 = vpow.pop %v7857
      %v7859 = vmul.f32 %v7819, 1.442695
      %v7860 = vpow.pop %v7859
      %v7861 = vmul.f32 %v7820, 1.442695
      %v7862 = vpow.pop %v7861
      %v7863 = vmul.f32 %v7821, 1.442695
      %v7864 = vpow.pop %v7863
      %v7865 = vmul.f32 %v7822, 1.442695
      %v7866 = vpow.pop %v7865
      %v7867 = vmul.f32 %v7823, 1.442695
      %v7868 = vpow.pop %v7867
      %v7869 = vmul.f32 %v7824, 1.442695
      %v7870 = vpow.pop %v7869
      %v7871 = vmul.f32 %v7825, 1.442695
      %v7872 = vpow.pop %v7871
      %v7873 = vmul.f32 %v7826, 1.442695
      %v7874 = vpow.pop %v7873
      %v7875 = vmul.f32 %v7827, 1.442695
      %v7876 = vpow.pop %v7875
      %v7877 = vmul.f32 %v7828, 1.442695
      %v7878 = vpow.pop %v7877
      %v7879 = vmul.f32 %v7829, 1.442695
      %v7880 = vpow.pop %v7879
      %v7881 = vmul.f32 %v7830, 1.442695
      %v7882 = vpow.pop %v7881
      %v7883 = vmul.f32 %v7831, 1.442695
      %v7884 = vpow.pop %v7883
      %v7885 = vmul.f32 %v7832, 1.442695
      %v7886 = vpow.pop %v7885
      %v7887 = vmul.f32 %v7833, 1.442695
      %v7888 = vpow.pop %v7887
      %v7889 = vmul.f32 %v7834, 1.442695
      %v7890 = vpow.pop %v7889
      %v7891 = vmul.f32 %v7835, 1.442695
      %v7892 = vpow.pop %v7891
      %v7893 = vmul.f32 %v7836, 1.442695
      %v7894 = vpow.pop %v7893
      %v7895 = vmul.f32 %v7837, 1.442695
      %v7896 = vpow.pop %v7895
      %v7897 = vmul.f32 %v7838, 1.442695
      %v7898 = vpow.pop %v7897
      %v7899 = vmul.f32 %v7839, 1.442695
      %v7900 = vpow.pop %v7899
      %v7901 = vmul.f32 %v7840, 1.442695
      %v7902 = vpow.pop %v7901
      %v7903 = vmul.f32 %v7841, 1.442695
      %v7904 = vpow.pop %v7903
      %v7905 = vmul.f32 %v7842, 1.442695
      %v7906 = vpow.pop %v7905
      %7907 = vmatprep.subr.mxu0 0.0
      %7908 = vmatpush1.msra.mxu0 %v7844
      %7909 = vmatprep.subr.mxu0 0.0
      %7910 = vmatpush1.msra.mxu0 %v7846
      %7911 = vmatprep.subr.mxu0 0.0
      %7912 = vmatpush1.msra.mxu0 %v7848
      %7913 = vmatprep.subr.mxu0 0.0
      %7914 = vmatpush1.msra.mxu0 %v7850
      %7915 = vmatprep.subr.mxu0 0.0
      %7916 = vmatpush1.msra.mxu0 %v7852
      %7917 = vmatprep.subr.mxu0 0.0
      %7918 = vmatpush1.msra.mxu0 %v7854
      %7919 = vmatprep.subr.mxu0 0.0
      %7920 = vmatpush1.msra.mxu0 %v7856
      %7921 = vmatprep.subr.mxu0 0.0
      %7922 = vmatpush1.msra.mxu0 %v7858
      %7923 = vmatprep.subr.mxu0 0.0
      %7924 = vmatpush1.msra.mxu0 %v7860
      %7925 = vmatprep.subr.mxu0 0.0
      %7926 = vmatpush1.msra.mxu0 %v7862
      %7927 = vmatprep.subr.mxu0 0.0
      %7928 = vmatpush1.msra.mxu0 %v7864
      %7929 = vmatprep.subr.mxu0 0.0
      %7930 = vmatpush1.msra.mxu0 %v7866
      %7931 = vmatprep.subr.mxu0 0.0
      %7932 = vmatpush1.msra.mxu0 %v7868
      %7933 = vmatprep.subr.mxu0 0.0
      %7934 = vmatpush1.msra.mxu0 %v7870
      %7935 = vmatprep.subr.mxu0 0.0
      %7936 = vmatpush1.msra.mxu0 %v7872
      %7937 = vmatprep.subr.mxu0 0.0
      %7938 = vmatpush1.msra.mxu0 %v7874
      %7939 = vmatprep.subr.mxu0 0.0
      %7940 = vmatpush1.msra.mxu0 %v7876
      %7941 = vmatprep.subr.mxu0 0.0
      %7942 = vmatpush1.msra.mxu0 %v7878
      %7943 = vmatprep.subr.mxu0 0.0
      %7944 = vmatpush1.msra.mxu0 %v7880
      %7945 = vmatprep.subr.mxu0 0.0
      %7946 = vmatpush1.msra.mxu0 %v7882
      %7947 = vmatprep.subr.mxu0 0.0
      %7948 = vmatpush1.msra.mxu0 %v7884
      %7949 = vmatprep.subr.mxu0 0.0
      %7950 = vmatpush1.msra.mxu0 %v7886
      %7951 = vmatprep.subr.mxu0 0.0
      %7952 = vmatpush1.msra.mxu0 %v7888
      %7953 = vmatprep.subr.mxu0 0.0
      %7954 = vmatpush1.msra.mxu0 %v7890
      %7955 = vmatprep.subr.mxu0 0.0
      %7956 = vmatpush1.msra.mxu0 %v7892
      %7957 = vmatprep.subr.mxu0 0.0
      %7958 = vmatpush1.msra.mxu0 %v7894
      %7959 = vmatprep.subr.mxu0 0.0
      %7960 = vmatpush1.msra.mxu0 %v7896
      %7961 = vmatprep.subr.mxu0 0.0
      %7962 = vmatpush1.msra.mxu0 %v7898
      %7963 = vmatprep.subr.mxu0 0.0
      %7964 = vmatpush1.msra.mxu0 %v7900
      %7965 = vmatprep.subr.mxu0 0.0
      %7966 = vmatpush1.msra.mxu0 %v7902
      %7967 = vmatprep.subr.mxu0 0.0
      %7968 = vmatpush1.msra.mxu0 %v7904
      %7969 = vmatprep.subr.mxu0 0.0
      %7970 = vmatpush1.msra.mxu0 %v7906
      %7971 = vmatprep.mubr.f32.mxu0 %v7465
      %7972 = vmatmul.mubr.f32.gmra.mrb[0].mxu0 %v7462
      %v7973 = vpop.f32.mrb[0].mxu0
      %v7974 = vadd.f32 0.0, %v7973
      %v7975 = vpop.f32.mrb[0].mxu0
      %7976 = vdwg.mxu0
      %v7977 = vrcp.pop %v7974
      %v7978 = vmul.f32 1.0, %v7977
      %v7979 = vlaneseq
      %v7980 = vshrl.u32 %v7979, 7
      %v7981 = vsub.s32 4, %v7980
      %v7982 = vrot.slane %v7978, %v7981
      %v7983 = vmul.f32 %v7974, %v7982
      %7984 = vst [vmem:[#allocation3 + $0x38] sm:$0xf] %v7983
      %v7985 = vld [vmem:[#allocation2 + $0x30] sm:$0xf0]
      %v7986 = vld [vmem:[#allocation2 + $0x38] sm:$0xf0]
      %v7987 = vld [vmem:[#allocation2 + $0x70] sm:$0xf0]
      %v7988 = vld [vmem:[#allocation2 + $0x78] sm:$0xf0]
      %v7989 = vld [vmem:[#allocation2 + $0xc0] sm:$0xf8]
      %v7990 = vld [vmem:[#allocation2 + $0xc8] sm:$0xf8]
      %v7993 = vrot.slane %v7985, 4
      %v7994 = vrot.slane %v7986, 4
      %7997 = vxpose.xlu0.b32.start [1/16] %v7993, 128
      %7998 = vxpose.xlu0.b32.cont [2/16] 0.0, 128
      %7999 = vxpose.xlu0.b32.cont [3/16] 0.0, 128
      %8000 = vxpose.xlu0.b32.cont [4/16] 0.0, 128
      %8001 = vxpose.xlu0.b32.cont [5/16] 0.0, 128
      %8002 = vxpose.xlu0.b32.cont [6/16] 0.0, 128
      %8003 = vxpose.xlu0.b32.cont [7/16] 0.0, 128
      %8004 = vxpose.xlu0.b32.cont [8/16] 0.0, 128
      %8005 = vxpose.xlu0.b32.cont [9/16] 0.0, 128
      %8006 = vxpose.xlu0.b32.cont [10/16] 0.0, 128
      %8007 = vxpose.xlu0.b32.cont [11/16] 0.0, 128
      %8008 = vxpose.xlu0.b32.cont [12/16] 0.0, 128
      %8009 = vxpose.xlu0.b32.cont [13/16] 0.0, 128
      %8010 = vxpose.xlu0.b32.cont [14/16] 0.0, 128
      %8011 = vxpose.xlu0.b32.cont [15/16] 0.0, 128
      %8012 = vxpose.xlu0.b32.end [16/16] 0.0, 128
      %v8013 = vpop.trf.xlu0
      %v8014 = vpop.trf.xlu0
      %v8015 = vpop.trf.xlu0
      %v8016 = vpop.trf.xlu0
      %v8017 = vpop.trf.xlu0
      %v8018 = vpop.trf.xlu0
      %v8019 = vpop.trf.xlu0
      %v8020 = vpop.trf.xlu0
      %v8021 = vpop.trf.xlu0
      %v8022 = vpop.trf.xlu0
      %v8023 = vpop.trf.xlu0
      %v8024 = vpop.trf.xlu0
      %v8025 = vpop.trf.xlu0
      %v8026 = vpop.trf.xlu0
      %v8027 = vpop.trf.xlu0
      %v8028 = vpop.trf.xlu0
      %8029 = vxpose.xlu0.b32.start [1/16] %v7994, 128
      %8030 = vxpose.xlu0.b32.cont [2/16] 0.0, 128
      %8031 = vxpose.xlu0.b32.cont [3/16] 0.0, 128
      %8032 = vxpose.xlu0.b32.cont [4/16] 0.0, 128
      %8033 = vxpose.xlu0.b32.cont [5/16] 0.0, 128
      %8034 = vxpose.xlu0.b32.cont [6/16] 0.0, 128
      %8035 = vxpose.xlu0.b32.cont [7/16] 0.0, 128
      %8036 = vxpose.xlu0.b32.cont [8/16] 0.0, 128
      %8037 = vxpose.xlu0.b32.cont [9/16] 0.0, 128
      %8038 = vxpose.xlu0.b32.cont [10/16] 0.0, 128
      %8039 = vxpose.xlu0.b32.cont [11/16] 0.0, 128
      %8040 = vxpose.xlu0.b32.cont [12/16] 0.0, 128
      %8041 = vxpose.xlu0.b32.cont [13/16] 0.0, 128
      %8042 = vxpose.xlu0.b32.cont [14/16] 0.0, 128
      %8043 = vxpose.xlu0.b32.cont [15/16] 0.0, 128
      %8044 = vxpose.xlu0.b32.end [16/16] 0.0, 128
      %v8045 = vpop.trf.xlu0
      %v8046 = vpop.trf.xlu0
      %v8047 = vpop.trf.xlu0
      %v8048 = vpop.trf.xlu0
      %v8049 = vpop.trf.xlu0
      %v8050 = vpop.trf.xlu0
      %v8051 = vpop.trf.xlu0
      %v8052 = vpop.trf.xlu0
      %v8053 = vpop.trf.xlu0
      %v8054 = vpop.trf.xlu0
      %v8055 = vpop.trf.xlu0
      %v8056 = vpop.trf.xlu0
      %v8057 = vpop.trf.xlu0
      %v8058 = vpop.trf.xlu0
      %v8059 = vpop.trf.xlu0
      %v8060 = vpop.trf.xlu0
      %v8062 = vrot.slane %v7987, 4
      %v8064 = vsel %vm632, %v8013, 0
      %v8067 = vsel %vm632, %v8014, 0
      %v8070 = vsel %vm632, %v8015, 0
      %v8073 = vsel %vm632, %v8016, 0
      %v8076 = vsel %vm632, %v8017, 0
      %v8079 = vsel %vm632, %v8018, 0
      %v8082 = vsel %vm632, %v8019, 0
      %v8085 = vsel %vm632, %v8020, 0
      %v8088 = vsel %vm632, %v8021, 0
      %v8091 = vsel %vm632, %v8022, 0
      %v8094 = vsel %vm632, %v8023, 0
      %v8097 = vsel %vm632, %v8024, 0
      %v8100 = vsel %vm632, %v8025, 0
      %v8103 = vsel %vm632, %v8026, 0
      %v8106 = vsel %vm632, %v8027, 0
      %v8109 = vsel %vm632, %v8028, 0
      %v8112 = vsel %vm632, %v8045, 0
      %v8115 = vsel %vm632, %v8046, 0
      %v8118 = vsel %vm632, %v8047, 0
      %v8121 = vsel %vm632, %v8048, 0
      %v8124 = vsel %vm632, %v8049, 0
      %v8127 = vsel %vm632, %v8050, 0
      %v8130 = vsel %vm632, %v8051, 0
      %v8133 = vsel %vm632, %v8052, 0
      %v8136 = vsel %vm632, %v8053, 0
      %v8139 = vsel %vm632, %v8054, 0
      %v8142 = vsel %vm632, %v8055, 0
      %v8145 = vsel %vm632, %v8056, 0
      %v8148 = vsel %vm632, %v8057, 0
      %v8151 = vsel %vm632, %v8058, 0
      %v8154 = vsel %vm632, %v8059, 0
      %v8157 = vsel %vm632, %v8060, 0
      %v8159 = vsel %vm729, %v8062, 0
      %8161 = vmatprep.subr.mxu0 0.0
      %8162 = vmatpush1.msra.mxu0 %v8159
      %8163 = vmatprep.subr.mxu0 0.0
      %8164 = vmatpush1.msra.mxu0 0.0
      %8165 = vmatprep.subr.mxu0 0.0
      %8166 = vmatpush1.msra.mxu0 0.0
      %8167 = vmatprep.subr.mxu0 0.0
      %8168 = vmatpush1.msra.mxu0 0.0
      %8169 = vmatprep.subr.mxu0 0.0
      %8170 = vmatpush1.msra.mxu0 0.0
      %8171 = vmatprep.subr.mxu0 0.0
      %8172 = vmatpush1.msra.mxu0 0.0
      %8173 = vmatprep.subr.mxu0 0.0
      %8174 = vmatpush1.msra.mxu0 0.0
      %8175 = vmatprep.subr.mxu0 0.0
      %8176 = vmatpush1.msra.mxu0 0.0
      %8177 = vmatprep.subr.mxu0 0.0
      %8178 = vmatpush1.msra.mxu0 0.0
      %8179 = vmatprep.subr.mxu0 0.0
      %8180 = vmatpush1.msra.mxu0 0.0
      %8181 = vmatprep.subr.mxu0 0.0
      %8182 = vmatpush1.msra.mxu0 0.0
      %8183 = vmatprep.subr.mxu0 0.0
      %8184 = vmatpush1.msra.mxu0 0.0
      %8185 = vmatprep.subr.mxu0 0.0
      %8186 = vmatpush1.msra.mxu0 0.0
      %8187 = vmatprep.subr.mxu0 0.0
      %8188 = vmatpush1.msra.mxu0 0.0
      %8189 = vmatprep.subr.mxu0 0.0
      %8190 = vmatpush1.msra.mxu0 0.0
      %8191 = vmatprep.subr.mxu0 0.0
      %8192 = vmatpush1.msra.mxu0 0.0
      %8193 = vmatprep.subr.mxu0 0.0
      %8194 = vmatpush1.msra.mxu0 0.0
      %8195 = vmatprep.subr.mxu0 0.0
      %8196 = vmatpush1.msra.mxu0 0.0
      %8197 = vmatprep.subr.mxu0 0.0
      %8198 = vmatpush1.msra.mxu0 0.0
      %8199 = vmatprep.subr.mxu0 0.0
      %8200 = vmatpush1.msra.mxu0 0.0
      %8201 = vmatprep.subr.mxu0 0.0
      %8202 = vmatpush1.msra.mxu0 0.0
      %8203 = vmatprep.subr.mxu0 0.0
      %8204 = vmatpush1.msra.mxu0 0.0
      %8205 = vmatprep.subr.mxu0 0.0
      %8206 = vmatpush1.msra.mxu0 0.0
      %8207 = vmatprep.subr.mxu0 0.0
      %8208 = vmatpush1.msra.mxu0 0.0
      %8209 = vmatprep.subr.mxu0 0.0
      %8210 = vmatpush1.msra.mxu0 0.0
      %8211 = vmatprep.subr.mxu0 0.0
      %8212 = vmatpush1.msra.mxu0 0.0
      %8213 = vmatprep.subr.mxu0 0.0
      %8214 = vmatpush1.msra.mxu0 0.0
      %8215 = vmatprep.subr.mxu0 0.0
      %8216 = vmatpush1.msra.mxu0 0.0
      %8217 = vmatprep.subr.mxu0 0.0
      %8218 = vmatpush1.msra.mxu0 0.0
      %8219 = vmatprep.subr.mxu0 0.0
      %8220 = vmatpush1.msra.mxu0 0.0
      %8221 = vmatprep.subr.mxu0 0.0
      %8222 = vmatpush1.msra.mxu0 0.0
      %8223 = vmatprep.subr.mxu0 0.0
      %8224 = vmatpush1.msra.mxu0 0.0
      %8225 = vmatprep.mubr.f32.mxu0 0.0
      %8226 = vmatmul.mubr.f32.gmra.mrb[0].mxu0 %v8064
      %v8227 = vpop.f32.mrb[0].mxu0
      %v8228 = vadd.f32 0.0, %v8227
      %v8229 = vpop.f32.mrb[0].mxu0
      %8230 = vmatprep.mubr.f32.mxu0 0.0
      %8231 = vmatmul.mubr.f32.gmra.mrb[0].mxu0 %v8067
      %v8232 = vpop.f32.mrb[0].mxu0
      %v8233 = vadd.f32 0.0, %v8232
      %v8234 = vpop.f32.mrb[0].mxu0
      %8235 = vmatprep.mubr.f32.mxu0 0.0
      %8236 = vmatmul.mubr.f32.gmra.mrb[0].mxu0 %v8070
      %v8237 = vpop.f32.mrb[0].mxu0
      %v8238 = vadd.f32 0.0, %v8237
      %v8239 = vpop.f32.mrb[0].mxu0
      %8240 = vmatprep.mubr.f32.mxu0 0.0
      %8241 = vmatmul.mubr.f32.gmra.mrb[0].mxu0 %v8073
      %v8242 = vpop.f32.mrb[0].mxu0
      %v8243 = vadd.f32 0.0, %v8242
      %v8244 = vpop.f32.mrb[0].mxu0
      %8245 = vmatprep.mubr.f32.mxu0 0.0
      %8246 = vmatmul.mubr.f32.gmra.mrb[0].mxu0 %v8076
      %v8247 = vpop.f32.mrb[0].mxu0
      %v8248 = vadd.f32 0.0, %v8247
      %v8249 = vpop.f32.mrb[0].mxu0
      %8250 = vmatprep.mubr.f32.mxu0 0.0
      %8251 = vmatmul.mubr.f32.gmra.mrb[0].mxu0 %v8079
      %v8252 = vpop.f32.mrb[0].mxu0
      %v8253 = vadd.f32 0.0, %v8252
      %v8254 = vpop.f32.mrb[0].mxu0
      %8255 = vmatprep.mubr.f32.mxu0 0.0
      %8256 = vmatmul.mubr.f32.gmra.mrb[0].mxu0 %v8082
      %v8257 = vpop.f32.mrb[0].mxu0
      %v8258 = vadd.f32 0.0, %v8257
      %v8259 = vpop.f32.mrb[0].mxu0
      %8260 = vmatprep.mubr.f32.mxu0 0.0
      %8261 = vmatmul.mubr.f32.gmra.mrb[0].mxu0 %v8085
      %v8262 = vpop.f32.mrb[0].mxu0
      %v8263 = vadd.f32 0.0, %v8262
      %v8264 = vpop.f32.mrb[0].mxu0
      %8265 = vmatprep.mubr.f32.mxu0 0.0
      %8266 = vmatmul.mubr.f32.gmra.mrb[0].mxu0 %v8088
      %v8267 = vpop.f32.mrb[0].mxu0
      %v8268 = vadd.f32 0.0, %v8267
      %v8269 = vpop.f32.mrb[0].mxu0
      %8270 = vmatprep.mubr.f32.mxu0 0.0
      %8271 = vmatmul.mubr.f32.gmra.mrb[0].mxu0 %v8091
      %v8272 = vpop.f32.mrb[0].mxu0
      %v8273 = vadd.f32 0.0, %v8272
      %v8274 = vpop.f32.mrb[0].mxu0
      %8275 = vmatprep.mubr.f32.mxu0 0.0
      %8276 = vmatmul.mubr.f32.gmra.mrb[0].mxu0 %v8094
      %v8277 = vpop.f32.mrb[0].mxu0
      %v8278 = vadd.f32 0.0, %v8277
      %v8279 = vpop.f32.mrb[0].mxu0
      %8280 = vmatprep.mubr.f32.mxu0 0.0
      %8281 = vmatmul.mubr.f32.gmra.mrb[0].mxu0 %v8097
      %v8282 = vpop.f32.mrb[0].mxu0
      %v8283 = vadd.f32 0.0, %v8282
      %v8284 = vpop.f32.mrb[0].mxu0
      %8285 = vmatprep.mubr.f32.mxu0 0.0
      %8286 = vmatmul.mubr.f32.gmra.mrb[0].mxu0 %v8100
      %v8287 = vpop.f32.mrb[0].mxu0
      %v8288 = vadd.f32 0.0, %v8287
      %v8289 = vpop.f32.mrb[0].mxu0
      %8290 = vmatprep.mubr.f32.mxu0 0.0
      %8291 = vmatmul.mubr.f32.gmra.mrb[0].mxu0 %v8103
      %v8292 = vpop.f32.mrb[0].mxu0
      %v8293 = vadd.f32 0.0, %v8292
      %v8294 = vpop.f32.mrb[0].mxu0
      %8295 = vmatprep.mubr.f32.mxu0 0.0
      %8296 = vmatmul.mubr.f32.gmra.mrb[0].mxu0 %v8106
      %v8297 = vpop.f32.mrb[0].mxu0
      %v8298 = vadd.f32 0.0, %v8297
      %v8299 = vpop.f32.mrb[0].mxu0
      %8300 = vmatprep.mubr.f32.mxu0 0.0
      %8301 = vmatmul.mubr.f32.gmra.mrb[0].mxu0 %v8109
      %v8302 = vpop.f32.mrb[0].mxu0
      %v8303 = vadd.f32 0.0, %v8302
      %v8304 = vpop.f32.mrb[0].mxu0
      %8305 = vmatprep.mubr.f32.mxu0 0.0
      %8306 = vmatmul.mubr.f32.gmra.mrb[0].mxu0 %v8112
      %v8307 = vpop.f32.mrb[0].mxu0
      %v8308 = vadd.f32 0.0, %v8307
      %v8309 = vpop.f32.mrb[0].mxu0
      %8310 = vmatprep.mubr.f32.mxu0 0.0
      %8311 = vmatmul.mubr.f32.gmra.mrb[0].mxu0 %v8115
      %v8312 = vpop.f32.mrb[0].mxu0
      %v8313 = vadd.f32 0.0, %v8312
      %v8314 = vpop.f32.mrb[0].mxu0
      %8315 = vmatprep.mubr.f32.mxu0 0.0
      %8316 = vmatmul.mubr.f32.gmra.mrb[0].mxu0 %v8118
      %v8317 = vpop.f32.mrb[0].mxu0
      %v8318 = vadd.f32 0.0, %v8317
      %v8319 = vpop.f32.mrb[0].mxu0
      %8320 = vmatprep.mubr.f32.mxu0 0.0
      %8321 = vmatmul.mubr.f32.gmra.mrb[0].mxu0 %v8121
      %v8322 = vpop.f32.mrb[0].mxu0
      %v8323 = vadd.f32 0.0, %v8322
      %v8324 = vpop.f32.mrb[0].mxu0
      %8325 = vmatprep.mubr.f32.mxu0 0.0
      %8326 = vmatmul.mubr.f32.gmra.mrb[0].mxu0 %v8124
      %v8327 = vpop.f32.mrb[0].mxu0
      %v8328 = vadd.f32 0.0, %v8327
      %v8329 = vpop.f32.mrb[0].mxu0
      %8330 = vmatprep.mubr.f32.mxu0 0.0
      %8331 = vmatmul.mubr.f32.gmra.mrb[0].mxu0 %v8127
      %v8332 = vpop.f32.mrb[0].mxu0
      %v8333 = vadd.f32 0.0, %v8332
      %v8334 = vpop.f32.mrb[0].mxu0
      %8335 = vmatprep.mubr.f32.mxu0 0.0
      %8336 = vmatmul.mubr.f32.gmra.mrb[0].mxu0 %v8130
      %v8337 = vpop.f32.mrb[0].mxu0
      %v8338 = vadd.f32 0.0, %v8337
      %v8339 = vpop.f32.mrb[0].mxu0
      %8340 = vmatprep.mubr.f32.mxu0 0.0
      %8341 = vmatmul.mubr.f32.gmra.mrb[0].mxu0 %v8133
      %v8342 = vpop.f32.mrb[0].mxu0
      %v8343 = vadd.f32 0.0, %v8342
      %v8344 = vpop.f32.mrb[0].mxu0
      %8345 = vmatprep.mubr.f32.mxu0 0.0
      %8346 = vmatmul.mubr.f32.gmra.mrb[0].mxu0 %v8136
      %v8347 = vpop.f32.mrb[0].mxu0
      %v8348 = vadd.f32 0.0, %v8347
      %v8349 = vpop.f32.mrb[0].mxu0
      %8350 = vmatprep.mubr.f32.mxu0 0.0
      %8351 = vmatmul.mubr.f32.gmra.mrb[0].mxu0 %v8139
      %v8352 = vpop.f32.mrb[0].mxu0
      %v8353 = vadd.f32 0.0, %v8352
      %v8354 = vpop.f32.mrb[0].mxu0
      %8355 = vmatprep.mubr.f32.mxu0 0.0
      %8356 = vmatmul.mubr.f32.gmra.mrb[0].mxu0 %v8142
      %v8357 = vpop.f32.mrb[0].mxu0
      %v8358 = vadd.f32 0.0, %v8357
      %v8359 = vpop.f32.mrb[0].mxu0
      %8360 = vmatprep.mubr.f32.mxu0 0.0
      %8361 = vmatmul.mubr.f32.gmra.mrb[0].mxu0 %v8145
      %v8362 = vpop.f32.mrb[0].mxu0
      %v8363 = vadd.f32 0.0, %v8362
      %v8364 = vpop.f32.mrb[0].mxu0
      %8365 = vmatprep.mubr.f32.mxu0 0.0
      %8366 = vmatmul.mubr.f32.gmra.mrb[0].mxu0 %v8148
      %v8367 = vpop.f32.mrb[0].mxu0
      %v8368 = vadd.f32 0.0, %v8367
      %v8369 = vpop.f32.mrb[0].mxu0
      %8370 = vmatprep.mubr.f32.mxu0 0.0
      %8371 = vmatmul.mubr.f32.gmra.mrb[0].mxu0 %v8151
      %v8372 = vpop.f32.mrb[0].mxu0
      %v8373 = vadd.f32 0.0, %v8372
      %v8374 = vpop.f32.mrb[0].mxu0
      %8375 = vmatprep.mubr.f32.mxu0 0.0
      %8376 = vmatmul.mubr.f32.gmra.mrb[0].mxu0 %v8154
      %v8377 = vpop.f32.mrb[0].mxu0
      %v8378 = vadd.f32 0.0, %v8377
      %v8379 = vpop.f32.mrb[0].mxu0
      %8380 = vmatprep.mubr.f32.mxu0 0.0
      %8381 = vmatmul.mubr.f32.gmra.mrb[0].mxu0 %v8157
      %v8382 = vpop.f32.mrb[0].mxu0
      %v8383 = vadd.f32 0.0, %v8382
      %v8384 = vpop.f32.mrb[0].mxu0
      %8385 = vdwg.mxu0
      %v8386 = vmax.f32 %v8228, %v8248
      %v8387 = vmax.f32 %v8233, %v8253
      %v8388 = vmax.f32 %v8238, %v8258
      %v8389 = vmax.f32 %v8243, %v8263
      %v8390 = vmax.f32 %v8386, %v8268
      %v8391 = vmax.f32 %v8387, %v8273
      %v8392 = vmax.f32 %v8388, %v8278
      %v8393 = vmax.f32 %v8389, %v8283
      %v8394 = vmax.f32 %v8390, %v8288
      %v8395 = vmax.f32 %v8391, %v8293
      %v8396 = vmax.f32 %v8392, %v8298
      %v8397 = vmax.f32 %v8393, %v8303
      %v8398 = vmax.f32 %v8394, %v8308
      %v8399 = vmax.f32 %v8395, %v8313
      %v8400 = vmax.f32 %v8396, %v8318
      %v8401 = vmax.f32 %v8397, %v8323
      %v8402 = vmax.f32 %v8398, %v8328
      %v8403 = vmax.f32 %v8399, %v8333
      %v8404 = vmax.f32 %v8400, %v8338
      %v8405 = vmax.f32 %v8401, %v8343
      %v8406 = vmax.f32 %v8402, %v8348
      %v8407 = vmax.f32 %v8403, %v8353
      %v8408 = vmax.f32 %v8404, %v8358
      %v8409 = vmax.f32 %v8405, %v8363
      %v8410 = vmax.f32 %v8406, %v8368
      %v8411 = vmax.f32 %v8407, %v8373
      %v8412 = vmax.f32 %v8408, %v8378
      %v8413 = vmax.f32 %v8409, %v8383
      %v8414 = vmax.f32 %v8410, %v8411
      %v8415 = vmax.f32 %v8412, %v8413
      %v8416 = vmax.f32 %v8414, %v8415
      %v8417 = vrot.slane %v8416, 4
      %v8418 = vmax.f32 %v8416, %v8417
      %v8419 = vrot.slane %v8418, 2
      %v8420 = vmax.f32 %v8418, %v8419
      %v8421 = vrot.slane %v8420, 1
      %v8422 = vmax.f32 %v8420, %v8421
      %v8423 = vsub.f32 %v8228, %v8422
      %v8424 = vsub.f32 %v8233, %v8422
      %v8425 = vsub.f32 %v8238, %v8422
      %v8426 = vsub.f32 %v8243, %v8422
      %v8427 = vsub.f32 %v8248, %v8422
      %v8428 = vsub.f32 %v8253, %v8422
      %v8429 = vsub.f32 %v8258, %v8422
      %v8430 = vsub.f32 %v8263, %v8422
      %v8431 = vsub.f32 %v8268, %v8422
      %v8432 = vsub.f32 %v8273, %v8422
      %v8433 = vsub.f32 %v8278, %v8422
      %v8434 = vsub.f32 %v8283, %v8422
      %v8435 = vsub.f32 %v8288, %v8422
      %v8436 = vsub.f32 %v8293, %v8422
      %v8437 = vsub.f32 %v8298, %v8422
      %v8438 = vsub.f32 %v8303, %v8422
      %v8439 = vsub.f32 %v8308, %v8422
      %v8440 = vsub.f32 %v8313, %v8422
      %v8441 = vsub.f32 %v8318, %v8422
      %v8442 = vsub.f32 %v8323, %v8422
      %v8443 = vsub.f32 %v8328, %v8422
      %v8444 = vsub.f32 %v8333, %v8422
      %v8445 = vsub.f32 %v8338, %v8422
      %v8446 = vsub.f32 %v8343, %v8422
      %v8447 = vsub.f32 %v8348, %v8422
      %v8448 = vsub.f32 %v8353, %v8422
      %v8449 = vsub.f32 %v8358, %v8422
      %v8450 = vsub.f32 %v8363, %v8422
      %v8451 = vsub.f32 %v8368, %v8422
      %v8452 = vsub.f32 %v8373, %v8422
      %v8453 = vsub.f32 %v8378, %v8422
      %v8454 = vsub.f32 %v8383, %v8422
      %v8455 = vmul.f32 %v8423, 1.442695
      %v8456 = vpow.pop %v8455
      %v8457 = vmul.f32 %v8424, 1.442695
      %v8458 = vpow.pop %v8457
      %v8459 = vmul.f32 %v8425, 1.442695
      %v8460 = vpow.pop %v8459
      %v8461 = vmul.f32 %v8426, 1.442695
      %v8462 = vpow.pop %v8461
      %v8463 = vmul.f32 %v8427, 1.442695
      %v8464 = vpow.pop %v8463
      %v8465 = vmul.f32 %v8428, 1.442695
      %v8466 = vpow.pop %v8465
      %v8467 = vmul.f32 %v8429, 1.442695
      %v8468 = vpow.pop %v8467
      %v8469 = vmul.f32 %v8430, 1.442695
      %v8470 = vpow.pop %v8469
      %v8471 = vmul.f32 %v8431, 1.442695
      %v8472 = vpow.pop %v8471
      %v8473 = vmul.f32 %v8432, 1.442695
      %v8474 = vpow.pop %v8473
      %v8475 = vmul.f32 %v8433, 1.442695
      %v8476 = vpow.pop %v8475
      %v8477 = vmul.f32 %v8434, 1.442695
      %v8478 = vpow.pop %v8477
      %v8479 = vmul.f32 %v8435, 1.442695
      %v8480 = vpow.pop %v8479
      %v8481 = vmul.f32 %v8436, 1.442695
      %v8482 = vpow.pop %v8481
      %v8483 = vmul.f32 %v8437, 1.442695
      %v8484 = vpow.pop %v8483
      %v8485 = vmul.f32 %v8438, 1.442695
      %v8486 = vpow.pop %v8485
      %v8487 = vmul.f32 %v8439, 1.442695
      %v8488 = vpow.pop %v8487
      %v8489 = vmul.f32 %v8440, 1.442695
      %v8490 = vpow.pop %v8489
      %v8491 = vmul.f32 %v8441, 1.442695
      %v8492 = vpow.pop %v8491
      %v8493 = vmul.f32 %v8442, 1.442695
      %v8494 = vpow.pop %v8493
      %v8495 = vmul.f32 %v8443, 1.442695
      %v8496 = vpow.pop %v8495
      %v8497 = vmul.f32 %v8444, 1.442695
      %v8498 = vpow.pop %v8497
      %v8499 = vmul.f32 %v8445, 1.442695
      %v8500 = vpow.pop %v8499
      %v8501 = vmul.f32 %v8446, 1.442695
      %v8502 = vpow.pop %v8501
      %v8503 = vmul.f32 %v8447, 1.442695
      %v8504 = vpow.pop %v8503
      %v8505 = vmul.f32 %v8448, 1.442695
      %v8506 = vpow.pop %v8505
      %v8507 = vmul.f32 %v8449, 1.442695
      %v8508 = vpow.pop %v8507
      %v8509 = vmul.f32 %v8450, 1.442695
      %v8510 = vpow.pop %v8509
      %v8511 = vmul.f32 %v8451, 1.442695
      %v8512 = vpow.pop %v8511
      %v8513 = vmul.f32 %v8452, 1.442695
      %v8514 = vpow.pop %v8513
      %v8515 = vmul.f32 %v8453, 1.442695
      %v8516 = vpow.pop %v8515
      %v8517 = vmul.f32 %v8454, 1.442695
      %v8518 = vpow.pop %v8517
      %v8521 = vrot.slane %v7989, 3
      %v8522 = vrot.slane %v7990, 3
      %8525 = vmatprep.subr.mxu0 0.0
      %8526 = vmatpush1.msra.mxu0 %v8456
      %8527 = vmatprep.subr.mxu0 0.0
      %8528 = vmatpush1.msra.mxu0 %v8458
      %8529 = vmatprep.subr.mxu0 0.0
      %8530 = vmatpush1.msra.mxu0 %v8460
      %8531 = vmatprep.subr.mxu0 0.0
      %8532 = vmatpush1.msra.mxu0 %v8462
      %8533 = vmatprep.subr.mxu0 0.0
      %8534 = vmatpush1.msra.mxu0 %v8464
      %8535 = vmatprep.subr.mxu0 0.0
      %8536 = vmatpush1.msra.mxu0 %v8466
      %8537 = vmatprep.subr.mxu0 0.0
      %8538 = vmatpush1.msra.mxu0 %v8468
      %8539 = vmatprep.subr.mxu0 0.0
      %8540 = vmatpush1.msra.mxu0 %v8470
      %8541 = vmatprep.subr.mxu0 0.0
      %8542 = vmatpush1.msra.mxu0 %v8472
      %8543 = vmatprep.subr.mxu0 0.0
      %8544 = vmatpush1.msra.mxu0 %v8474
      %8545 = vmatprep.subr.mxu0 0.0
      %8546 = vmatpush1.msra.mxu0 %v8476
      %8547 = vmatprep.subr.mxu0 0.0
      %8548 = vmatpush1.msra.mxu0 %v8478
      %8549 = vmatprep.subr.mxu0 0.0
      %8550 = vmatpush1.msra.mxu0 %v8480
      %8551 = vmatprep.subr.mxu0 0.0
      %8552 = vmatpush1.msra.mxu0 %v8482
      %8553 = vmatprep.subr.mxu0 0.0
      %8554 = vmatpush1.msra.mxu0 %v8484
      %8555 = vmatprep.subr.mxu0 0.0
      %8556 = vmatpush1.msra.mxu0 %v8486
      %8557 = vmatprep.subr.mxu0 0.0
      %8558 = vmatpush1.msra.mxu0 %v8488
      %8559 = vmatprep.subr.mxu0 0.0
      %8560 = vmatpush1.msra.mxu0 %v8490
      %8561 = vmatprep.subr.mxu0 0.0
      %8562 = vmatpush1.msra.mxu0 %v8492
      %8563 = vmatprep.subr.mxu0 0.0
      %8564 = vmatpush1.msra.mxu0 %v8494
      %8565 = vmatprep.subr.mxu0 0.0
      %8566 = vmatpush1.msra.mxu0 %v8496
      %8567 = vmatprep.subr.mxu0 0.0
      %8568 = vmatpush1.msra.mxu0 %v8498
      %8569 = vmatprep.subr.mxu0 0.0
      %8570 = vmatpush1.msra.mxu0 %v8500
      %8571 = vmatprep.subr.mxu0 0.0
      %8572 = vmatpush1.msra.mxu0 %v8502
      %8573 = vmatprep.subr.mxu0 0.0
      %8574 = vmatpush1.msra.mxu0 %v8504
      %8575 = vmatprep.subr.mxu0 0.0
      %8576 = vmatpush1.msra.mxu0 %v8506
      %8577 = vmatprep.subr.mxu0 0.0
      %8578 = vmatpush1.msra.mxu0 %v8508
      %8579 = vmatprep.subr.mxu0 0.0
      %8580 = vmatpush1.msra.mxu0 %v8510
      %8581 = vmatprep.subr.mxu0 0.0
      %8582 = vmatpush1.msra.mxu0 %v8512
      %8583 = vmatprep.subr.mxu0 0.0
      %8584 = vmatpush1.msra.mxu0 %v8514
      %8585 = vmatprep.subr.mxu0 0.0
      %8586 = vmatpush1.msra.mxu0 %v8516
      %8587 = vmatprep.subr.mxu0 0.0
      %8588 = vmatpush1.msra.mxu0 %v8518
      %8589 = vmatprep.mubr.f32.mxu0 %v8522
      %8590 = vmatmul.mubr.f32.gmra.mrb[0].mxu0 %v8521
      %v8591 = vpop.f32.mrb[0].mxu0
      %v8592 = vadd.f32 0.0, %v8591
      %v8593 = vpop.f32.mrb[0].mxu0
      %8594 = vdwg.mxu0
      %v8595 = vrcp.pop %v8592
      %v8596 = vmul.f32 1.0, %v8595
      %v8597 = vlaneseq
      %v8598 = vshrl.u32 %v8597, 7
      %v8599 = vsub.s32 4, %v8598
      %v8600 = vrot.slane %v8596, %v8599
      %v8601 = vmul.f32 %v8592, %v8600
      %v8603 = vrot.slane %v8601, 4
      %8605 = vst [vmem:[#allocation3 + $0x30] sm:$0xf0] %v8603
      %v8607 = vrot.slane %v7988, 4
      %v8608 = vsel %vm729, %v8607, 0
      %8610 = vmatprep.subr.mxu0 0.0
      %8611 = vmatpush1.msra.mxu0 %v8608
      %8612 = vmatprep.subr.mxu0 0.0
      %8613 = vmatpush1.msra.mxu0 0.0
      %8614 = vmatprep.subr.mxu0 0.0
      %8615 = vmatpush1.msra.mxu0 0.0
      %8616 = vmatprep.subr.mxu0 0.0
      %8617 = vmatpush1.msra.mxu0 0.0
      %8618 = vmatprep.subr.mxu0 0.0
      %8619 = vmatpush1.msra.mxu0 0.0
      %8620 = vmatprep.subr.mxu0 0.0
      %8621 = vmatpush1.msra.mxu0 0.0
      %8622 = vmatprep.subr.mxu0 0.0
      %8623 = vmatpush1.msra.mxu0 0.0
      %8624 = vmatprep.subr.mxu0 0.0
      %8625 = vmatpush1.msra.mxu0 0.0
      %8626 = vmatprep.subr.mxu0 0.0
      %8627 = vmatpush1.msra.mxu0 0.0
      %8628 = vmatprep.subr.mxu0 0.0
      %8629 = vmatpush1.msra.mxu0 0.0
      %8630 = vmatprep.subr.mxu0 0.0
      %8631 = vmatpush1.msra.mxu0 0.0
      %8632 = vmatprep.subr.mxu0 0.0
      %8633 = vmatpush1.msra.mxu0 0.0
      %8634 = vmatprep.subr.mxu0 0.0
      %8635 = vmatpush1.msra.mxu0 0.0
      %8636 = vmatprep.subr.mxu0 0.0
      %8637 = vmatpush1.msra.mxu0 0.0
      %8638 = vmatprep.subr.mxu0 0.0
      %8639 = vmatpush1.msra.mxu0 0.0
      %8640 = vmatprep.subr.mxu0 0.0
      %8641 = vmatpush1.msra.mxu0 0.0
      %8642 = vmatprep.subr.mxu0 0.0
      %8643 = vmatpush1.msra.mxu0 0.0
      %8644 = vmatprep.subr.mxu0 0.0
      %8645 = vmatpush1.msra.mxu0 0.0
      %8646 = vmatprep.subr.mxu0 0.0
      %8647 = vmatpush1.msra.mxu0 0.0
      %8648 = vmatprep.subr.mxu0 0.0
      %8649 = vmatpush1.msra.mxu0 0.0
      %8650 = vmatprep.subr.mxu0 0.0
      %8651 = vmatpush1.msra.mxu0 0.0
      %8652 = vmatprep.subr.mxu0 0.0
      %8653 = vmatpush1.msra.mxu0 0.0
      %8654 = vmatprep.subr.mxu0 0.0
      %8655 = vmatpush1.msra.mxu0 0.0
      %8656 = vmatprep.subr.mxu0 0.0
      %8657 = vmatpush1.msra.mxu0 0.0
      %8658 = vmatprep.subr.mxu0 0.0
      %8659 = vmatpush1.msra.mxu0 0.0
      %8660 = vmatprep.subr.mxu0 0.0
      %8661 = vmatpush1.msra.mxu0 0.0
      %8662 = vmatprep.subr.mxu0 0.0
      %8663 = vmatpush1.msra.mxu0 0.0
      %8664 = vmatprep.subr.mxu0 0.0
      %8665 = vmatpush1.msra.mxu0 0.0
      %8666 = vmatprep.subr.mxu0 0.0
      %8667 = vmatpush1.msra.mxu0 0.0
      %8668 = vmatprep.subr.mxu0 0.0
      %8669 = vmatpush1.msra.mxu0 0.0
      %8670 = vmatprep.subr.mxu0 0.0
      %8671 = vmatpush1.msra.mxu0 0.0
      %8672 = vmatprep.subr.mxu0 0.0
      %8673 = vmatpush1.msra.mxu0 0.0
      %8674 = vmatprep.mubr.f32.mxu0 0.0
      %8675 = vmatmul.mubr.f32.gmra.mrb[0].mxu0 %v8064
      %v8676 = vpop.f32.mrb[0].mxu0
      %v8677 = vadd.f32 0.0, %v8676
      %v8678 = vpop.f32.mrb[0].mxu0
      %8679 = vmatprep.mubr.f32.mxu0 0.0
      %8680 = vmatmul.mubr.f32.gmra.mrb[0].mxu0 %v8067
      %v8681 = vpop.f32.mrb[0].mxu0
      %v8682 = vadd.f32 0.0, %v8681
      %v8683 = vpop.f32.mrb[0].mxu0
      %8684 = vmatprep.mubr.f32.mxu0 0.0
      %8685 = vmatmul.mubr.f32.gmra.mrb[0].mxu0 %v8070
      %v8686 = vpop.f32.mrb[0].mxu0
      %v8687 = vadd.f32 0.0, %v8686
      %v8688 = vpop.f32.mrb[0].mxu0
      %8689 = vmatprep.mubr.f32.mxu0 0.0
      %8690 = vmatmul.mubr.f32.gmra.mrb[0].mxu0 %v8073
      %v8691 = vpop.f32.mrb[0].mxu0
      %v8692 = vadd.f32 0.0, %v8691
      %v8693 = vpop.f32.mrb[0].mxu0
      %8694 = vmatprep.mubr.f32.mxu0 0.0
      %8695 = vmatmul.mubr.f32.gmra.mrb[0].mxu0 %v8076
      %v8696 = vpop.f32.mrb[0].mxu0
      %v8697 = vadd.f32 0.0, %v8696
      %v8698 = vpop.f32.mrb[0].mxu0
      %8699 = vmatprep.mubr.f32.mxu0 0.0
      %8700 = vmatmul.mubr.f32.gmra.mrb[0].mxu0 %v8079
      %v8701 = vpop.f32.mrb[0].mxu0
      %v8702 = vadd.f32 0.0, %v8701
      %v8703 = vpop.f32.mrb[0].mxu0
      %8704 = vmatprep.mubr.f32.mxu0 0.0
      %8705 = vmatmul.mubr.f32.gmra.mrb[0].mxu0 %v8082
      %v8706 = vpop.f32.mrb[0].mxu0
      %v8707 = vadd.f32 0.0, %v8706
      %v8708 = vpop.f32.mrb[0].mxu0
      %8709 = vmatprep.mubr.f32.mxu0 0.0
      %8710 = vmatmul.mubr.f32.gmra.mrb[0].mxu0 %v8085
      %v8711 = vpop.f32.mrb[0].mxu0
      %v8712 = vadd.f32 0.0, %v8711
      %v8713 = vpop.f32.mrb[0].mxu0
      %8714 = vmatprep.mubr.f32.mxu0 0.0
      %8715 = vmatmul.mubr.f32.gmra.mrb[0].mxu0 %v8088
      %v8716 = vpop.f32.mrb[0].mxu0
      %v8717 = vadd.f32 0.0, %v8716
      %v8718 = vpop.f32.mrb[0].mxu0
      %8719 = vmatprep.mubr.f32.mxu0 0.0
      %8720 = vmatmul.mubr.f32.gmra.mrb[0].mxu0 %v8091
      %v8721 = vpop.f32.mrb[0].mxu0
      %v8722 = vadd.f32 0.0, %v8721
      %v8723 = vpop.f32.mrb[0].mxu0
      %8724 = vmatprep.mubr.f32.mxu0 0.0
      %8725 = vmatmul.mubr.f32.gmra.mrb[0].mxu0 %v8094
      %v8726 = vpop.f32.mrb[0].mxu0
      %v8727 = vadd.f32 0.0, %v8726
      %v8728 = vpop.f32.mrb[0].mxu0
      %8729 = vmatprep.mubr.f32.mxu0 0.0
      %8730 = vmatmul.mubr.f32.gmra.mrb[0].mxu0 %v8097
      %v8731 = vpop.f32.mrb[0].mxu0
      %v8732 = vadd.f32 0.0, %v8731
      %v8733 = vpop.f32.mrb[0].mxu0
      %8734 = vmatprep.mubr.f32.mxu0 0.0
      %8735 = vmatmul.mubr.f32.gmra.mrb[0].mxu0 %v8100
      %v8736 = vpop.f32.mrb[0].mxu0
      %v8737 = vadd.f32 0.0, %v8736
      %v8738 = vpop.f32.mrb[0].mxu0
      %8739 = vmatprep.mubr.f32.mxu0 0.0
      %8740 = vmatmul.mubr.f32.gmra.mrb[0].mxu0 %v8103
      %v8741 = vpop.f32.mrb[0].mxu0
      %v8742 = vadd.f32 0.0, %v8741
      %v8743 = vpop.f32.mrb[0].mxu0
      %8744 = vmatprep.mubr.f32.mxu0 0.0
      %8745 = vmatmul.mubr.f32.gmra.mrb[0].mxu0 %v8106
      %v8746 = vpop.f32.mrb[0].mxu0
      %v8747 = vadd.f32 0.0, %v8746
      %v8748 = vpop.f32.mrb[0].mxu0
      %8749 = vmatprep.mubr.f32.mxu0 0.0
      %8750 = vmatmul.mubr.f32.gmra.mrb[0].mxu0 %v8109
      %v8751 = vpop.f32.mrb[0].mxu0
      %v8752 = vadd.f32 0.0, %v8751
      %v8753 = vpop.f32.mrb[0].mxu0
      %8754 = vmatprep.mubr.f32.mxu0 0.0
      %8755 = vmatmul.mubr.f32.gmra.mrb[0].mxu0 %v8112
      %v8756 = vpop.f32.mrb[0].mxu0
      %v8757 = vadd.f32 0.0, %v8756
      %v8758 = vpop.f32.mrb[0].mxu0
      %8759 = vmatprep.mubr.f32.mxu0 0.0
      %8760 = vmatmul.mubr.f32.gmra.mrb[0].mxu0 %v8115
      %v8761 = vpop.f32.mrb[0].mxu0
      %v8762 = vadd.f32 0.0, %v8761
      %v8763 = vpop.f32.mrb[0].mxu0
      %8764 = vmatprep.mubr.f32.mxu0 0.0
      %8765 = vmatmul.mubr.f32.gmra.mrb[0].mxu0 %v8118
      %v8766 = vpop.f32.mrb[0].mxu0
      %v8767 = vadd.f32 0.0, %v8766
      %v8768 = vpop.f32.mrb[0].mxu0
      %8769 = vmatprep.mubr.f32.mxu0 0.0
      %8770 = vmatmul.mubr.f32.gmra.mrb[0].mxu0 %v8121
      %v8771 = vpop.f32.mrb[0].mxu0
      %v8772 = vadd.f32 0.0, %v8771
      %v8773 = vpop.f32.mrb[0].mxu0
      %8774 = vmatprep.mubr.f32.mxu0 0.0
      %8775 = vmatmul.mubr.f32.gmra.mrb[0].mxu0 %v8124
      %v8776 = vpop.f32.mrb[0].mxu0
      %v8777 = vadd.f32 0.0, %v8776
      %v8778 = vpop.f32.mrb[0].mxu0
      %8779 = vmatprep.mubr.f32.mxu0 0.0
      %8780 = vmatmul.mubr.f32.gmra.mrb[0].mxu0 %v8127
      %v8781 = vpop.f32.mrb[0].mxu0
      %v8782 = vadd.f32 0.0, %v8781
      %v8783 = vpop.f32.mrb[0].mxu0
      %8784 = vmatprep.mubr.f32.mxu0 0.0
      %8785 = vmatmul.mubr.f32.gmra.mrb[0].mxu0 %v8130
      %v8786 = vpop.f32.mrb[0].mxu0
      %v8787 = vadd.f32 0.0, %v8786
      %v8788 = vpop.f32.mrb[0].mxu0
      %8789 = vmatprep.mubr.f32.mxu0 0.0
      %8790 = vmatmul.mubr.f32.gmra.mrb[0].mxu0 %v8133
      %v8791 = vpop.f32.mrb[0].mxu0
      %v8792 = vadd.f32 0.0, %v8791
      %v8793 = vpop.f32.mrb[0].mxu0
      %8794 = vmatprep.mubr.f32.mxu0 0.0
      %8795 = vmatmul.mubr.f32.gmra.mrb[0].mxu0 %v8136
      %v8796 = vpop.f32.mrb[0].mxu0
      %v8797 = vadd.f32 0.0, %v8796
      %v8798 = vpop.f32.mrb[0].mxu0
      %8799 = vmatprep.mubr.f32.mxu0 0.0
      %8800 = vmatmul.mubr.f32.gmra.mrb[0].mxu0 %v8139
      %v8801 = vpop.f32.mrb[0].mxu0
      %v8802 = vadd.f32 0.0, %v8801
      %v8803 = vpop.f32.mrb[0].mxu0
      %8804 = vmatprep.mubr.f32.mxu0 0.0
      %8805 = vmatmul.mubr.f32.gmra.mrb[0].mxu0 %v8142
      %v8806 = vpop.f32.mrb[0].mxu0
      %v8807 = vadd.f32 0.0, %v8806
      %v8808 = vpop.f32.mrb[0].mxu0
      %8809 = vmatprep.mubr.f32.mxu0 0.0
      %8810 = vmatmul.mubr.f32.gmra.mrb[0].mxu0 %v8145
      %v8811 = vpop.f32.mrb[0].mxu0
      %v8812 = vadd.f32 0.0, %v8811
      %v8813 = vpop.f32.mrb[0].mxu0
      %8814 = vmatprep.mubr.f32.mxu0 0.0
      %8815 = vmatmul.mubr.f32.gmra.mrb[0].mxu0 %v8148
      %v8816 = vpop.f32.mrb[0].mxu0
      %v8817 = vadd.f32 0.0, %v8816
      %v8818 = vpop.f32.mrb[0].mxu0
      %8819 = vmatprep.mubr.f32.mxu0 0.0
      %8820 = vmatmul.mubr.f32.gmra.mrb[0].mxu0 %v8151
      %v8821 = vpop.f32.mrb[0].mxu0
      %v8822 = vadd.f32 0.0, %v8821
      %v8823 = vpop.f32.mrb[0].mxu0
      %8824 = vmatprep.mubr.f32.mxu0 0.0
      %8825 = vmatmul.mubr.f32.gmra.mrb[0].mxu0 %v8154
      %v8826 = vpop.f32.mrb[0].mxu0
      %v8827 = vadd.f32 0.0, %v8826
      %v8828 = vpop.f32.mrb[0].mxu0
      %8829 = vmatprep.mubr.f32.mxu0 0.0
      %8830 = vmatmul.mubr.f32.gmra.mrb[0].mxu0 %v8157
      %v8831 = vpop.f32.mrb[0].mxu0
      %v8832 = vadd.f32 0.0, %v8831
      %v8833 = vpop.f32.mrb[0].mxu0
      %8834 = vdwg.mxu0
      %v8835 = vmax.f32 %v8677, %v8697
      %v8836 = vmax.f32 %v8682, %v8702
      %v8837 = vmax.f32 %v8687, %v8707
      %v8838 = vmax.f32 %v8692, %v8712
      %v8839 = vmax.f32 %v8835, %v8717
      %v8840 = vmax.f32 %v8836, %v8722
      %v8841 = vmax.f32 %v8837, %v8727
      %v8842 = vmax.f32 %v8838, %v8732
      %v8843 = vmax.f32 %v8839, %v8737
      %v8844 = vmax.f32 %v8840, %v8742
      %v8845 = vmax.f32 %v8841, %v8747
      %v8846 = vmax.f32 %v8842, %v8752
      %v8847 = vmax.f32 %v8843, %v8757
      %v8848 = vmax.f32 %v8844, %v8762
      %v8849 = vmax.f32 %v8845, %v8767
      %v8850 = vmax.f32 %v8846, %v8772
      %v8851 = vmax.f32 %v8847, %v8777
      %v8852 = vmax.f32 %v8848, %v8782
      %v8853 = vmax.f32 %v8849, %v8787
      %v8854 = vmax.f32 %v8850, %v8792
      %v8855 = vmax.f32 %v8851, %v8797
      %v8856 = vmax.f32 %v8852, %v8802
      %v8857 = vmax.f32 %v8853, %v8807
      %v8858 = vmax.f32 %v8854, %v8812
      %v8859 = vmax.f32 %v8855, %v8817
      %v8860 = vmax.f32 %v8856, %v8822
      %v8861 = vmax.f32 %v8857, %v8827
      %v8862 = vmax.f32 %v8858, %v8832
      %v8863 = vmax.f32 %v8859, %v8860
      %v8864 = vmax.f32 %v8861, %v8862
      %v8865 = vmax.f32 %v8863, %v8864
      %v8866 = vrot.slane %v8865, 4
      %v8867 = vmax.f32 %v8865, %v8866
      %v8868 = vrot.slane %v8867, 2
      %v8869 = vmax.f32 %v8867, %v8868
      %v8870 = vrot.slane %v8869, 1
      %v8871 = vmax.f32 %v8869, %v8870
      %v8872 = vsub.f32 %v8677, %v8871
      %v8873 = vsub.f32 %v8682, %v8871
      %v8874 = vsub.f32 %v8687, %v8871
      %v8875 = vsub.f32 %v8692, %v8871
      %v8876 = vsub.f32 %v8697, %v8871
      %v8877 = vsub.f32 %v8702, %v8871
      %v8878 = vsub.f32 %v8707, %v8871
      %v8879 = vsub.f32 %v8712, %v8871
      %v8880 = vsub.f32 %v8717, %v8871
      %v8881 = vsub.f32 %v8722, %v8871
      %v8882 = vsub.f32 %v8727, %v8871
      %v8883 = vsub.f32 %v8732, %v8871
      %v8884 = vsub.f32 %v8737, %v8871
      %v8885 = vsub.f32 %v8742, %v8871
      %v8886 = vsub.f32 %v8747, %v8871
      %v8887 = vsub.f32 %v8752, %v8871
      %v8888 = vsub.f32 %v8757, %v8871
      %v8889 = vsub.f32 %v8762, %v8871
      %v8890 = vsub.f32 %v8767, %v8871
      %v8891 = vsub.f32 %v8772, %v8871
      %v8892 = vsub.f32 %v8777, %v8871
      %v8893 = vsub.f32 %v8782, %v8871
      %v8894 = vsub.f32 %v8787, %v8871
      %v8895 = vsub.f32 %v8792, %v8871
      %v8896 = vsub.f32 %v8797, %v8871
      %v8897 = vsub.f32 %v8802, %v8871
      %v8898 = vsub.f32 %v8807, %v8871
      %v8899 = vsub.f32 %v8812, %v8871
      %v8900 = vsub.f32 %v8817, %v8871
      %v8901 = vsub.f32 %v8822, %v8871
      %v8902 = vsub.f32 %v8827, %v8871
      %v8903 = vsub.f32 %v8832, %v8871
      %v8904 = vmul.f32 %v8872, 1.442695
      %v8905 = vpow.pop %v8904
      %v8906 = vmul.f32 %v8873, 1.442695
      %v8907 = vpow.pop %v8906
      %v8908 = vmul.f32 %v8874, 1.442695
      %v8909 = vpow.pop %v8908
      %v8910 = vmul.f32 %v8875, 1.442695
      %v8911 = vpow.pop %v8910
      %v8912 = vmul.f32 %v8876, 1.442695
      %v8913 = vpow.pop %v8912
      %v8914 = vmul.f32 %v8877, 1.442695
      %v8915 = vpow.pop %v8914
      %v8916 = vmul.f32 %v8878, 1.442695
      %v8917 = vpow.pop %v8916
      %v8918 = vmul.f32 %v8879, 1.442695
      %v8919 = vpow.pop %v8918
      %v8920 = vmul.f32 %v8880, 1.442695
      %v8921 = vpow.pop %v8920
      %v8922 = vmul.f32 %v8881, 1.442695
      %v8923 = vpow.pop %v8922
      %v8924 = vmul.f32 %v8882, 1.442695
      %v8925 = vpow.pop %v8924
      %v8926 = vmul.f32 %v8883, 1.442695
      %v8927 = vpow.pop %v8926
      %v8928 = vmul.f32 %v8884, 1.442695
      %v8929 = vpow.pop %v8928
      %v8930 = vmul.f32 %v8885, 1.442695
      %v8931 = vpow.pop %v8930
      %v8932 = vmul.f32 %v8886, 1.442695
      %v8933 = vpow.pop %v8932
      %v8934 = vmul.f32 %v8887, 1.442695
      %v8935 = vpow.pop %v8934
      %v8936 = vmul.f32 %v8888, 1.442695
      %v8937 = vpow.pop %v8936
      %v8938 = vmul.f32 %v8889, 1.442695
      %v8939 = vpow.pop %v8938
      %v8940 = vmul.f32 %v8890, 1.442695
      %v8941 = vpow.pop %v8940
      %v8942 = vmul.f32 %v8891, 1.442695
      %v8943 = vpow.pop %v8942
      %v8944 = vmul.f32 %v8892, 1.442695
      %v8945 = vpow.pop %v8944
      %v8946 = vmul.f32 %v8893, 1.442695
      %v8947 = vpow.pop %v8946
      %v8948 = vmul.f32 %v8894, 1.442695
      %v8949 = vpow.pop %v8948
      %v8950 = vmul.f32 %v8895, 1.442695
      %v8951 = vpow.pop %v8950
      %v8952 = vmul.f32 %v8896, 1.442695
      %v8953 = vpow.pop %v8952
      %v8954 = vmul.f32 %v8897, 1.442695
      %v8955 = vpow.pop %v8954
      %v8956 = vmul.f32 %v8898, 1.442695
      %v8957 = vpow.pop %v8956
      %v8958 = vmul.f32 %v8899, 1.442695
      %v8959 = vpow.pop %v8958
      %v8960 = vmul.f32 %v8900, 1.442695
      %v8961 = vpow.pop %v8960
      %v8962 = vmul.f32 %v8901, 1.442695
      %v8963 = vpow.pop %v8962
      %v8964 = vmul.f32 %v8902, 1.442695
      %v8965 = vpow.pop %v8964
      %v8966 = vmul.f32 %v8903, 1.442695
      %v8967 = vpow.pop %v8966
      %8968 = vmatprep.subr.mxu0 0.0
      %8969 = vmatpush1.msra.mxu0 %v8905
      %8970 = vmatprep.subr.mxu0 0.0
      %8971 = vmatpush1.msra.mxu0 %v8907
      %8972 = vmatprep.subr.mxu0 0.0
      %8973 = vmatpush1.msra.mxu0 %v8909
      %8974 = vmatprep.subr.mxu0 0.0
      %8975 = vmatpush1.msra.mxu0 %v8911
      %8976 = vmatprep.subr.mxu0 0.0
      %8977 = vmatpush1.msra.mxu0 %v8913
      %8978 = vmatprep.subr.mxu0 0.0
      %8979 = vmatpush1.msra.mxu0 %v8915
      %8980 = vmatprep.subr.mxu0 0.0
      %8981 = vmatpush1.msra.mxu0 %v8917
      %8982 = vmatprep.subr.mxu0 0.0
      %8983 = vmatpush1.msra.mxu0 %v8919
      %8984 = vmatprep.subr.mxu0 0.0
      %8985 = vmatpush1.msra.mxu0 %v8921
      %8986 = vmatprep.subr.mxu0 0.0
      %8987 = vmatpush1.msra.mxu0 %v8923
      %8988 = vmatprep.subr.mxu0 0.0
      %8989 = vmatpush1.msra.mxu0 %v8925
      %8990 = vmatprep.subr.mxu0 0.0
      %8991 = vmatpush1.msra.mxu0 %v8927
      %8992 = vmatprep.subr.mxu0 0.0
      %8993 = vmatpush1.msra.mxu0 %v8929
      %8994 = vmatprep.subr.mxu0 0.0
      %8995 = vmatpush1.msra.mxu0 %v8931
      %8996 = vmatprep.subr.mxu0 0.0
      %8997 = vmatpush1.msra.mxu0 %v8933
      %8998 = vmatprep.subr.mxu0 0.0
      %8999 = vmatpush1.msra.mxu0 %v8935
      %9000 = vmatprep.subr.mxu0 0.0
      %9001 = vmatpush1.msra.mxu0 %v8937
      %9002 = vmatprep.subr.mxu0 0.0
      %9003 = vmatpush1.msra.mxu0 %v8939
      %9004 = vmatprep.subr.mxu0 0.0
      %9005 = vmatpush1.msra.mxu0 %v8941
      %9006 = vmatprep.subr.mxu0 0.0
      %9007 = vmatpush1.msra.mxu0 %v8943
      %9008 = vmatprep.subr.mxu0 0.0
      %9009 = vmatpush1.msra.mxu0 %v8945
      %9010 = vmatprep.subr.mxu0 0.0
      %9011 = vmatpush1.msra.mxu0 %v8947
      %9012 = vmatprep.subr.mxu0 0.0
      %9013 = vmatpush1.msra.mxu0 %v8949
      %9014 = vmatprep.subr.mxu0 0.0
      %9015 = vmatpush1.msra.mxu0 %v8951
      %9016 = vmatprep.subr.mxu0 0.0
      %9017 = vmatpush1.msra.mxu0 %v8953
      %9018 = vmatprep.subr.mxu0 0.0
      %9019 = vmatpush1.msra.mxu0 %v8955
      %9020 = vmatprep.subr.mxu0 0.0
      %9021 = vmatpush1.msra.mxu0 %v8957
      %9022 = vmatprep.subr.mxu0 0.0
      %9023 = vmatpush1.msra.mxu0 %v8959
      %9024 = vmatprep.subr.mxu0 0.0
      %9025 = vmatpush1.msra.mxu0 %v8961
      %9026 = vmatprep.subr.mxu0 0.0
      %9027 = vmatpush1.msra.mxu0 %v8963
      %9028 = vmatprep.subr.mxu0 0.0
      %9029 = vmatpush1.msra.mxu0 %v8965
      %9030 = vmatprep.subr.mxu0 0.0
      %9031 = vmatpush1.msra.mxu0 %v8967
      %9032 = vmatprep.mubr.f32.mxu0 %v8522
      %9033 = vmatmul.mubr.f32.gmra.mrb[0].mxu0 %v8521
      %v9034 = vpop.f32.mrb[0].mxu0
      %v9035 = vadd.f32 0.0, %v9034
      %v9036 = vpop.f32.mrb[0].mxu0
      %9037 = vdwg.mxu0
      %v9038 = vrcp.pop %v9035
      %v9039 = vmul.f32 1.0, %v9038
      %v9040 = vlaneseq
      %v9041 = vshrl.u32 %v9040, 7
      %v9042 = vsub.s32 4, %v9041
      %v9043 = vrot.slane %v9039, %v9042
      %v9044 = vmul.f32 %v9035, %v9043
      %v9046 = vrot.slane %v9044, 4
      %9048 = vst [vmem:[#allocation3 + $0x38] sm:$0xf0] %v9046
      %v9049 = vld [vmem:[%s4] sm:$0xff]
      %v9050 = vld [vmem:[%s4 + $0x8] sm:$0xff]
      %v9051 = vld [vmem:[%s4 + $0x10] sm:$0xff]
      %v9052 = vld [vmem:[%s4 + $0x18] sm:$0xff]
      %v9053 = vld [vmem:[#allocation3] sm:$0xff]
      %v9054 = vld [vmem:[#allocation3 + $0x8] sm:$0xff]
      %v9055 = vld [vmem:[#allocation3 + $0x10] sm:$0xff]
      %v9056 = vld [vmem:[#allocation3 + $0x18] sm:$0xff]
      %v9057 = vld [vmem:[#allocation3 + $0x20] sm:$0xff]
      %v9058 = vld [vmem:[#allocation3 + $0x28] sm:$0xff]
      %v9059 = vld [vmem:[#allocation3 + $0x30] sm:$0xff]
      %v9060 = vld [vmem:[#allocation3 + $0x38] sm:$0xff]
      %v9061 = vld [vmem:[%s5] sm:$0xff]
      %v9062 = vld [vmem:[%s5 + $0x8] sm:$0xff]
      %v9063 = vld [vmem:[%s5 + $0x10] sm:$0xff]
      %v9064 = vld [vmem:[%s5 + $0x18] sm:$0xff]
      %9066 = vset.pattern.permute.xlu0 0
      %9067 = vperm.xlu0 %9066, %v9061
      %v9068 = vpop.permute.xlu0 %9067
      %9071 = vset.pattern.permute.xlu0 0
      %9072 = vperm.xlu0 %9071, %v9062
      %v9073 = vpop.permute.xlu0 %9072
      %9076 = vset.pattern.permute.xlu0 0
      %9077 = vperm.xlu0 %9076, %v9063
      %v9078 = vpop.permute.xlu0 %9077
      %9081 = vset.pattern.permute.xlu0 0
      %9082 = vperm.xlu0 %9081, %v9064
      %v9083 = vpop.permute.xlu0 %9082
      %v9086 = vsel %vm353, %v9049, 0
      %v9089 = vsel %vm353, %v9050, 0
      %v9092 = vsel %vm353, %v9051, 0
      %v9095 = vsel %vm353, %v9052, 0
      %9097 = vmatprep.subr.mxu0 %v9054
      %9098 = vmatpush1.msra.mxu0 %v9053
      %9099 = vmatprep.subr.mxu0 %v9056
      %9100 = vmatpush1.msra.mxu0 %v9055
      %9101 = vmatprep.subr.mxu0 %v9058
      %9102 = vmatpush1.msra.mxu0 %v9057
      %9103 = vmatprep.subr.mxu0 %v9060
      %9104 = vmatpush1.msra.mxu0 %v9059
      %9105 = vmatprep.subr.mxu0 0.0
      %9106 = vmatpush1.msra.mxu0 0.0
      %9107 = vmatprep.subr.mxu0 0.0
      %9108 = vmatpush1.msra.mxu0 0.0
      %9109 = vmatprep.subr.mxu0 0.0
      %9110 = vmatpush1.msra.mxu0 0.0
      %9111 = vmatprep.subr.mxu0 0.0
      %9112 = vmatpush1.msra.mxu0 0.0
      %9113 = vmatprep.subr.mxu0 0.0
      %9114 = vmatpush1.msra.mxu0 0.0
      %9115 = vmatprep.subr.mxu0 0.0
      %9116 = vmatpush1.msra.mxu0 0.0
      %9117 = vmatprep.subr.mxu0 0.0
      %9118 = vmatpush1.msra.mxu0 0.0
      %9119 = vmatprep.subr.mxu0 0.0
      %9120 = vmatpush1.msra.mxu0 0.0
      %9121 = vmatprep.subr.mxu0 0.0
      %9122 = vmatpush1.msra.mxu0 0.0
      %9123 = vmatprep.subr.mxu0 0.0
      %9124 = vmatpush1.msra.mxu0 0.0
      %9125 = vmatprep.subr.mxu0 0.0
      %9126 = vmatpush1.msra.mxu0 0.0
      %9127 = vmatprep.subr.mxu0 0.0
      %9128 = vmatpush1.msra.mxu0 0.0
      %9129 = vmatprep.subr.mxu0 0.0
      %9130 = vmatpush1.msra.mxu0 0.0
      %9131 = vmatprep.subr.mxu0 0.0
      %9132 = vmatpush1.msra.mxu0 0.0
      %9133 = vmatprep.subr.mxu0 0.0
      %9134 = vmatpush1.msra.mxu0 0.0
      %9135 = vmatprep.subr.mxu0 0.0
      %9136 = vmatpush1.msra.mxu0 0.0
      %9137 = vmatprep.subr.mxu0 0.0
      %9138 = vmatpush1.msra.mxu0 0.0
      %9139 = vmatprep.subr.mxu0 0.0
      %9140 = vmatpush1.msra.mxu0 0.0
      %9141 = vmatprep.subr.mxu0 0.0
      %9142 = vmatpush1.msra.mxu0 0.0
      %9143 = vmatprep.subr.mxu0 0.0
      %9144 = vmatpush1.msra.mxu0 0.0
      %9145 = vmatprep.subr.mxu0 0.0
      %9146 = vmatpush1.msra.mxu0 0.0
      %9147 = vmatprep.subr.mxu0 0.0
      %9148 = vmatpush1.msra.mxu0 0.0
      %9149 = vmatprep.subr.mxu0 0.0
      %9150 = vmatpush1.msra.mxu0 0.0
      %9151 = vmatprep.subr.mxu0 0.0
      %9152 = vmatpush1.msra.mxu0 0.0
      %9153 = vmatprep.subr.mxu0 0.0
      %9154 = vmatpush1.msra.mxu0 0.0
      %9155 = vmatprep.subr.mxu0 0.0
      %9156 = vmatpush1.msra.mxu0 0.0
      %9157 = vmatprep.subr.mxu0 0.0
      %9158 = vmatpush1.msra.mxu0 0.0
      %9159 = vmatprep.subr.mxu0 0.0
      %9160 = vmatpush1.msra.mxu0 0.0
      %9161 = vmatprep.mubr.f32.mxu0 0.0
      %9162 = vmatmul.mubr.f32.gmra.mrb[0].mxu0 %v9086
      %v9163 = vpop.f32.mrb[0].mxu0
      %v9164 = vadd.f32 %v9068, %v9163
      %v9165 = vpop.f32.mrb[0].mxu0
      %v9166 = vadd.f32 %v9068, %v9165
      %9167 = vmatprep.mubr.f32.mxu0 0.0
      %9168 = vmatmul.mubr.f32.gmra.mrb[0].mxu0 %v9089
      %v9169 = vpop.f32.mrb[0].mxu0
      %v9170 = vadd.f32 %v9073, %v9169
      %v9171 = vpop.f32.mrb[0].mxu0
      %v9172 = vadd.f32 %v9073, %v9171
      %9173 = vmatprep.mubr.f32.mxu0 0.0
      %9174 = vmatmul.mubr.f32.gmra.mrb[0].mxu0 %v9092
      %v9175 = vpop.f32.mrb[0].mxu0
      %v9176 = vadd.f32 %v9078, %v9175
      %v9177 = vpop.f32.mrb[0].mxu0
      %v9178 = vadd.f32 %v9078, %v9177
      %9179 = vmatprep.mubr.f32.mxu0 0.0
      %9180 = vmatmul.mubr.f32.gmra.mrb[0].mxu0 %v9095
      %v9181 = vpop.f32.mrb[0].mxu0
      %v9182 = vadd.f32 %v9083, %v9181
      %v9183 = vpop.f32.mrb[0].mxu0
      %v9184 = vadd.f32 %v9083, %v9183
      %9185 = vdwg.mxu0
      %v9186 = vstv %s253
      %v9187 = vmul.f32 %v9186, %v9164
      %v9188 = vmul.f32 %v9186, %v9166
      %v9189 = vmul.f32 %v9186, %v9170
      %v9190 = vmul.f32 %v9186, %v9172
      %v9191 = vmul.f32 %v9186, %v9176
      %v9192 = vmul.f32 %v9186, %v9178
      %v9193 = vmul.f32 %v9186, %v9182
      %v9194 = vmul.f32 %v9186, %v9184
      %v9195 = vld [vmem:[%s247] sm:$0xff]
      %v9196 = vld [vmem:[%s247 + $0x8] sm:$0xff]
      %v9197 = vld [vmem:[%s247 + $0x10] sm:$0xff]
      %v9198 = vld [vmem:[%s247 + $0x18] sm:$0xff]
      %v9199 = vld [vmem:[%s247 + $0x20] sm:$0xff]
      %v9200 = vld [vmem:[%s247 + $0x28] sm:$0xff]
      %v9201 = vld [vmem:[%s247 + $0x30] sm:$0xff]
      %v9202 = vld [vmem:[%s247 + $0x38] sm:$0xff]
      %v9203 = vadd.f32 %v9187, %v9195
      %v9204 = vadd.f32 %v9188, %v9196
      %v9205 = vadd.f32 %v9189, %v9197
      %v9206 = vadd.f32 %v9190, %v9198
      %v9207 = vadd.f32 %v9191, %v9199
      %v9208 = vadd.f32 %v9192, %v9200
      %v9209 = vadd.f32 %v9193, %v9201
      %v9210 = vadd.f32 %v9194, %v9202
      %9211 = vst [vmem:[%s252] sm:$0xff] %v9203
      %9212 = vst [vmem:[%s252 + $0x8] sm:$0xff] %v9204
      %9213 = vst [vmem:[%s252 + $0x10] sm:$0xff] %v9205
      %9214 = vst [vmem:[%s252 + $0x18] sm:$0xff] %v9206
      %9215 = vst [vmem:[%s252 + $0x20] sm:$0xff] %v9207
      %9216 = vst [vmem:[%s252 + $0x28] sm:$0xff] %v9208
      %9217 = vst [vmem:[%s252 + $0x30] sm:$0xff] %v9209
      %9218 = vst [vmem:[%s252 + $0x38] sm:$0xff] %v9210
      %p9219 = scmp.lt.s32.totalorder %s18, 1
      %s9220 = scalar_select %p9219, %s18, 1
      %s9221 = smul.addr %s9220, 8
      %s9222 = smul.addr %s9221, 8
      %s9223 = scalar_lea.vmem %s6, %s9222
      // Predicated region
      $region45: #{_mhsa_forward_impl.1} parent=43 // pred_check
        %p9224 = pneg %p167
      $region46: #{_mhsa_forward_impl.1} parent=43 // pred_check_branch
        %9226 = sbr.rel (%p9224) target = $region48
      $region47: #{_mhsa_forward_impl.1} parent=43 // pred_region
        _
      $region48: #{_mhsa_forward_impl.1} parent=43 // pred_fallthru
        _
    $region44: #{_mhsa_forward_impl.1} parent=5 // pred_fallthru
      _
    %p9227 = scmp.le.s32.totalorder 2, %s13
    // Predicated region
    $region49: #{_mhsa_forward_impl.1} parent=5 // pred_check
      %p9228 = pneg %p9227
    $region50: #{_mhsa_forward_impl.1} parent=5 // pred_check_branch
      %9230 = sbr.rel (%p9228) target = $region52
    $region51: #{_mhsa_forward_impl.1} parent=5 // pred_region
      %s9231 = ssub.s32 %s13, 2
      // Predicated region
      $region53: #{_mhsa_forward_impl.1} parent=51 // pred_check
        %p9232 = pneg %p173
      $region54: #{_mhsa_forward_impl.1} parent=51 // pred_check_branch
        %9234 = sbr.rel (%p9232) target = $region56
      $region55: #{_mhsa_forward_impl.1} parent=51 // pred_region
        %p9235 = scmp.lt.s32.totalorder %s19, 1
        %s9236 = scalar_select %p9235, %s19, 1
        %s9237 = smul.addr %s9236, 8
        %s9238 = smul.addr %s9237, 8
        %s9239 = scalar_lea.vmem %s6, %s9238
      $region56: #{_mhsa_forward_impl.1} parent=51 // pred_fallthru
        _
    $region52: #{_mhsa_forward_impl.1} parent=5 // pred_fallthru
      _
  $region6: #{_mhsa_forward_impl.1} parent=0 // loop_footer
    %s17 = sadd.s32 1, %s13
  $region7: #{_mhsa_forward_impl.1} parent=0 // loop_footer_branch
    %12 = sbr.rel target = $region3
  $region8: #{_mhsa_forward_impl.1} parent=0 // loop_exit
    _

</llo_original>
